<compile_context>
chip_gen: v7x
topology: tpu7x:2x2x1
jax: 0.10.0
libtpu: 0.0.40
codegen_flags: <defaults>
</compile_context>

<pallas_src>
import jax
import jax.numpy as jnp
from jax.experimental import pallas as pl
from jax.experimental.pallas import tpu as pltpu

HIDDEN = 768
VOCAB = 49411
LN_EPS = 1e-12
TN = 2048                             # vocab (lane) tile, multiple of 128
VOCAB_PAD = pl.cdiv(VOCAB, TN) * TN   # 51200: weight/bias padded to full tiles


def _pick_row_tile(m, preferred):
    """Largest row tile <= preferred that divides m (sublane-friendly)."""
    for t in (preferred, 1024, 512, 256, 128, 64, 32, 16, 8):
        if t <= m and m % t == 0:
            return t
    return m  # tiny / odd M: a single full block (block == full dim is legal)


# ---------------------------------------------------------------------------
# Kernel 1: dense(768->768) + exact GELU + LayerNorm(eps=1e-12), bf16 output
# ---------------------------------------------------------------------------
def _transform_kernel(x_ref, w_ref, b_ref, gamma_ref, beta_ref, o_ref):
    x = x_ref[...]                                                  # (tm, 768)
    h = jnp.dot(x, w_ref[...], preferred_element_type=jnp.float32) + b_ref[...]
    # exact (erf-based) GELU, matching nn.GELU() default
    h = 0.5 * h * (1.0 + jax.lax.erf(h * (1.0 / jnp.sqrt(2.0))))
    mu = jnp.mean(h, axis=-1, keepdims=True)
    var = jnp.mean(jnp.square(h - mu), axis=-1, keepdims=True)
    h = (h - mu) * jax.lax.rsqrt(var + LN_EPS)
    o_ref[...] = (h * gamma_ref[...] + beta_ref[...]).astype(o_ref.dtype)


def transform(x, w_dense_t, b_dense, gamma, beta, *, tm=512):
    """x: (M, 768) f32 -> h: (M, 768) bf16."""
    m = x.shape[0]
    tm = _pick_row_tile(m, tm)
    cost = pl.CostEstimate(
        flops=2 * m * HIDDEN * HIDDEN,
        transcendentals=m * HIDDEN,
        bytes_accessed=(m * HIDDEN * 4 + HIDDEN * HIDDEN * 4
                        + 3 * HIDDEN * 4 + m * HIDDEN * 2),
    )
    return pl.pallas_call(
        _transform_kernel,
        out_shape=jax.ShapeDtypeStruct((m, HIDDEN), jnp.bfloat16),
        grid_spec=pl.GridSpec(
            grid=(m // tm,),
            in_specs=[
                pl.BlockSpec((tm, HIDDEN), lambda i: (i, 0)),
                pl.BlockSpec((HIDDEN, HIDDEN), lambda i: (0, 0)),
                pl.BlockSpec((1, HIDDEN), lambda i: (0, 0)),
                pl.BlockSpec((1, HIDDEN), lambda i: (0, 0)),
                pl.BlockSpec((1, HIDDEN), lambda i: (0, 0)),
            ],
            out_specs=pl.BlockSpec((tm, HIDDEN), lambda i: (i, 0)),
        ),
        compiler_params=pltpu.CompilerParams(
            dimension_semantics=("parallel",),
        ),
        cost_estimate=cost,
    )(x, w_dense_t, b_dense, gamma, beta)


# ---------------------------------------------------------------------------
# Kernel 2: decoder matmul (768 -> vocab) + bias, tiled over (M, vocab)
#   bf16 h x bf16 W on the MXU with f32 accumulation; f32 logits out.
# ---------------------------------------------------------------------------
def _decoder_kernel(h_ref, w_ref, b_ref, o_ref):
    o_ref[...] = (
        jnp.dot(h_ref[...], w_ref[...], preferred_element_type=jnp.float32)
        + b_ref[...]
    ).astype(o_ref.dtype)


def decoder(h, w_dec_t_pad, bias_pad, *, tm=256, tn=TN):
    """h: (M, 768) bf16; w: (768, VOCAB_PAD) bf16; bias: (1, VOCAB_PAD) f32
       -> logits (M, VOCAB) f32 (partial last vocab block masked by Pallas)."""
    m = h.shape[0]
    n_pad = w_dec_t_pad.shape[1]
    assert n_pad % tn == 0
    tm = _pick_row_tile(m, tm)
    cost = pl.CostEstimate(
        flops=2 * m * HIDDEN * n_pad,
        transcendentals=0,
        bytes_accessed=(m * HIDDEN * 2 + HIDDEN * n_pad * 2
                        + n_pad * 4 + m * VOCAB * 4),
    )
    return pl.pallas_call(
        _decoder_kernel,
        out_shape=jax.ShapeDtypeStruct((m, VOCAB), jnp.float32),
        grid_spec=pl.GridSpec(
            grid=(m // tm, n_pad // tn),
            in_specs=[
                pl.BlockSpec((tm, HIDDEN), lambda i, j: (i, 0)),
                pl.BlockSpec((HIDDEN, tn), lambda i, j: (0, j)),
                pl.BlockSpec((1, tn), lambda i, j: (0, j)),
            ],
            out_specs=pl.BlockSpec((tm, tn), lambda i, j: (i, j)),
        ),
        compiler_params=pltpu.CompilerParams(
            dimension_semantics=("parallel", "parallel"),
        ),
        cost_estimate=cost,
    )(h, w_dec_t_pad, bias_pad)


# ---------------------------------------------------------------------------
# Full MLMHead forward
# ---------------------------------------------------------------------------
@jax.jit
def mlm_head(x, params):
    B, S, H = x.shape
    assert H == HIDDEN
    xm = x.reshape(B * S, H).astype(jnp.float32)
    h = transform(xm, params["w_dense_t"], params["b_dense"],
                  params["ln_gamma"], params["ln_beta"])
    logits = decoder(h, params["w_dec_t_pad"], params["bias_pad"])
    return logits.reshape(B, S, VOCAB)


def init_params(key):
    k1, k2, k3 = jax.random.split(key, 3)
    # nn.Linear(768, 768): weight (out, in) -> stored transposed (in, out)
    w_dense_t = jax.random.normal(k1, (HIDDEN, HIDDEN), jnp.float32) * 0.02
    b_dense = jax.random.normal(k2, (1, HIDDEN), jnp.float32) * 0.02
    # LayerNorm(768): gamma=1, beta=0 (PyTorch default init)
    ln_gamma = jnp.ones((1, HIDDEN), jnp.float32)
    ln_beta = jnp.zeros((1, HIDDEN), jnp.float32)
    # decoder: nn.Linear(768, 49411, bias=False) weight (49411,768) -> (768,49411)
    w_dec_t = jax.random.normal(k3, (HIDDEN, VOCAB), jnp.float32) * 0.02
    # separate bias Parameter of shape (49411,), zero-initialized in the module
    bias = jnp.zeros((VOCAB,), jnp.float32)
    # pad vocab dim to a multiple of the vocab tile; store decoder weight bf16
    w_dec_t_pad = jnp.pad(
        w_dec_t, ((0, 0), (0, VOCAB_PAD - VOCAB))).astype(jnp.bfloat16)
    bias_pad = jnp.pad(bias, (0, VOCAB_PAD - VOCAB)).reshape(1, VOCAB_PAD)
    return {
        "w_dense_t": w_dense_t,
        "b_dense": b_dense,
        "ln_gamma": ln_gamma,
        "ln_beta": ln_beta,
        "w_dec_t_pad": w_dec_t_pad,
        "bias_pad": bias_pad,
    }


if __name__ == "__main__":
    key = jax.random.PRNGKey(0)
    kx, kp = jax.random.split(key)
    B, S = 2, 8
    x = jax.random.normal(kx, (B, S, HIDDEN), jnp.float32)
    params = init_params(kp)

    out = mlm_head(x, params)
    jax.block_until_ready(out)
    assert out.shape == (B, S, VOCAB), out.shape

    # sanity check against a pure-JAX reference (mirrors the bf16 h / bf16 W
    # representation used by the decoder kernel)
    def ref(x, p):
        h = x.reshape(-1, HIDDEN) @ p["w_dense_t"] + p["b_dense"]
        h = 0.5 * h * (1.0 + jax.lax.erf(h / jnp.sqrt(2.0)))
        mu = h.mean(-1, keepdims=True)
        var = ((h - mu) ** 2).mean(-1, keepdims=True)
        h = (h - mu) / jnp.sqrt(var + LN_EPS) * p["ln_gamma"] + p["ln_beta"]
        h = h.astype(jnp.bfloat16).astype(jnp.float32)
        w = p["w_dec_t_pad"].astype(jnp.float32)[:, :VOCAB]
        y = h @ w + p["bias_pad"][:, :VOCAB]
        return y.reshape(B, S, VOCAB)

    ref_out = ref(x, params)
    max_err = float(jnp.max(jnp.abs(out - ref_out)))
    assert jnp.allclose(out, ref_out, atol=1e-3, rtol=1e-3), max_err

    print("KERNEL_OK")
</pallas_src>

<mosaic_0001>
module attributes {stable_mosaic.version = 11 : i64} {
  func.func @_decoder_kernel(%arg0: i32, %arg1: i32, %arg2: memref<16x768xbf16, #tpu.memory_space<vmem>>, %arg3: memref<768x2048xbf16, #tpu.memory_space<vmem>>, %arg4: memref<1x2048xf32, #tpu.memory_space<vmem>>, %arg5: memref<16x2048xf32, #tpu.memory_space<vmem>>) attributes {dimension_semantics = [#tpu.dimension_semantics<parallel>, #tpu.dimension_semantics<parallel>], iteration_bounds = array<i64: 1, 25>, scalar_prefetch = 0 : i64, scratch_operands = 0 : i64, tpu.core_type = #tpu.core_type<tc>, window_params = [{transform_indices = @transform_0, window_bounds = array<i64: 16, 768>}, {transform_indices = @transform_1, window_bounds = array<i64: 768, 2048>}, {transform_indices = @transform_2, window_bounds = array<i64: 1, 2048>}, {transform_indices = @transform_3, window_bounds = array<i64: 16, 2048>}]} {
    %c0 = arith.constant 0 : index
    %c0_0 = arith.constant 0 : index
    %0 = vector.load %arg2[%c0, %c0_0] : memref<16x768xbf16, #tpu.memory_space<vmem>>, vector<16x768xbf16>
    %c0_1 = arith.constant 0 : index
    %c0_2 = arith.constant 0 : index
    %1 = vector.load %arg3[%c0_1, %c0_2] : memref<768x2048xbf16, #tpu.memory_space<vmem>>, vector<768x2048xbf16>
    %cst = arith.constant dense<0.000000e+00> : vector<16x2048xf32>
    %2 = tpu.matmul %0, %1, %cst {dimension_numbers = #tpu.dot_dimension_numbers<[1], [0], [0], [1], [0, 0, 1, 1], [], []>} : vector<16x768xbf16>, vector<768x2048xbf16>, vector<16x2048xf32> -> vector<16x2048xf32>
    %c0_3 = arith.constant 0 : index
    %c0_4 = arith.constant 0 : index
    %3 = vector.load %arg4[%c0_3, %c0_4] : memref<1x2048xf32, #tpu.memory_space<vmem>>, vector<1x2048xf32>
    %4 = vector.broadcast %3 : vector<1x2048xf32> to vector<16x2048xf32>
    %5 = arith.addf %2, %4 : vector<16x2048xf32>
    %c0_5 = arith.constant 0 : index
    %c0_6 = arith.constant 0 : index
    %6 = vector.load %arg5[%c0_5, %c0_6] : memref<16x2048xf32, #tpu.memory_space<vmem>>, vector<16x2048xf32>
    tpu.vector_store %arg5[%c0_5, %c0_6], %5 {strides = array<i32>} : memref<16x2048xf32, #tpu.memory_space<vmem>>, vector<16x2048xf32>,
    return
  }
  func.func @transform_0(%arg0: i32, %arg1: i32) -> (i32, i32) {
    %c0_i32 = arith.constant 0 : i32
    %c0_i32_0 = arith.constant 0 : i32
    return %arg0, %c0_i32 : i32, i32
  }
  func.func @transform_1(%arg0: i32, %arg1: i32) -> (i32, i32) {
    %c0_i32 = arith.constant 0 : i32
    %c0_i32_0 = arith.constant 0 : i32
    return %c0_i32, %arg1 : i32, i32
  }
  func.func @transform_2(%arg0: i32, %arg1: i32) -> (i32, i32) {
    %c0_i32 = arith.constant 0 : i32
    %c0_i32_0 = arith.constant 0 : i32
    return %c0_i32, %arg1 : i32, i32
  }
  func.func @transform_3(%arg0: i32, %arg1: i32) -> (i32, i32) {
    %c0_i32 = arith.constant 0 : i32
    return %arg0, %arg1 : i32, i32
  }
}

module attributes {stable_mosaic.version = 11 : i64} {
  func.func @_transform_kernel(%arg0: i32, %arg1: memref<16x768xf32, #tpu.memory_space<vmem>>, %arg2: memref<768x768xf32, #tpu.memory_space<vmem>>, %arg3: memref<1x768xf32, #tpu.memory_space<vmem>>, %arg4: memref<1x768xf32, #tpu.memory_space<vmem>>, %arg5: memref<1x768xf32, #tpu.memory_space<vmem>>, %arg6: memref<16x768xbf16, #tpu.memory_space<vmem>>) attributes {dimension_semantics = [#tpu.dimension_semantics<parallel>], iteration_bounds = array<i64: 1>, scalar_prefetch = 0 : i64, scratch_operands = 0 : i64, tpu.core_type = #tpu.core_type<tc>, window_params = [{transform_indices = @transform_0, window_bounds = array<i64: 16, 768>}, {pipeline_mode = #tpu.pipeline_mode<synchronous>, transform_indices = @transform_1, window_bounds = array<i64: 768, 768>}, {pipeline_mode = #tpu.pipeline_mode<synchronous>, transform_indices = @transform_2, window_bounds = array<i64: 1, 768>}, {pipeline_mode = #tpu.pipeline_mode<synchronous>, transform_indices = @transform_3, window_bounds = array<i64: 1, 768>}, {pipeline_mode = #tpu.pipeline_mode<synchronous>, transform_indices = @transform_4, window_bounds = array<i64: 1, 768>}, {transform_indices = @transform_5, window_bounds = array<i64: 16, 768>}]} {
    %c0 = arith.constant 0 : index
    %c0_0 = arith.constant 0 : index
    %0 = vector.load %arg1[%c0, %c0_0] : memref<16x768xf32, #tpu.memory_space<vmem>>, vector<16x768xf32>
    %c0_1 = arith.constant 0 : index
    %c0_2 = arith.constant 0 : index
    %1 = vector.load %arg2[%c0_1, %c0_2] : memref<768x768xf32, #tpu.memory_space<vmem>>, vector<768x768xf32>
    %cst = arith.constant dense<0.000000e+00> : vector<16x768xf32>
    %2 = tpu.matmul %0, %1, %cst {dimension_numbers = #tpu.dot_dimension_numbers<[1], [0], [0], [1], [0, 0, 1, 1], [], []>} : vector<16x768xf32>, vector<768x768xf32>, vector<16x768xf32> -> vector<16x768xf32>
    %c0_3 = arith.constant 0 : index
    %c0_4 = arith.constant 0 : index
    %3 = vector.load %arg3[%c0_3, %c0_4] : memref<1x768xf32, #tpu.memory_space<vmem>>, vector<1x768xf32>
    %4 = vector.broadcast %3 : vector<1x768xf32> to vector<16x768xf32>
    %5 = arith.addf %2, %4 : vector<16x768xf32>
    %cst_5 = arith.constant 5.000000e-01 : f32
    %6 = vector.broadcast %cst_5 : f32 to vector<16x768xf32>
    %7 = arith.mulf %6, %5 : vector<16x768xf32>
    %cst_6 = arith.constant 2.000000e+00 : f32
    %8 = math.sqrt %cst_6 : f32
    %cst_7 = arith.constant 1.000000e+00 : f32
    %9 = arith.divf %cst_7, %8 : f32
    %10 = vector.broadcast %9 : f32 to vector<16x768xf32>
    %11 = arith.mulf %5, %10 : vector<16x768xf32>
    %12 = math.erf %11 : vector<16x768xf32>
    %cst_8 = arith.constant 1.000000e+00 : f32
    %13 = vector.broadcast %cst_8 : f32 to vector<16x768xf32>
    %14 = arith.addf %13, %12 : vector<16x768xf32>
    %15 = arith.mulf %7, %14 : vector<16x768xf32>
    %cst_9 = arith.constant dense<0.000000e+00> : vector<16xf32>
    %16 = vector.multi_reduction <add>, %15, %cst_9 [1] : vector<16x768xf32> to vector<16xf32>
    %17 = vector.shape_cast %16 : vector<16xf32> to vector<16x1xf32>
    %cst_10 = arith.constant 7.680000e+02 : f32
    %18 = vector.broadcast %cst_10 : f32 to vector<16x1xf32>
    %19 = arith.divf %17, %18 : vector<16x1xf32>
    %20 = vector.broadcast %19 : vector<16x1xf32> to vector<16x768xf32>
    %21 = arith.subf %15, %20 : vector<16x768xf32>
    %22 = arith.mulf %21, %21 : vector<16x768xf32>
    %cst_11 = arith.constant dense<0.000000e+00> : vector<16xf32>
    %23 = vector.multi_reduction <add>, %22, %cst_11 [1] : vector<16x768xf32> to vector<16xf32>
    %24 = vector.shape_cast %23 : vector<16xf32> to vector<16x1xf32>
    %cst_12 = arith.constant 7.680000e+02 : f32
    %25 = vector.broadcast %cst_12 : f32 to vector<16x1xf32>
    %26 = arith.divf %24, %25 : vector<16x1xf32>
    %27 = vector.broadcast %19 : vector<16x1xf32> to vector<16x768xf32>
    %28 = arith.subf %15, %27 : vector<16x768xf32>
    %cst_13 = arith.constant 9.99999996E-13 : f32
    %29 = vector.broadcast %cst_13 : f32 to vector<16x1xf32>
    %30 = arith.addf %26, %29 : vector<16x1xf32>
    %31 = math.rsqrt %30 : vector<16x1xf32>
    %32 = vector.broadcast %31 : vector<16x1xf32> to vector<16x768xf32>
    %33 = arith.mulf %28, %32 : vector<16x768xf32>
    %c0_14 = arith.constant 0 : index
    %c0_15 = arith.constant 0 : index
    %34 = vector.load %arg4[%c0_14, %c0_15] : memref<1x768xf32, #tpu.memory_space<vmem>>, vector<1x768xf32>
    %35 = vector.broadcast %34 : vector<1x768xf32> to vector<16x768xf32>
    %36 = arith.mulf %33, %35 : vector<16x768xf32>
    %c0_16 = arith.constant 0 : index
    %c0_17 = arith.constant 0 : index
    %37 = vector.load %arg5[%c0_16, %c0_17] : memref<1x768xf32, #tpu.memory_space<vmem>>, vector<1x768xf32>
    %38 = vector.broadcast %37 : vector<1x768xf32> to vector<16x768xf32>
    %39 = arith.addf %36, %38 : vector<16x768xf32>
    %40 = arith.truncf %39 : vector<16x768xf32> to vector<16x768xbf16>
    %c0_18 = arith.constant 0 : index
    %c0_19 = arith.constant 0 : index
    %41 = vector.load %arg6[%c0_18, %c0_19] : memref<16x768xbf16, #tpu.memory_space<vmem>>, vector<16x768xbf16>
    tpu.vector_store %arg6[%c0_18, %c0_19], %40 {strides = array<i32>} : memref<16x768xbf16, #tpu.memory_space<vmem>>, vector<16x768xbf16>,
    return
  }
  func.func @transform_0(%arg0: i32) -> (i32, i32) {
    %c0_i32 = arith.constant 0 : i32
    %c0_i32_0 = arith.constant 0 : i32
    return %arg0, %c0_i32 : i32, i32
  }
  func.func @transform_1(%arg0: i32) -> (i32, i32) {
    %c0_i32 = arith.constant 0 : i32
    %c0_i32_0 = arith.constant 0 : i32
    %c0_i32_1 = arith.constant 0 : i32
    return %c0_i32, %c0_i32_0 : i32, i32
  }
  func.func @transform_2(%arg0: i32) -> (i32, i32) {
    %c0_i32 = arith.constant 0 : i32
    %c0_i32_0 = arith.constant 0 : i32
    %c0_i32_1 = arith.constant 0 : i32
    return %c0_i32, %c0_i32_0 : i32, i32
  }
  func.func @transform_3(%arg0: i32) -> (i32, i32) {
    %c0_i32 = arith.constant 0 : i32
    %c0_i32_0 = arith.constant 0 : i32
    %c0_i32_1 = arith.constant 0 : i32
    return %c0_i32, %c0_i32_0 : i32, i32
  }
  func.func @transform_4(%arg0: i32) -> (i32, i32) {
    %c0_i32 = arith.constant 0 : i32
    %c0_i32_0 = arith.constant 0 : i32
    %c0_i32_1 = arith.constant 0 : i32
    return %c0_i32, %c0_i32_0 : i32, i32
  }
  func.func @transform_5(%arg0: i32) -> (i32, i32) {
    %c0_i32 = arith.constant 0 : i32
    %c0_i32_0 = arith.constant 0 : i32
    return %arg0, %c0_i32 : i32, i32
  }
}

</mosaic_0001>

<llo_original>
// kernel: mlm_head.2
$region0: #{mlm_head.2}
  #allocation0 [shape = 'u32[]', space=smem, size = 0x4, offset = 0x4, fixed_abs, tag = 'smem constant byte address 0x4 - core index']
  #allocation1 [shape = 'u32[144,128]{1,0:T(1,128)}', space=vmem, size = 0x12000, scoped, tag = 'internal scratch']
  %s0 = inlined_call_operand.hbm [shape: f32[16,768], index: 0, kind: input, shape index: {}]
  %s1 = inlined_call_operand.hbm [shape: f32[768,768], index: 1, kind: input, shape index: {}]
  %s2 = inlined_call_operand.hbm [shape: f32[1,768], index: 2, kind: input, shape index: {}]
  %s3 = inlined_call_operand.hbm [shape: f32[1,768], index: 3, kind: input, shape index: {}]
  %s4 = inlined_call_operand.hbm [shape: f32[1,768], index: 4, kind: input, shape index: {}]
  %s5 = inlined_call_operand.vmem [shape: bf16[16,768], index: 5, kind: output, shape index: {}]
  %s6 = sld [smem:[#allocation0]]
  $region50: #{mlm_head.2} parent=0
    _
  %s8 = ssub.s32 1, %s6
  %s9 = scalar_select 0, %s8, %s6
  $region1: #{mlm_head.2} parent=0
    #allocation2 [shape = 'u8[49152]{0}', space=vmem, size = 0xc000, scoped, tag = 'input window, operand 0, single buffered']
    #allocation3 [shape = 's32[1]{0}', space=sflag, size = 0x4, scoped, tag = 'scoped memory for mlm_head.2']
    #allocation4 [shape = 'u8[2359296]{0}', space=vmem, size = 0x240000, scoped, tag = 'input window, operand 1, single buffered']
    #allocation5 [shape = 's32[1]{0}', space=sflag, size = 0x4, scoped, tag = 'scoped memory for mlm_head.2']
    #allocation6 [shape = 'u8[3072]{0}', space=vmem, size = 0xc00, scoped, tag = 'input window, operand 2, single buffered']
    #allocation7 [shape = 'u8[3072]{0}', space=vmem, size = 0xc00, scoped, tag = 'input window, operand 3, single buffered']
    #allocation8 [shape = 's32[1]{0}', space=sflag, size = 0x4, scoped, tag = 'scoped memory for mlm_head.2']
    #allocation9 [shape = 'u8[3072]{0}', space=vmem, size = 0xc00, scoped, tag = 'input window, operand 4, single buffered']
    %10 = vsyncpa [#allocation3], 0
    %11 = vsyncpa [#allocation5], 0
    %12 = vsyncpa [#allocation8], 0
    // Predicated region
    $region2: #{mlm_head.2} parent=1 // pred_check
      _
    $region3: #{mlm_head.2} parent=1 // pred_check_branch
      %14 = sbr.rel (0) target = $region5
    $region4: #{mlm_head.2} parent=1 // pred_region
      %s16 = ssub.s32 1536, 1536
      %17 = vsyncadd [#allocation3], %s16
      %s18 = sshll.u32 [#allocation2], 4
      %s19 = int_to_ptr.vmem [resolvable:$true] %s18
      %24 = dma.hbm_to_vmem [thread:$0]  %s0, 1536, %s19, [#allocation3], 768, 768, 48
    $region5: #{mlm_head.2} parent=1 // pred_fallthru
      _
    // Predicated region
    $region6: #{mlm_head.2} parent=1 // pred_check
      _
    $region7: #{mlm_head.2} parent=1 // pred_check_branch
      %26 = sbr.rel (0) target = $region9
    $region8: #{mlm_head.2} parent=1 // pred_region
      %s28 = ssub.s32 73728, 73728
      %29 = vsyncadd [#allocation5], %s28
      %s30 = sshll.u32 [#allocation4], 4
      %s31 = int_to_ptr.vmem [resolvable:$true] %s30
      %36 = dma.hbm_to_vmem [thread:$0]  %s1, 73728, %s31, [#allocation5], 768, 768, 48
    $region9: #{mlm_head.2} parent=1 // pred_fallthru
      _
    // Predicated region
    $region10: #{mlm_head.2} parent=1 // pred_check
      _
    $region11: #{mlm_head.2} parent=1 // pred_check_branch
      %38 = sbr.rel (0) target = $region13
    $region12: #{mlm_head.2} parent=1 // pred_region
      %s40 = ssub.s32 96, 96
      %41 = vsyncadd [#allocation5], %s40
      %s43 = sshll.u32 [#allocation6], 4
      %s44 = int_to_ptr.vmem [resolvable:$true] %s43
      %46 = dma.hbm_to_vmem [thread:$0]  %s2, 96, %s44, [#allocation5]
    $region13: #{mlm_head.2} parent=1 // pred_fallthru
      _
    // Predicated region
    $region14: #{mlm_head.2} parent=1 // pred_check
      _
    $region15: #{mlm_head.2} parent=1 // pred_check_branch
      %48 = sbr.rel (0) target = $region17
    $region16: #{mlm_head.2} parent=1 // pred_region
      %s50 = ssub.s32 96, 96
      %51 = vsyncadd [#allocation8], %s50
      %s53 = sshll.u32 [#allocation7], 4
      %s54 = int_to_ptr.vmem [resolvable:$true] %s53
      %56 = dma.hbm_to_vmem [thread:$0]  %s3, 96, %s54, [#allocation8]
    $region17: #{mlm_head.2} parent=1 // pred_fallthru
      _
    // Predicated region
    $region18: #{mlm_head.2} parent=1 // pred_check
      _
    $region19: #{mlm_head.2} parent=1 // pred_check_branch
      %58 = sbr.rel (0) target = $region21
    $region20: #{mlm_head.2} parent=1 // pred_region
      %s60 = ssub.s32 96, 96
      %61 = vsyncadd [#allocation8], %s60
      %s63 = sshll.u32 [#allocation9], 4
      %s64 = int_to_ptr.vmem [resolvable:$true] %s63
      %66 = dma.hbm_to_vmem [thread:$0]  %s4, 96, %s64, [#allocation8]
    $region21: #{mlm_head.2} parent=1 // pred_fallthru
      _
    // Predicated region
    $region22: #{mlm_head.2} parent=1 // pred_check
      _
    $region23: #{mlm_head.2} parent=1 // pred_check_branch
      %68 = sbr.rel (0) target = $region25
    $region24: #{mlm_head.2} parent=1 // pred_region
      %69 = dma.done [#allocation3], 1536
    $region25: #{mlm_head.2} parent=1 // pred_fallthru
      _
    // Predicated region
    $region26: #{mlm_head.2} parent=1 // pred_check
      _
    $region27: #{mlm_head.2} parent=1 // pred_check_branch
      %71 = sbr.rel (0) target = $region29
    $region28: #{mlm_head.2} parent=1 // pred_region
      %72 = dma.done [#allocation5], 73728
    $region29: #{mlm_head.2} parent=1 // pred_fallthru
      _
    // Predicated region
    $region30: #{mlm_head.2} parent=1 // pred_check
      _
    $region31: #{mlm_head.2} parent=1 // pred_check_branch
      %74 = sbr.rel (0) target = $region33
    $region32: #{mlm_head.2} parent=1 // pred_region
      %75 = dma.done [#allocation5], 96
    $region33: #{mlm_head.2} parent=1 // pred_fallthru
      _
    // Predicated region
    $region34: #{mlm_head.2} parent=1 // pred_check
      _
    $region35: #{mlm_head.2} parent=1 // pred_check_branch
      %77 = sbr.rel (0) target = $region37
    $region36: #{mlm_head.2} parent=1 // pred_region
      %78 = dma.done [#allocation8], 96
    $region37: #{mlm_head.2} parent=1 // pred_fallthru
      _
    // Predicated region
    $region38: #{mlm_head.2} parent=1 // pred_check
      _
    $region39: #{mlm_head.2} parent=1 // pred_check_branch
      %80 = sbr.rel (0) target = $region41
    $region40: #{mlm_head.2} parent=1 // pred_region
      %81 = dma.done [#allocation8], 96
    $region41: #{mlm_head.2} parent=1 // pred_fallthru
      _
    %v82 = vld [vmem:[#allocation2] sm:$0xff]
    %v83 = vld [vmem:[#allocation2 + $0x8] sm:$0xff]
    %v84 = vld [vmem:[#allocation2 + $0x10] sm:$0xff]
    %v85 = vld [vmem:[#allocation2 + $0x18] sm:$0xff]
    %v86 = vld [vmem:[#allocation2 + $0x20] sm:$0xff]
    %v87 = vld [vmem:[#allocation2 + $0x28] sm:$0xff]
    %v88 = vld [vmem:[#allocation2 + $0x30] sm:$0xff]
    %v89 = vld [vmem:[#allocation2 + $0x38] sm:$0xff]
    %v90 = vld [vmem:[#allocation2 + $0x40] sm:$0xff]
    %v91 = vld [vmem:[#allocation2 + $0x48] sm:$0xff]
    %v92 = vld [vmem:[#allocation2 + $0x50] sm:$0xff]
    %v93 = vld [vmem:[#allocation2 + $0x58] sm:$0xff]
    %v94 = vld [vmem:[#allocation4] sm:$0xff]
    %v95 = vld [vmem:[#allocation4 + $0x8] sm:$0xff]
    %v96 = vld [vmem:[#allocation4 + $0x10] sm:$0xff]
    %v97 = vld [vmem:[#allocation4 + $0x18] sm:$0xff]
    %v98 = vld [vmem:[#allocation4 + $0x20] sm:$0xff]
    %v99 = vld [vmem:[#allocation4 + $0x28] sm:$0xff]
    %v100 = vld [vmem:[#allocation4 + $0x30] sm:$0xff]
    %v101 = vld [vmem:[#allocation4 + $0x38] sm:$0xff]
    %v102 = vld [vmem:[#allocation4 + $0x40] sm:$0xff]
    %v103 = vld [vmem:[#allocation4 + $0x48] sm:$0xff]
    %v104 = vld [vmem:[#allocation4 + $0x50] sm:$0xff]
    %v105 = vld [vmem:[#allocation4 + $0x58] sm:$0xff]
    %v106 = vld [vmem:[#allocation4 + $0x60] sm:$0xff]
    %v107 = vld [vmem:[#allocation4 + $0x68] sm:$0xff]
    %v108 = vld [vmem:[#allocation4 + $0x70] sm:$0xff]
    %v109 = vld [vmem:[#allocation4 + $0x78] sm:$0xff]
    %v110 = vld [vmem:[#allocation4 + $0x80] sm:$0xff]
    %v111 = vld [vmem:[#allocation4 + $0x88] sm:$0xff]
    %v112 = vld [vmem:[#allocation4 + $0x90] sm:$0xff]
    %v113 = vld [vmem:[#allocation4 + $0x98] sm:$0xff]
    %v114 = vld [vmem:[#allocation4 + $0xa0] sm:$0xff]
    %v115 = vld [vmem:[#allocation4 + $0xa8] sm:$0xff]
    %v116 = vld [vmem:[#allocation4 + $0xb0] sm:$0xff]
    %v117 = vld [vmem:[#allocation4 + $0xb8] sm:$0xff]
    %v118 = vld [vmem:[#allocation4 + $0xc0] sm:$0xff]
    %v119 = vld [vmem:[#allocation4 + $0xc8] sm:$0xff]
    %v120 = vld [vmem:[#allocation4 + $0xd0] sm:$0xff]
    %v121 = vld [vmem:[#allocation4 + $0xd8] sm:$0xff]
    %v122 = vld [vmem:[#allocation4 + $0xe0] sm:$0xff]
    %v123 = vld [vmem:[#allocation4 + $0xe8] sm:$0xff]
    %v124 = vld [vmem:[#allocation4 + $0xf0] sm:$0xff]
    %v125 = vld [vmem:[#allocation4 + $0xf8] sm:$0xff]
    %v126 = vld [vmem:[#allocation4 + $0x100] sm:$0xff]
    %v127 = vld [vmem:[#allocation4 + $0x108] sm:$0xff]
    %v128 = vld [vmem:[#allocation4 + $0x110] sm:$0xff]
    %v129 = vld [vmem:[#allocation4 + $0x118] sm:$0xff]
    %v130 = vld [vmem:[#allocation4 + $0x120] sm:$0xff]
    %v131 = vld [vmem:[#allocation4 + $0x128] sm:$0xff]
    %v132 = vld [vmem:[#allocation4 + $0x130] sm:$0xff]
    %v133 = vld [vmem:[#allocation4 + $0x138] sm:$0xff]
    %v134 = vld [vmem:[#allocation4 + $0x140] sm:$0xff]
    %v135 = vld [vmem:[#allocation4 + $0x148] sm:$0xff]
    %v136 = vld [vmem:[#allocation4 + $0x150] sm:$0xff]
    %v137 = vld [vmem:[#allocation4 + $0x158] sm:$0xff]
    %v138 = vld [vmem:[#allocation4 + $0x160] sm:$0xff]
    %v139 = vld [vmem:[#allocation4 + $0x168] sm:$0xff]
    %v140 = vld [vmem:[#allocation4 + $0x170] sm:$0xff]
    %v141 = vld [vmem:[#allocation4 + $0x178] sm:$0xff]
    %v142 = vld [vmem:[#allocation4 + $0x180] sm:$0xff]
    %v143 = vld [vmem:[#allocation4 + $0x188] sm:$0xff]
    %v144 = vld [vmem:[#allocation4 + $0x190] sm:$0xff]
    %v145 = vld [vmem:[#allocation4 + $0x198] sm:$0xff]
    %v146 = vld [vmem:[#allocation4 + $0x1a0] sm:$0xff]
    %v147 = vld [vmem:[#allocation4 + $0x1a8] sm:$0xff]
    %v148 = vld [vmem:[#allocation4 + $0x1b0] sm:$0xff]
    %v149 = vld [vmem:[#allocation4 + $0x1b8] sm:$0xff]
    %v150 = vld [vmem:[#allocation4 + $0x1c0] sm:$0xff]
    %v151 = vld [vmem:[#allocation4 + $0x1c8] sm:$0xff]
    %v152 = vld [vmem:[#allocation4 + $0x1d0] sm:$0xff]
    %v153 = vld [vmem:[#allocation4 + $0x1d8] sm:$0xff]
    %v154 = vld [vmem:[#allocation4 + $0x1e0] sm:$0xff]
    %v155 = vld [vmem:[#allocation4 + $0x1e8] sm:$0xff]
    %v156 = vld [vmem:[#allocation4 + $0x1f0] sm:$0xff]
    %v157 = vld [vmem:[#allocation4 + $0x1f8] sm:$0xff]
    %v158 = vld [vmem:[#allocation4 + $0x200] sm:$0xff]
    %v159 = vld [vmem:[#allocation4 + $0x208] sm:$0xff]
    %v160 = vld [vmem:[#allocation4 + $0x210] sm:$0xff]
    %v161 = vld [vmem:[#allocation4 + $0x218] sm:$0xff]
    %v162 = vld [vmem:[#allocation4 + $0x220] sm:$0xff]
    %v163 = vld [vmem:[#allocation4 + $0x228] sm:$0xff]
    %v164 = vld [vmem:[#allocation4 + $0x230] sm:$0xff]
    %v165 = vld [vmem:[#allocation4 + $0x238] sm:$0xff]
    %v166 = vld [vmem:[#allocation4 + $0x240] sm:$0xff]
    %v167 = vld [vmem:[#allocation4 + $0x248] sm:$0xff]
    %v168 = vld [vmem:[#allocation4 + $0x250] sm:$0xff]
    %v169 = vld [vmem:[#allocation4 + $0x258] sm:$0xff]
    %v170 = vld [vmem:[#allocation4 + $0x260] sm:$0xff]
    %v171 = vld [vmem:[#allocation4 + $0x268] sm:$0xff]
    %v172 = vld [vmem:[#allocation4 + $0x270] sm:$0xff]
    %v173 = vld [vmem:[#allocation4 + $0x278] sm:$0xff]
    %v174 = vld [vmem:[#allocation4 + $0x280] sm:$0xff]
    %v175 = vld [vmem:[#allocation4 + $0x288] sm:$0xff]
    %v176 = vld [vmem:[#allocation4 + $0x290] sm:$0xff]
    %v177 = vld [vmem:[#allocation4 + $0x298] sm:$0xff]
    %v178 = vld [vmem:[#allocation4 + $0x2a0] sm:$0xff]
    %v179 = vld [vmem:[#allocation4 + $0x2a8] sm:$0xff]
    %v180 = vld [vmem:[#allocation4 + $0x2b0] sm:$0xff]
    %v181 = vld [vmem:[#allocation4 + $0x2b8] sm:$0xff]
    %v182 = vld [vmem:[#allocation4 + $0x2c0] sm:$0xff]
    %v183 = vld [vmem:[#allocation4 + $0x2c8] sm:$0xff]
    %v184 = vld [vmem:[#allocation4 + $0x2d0] sm:$0xff]
    %v185 = vld [vmem:[#allocation4 + $0x2d8] sm:$0xff]
    %v186 = vld [vmem:[#allocation4 + $0x2e0] sm:$0xff]
    %v187 = vld [vmem:[#allocation4 + $0x2e8] sm:$0xff]
    %v188 = vld [vmem:[#allocation4 + $0x2f0] sm:$0xff]
    %v189 = vld [vmem:[#allocation4 + $0x2f8] sm:$0xff]
    %v190 = vld [vmem:[#allocation4 + $0x300] sm:$0xff]
    %v191 = vld [vmem:[#allocation4 + $0x308] sm:$0xff]
    %v192 = vld [vmem:[#allocation4 + $0x310] sm:$0xff]
    %v193 = vld [vmem:[#allocation4 + $0x318] sm:$0xff]
    %v194 = vld [vmem:[#allocation4 + $0x320] sm:$0xff]
    %v195 = vld [vmem:[#allocation4 + $0x328] sm:$0xff]
    %v196 = vld [vmem:[#allocation4 + $0x330] sm:$0xff]
    %v197 = vld [vmem:[#allocation4 + $0x338] sm:$0xff]
    %v198 = vld [vmem:[#allocation4 + $0x340] sm:$0xff]
    %v199 = vld [vmem:[#allocation4 + $0x348] sm:$0xff]
    %v200 = vld [vmem:[#allocation4 + $0x350] sm:$0xff]
    %v201 = vld [vmem:[#allocation4 + $0x358] sm:$0xff]
    %v202 = vld [vmem:[#allocation4 + $0x360] sm:$0xff]
    %v203 = vld [vmem:[#allocation4 + $0x368] sm:$0xff]
    %v204 = vld [vmem:[#allocation4 + $0x370] sm:$0xff]
    %v205 = vld [vmem:[#allocation4 + $0x378] sm:$0xff]
    %v206 = vld [vmem:[#allocation4 + $0x380] sm:$0xff]
    %v207 = vld [vmem:[#allocation4 + $0x388] sm:$0xff]
    %v208 = vld [vmem:[#allocation4 + $0x390] sm:$0xff]
    %v209 = vld [vmem:[#allocation4 + $0x398] sm:$0xff]
    %v210 = vld [vmem:[#allocation4 + $0x3a0] sm:$0xff]
    %v211 = vld [vmem:[#allocation4 + $0x3a8] sm:$0xff]
    %v212 = vld [vmem:[#allocation4 + $0x3b0] sm:$0xff]
    %v213 = vld [vmem:[#allocation4 + $0x3b8] sm:$0xff]
    %v214 = vld [vmem:[#allocation4 + $0x3c0] sm:$0xff]
    %v215 = vld [vmem:[#allocation4 + $0x3c8] sm:$0xff]
    %v216 = vld [vmem:[#allocation4 + $0x3d0] sm:$0xff]
    %v217 = vld [vmem:[#allocation4 + $0x3d8] sm:$0xff]
    %v218 = vld [vmem:[#allocation4 + $0x3e0] sm:$0xff]
    %v219 = vld [vmem:[#allocation4 + $0x3e8] sm:$0xff]
    %v220 = vld [vmem:[#allocation4 + $0x3f0] sm:$0xff]
    %v221 = vld [vmem:[#allocation4 + $0x3f8] sm:$0xff]
    %v222 = vld [vmem:[#allocation4 + $0x400] sm:$0xff]
    %v223 = vld [vmem:[#allocation4 + $0x408] sm:$0xff]
    %v224 = vld [vmem:[#allocation4 + $0x410] sm:$0xff]
    %v225 = vld [vmem:[#allocation4 + $0x418] sm:$0xff]
    %v226 = vld [vmem:[#allocation4 + $0x420] sm:$0xff]
    %v227 = vld [vmem:[#allocation4 + $0x428] sm:$0xff]
    %v228 = vld [vmem:[#allocation4 + $0x430] sm:$0xff]
    %v229 = vld [vmem:[#allocation4 + $0x438] sm:$0xff]
    %v230 = vld [vmem:[#allocation4 + $0x440] sm:$0xff]
    %v231 = vld [vmem:[#allocation4 + $0x448] sm:$0xff]
    %v232 = vld [vmem:[#allocation4 + $0x450] sm:$0xff]
    %v233 = vld [vmem:[#allocation4 + $0x458] sm:$0xff]
    %v234 = vld [vmem:[#allocation4 + $0x460] sm:$0xff]
    %v235 = vld [vmem:[#allocation4 + $0x468] sm:$0xff]
    %v236 = vld [vmem:[#allocation4 + $0x470] sm:$0xff]
    %v237 = vld [vmem:[#allocation4 + $0x478] sm:$0xff]
    %v238 = vld [vmem:[#allocation4 + $0x480] sm:$0xff]
    %v239 = vld [vmem:[#allocation4 + $0x488] sm:$0xff]
    %v240 = vld [vmem:[#allocation4 + $0x490] sm:$0xff]
    %v241 = vld [vmem:[#allocation4 + $0x498] sm:$0xff]
    %v242 = vld [vmem:[#allocation4 + $0x4a0] sm:$0xff]
    %v243 = vld [vmem:[#allocation4 + $0x4a8] sm:$0xff]
    %v244 = vld [vmem:[#allocation4 + $0x4b0] sm:$0xff]
    %v245 = vld [vmem:[#allocation4 + $0x4b8] sm:$0xff]
    %v246 = vld [vmem:[#allocation4 + $0x4c0] sm:$0xff]
    %v247 = vld [vmem:[#allocation4 + $0x4c8] sm:$0xff]
    %v248 = vld [vmem:[#allocation4 + $0x4d0] sm:$0xff]
    %v249 = vld [vmem:[#allocation4 + $0x4d8] sm:$0xff]
    %v250 = vld [vmem:[#allocation4 + $0x4e0] sm:$0xff]
    %v251 = vld [vmem:[#allocation4 + $0x4e8] sm:$0xff]
    %v252 = vld [vmem:[#allocation4 + $0x4f0] sm:$0xff]
    %v253 = vld [vmem:[#allocation4 + $0x4f8] sm:$0xff]
    %v254 = vld [vmem:[#allocation4 + $0x500] sm:$0xff]
    %v255 = vld [vmem:[#allocation4 + $0x508] sm:$0xff]
    %v256 = vld [vmem:[#allocation4 + $0x510] sm:$0xff]
    %v257 = vld [vmem:[#allocation4 + $0x518] sm:$0xff]
    %v258 = vld [vmem:[#allocation4 + $0x520] sm:$0xff]
    %v259 = vld [vmem:[#allocation4 + $0x528] sm:$0xff]
    %v260 = vld [vmem:[#allocation4 + $0x530] sm:$0xff]
    %v261 = vld [vmem:[#allocation4 + $0x538] sm:$0xff]
    %v262 = vld [vmem:[#allocation4 + $0x540] sm:$0xff]
    %v263 = vld [vmem:[#allocation4 + $0x548] sm:$0xff]
    %v264 = vld [vmem:[#allocation4 + $0x550] sm:$0xff]
    %v265 = vld [vmem:[#allocation4 + $0x558] sm:$0xff]
    %v266 = vld [vmem:[#allocation4 + $0x560] sm:$0xff]
    %v267 = vld [vmem:[#allocation4 + $0x568] sm:$0xff]
    %v268 = vld [vmem:[#allocation4 + $0x570] sm:$0xff]
    %v269 = vld [vmem:[#allocation4 + $0x578] sm:$0xff]
    %v270 = vld [vmem:[#allocation4 + $0x580] sm:$0xff]
    %v271 = vld [vmem:[#allocation4 + $0x588] sm:$0xff]
    %v272 = vld [vmem:[#allocation4 + $0x590] sm:$0xff]
    %v273 = vld [vmem:[#allocation4 + $0x598] sm:$0xff]
    %v274 = vld [vmem:[#allocation4 + $0x5a0] sm:$0xff]
    %v275 = vld [vmem:[#allocation4 + $0x5a8] sm:$0xff]
    %v276 = vld [vmem:[#allocation4 + $0x5b0] sm:$0xff]
    %v277 = vld [vmem:[#allocation4 + $0x5b8] sm:$0xff]
    %v278 = vld [vmem:[#allocation4 + $0x5c0] sm:$0xff]
    %v279 = vld [vmem:[#allocation4 + $0x5c8] sm:$0xff]
    %v280 = vld [vmem:[#allocation4 + $0x5d0] sm:$0xff]
    %v281 = vld [vmem:[#allocation4 + $0x5d8] sm:$0xff]
    %v282 = vld [vmem:[#allocation4 + $0x5e0] sm:$0xff]
    %v283 = vld [vmem:[#allocation4 + $0x5e8] sm:$0xff]
    %v284 = vld [vmem:[#allocation4 + $0x5f0] sm:$0xff]
    %v285 = vld [vmem:[#allocation4 + $0x5f8] sm:$0xff]
    %v286 = vld [vmem:[#allocation4 + $0x600] sm:$0xff]
    %v287 = vld [vmem:[#allocation4 + $0x608] sm:$0xff]
    %v288 = vld [vmem:[#allocation4 + $0x610] sm:$0xff]
    %v289 = vld [vmem:[#allocation4 + $0x618] sm:$0xff]
    %v290 = vld [vmem:[#allocation4 + $0x620] sm:$0xff]
    %v291 = vld [vmem:[#allocation4 + $0x628] sm:$0xff]
    %v292 = vld [vmem:[#allocation4 + $0x630] sm:$0xff]
    %v293 = vld [vmem:[#allocation4 + $0x638] sm:$0xff]
    %v294 = vld [vmem:[#allocation4 + $0x640] sm:$0xff]
    %v295 = vld [vmem:[#allocation4 + $0x648] sm:$0xff]
    %v296 = vld [vmem:[#allocation4 + $0x650] sm:$0xff]
    %v297 = vld [vmem:[#allocation4 + $0x658] sm:$0xff]
    %v298 = vld [vmem:[#allocation4 + $0x660] sm:$0xff]
    %v299 = vld [vmem:[#allocation4 + $0x668] sm:$0xff]
    %v300 = vld [vmem:[#allocation4 + $0x670] sm:$0xff]
    %v301 = vld [vmem:[#allocation4 + $0x678] sm:$0xff]
    %v302 = vld [vmem:[#allocation4 + $0x680] sm:$0xff]
    %v303 = vld [vmem:[#allocation4 + $0x688] sm:$0xff]
    %v304 = vld [vmem:[#allocation4 + $0x690] sm:$0xff]
    %v305 = vld [vmem:[#allocation4 + $0x698] sm:$0xff]
    %v306 = vld [vmem:[#allocation4 + $0x6a0] sm:$0xff]
    %v307 = vld [vmem:[#allocation4 + $0x6a8] sm:$0xff]
    %v308 = vld [vmem:[#allocation4 + $0x6b0] sm:$0xff]
    %v309 = vld [vmem:[#allocation4 + $0x6b8] sm:$0xff]
    %v310 = vld [vmem:[#allocation4 + $0x6c0] sm:$0xff]
    %v311 = vld [vmem:[#allocation4 + $0x6c8] sm:$0xff]
    %v312 = vld [vmem:[#allocation4 + $0x6d0] sm:$0xff]
    %v313 = vld [vmem:[#allocation4 + $0x6d8] sm:$0xff]
    %v314 = vld [vmem:[#allocation4 + $0x6e0] sm:$0xff]
    %v315 = vld [vmem:[#allocation4 + $0x6e8] sm:$0xff]
    %v316 = vld [vmem:[#allocation4 + $0x6f0] sm:$0xff]
    %v317 = vld [vmem:[#allocation4 + $0x6f8] sm:$0xff]
    %v318 = vld [vmem:[#allocation4 + $0x700] sm:$0xff]
    %v319 = vld [vmem:[#allocation4 + $0x708] sm:$0xff]
    %v320 = vld [vmem:[#allocation4 + $0x710] sm:$0xff]
    %v321 = vld [vmem:[#allocation4 + $0x718] sm:$0xff]
    %v322 = vld [vmem:[#allocation4 + $0x720] sm:$0xff]
    %v323 = vld [vmem:[#allocation4 + $0x728] sm:$0xff]
    %v324 = vld [vmem:[#allocation4 + $0x730] sm:$0xff]
    %v325 = vld [vmem:[#allocation4 + $0x738] sm:$0xff]
    %v326 = vld [vmem:[#allocation4 + $0x740] sm:$0xff]
    %v327 = vld [vmem:[#allocation4 + $0x748] sm:$0xff]
    %v328 = vld [vmem:[#allocation4 + $0x750] sm:$0xff]
    %v329 = vld [vmem:[#allocation4 + $0x758] sm:$0xff]
    %v330 = vld [vmem:[#allocation4 + $0x760] sm:$0xff]
    %v331 = vld [vmem:[#allocation4 + $0x768] sm:$0xff]
    %v332 = vld [vmem:[#allocation4 + $0x770] sm:$0xff]
    %v333 = vld [vmem:[#allocation4 + $0x778] sm:$0xff]
    %v334 = vld [vmem:[#allocation4 + $0x780] sm:$0xff]
    %v335 = vld [vmem:[#allocation4 + $0x788] sm:$0xff]
    %v336 = vld [vmem:[#allocation4 + $0x790] sm:$0xff]
    %v337 = vld [vmem:[#allocation4 + $0x798] sm:$0xff]
    %v338 = vld [vmem:[#allocation4 + $0x7a0] sm:$0xff]
    %v339 = vld [vmem:[#allocation4 + $0x7a8] sm:$0xff]
    %v340 = vld [vmem:[#allocation4 + $0x7b0] sm:$0xff]
    %v341 = vld [vmem:[#allocation4 + $0x7b8] sm:$0xff]
    %v342 = vld [vmem:[#allocation4 + $0x7c0] sm:$0xff]
    %v343 = vld [vmem:[#allocation4 + $0x7c8] sm:$0xff]
    %v344 = vld [vmem:[#allocation4 + $0x7d0] sm:$0xff]
    %v345 = vld [vmem:[#allocation4 + $0x7d8] sm:$0xff]
    %v346 = vld [vmem:[#allocation4 + $0x7e0] sm:$0xff]
    %v347 = vld [vmem:[#allocation4 + $0x7e8] sm:$0xff]
    %v348 = vld [vmem:[#allocation4 + $0x7f0] sm:$0xff]
    %v349 = vld [vmem:[#allocation4 + $0x7f8] sm:$0xff]
    %v350 = vld [vmem:[#allocation4 + $0x800] sm:$0xff]
    %v351 = vld [vmem:[#allocation4 + $0x808] sm:$0xff]
    %v352 = vld [vmem:[#allocation4 + $0x810] sm:$0xff]
    %v353 = vld [vmem:[#allocation4 + $0x818] sm:$0xff]
    %v354 = vld [vmem:[#allocation4 + $0x820] sm:$0xff]
    %v355 = vld [vmem:[#allocation4 + $0x828] sm:$0xff]
    %v356 = vld [vmem:[#allocation4 + $0x830] sm:$0xff]
    %v357 = vld [vmem:[#allocation4 + $0x838] sm:$0xff]
    %v358 = vld [vmem:[#allocation4 + $0x840] sm:$0xff]
    %v359 = vld [vmem:[#allocation4 + $0x848] sm:$0xff]
    %v360 = vld [vmem:[#allocation4 + $0x850] sm:$0xff]
    %v361 = vld [vmem:[#allocation4 + $0x858] sm:$0xff]
    %v362 = vld [vmem:[#allocation4 + $0x860] sm:$0xff]
    %v363 = vld [vmem:[#allocation4 + $0x868] sm:$0xff]
    %v364 = vld [vmem:[#allocation4 + $0x870] sm:$0xff]
    %v365 = vld [vmem:[#allocation4 + $0x878] sm:$0xff]
    %v366 = vld [vmem:[#allocation4 + $0x880] sm:$0xff]
    %v367 = vld [vmem:[#allocation4 + $0x888] sm:$0xff]
    %v368 = vld [vmem:[#allocation4 + $0x890] sm:$0xff]
    %v369 = vld [vmem:[#allocation4 + $0x898] sm:$0xff]
    %v370 = vld [vmem:[#allocation4 + $0x8a0] sm:$0xff]
    %v371 = vld [vmem:[#allocation4 + $0x8a8] sm:$0xff]
    %v372 = vld [vmem:[#allocation4 + $0x8b0] sm:$0xff]
    %v373 = vld [vmem:[#allocation4 + $0x8b8] sm:$0xff]
    %v374 = vld [vmem:[#allocation4 + $0x8c0] sm:$0xff]
    %v375 = vld [vmem:[#allocation4 + $0x8c8] sm:$0xff]
    %v376 = vld [vmem:[#allocation4 + $0x8d0] sm:$0xff]
    %v377 = vld [vmem:[#allocation4 + $0x8d8] sm:$0xff]
    %v378 = vld [vmem:[#allocation4 + $0x8e0] sm:$0xff]
    %v379 = vld [vmem:[#allocation4 + $0x8e8] sm:$0xff]
    %v380 = vld [vmem:[#allocation4 + $0x8f0] sm:$0xff]
    %v381 = vld [vmem:[#allocation4 + $0x8f8] sm:$0xff]
    %v382 = vld [vmem:[#allocation4 + $0x900] sm:$0xff]
    %v383 = vld [vmem:[#allocation4 + $0x908] sm:$0xff]
    %v384 = vld [vmem:[#allocation4 + $0x910] sm:$0xff]
    %v385 = vld [vmem:[#allocation4 + $0x918] sm:$0xff]
    %v386 = vld [vmem:[#allocation4 + $0x920] sm:$0xff]
    %v387 = vld [vmem:[#allocation4 + $0x928] sm:$0xff]
    %v388 = vld [vmem:[#allocation4 + $0x930] sm:$0xff]
    %v389 = vld [vmem:[#allocation4 + $0x938] sm:$0xff]
    %v390 = vld [vmem:[#allocation4 + $0x940] sm:$0xff]
    %v391 = vld [vmem:[#allocation4 + $0x948] sm:$0xff]
    %v392 = vld [vmem:[#allocation4 + $0x950] sm:$0xff]
    %v393 = vld [vmem:[#allocation4 + $0x958] sm:$0xff]
    %v394 = vld [vmem:[#allocation4 + $0x960] sm:$0xff]
    %v395 = vld [vmem:[#allocation4 + $0x968] sm:$0xff]
    %v396 = vld [vmem:[#allocation4 + $0x970] sm:$0xff]
    %v397 = vld [vmem:[#allocation4 + $0x978] sm:$0xff]
    %v398 = vld [vmem:[#allocation4 + $0x980] sm:$0xff]
    %v399 = vld [vmem:[#allocation4 + $0x988] sm:$0xff]
    %v400 = vld [vmem:[#allocation4 + $0x990] sm:$0xff]
    %v401 = vld [vmem:[#allocation4 + $0x998] sm:$0xff]
    %v402 = vld [vmem:[#allocation4 + $0x9a0] sm:$0xff]
    %v403 = vld [vmem:[#allocation4 + $0x9a8] sm:$0xff]
    %v404 = vld [vmem:[#allocation4 + $0x9b0] sm:$0xff]
    %v405 = vld [vmem:[#allocation4 + $0x9b8] sm:$0xff]
    %v406 = vld [vmem:[#allocation4 + $0x9c0] sm:$0xff]
    %v407 = vld [vmem:[#allocation4 + $0x9c8] sm:$0xff]
    %v408 = vld [vmem:[#allocation4 + $0x9d0] sm:$0xff]
    %v409 = vld [vmem:[#allocation4 + $0x9d8] sm:$0xff]
    %v410 = vld [vmem:[#allocation4 + $0x9e0] sm:$0xff]
    %v411 = vld [vmem:[#allocation4 + $0x9e8] sm:$0xff]
    %v412 = vld [vmem:[#allocation4 + $0x9f0] sm:$0xff]
    %v413 = vld [vmem:[#allocation4 + $0x9f8] sm:$0xff]
    %v414 = vld [vmem:[#allocation4 + $0xa00] sm:$0xff]
    %v415 = vld [vmem:[#allocation4 + $0xa08] sm:$0xff]
    %v416 = vld [vmem:[#allocation4 + $0xa10] sm:$0xff]
    %v417 = vld [vmem:[#allocation4 + $0xa18] sm:$0xff]
    %v418 = vld [vmem:[#allocation4 + $0xa20] sm:$0xff]
    %v419 = vld [vmem:[#allocation4 + $0xa28] sm:$0xff]
    %v420 = vld [vmem:[#allocation4 + $0xa30] sm:$0xff]
    %v421 = vld [vmem:[#allocation4 + $0xa38] sm:$0xff]
    %v422 = vld [vmem:[#allocation4 + $0xa40] sm:$0xff]
    %v423 = vld [vmem:[#allocation4 + $0xa48] sm:$0xff]
    %v424 = vld [vmem:[#allocation4 + $0xa50] sm:$0xff]
    %v425 = vld [vmem:[#allocation4 + $0xa58] sm:$0xff]
    %v426 = vld [vmem:[#allocation4 + $0xa60] sm:$0xff]
    %v427 = vld [vmem:[#allocation4 + $0xa68] sm:$0xff]
    %v428 = vld [vmem:[#allocation4 + $0xa70] sm:$0xff]
    %v429 = vld [vmem:[#allocation4 + $0xa78] sm:$0xff]
    %v430 = vld [vmem:[#allocation4 + $0xa80] sm:$0xff]
    %v431 = vld [vmem:[#allocation4 + $0xa88] sm:$0xff]
    %v432 = vld [vmem:[#allocation4 + $0xa90] sm:$0xff]
    %v433 = vld [vmem:[#allocation4 + $0xa98] sm:$0xff]
    %v434 = vld [vmem:[#allocation4 + $0xaa0] sm:$0xff]
    %v435 = vld [vmem:[#allocation4 + $0xaa8] sm:$0xff]
    %v436 = vld [vmem:[#allocation4 + $0xab0] sm:$0xff]
    %v437 = vld [vmem:[#allocation4 + $0xab8] sm:$0xff]
    %v438 = vld [vmem:[#allocation4 + $0xac0] sm:$0xff]
    %v439 = vld [vmem:[#allocation4 + $0xac8] sm:$0xff]
    %v440 = vld [vmem:[#allocation4 + $0xad0] sm:$0xff]
    %v441 = vld [vmem:[#allocation4 + $0xad8] sm:$0xff]
    %v442 = vld [vmem:[#allocation4 + $0xae0] sm:$0xff]
    %v443 = vld [vmem:[#allocation4 + $0xae8] sm:$0xff]
    %v444 = vld [vmem:[#allocation4 + $0xaf0] sm:$0xff]
    %v445 = vld [vmem:[#allocation4 + $0xaf8] sm:$0xff]
    %v446 = vld [vmem:[#allocation4 + $0xb00] sm:$0xff]
    %v447 = vld [vmem:[#allocation4 + $0xb08] sm:$0xff]
    %v448 = vld [vmem:[#allocation4 + $0xb10] sm:$0xff]
    %v449 = vld [vmem:[#allocation4 + $0xb18] sm:$0xff]
    %v450 = vld [vmem:[#allocation4 + $0xb20] sm:$0xff]
    %v451 = vld [vmem:[#allocation4 + $0xb28] sm:$0xff]
    %v452 = vld [vmem:[#allocation4 + $0xb30] sm:$0xff]
    %v453 = vld [vmem:[#allocation4 + $0xb38] sm:$0xff]
    %v454 = vld [vmem:[#allocation4 + $0xb40] sm:$0xff]
    %v455 = vld [vmem:[#allocation4 + $0xb48] sm:$0xff]
    %v456 = vld [vmem:[#allocation4 + $0xb50] sm:$0xff]
    %v457 = vld [vmem:[#allocation4 + $0xb58] sm:$0xff]
    %v458 = vld [vmem:[#allocation4 + $0xb60] sm:$0xff]
    %v459 = vld [vmem:[#allocation4 + $0xb68] sm:$0xff]
    %v460 = vld [vmem:[#allocation4 + $0xb70] sm:$0xff]
    %v461 = vld [vmem:[#allocation4 + $0xb78] sm:$0xff]
    %v462 = vld [vmem:[#allocation4 + $0xb80] sm:$0xff]
    %v463 = vld [vmem:[#allocation4 + $0xb88] sm:$0xff]
    %v464 = vld [vmem:[#allocation4 + $0xb90] sm:$0xff]
    %v465 = vld [vmem:[#allocation4 + $0xb98] sm:$0xff]
    %v466 = vld [vmem:[#allocation4 + $0xba0] sm:$0xff]
    %v467 = vld [vmem:[#allocation4 + $0xba8] sm:$0xff]
    %v468 = vld [vmem:[#allocation4 + $0xbb0] sm:$0xff]
    %v469 = vld [vmem:[#allocation4 + $0xbb8] sm:$0xff]
    %v470 = vld [vmem:[#allocation4 + $0xbc0] sm:$0xff]
    %v471 = vld [vmem:[#allocation4 + $0xbc8] sm:$0xff]
    %v472 = vld [vmem:[#allocation4 + $0xbd0] sm:$0xff]
    %v473 = vld [vmem:[#allocation4 + $0xbd8] sm:$0xff]
    %v474 = vld [vmem:[#allocation4 + $0xbe0] sm:$0xff]
    %v475 = vld [vmem:[#allocation4 + $0xbe8] sm:$0xff]
    %v476 = vld [vmem:[#allocation4 + $0xbf0] sm:$0xff]
    %v477 = vld [vmem:[#allocation4 + $0xbf8] sm:$0xff]
    %v478 = vld [vmem:[#allocation4 + $0xc00] sm:$0xff]
    %v479 = vld [vmem:[#allocation4 + $0xc08] sm:$0xff]
    %v480 = vld [vmem:[#allocation4 + $0xc10] sm:$0xff]
    %v481 = vld [vmem:[#allocation4 + $0xc18] sm:$0xff]
    %v482 = vld [vmem:[#allocation4 + $0xc20] sm:$0xff]
    %v483 = vld [vmem:[#allocation4 + $0xc28] sm:$0xff]
    %v484 = vld [vmem:[#allocation4 + $0xc30] sm:$0xff]
    %v485 = vld [vmem:[#allocation4 + $0xc38] sm:$0xff]
    %v486 = vld [vmem:[#allocation4 + $0xc40] sm:$0xff]
    %v487 = vld [vmem:[#allocation4 + $0xc48] sm:$0xff]
    %v488 = vld [vmem:[#allocation4 + $0xc50] sm:$0xff]
    %v489 = vld [vmem:[#allocation4 + $0xc58] sm:$0xff]
    %v490 = vld [vmem:[#allocation4 + $0xc60] sm:$0xff]
    %v491 = vld [vmem:[#allocation4 + $0xc68] sm:$0xff]
    %v492 = vld [vmem:[#allocation4 + $0xc70] sm:$0xff]
    %v493 = vld [vmem:[#allocation4 + $0xc78] sm:$0xff]
    %v494 = vld [vmem:[#allocation4 + $0xc80] sm:$0xff]
    %v495 = vld [vmem:[#allocation4 + $0xc88] sm:$0xff]
    %v496 = vld [vmem:[#allocation4 + $0xc90] sm:$0xff]
    %v497 = vld [vmem:[#allocation4 + $0xc98] sm:$0xff]
    %v498 = vld [vmem:[#allocation4 + $0xca0] sm:$0xff]
    %v499 = vld [vmem:[#allocation4 + $0xca8] sm:$0xff]
    %v500 = vld [vmem:[#allocation4 + $0xcb0] sm:$0xff]
    %v501 = vld [vmem:[#allocation4 + $0xcb8] sm:$0xff]
    %v502 = vld [vmem:[#allocation4 + $0xcc0] sm:$0xff]
    %v503 = vld [vmem:[#allocation4 + $0xcc8] sm:$0xff]
    %v504 = vld [vmem:[#allocation4 + $0xcd0] sm:$0xff]
    %v505 = vld [vmem:[#allocation4 + $0xcd8] sm:$0xff]
    %v506 = vld [vmem:[#allocation4 + $0xce0] sm:$0xff]
    %v507 = vld [vmem:[#allocation4 + $0xce8] sm:$0xff]
    %v508 = vld [vmem:[#allocation4 + $0xcf0] sm:$0xff]
    %v509 = vld [vmem:[#allocation4 + $0xcf8] sm:$0xff]
    %v510 = vld [vmem:[#allocation4 + $0xd00] sm:$0xff]
    %v511 = vld [vmem:[#allocation4 + $0xd08] sm:$0xff]
    %v512 = vld [vmem:[#allocation4 + $0xd10] sm:$0xff]
    %v513 = vld [vmem:[#allocation4 + $0xd18] sm:$0xff]
    %v514 = vld [vmem:[#allocation4 + $0xd20] sm:$0xff]
    %v515 = vld [vmem:[#allocation4 + $0xd28] sm:$0xff]
    %v516 = vld [vmem:[#allocation4 + $0xd30] sm:$0xff]
    %v517 = vld [vmem:[#allocation4 + $0xd38] sm:$0xff]
    %v518 = vld [vmem:[#allocation4 + $0xd40] sm:$0xff]
    %v519 = vld [vmem:[#allocation4 + $0xd48] sm:$0xff]
    %v520 = vld [vmem:[#allocation4 + $0xd50] sm:$0xff]
    %v521 = vld [vmem:[#allocation4 + $0xd58] sm:$0xff]
    %v522 = vld [vmem:[#allocation4 + $0xd60] sm:$0xff]
    %v523 = vld [vmem:[#allocation4 + $0xd68] sm:$0xff]
    %v524 = vld [vmem:[#allocation4 + $0xd70] sm:$0xff]
    %v525 = vld [vmem:[#allocation4 + $0xd78] sm:$0xff]
    %v526 = vld [vmem:[#allocation4 + $0xd80] sm:$0xff]
    %v527 = vld [vmem:[#allocation4 + $0xd88] sm:$0xff]
    %v528 = vld [vmem:[#allocation4 + $0xd90] sm:$0xff]
    %v529 = vld [vmem:[#allocation4 + $0xd98] sm:$0xff]
    %v530 = vld [vmem:[#allocation4 + $0xda0] sm:$0xff]
    %v531 = vld [vmem:[#allocation4 + $0xda8] sm:$0xff]
    %v532 = vld [vmem:[#allocation4 + $0xdb0] sm:$0xff]
    %v533 = vld [vmem:[#allocation4 + $0xdb8] sm:$0xff]
    %v534 = vld [vmem:[#allocation4 + $0xdc0] sm:$0xff]
    %v535 = vld [vmem:[#allocation4 + $0xdc8] sm:$0xff]
    %v536 = vld [vmem:[#allocation4 + $0xdd0] sm:$0xff]
    %v537 = vld [vmem:[#allocation4 + $0xdd8] sm:$0xff]
    %v538 = vld [vmem:[#allocation4 + $0xde0] sm:$0xff]
    %v539 = vld [vmem:[#allocation4 + $0xde8] sm:$0xff]
    %v540 = vld [vmem:[#allocation4 + $0xdf0] sm:$0xff]
    %v541 = vld [vmem:[#allocation4 + $0xdf8] sm:$0xff]
    %v542 = vld [vmem:[#allocation4 + $0xe00] sm:$0xff]
    %v543 = vld [vmem:[#allocation4 + $0xe08] sm:$0xff]
    %v544 = vld [vmem:[#allocation4 + $0xe10] sm:$0xff]
    %v545 = vld [vmem:[#allocation4 + $0xe18] sm:$0xff]
    %v546 = vld [vmem:[#allocation4 + $0xe20] sm:$0xff]
    %v547 = vld [vmem:[#allocation4 + $0xe28] sm:$0xff]
    %v548 = vld [vmem:[#allocation4 + $0xe30] sm:$0xff]
    %v549 = vld [vmem:[#allocation4 + $0xe38] sm:$0xff]
    %v550 = vld [vmem:[#allocation4 + $0xe40] sm:$0xff]
    %v551 = vld [vmem:[#allocation4 + $0xe48] sm:$0xff]
    %v552 = vld [vmem:[#allocation4 + $0xe50] sm:$0xff]
    %v553 = vld [vmem:[#allocation4 + $0xe58] sm:$0xff]
    %v554 = vld [vmem:[#allocation4 + $0xe60] sm:$0xff]
    %v555 = vld [vmem:[#allocation4 + $0xe68] sm:$0xff]
    %v556 = vld [vmem:[#allocation4 + $0xe70] sm:$0xff]
    %v557 = vld [vmem:[#allocation4 + $0xe78] sm:$0xff]
    %v558 = vld [vmem:[#allocation4 + $0xe80] sm:$0xff]
    %v559 = vld [vmem:[#allocation4 + $0xe88] sm:$0xff]
    %v560 = vld [vmem:[#allocation4 + $0xe90] sm:$0xff]
    %v561 = vld [vmem:[#allocation4 + $0xe98] sm:$0xff]
    %v562 = vld [vmem:[#allocation4 + $0xea0] sm:$0xff]
    %v563 = vld [vmem:[#allocation4 + $0xea8] sm:$0xff]
    %v564 = vld [vmem:[#allocation4 + $0xeb0] sm:$0xff]
    %v565 = vld [vmem:[#allocation4 + $0xeb8] sm:$0xff]
    %v566 = vld [vmem:[#allocation4 + $0xec0] sm:$0xff]
    %v567 = vld [vmem:[#allocation4 + $0xec8] sm:$0xff]
    %v568 = vld [vmem:[#allocation4 + $0xed0] sm:$0xff]
    %v569 = vld [vmem:[#allocation4 + $0xed8] sm:$0xff]
    %v570 = vld [vmem:[#allocation4 + $0xee0] sm:$0xff]
    %v571 = vld [vmem:[#allocation4 + $0xee8] sm:$0xff]
    %v572 = vld [vmem:[#allocation4 + $0xef0] sm:$0xff]
    %v573 = vld [vmem:[#allocation4 + $0xef8] sm:$0xff]
    %v574 = vld [vmem:[#allocation4 + $0xf00] sm:$0xff]
    %v575 = vld [vmem:[#allocation4 + $0xf08] sm:$0xff]
    %v576 = vld [vmem:[#allocation4 + $0xf10] sm:$0xff]
    %v577 = vld [vmem:[#allocation4 + $0xf18] sm:$0xff]
    %v578 = vld [vmem:[#allocation4 + $0xf20] sm:$0xff]
    %v579 = vld [vmem:[#allocation4 + $0xf28] sm:$0xff]
    %v580 = vld [vmem:[#allocation4 + $0xf30] sm:$0xff]
    %v581 = vld [vmem:[#allocation4 + $0xf38] sm:$0xff]
    %v582 = vld [vmem:[#allocation4 + $0xf40] sm:$0xff]
    %v583 = vld [vmem:[#allocation4 + $0xf48] sm:$0xff]
    %v584 = vld [vmem:[#allocation4 + $0xf50] sm:$0xff]
    %v585 = vld [vmem:[#allocation4 + $0xf58] sm:$0xff]
    %v586 = vld [vmem:[#allocation4 + $0xf60] sm:$0xff]
    %v587 = vld [vmem:[#allocation4 + $0xf68] sm:$0xff]
    %v588 = vld [vmem:[#allocation4 + $0xf70] sm:$0xff]
    %v589 = vld [vmem:[#allocation4 + $0xf78] sm:$0xff]
    %v590 = vld [vmem:[#allocation4 + $0xf80] sm:$0xff]
    %v591 = vld [vmem:[#allocation4 + $0xf88] sm:$0xff]
    %v592 = vld [vmem:[#allocation4 + $0xf90] sm:$0xff]
    %v593 = vld [vmem:[#allocation4 + $0xf98] sm:$0xff]
    %v594 = vld [vmem:[#allocation4 + $0xfa0] sm:$0xff]
    %v595 = vld [vmem:[#allocation4 + $0xfa8] sm:$0xff]
    %v596 = vld [vmem:[#allocation4 + $0xfb0] sm:$0xff]
    %v597 = vld [vmem:[#allocation4 + $0xfb8] sm:$0xff]
    %v598 = vld [vmem:[#allocation4 + $0xfc0] sm:$0xff]
    %v599 = vld [vmem:[#allocation4 + $0xfc8] sm:$0xff]
    %v600 = vld [vmem:[#allocation4 + $0xfd0] sm:$0xff]
    %v601 = vld [vmem:[#allocation4 + $0xfd8] sm:$0xff]
    %v602 = vld [vmem:[#allocation4 + $0xfe0] sm:$0xff]
    %v603 = vld [vmem:[#allocation4 + $0xfe8] sm:$0xff]
    %v604 = vld [vmem:[#allocation4 + $0xff0] sm:$0xff]
    %v605 = vld [vmem:[#allocation4 + $0xff8] sm:$0xff]
    %v606 = vld [vmem:[#allocation4 + $0x1000] sm:$0xff]
    %v607 = vld [vmem:[#allocation4 + $0x1008] sm:$0xff]
    %v608 = vld [vmem:[#allocation4 + $0x1010] sm:$0xff]
    %v609 = vld [vmem:[#allocation4 + $0x1018] sm:$0xff]
    %v610 = vld [vmem:[#allocation4 + $0x1020] sm:$0xff]
    %v611 = vld [vmem:[#allocation4 + $0x1028] sm:$0xff]
    %v612 = vld [vmem:[#allocation4 + $0x1030] sm:$0xff]
    %v613 = vld [vmem:[#allocation4 + $0x1038] sm:$0xff]
    %v614 = vld [vmem:[#allocation4 + $0x1040] sm:$0xff]
    %v615 = vld [vmem:[#allocation4 + $0x1048] sm:$0xff]
    %v616 = vld [vmem:[#allocation4 + $0x1050] sm:$0xff]
    %v617 = vld [vmem:[#allocation4 + $0x1058] sm:$0xff]
    %v618 = vld [vmem:[#allocation4 + $0x1060] sm:$0xff]
    %v619 = vld [vmem:[#allocation4 + $0x1068] sm:$0xff]
    %v620 = vld [vmem:[#allocation4 + $0x1070] sm:$0xff]
    %v621 = vld [vmem:[#allocation4 + $0x1078] sm:$0xff]
    %v622 = vld [vmem:[#allocation4 + $0x1080] sm:$0xff]
    %v623 = vld [vmem:[#allocation4 + $0x1088] sm:$0xff]
    %v624 = vld [vmem:[#allocation4 + $0x1090] sm:$0xff]
    %v625 = vld [vmem:[#allocation4 + $0x1098] sm:$0xff]
    %v626 = vld [vmem:[#allocation4 + $0x10a0] sm:$0xff]
    %v627 = vld [vmem:[#allocation4 + $0x10a8] sm:$0xff]
    %v628 = vld [vmem:[#allocation4 + $0x10b0] sm:$0xff]
    %v629 = vld [vmem:[#allocation4 + $0x10b8] sm:$0xff]
    %v630 = vld [vmem:[#allocation4 + $0x10c0] sm:$0xff]
    %v631 = vld [vmem:[#allocation4 + $0x10c8] sm:$0xff]
    %v632 = vld [vmem:[#allocation4 + $0x10d0] sm:$0xff]
    %v633 = vld [vmem:[#allocation4 + $0x10d8] sm:$0xff]
    %v634 = vld [vmem:[#allocation4 + $0x10e0] sm:$0xff]
    %v635 = vld [vmem:[#allocation4 + $0x10e8] sm:$0xff]
    %v636 = vld [vmem:[#allocation4 + $0x10f0] sm:$0xff]
    %v637 = vld [vmem:[#allocation4 + $0x10f8] sm:$0xff]
    %v638 = vld [vmem:[#allocation4 + $0x1100] sm:$0xff]
    %v639 = vld [vmem:[#allocation4 + $0x1108] sm:$0xff]
    %v640 = vld [vmem:[#allocation4 + $0x1110] sm:$0xff]
    %v641 = vld [vmem:[#allocation4 + $0x1118] sm:$0xff]
    %v642 = vld [vmem:[#allocation4 + $0x1120] sm:$0xff]
    %v643 = vld [vmem:[#allocation4 + $0x1128] sm:$0xff]
    %v644 = vld [vmem:[#allocation4 + $0x1130] sm:$0xff]
    %v645 = vld [vmem:[#allocation4 + $0x1138] sm:$0xff]
    %v646 = vld [vmem:[#allocation4 + $0x1140] sm:$0xff]
    %v647 = vld [vmem:[#allocation4 + $0x1148] sm:$0xff]
    %v648 = vld [vmem:[#allocation4 + $0x1150] sm:$0xff]
    %v649 = vld [vmem:[#allocation4 + $0x1158] sm:$0xff]
    %v650 = vld [vmem:[#allocation4 + $0x1160] sm:$0xff]
    %v651 = vld [vmem:[#allocation4 + $0x1168] sm:$0xff]
    %v652 = vld [vmem:[#allocation4 + $0x1170] sm:$0xff]
    %v653 = vld [vmem:[#allocation4 + $0x1178] sm:$0xff]
    %v654 = vld [vmem:[#allocation4 + $0x1180] sm:$0xff]
    %v655 = vld [vmem:[#allocation4 + $0x1188] sm:$0xff]
    %v656 = vld [vmem:[#allocation4 + $0x1190] sm:$0xff]
    %v657 = vld [vmem:[#allocation4 + $0x1198] sm:$0xff]
    %v658 = vld [vmem:[#allocation4 + $0x11a0] sm:$0xff]
    %v659 = vld [vmem:[#allocation4 + $0x11a8] sm:$0xff]
    %v660 = vld [vmem:[#allocation4 + $0x11b0] sm:$0xff]
    %v661 = vld [vmem:[#allocation4 + $0x11b8] sm:$0xff]
    %v662 = vld [vmem:[#allocation4 + $0x11c0] sm:$0xff]
    %v663 = vld [vmem:[#allocation4 + $0x11c8] sm:$0xff]
    %v664 = vld [vmem:[#allocation4 + $0x11d0] sm:$0xff]
    %v665 = vld [vmem:[#allocation4 + $0x11d8] sm:$0xff]
    %v666 = vld [vmem:[#allocation4 + $0x11e0] sm:$0xff]
    %v667 = vld [vmem:[#allocation4 + $0x11e8] sm:$0xff]
    %v668 = vld [vmem:[#allocation4 + $0x11f0] sm:$0xff]
    %v669 = vld [vmem:[#allocation4 + $0x11f8] sm:$0xff]
    %v670 = vld [vmem:[#allocation6] sm:$0x3f]
    %v672 = vlaneseq
    %v673 = vshrl.u32 %v672, 7
    %v674 = vsub.s32 0, %v673
    %v675 = vrot.slane %v670, %v674
    %v676 = vlaneseq
    %v677 = vshrl.u32 %v676, 7
    %v678 = vsub.s32 1, %v677
    %v679 = vrot.slane %v670, %v678
    %v680 = vlaneseq
    %v681 = vshrl.u32 %v680, 7
    %v682 = vsub.s32 2, %v681
    %v683 = vrot.slane %v670, %v682
    %v684 = vlaneseq
    %v685 = vshrl.u32 %v684, 7
    %v686 = vsub.s32 3, %v685
    %v687 = vrot.slane %v670, %v686
    %v688 = vlaneseq
    %v689 = vshrl.u32 %v688, 7
    %v690 = vsub.s32 4, %v689
    %v691 = vrot.slane %v670, %v690
    %v692 = vlaneseq
    %v693 = vshrl.u32 %v692, 7
    %v694 = vsub.s32 5, %v693
    %v695 = vrot.slane %v670, %v694
    %702 = vmatprep.subr.mxu0 %v95
    %703 = vmatpush1.msra.mxu0 %v94
    %704 = vmatprep.subr.mxu0 %v101
    %705 = vmatpush1.msra.mxu0 %v100
    %706 = vmatprep.subr.mxu0 %v107
    %707 = vmatpush1.msra.mxu0 %v106
    %708 = vmatprep.subr.mxu0 %v113
    %709 = vmatpush1.msra.mxu0 %v112
    %710 = vmatprep.subr.mxu0 %v119
    %711 = vmatpush1.msra.mxu0 %v118
    %712 = vmatprep.subr.mxu0 %v125
    %713 = vmatpush1.msra.mxu0 %v124
    %714 = vmatprep.subr.mxu0 %v131
    %715 = vmatpush1.msra.mxu0 %v130
    %716 = vmatprep.subr.mxu0 %v137
    %717 = vmatpush1.msra.mxu0 %v136
    %718 = vmatprep.subr.mxu0 %v143
    %719 = vmatpush1.msra.mxu0 %v142
    %720 = vmatprep.subr.mxu0 %v149
    %721 = vmatpush1.msra.mxu0 %v148
    %722 = vmatprep.subr.mxu0 %v155
    %723 = vmatpush1.msra.mxu0 %v154
    %724 = vmatprep.subr.mxu0 %v161
    %725 = vmatpush1.msra.mxu0 %v160
    %726 = vmatprep.subr.mxu0 %v167
    %727 = vmatpush1.msra.mxu0 %v166
    %728 = vmatprep.subr.mxu0 %v173
    %729 = vmatpush1.msra.mxu0 %v172
    %730 = vmatprep.subr.mxu0 %v179
    %731 = vmatpush1.msra.mxu0 %v178
    %732 = vmatprep.subr.mxu0 %v185
    %733 = vmatpush1.msra.mxu0 %v184
    %734 = vmatprep.subr.mxu0 %v191
    %735 = vmatpush1.msra.mxu0 %v190
    %736 = vmatprep.subr.mxu0 %v197
    %737 = vmatpush1.msra.mxu0 %v196
    %738 = vmatprep.subr.mxu0 %v203
    %739 = vmatpush1.msra.mxu0 %v202
    %740 = vmatprep.subr.mxu0 %v209
    %741 = vmatpush1.msra.mxu0 %v208
    %742 = vmatprep.subr.mxu0 %v215
    %743 = vmatpush1.msra.mxu0 %v214
    %744 = vmatprep.subr.mxu0 %v221
    %745 = vmatpush1.msra.mxu0 %v220
    %746 = vmatprep.subr.mxu0 %v227
    %747 = vmatpush1.msra.mxu0 %v226
    %748 = vmatprep.subr.mxu0 %v233
    %749 = vmatpush1.msra.mxu0 %v232
    %750 = vmatprep.subr.mxu0 %v239
    %751 = vmatpush1.msra.mxu0 %v238
    %752 = vmatprep.subr.mxu0 %v245
    %753 = vmatpush1.msra.mxu0 %v244
    %754 = vmatprep.subr.mxu0 %v251
    %755 = vmatpush1.msra.mxu0 %v250
    %756 = vmatprep.subr.mxu0 %v257
    %757 = vmatpush1.msra.mxu0 %v256
    %758 = vmatprep.subr.mxu0 %v263
    %759 = vmatpush1.msra.mxu0 %v262
    %760 = vmatprep.subr.mxu0 %v269
    %761 = vmatpush1.msra.mxu0 %v268
    %762 = vmatprep.subr.mxu0 %v275
    %763 = vmatpush1.msra.mxu0 %v274
    %764 = vmatprep.subr.mxu0 %v281
    %765 = vmatpush1.msra.mxu0 %v280
    %766 = vmatprep.mubr.f32.mxu0 %v83
    %767 = vmatmul.mubr.f32.gmra.mrb[0].mxu0 %v82
    %v768 = vpop.f32.mrb[0].mxu0
    %v769 = vadd.f32 %v675, %v768
    %v770 = vpop.f32.mrb[0].mxu0
    %v771 = vadd.f32 %v679, %v770
    %772 = vmatprep.mubr.f32.mxu0 %v89
    %773 = vmatmul.mubr.f32.gmra.mrb[0].mxu0 %v88
    %v774 = vpop.f32.mrb[0].mxu0
    %v775 = vadd.f32 %v675, %v774
    %v776 = vpop.f32.mrb[0].mxu0
    %v777 = vadd.f32 %v679, %v776
    %778 = vdwg.mxu0
    %779 = vmatprep.subr.mxu0 %v287
    %780 = vmatpush1.msra.mxu0 %v286
    %781 = vmatprep.subr.mxu0 %v293
    %782 = vmatpush1.msra.mxu0 %v292
    %783 = vmatprep.subr.mxu0 %v299
    %784 = vmatpush1.msra.mxu0 %v298
    %785 = vmatprep.subr.mxu0 %v305
    %786 = vmatpush1.msra.mxu0 %v304
    %787 = vmatprep.subr.mxu0 %v311
    %788 = vmatpush1.msra.mxu0 %v310
    %789 = vmatprep.subr.mxu0 %v317
    %790 = vmatpush1.msra.mxu0 %v316
    %791 = vmatprep.subr.mxu0 %v323
    %792 = vmatpush1.msra.mxu0 %v322
    %793 = vmatprep.subr.mxu0 %v329
    %794 = vmatpush1.msra.mxu0 %v328
    %795 = vmatprep.subr.mxu0 %v335
    %796 = vmatpush1.msra.mxu0 %v334
    %797 = vmatprep.subr.mxu0 %v341
    %798 = vmatpush1.msra.mxu0 %v340
    %799 = vmatprep.subr.mxu0 %v347
    %800 = vmatpush1.msra.mxu0 %v346
    %801 = vmatprep.subr.mxu0 %v353
    %802 = vmatpush1.msra.mxu0 %v352
    %803 = vmatprep.subr.mxu0 %v359
    %804 = vmatpush1.msra.mxu0 %v358
    %805 = vmatprep.subr.mxu0 %v365
    %806 = vmatpush1.msra.mxu0 %v364
    %807 = vmatprep.subr.mxu0 %v371
    %808 = vmatpush1.msra.mxu0 %v370
    %809 = vmatprep.subr.mxu0 %v377
    %810 = vmatpush1.msra.mxu0 %v376
    %811 = vmatprep.subr.mxu0 %v383
    %812 = vmatpush1.msra.mxu0 %v382
    %813 = vmatprep.subr.mxu0 %v389
    %814 = vmatpush1.msra.mxu0 %v388
    %815 = vmatprep.subr.mxu0 %v395
    %816 = vmatpush1.msra.mxu0 %v394
    %817 = vmatprep.subr.mxu0 %v401
    %818 = vmatpush1.msra.mxu0 %v400
    %819 = vmatprep.subr.mxu0 %v407
    %820 = vmatpush1.msra.mxu0 %v406
    %821 = vmatprep.subr.mxu0 %v413
    %822 = vmatpush1.msra.mxu0 %v412
    %823 = vmatprep.subr.mxu0 %v419
    %824 = vmatpush1.msra.mxu0 %v418
    %825 = vmatprep.subr.mxu0 %v425
    %826 = vmatpush1.msra.mxu0 %v424
    %827 = vmatprep.subr.mxu0 %v431
    %828 = vmatpush1.msra.mxu0 %v430
    %829 = vmatprep.subr.mxu0 %v437
    %830 = vmatpush1.msra.mxu0 %v436
    %831 = vmatprep.subr.mxu0 %v443
    %832 = vmatpush1.msra.mxu0 %v442
    %833 = vmatprep.subr.mxu0 %v449
    %834 = vmatpush1.msra.mxu0 %v448
    %835 = vmatprep.subr.mxu0 %v455
    %836 = vmatpush1.msra.mxu0 %v454
    %837 = vmatprep.subr.mxu0 %v461
    %838 = vmatpush1.msra.mxu0 %v460
    %839 = vmatprep.subr.mxu0 %v467
    %840 = vmatpush1.msra.mxu0 %v466
    %841 = vmatprep.subr.mxu0 %v473
    %842 = vmatpush1.msra.mxu0 %v472
    %843 = vmatprep.mubr.f32.mxu0 %v85
    %844 = vmatmul.mubr.f32.gmra.mrb[0].mxu0 %v84
    %v845 = vpop.f32.mrb[0].mxu0
    %v846 = vadd.f32 %v769, %v845
    %v847 = vpop.f32.mrb[0].mxu0
    %v848 = vadd.f32 %v771, %v847
    %849 = vmatprep.mubr.f32.mxu0 %v91
    %850 = vmatmul.mubr.f32.gmra.mrb[0].mxu0 %v90
    %v851 = vpop.f32.mrb[0].mxu0
    %v852 = vadd.f32 %v775, %v851
    %v853 = vpop.f32.mrb[0].mxu0
    %v854 = vadd.f32 %v777, %v853
    %855 = vdwg.mxu0
    %856 = vmatprep.subr.mxu0 %v479
    %857 = vmatpush1.msra.mxu0 %v478
    %858 = vmatprep.subr.mxu0 %v485
    %859 = vmatpush1.msra.mxu0 %v484
    %860 = vmatprep.subr.mxu0 %v491
    %861 = vmatpush1.msra.mxu0 %v490
    %862 = vmatprep.subr.mxu0 %v497
    %863 = vmatpush1.msra.mxu0 %v496
    %864 = vmatprep.subr.mxu0 %v503
    %865 = vmatpush1.msra.mxu0 %v502
    %866 = vmatprep.subr.mxu0 %v509
    %867 = vmatpush1.msra.mxu0 %v508
    %868 = vmatprep.subr.mxu0 %v515
    %869 = vmatpush1.msra.mxu0 %v514
    %870 = vmatprep.subr.mxu0 %v521
    %871 = vmatpush1.msra.mxu0 %v520
    %872 = vmatprep.subr.mxu0 %v527
    %873 = vmatpush1.msra.mxu0 %v526
    %874 = vmatprep.subr.mxu0 %v533
    %875 = vmatpush1.msra.mxu0 %v532
    %876 = vmatprep.subr.mxu0 %v539
    %877 = vmatpush1.msra.mxu0 %v538
    %878 = vmatprep.subr.mxu0 %v545
    %879 = vmatpush1.msra.mxu0 %v544
    %880 = vmatprep.subr.mxu0 %v551
    %881 = vmatpush1.msra.mxu0 %v550
    %882 = vmatprep.subr.mxu0 %v557
    %883 = vmatpush1.msra.mxu0 %v556
    %884 = vmatprep.subr.mxu0 %v563
    %885 = vmatpush1.msra.mxu0 %v562
    %886 = vmatprep.subr.mxu0 %v569
    %887 = vmatpush1.msra.mxu0 %v568
    %888 = vmatprep.subr.mxu0 %v575
    %889 = vmatpush1.msra.mxu0 %v574
    %890 = vmatprep.subr.mxu0 %v581
    %891 = vmatpush1.msra.mxu0 %v580
    %892 = vmatprep.subr.mxu0 %v587
    %893 = vmatpush1.msra.mxu0 %v586
    %894 = vmatprep.subr.mxu0 %v593
    %895 = vmatpush1.msra.mxu0 %v592
    %896 = vmatprep.subr.mxu0 %v599
    %897 = vmatpush1.msra.mxu0 %v598
    %898 = vmatprep.subr.mxu0 %v605
    %899 = vmatpush1.msra.mxu0 %v604
    %900 = vmatprep.subr.mxu0 %v611
    %901 = vmatpush1.msra.mxu0 %v610
    %902 = vmatprep.subr.mxu0 %v617
    %903 = vmatpush1.msra.mxu0 %v616
    %904 = vmatprep.subr.mxu0 %v623
    %905 = vmatpush1.msra.mxu0 %v622
    %906 = vmatprep.subr.mxu0 %v629
    %907 = vmatpush1.msra.mxu0 %v628
    %908 = vmatprep.subr.mxu0 %v635
    %909 = vmatpush1.msra.mxu0 %v634
    %910 = vmatprep.subr.mxu0 %v641
    %911 = vmatpush1.msra.mxu0 %v640
    %912 = vmatprep.subr.mxu0 %v647
    %913 = vmatpush1.msra.mxu0 %v646
    %914 = vmatprep.subr.mxu0 %v653
    %915 = vmatpush1.msra.mxu0 %v652
    %916 = vmatprep.subr.mxu0 %v659
    %917 = vmatpush1.msra.mxu0 %v658
    %918 = vmatprep.subr.mxu0 %v665
    %919 = vmatpush1.msra.mxu0 %v664
    %920 = vmatprep.mubr.f32.mxu0 %v87
    %921 = vmatmul.mubr.f32.gmra.mrb[0].mxu0 %v86
    %v922 = vpop.f32.mrb[0].mxu0
    %v923 = vadd.f32 %v846, %v922
    %v924 = vpop.f32.mrb[0].mxu0
    %v925 = vadd.f32 %v848, %v924
    %926 = vmatprep.mubr.f32.mxu0 %v93
    %927 = vmatmul.mubr.f32.gmra.mrb[0].mxu0 %v92
    %v928 = vpop.f32.mrb[0].mxu0
    %v929 = vadd.f32 %v852, %v928
    %v930 = vpop.f32.mrb[0].mxu0
    %v931 = vadd.f32 %v854, %v930
    %932 = vdwg.mxu0
    %933 = vmatprep.subr.mxu0 %v97
    %934 = vmatpush1.msra.mxu0 %v96
    %935 = vmatprep.subr.mxu0 %v103
    %936 = vmatpush1.msra.mxu0 %v102
    %937 = vmatprep.subr.mxu0 %v109
    %938 = vmatpush1.msra.mxu0 %v108
    %939 = vmatprep.subr.mxu0 %v115
    %940 = vmatpush1.msra.mxu0 %v114
    %941 = vmatprep.subr.mxu0 %v121
    %942 = vmatpush1.msra.mxu0 %v120
    %943 = vmatprep.subr.mxu0 %v127
    %944 = vmatpush1.msra.mxu0 %v126
    %945 = vmatprep.subr.mxu0 %v133
    %946 = vmatpush1.msra.mxu0 %v132
    %947 = vmatprep.subr.mxu0 %v139
    %948 = vmatpush1.msra.mxu0 %v138
    %949 = vmatprep.subr.mxu0 %v145
    %950 = vmatpush1.msra.mxu0 %v144
    %951 = vmatprep.subr.mxu0 %v151
    %952 = vmatpush1.msra.mxu0 %v150
    %953 = vmatprep.subr.mxu0 %v157
    %954 = vmatpush1.msra.mxu0 %v156
    %955 = vmatprep.subr.mxu0 %v163
    %956 = vmatpush1.msra.mxu0 %v162
    %957 = vmatprep.subr.mxu0 %v169
    %958 = vmatpush1.msra.mxu0 %v168
    %959 = vmatprep.subr.mxu0 %v175
    %960 = vmatpush1.msra.mxu0 %v174
    %961 = vmatprep.subr.mxu0 %v181
    %962 = vmatpush1.msra.mxu0 %v180
    %963 = vmatprep.subr.mxu0 %v187
    %964 = vmatpush1.msra.mxu0 %v186
    %965 = vmatprep.subr.mxu0 %v193
    %966 = vmatpush1.msra.mxu0 %v192
    %967 = vmatprep.subr.mxu0 %v199
    %968 = vmatpush1.msra.mxu0 %v198
    %969 = vmatprep.subr.mxu0 %v205
    %970 = vmatpush1.msra.mxu0 %v204
    %971 = vmatprep.subr.mxu0 %v211
    %972 = vmatpush1.msra.mxu0 %v210
    %973 = vmatprep.subr.mxu0 %v217
    %974 = vmatpush1.msra.mxu0 %v216
    %975 = vmatprep.subr.mxu0 %v223
    %976 = vmatpush1.msra.mxu0 %v222
    %977 = vmatprep.subr.mxu0 %v229
    %978 = vmatpush1.msra.mxu0 %v228
    %979 = vmatprep.subr.mxu0 %v235
    %980 = vmatpush1.msra.mxu0 %v234
    %981 = vmatprep.subr.mxu0 %v241
    %982 = vmatpush1.msra.mxu0 %v240
    %983 = vmatprep.subr.mxu0 %v247
    %984 = vmatpush1.msra.mxu0 %v246
    %985 = vmatprep.subr.mxu0 %v253
    %986 = vmatpush1.msra.mxu0 %v252
    %987 = vmatprep.subr.mxu0 %v259
    %988 = vmatpush1.msra.mxu0 %v258
    %989 = vmatprep.subr.mxu0 %v265
    %990 = vmatpush1.msra.mxu0 %v264
    %991 = vmatprep.subr.mxu0 %v271
    %992 = vmatpush1.msra.mxu0 %v270
    %993 = vmatprep.subr.mxu0 %v277
    %994 = vmatpush1.msra.mxu0 %v276
    %995 = vmatprep.subr.mxu0 %v283
    %996 = vmatpush1.msra.mxu0 %v282
    %997 = vmatprep.mubr.f32.mxu0 %v83
    %998 = vmatmul.mubr.f32.gmra.mrb[0].mxu0 %v82
    %v999 = vpop.f32.mrb[0].mxu0
    %v1000 = vadd.f32 %v683, %v999
    %v1001 = vpop.f32.mrb[0].mxu0
    %v1002 = vadd.f32 %v687, %v1001
    %1003 = vmatprep.mubr.f32.mxu0 %v89
    %1004 = vmatmul.mubr.f32.gmra.mrb[0].mxu0 %v88
    %v1005 = vpop.f32.mrb[0].mxu0
    %v1006 = vadd.f32 %v683, %v1005
    %v1007 = vpop.f32.mrb[0].mxu0
    %v1008 = vadd.f32 %v687, %v1007
    %1009 = vdwg.mxu0
    %1010 = vmatprep.subr.mxu0 %v289
    %1011 = vmatpush1.msra.mxu0 %v288
    %1012 = vmatprep.subr.mxu0 %v295
    %1013 = vmatpush1.msra.mxu0 %v294
    %1014 = vmatprep.subr.mxu0 %v301
    %1015 = vmatpush1.msra.mxu0 %v300
    %1016 = vmatprep.subr.mxu0 %v307
    %1017 = vmatpush1.msra.mxu0 %v306
    %1018 = vmatprep.subr.mxu0 %v313
    %1019 = vmatpush1.msra.mxu0 %v312
    %1020 = vmatprep.subr.mxu0 %v319
    %1021 = vmatpush1.msra.mxu0 %v318
    %1022 = vmatprep.subr.mxu0 %v325
    %1023 = vmatpush1.msra.mxu0 %v324
    %1024 = vmatprep.subr.mxu0 %v331
    %1025 = vmatpush1.msra.mxu0 %v330
    %1026 = vmatprep.subr.mxu0 %v337
    %1027 = vmatpush1.msra.mxu0 %v336
    %1028 = vmatprep.subr.mxu0 %v343
    %1029 = vmatpush1.msra.mxu0 %v342
    %1030 = vmatprep.subr.mxu0 %v349
    %1031 = vmatpush1.msra.mxu0 %v348
    %1032 = vmatprep.subr.mxu0 %v355
    %1033 = vmatpush1.msra.mxu0 %v354
    %1034 = vmatprep.subr.mxu0 %v361
    %1035 = vmatpush1.msra.mxu0 %v360
    %1036 = vmatprep.subr.mxu0 %v367
    %1037 = vmatpush1.msra.mxu0 %v366
    %1038 = vmatprep.subr.mxu0 %v373
    %1039 = vmatpush1.msra.mxu0 %v372
    %1040 = vmatprep.subr.mxu0 %v379
    %1041 = vmatpush1.msra.mxu0 %v378
    %1042 = vmatprep.subr.mxu0 %v385
    %1043 = vmatpush1.msra.mxu0 %v384
    %1044 = vmatprep.subr.mxu0 %v391
    %1045 = vmatpush1.msra.mxu0 %v390
    %1046 = vmatprep.subr.mxu0 %v397
    %1047 = vmatpush1.msra.mxu0 %v396
    %1048 = vmatprep.subr.mxu0 %v403
    %1049 = vmatpush1.msra.mxu0 %v402
    %1050 = vmatprep.subr.mxu0 %v409
    %1051 = vmatpush1.msra.mxu0 %v408
    %1052 = vmatprep.subr.mxu0 %v415
    %1053 = vmatpush1.msra.mxu0 %v414
    %1054 = vmatprep.subr.mxu0 %v421
    %1055 = vmatpush1.msra.mxu0 %v420
    %1056 = vmatprep.subr.mxu0 %v427
    %1057 = vmatpush1.msra.mxu0 %v426
    %1058 = vmatprep.subr.mxu0 %v433
    %1059 = vmatpush1.msra.mxu0 %v432
    %1060 = vmatprep.subr.mxu0 %v439
    %1061 = vmatpush1.msra.mxu0 %v438
    %1062 = vmatprep.subr.mxu0 %v445
    %1063 = vmatpush1.msra.mxu0 %v444
    %1064 = vmatprep.subr.mxu0 %v451
    %1065 = vmatpush1.msra.mxu0 %v450
    %1066 = vmatprep.subr.mxu0 %v457
    %1067 = vmatpush1.msra.mxu0 %v456
    %1068 = vmatprep.subr.mxu0 %v463
    %1069 = vmatpush1.msra.mxu0 %v462
    %1070 = vmatprep.subr.mxu0 %v469
    %1071 = vmatpush1.msra.mxu0 %v468
    %1072 = vmatprep.subr.mxu0 %v475
    %1073 = vmatpush1.msra.mxu0 %v474
    %1074 = vmatprep.mubr.f32.mxu0 %v85
    %1075 = vmatmul.mubr.f32.gmra.mrb[0].mxu0 %v84
    %v1076 = vpop.f32.mrb[0].mxu0
    %v1077 = vadd.f32 %v1000, %v1076
    %v1078 = vpop.f32.mrb[0].mxu0
    %v1079 = vadd.f32 %v1002, %v1078
    %1080 = vmatprep.mubr.f32.mxu0 %v91
    %1081 = vmatmul.mubr.f32.gmra.mrb[0].mxu0 %v90
    %v1082 = vpop.f32.mrb[0].mxu0
    %v1083 = vadd.f32 %v1006, %v1082
    %v1084 = vpop.f32.mrb[0].mxu0
    %v1085 = vadd.f32 %v1008, %v1084
    %1086 = vdwg.mxu0
    %1087 = vmatprep.subr.mxu0 %v481
    %1088 = vmatpush1.msra.mxu0 %v480
    %1089 = vmatprep.subr.mxu0 %v487
    %1090 = vmatpush1.msra.mxu0 %v486
    %1091 = vmatprep.subr.mxu0 %v493
    %1092 = vmatpush1.msra.mxu0 %v492
    %1093 = vmatprep.subr.mxu0 %v499
    %1094 = vmatpush1.msra.mxu0 %v498
    %1095 = vmatprep.subr.mxu0 %v505
    %1096 = vmatpush1.msra.mxu0 %v504
    %1097 = vmatprep.subr.mxu0 %v511
    %1098 = vmatpush1.msra.mxu0 %v510
    %1099 = vmatprep.subr.mxu0 %v517
    %1100 = vmatpush1.msra.mxu0 %v516
    %1101 = vmatprep.subr.mxu0 %v523
    %1102 = vmatpush1.msra.mxu0 %v522
    %1103 = vmatprep.subr.mxu0 %v529
    %1104 = vmatpush1.msra.mxu0 %v528
    %1105 = vmatprep.subr.mxu0 %v535
    %1106 = vmatpush1.msra.mxu0 %v534
    %1107 = vmatprep.subr.mxu0 %v541
    %1108 = vmatpush1.msra.mxu0 %v540
    %1109 = vmatprep.subr.mxu0 %v547
    %1110 = vmatpush1.msra.mxu0 %v546
    %1111 = vmatprep.subr.mxu0 %v553
    %1112 = vmatpush1.msra.mxu0 %v552
    %1113 = vmatprep.subr.mxu0 %v559
    %1114 = vmatpush1.msra.mxu0 %v558
    %1115 = vmatprep.subr.mxu0 %v565
    %1116 = vmatpush1.msra.mxu0 %v564
    %1117 = vmatprep.subr.mxu0 %v571
    %1118 = vmatpush1.msra.mxu0 %v570
    %1119 = vmatprep.subr.mxu0 %v577
    %1120 = vmatpush1.msra.mxu0 %v576
    %1121 = vmatprep.subr.mxu0 %v583
    %1122 = vmatpush1.msra.mxu0 %v582
    %1123 = vmatprep.subr.mxu0 %v589
    %1124 = vmatpush1.msra.mxu0 %v588
    %1125 = vmatprep.subr.mxu0 %v595
    %1126 = vmatpush1.msra.mxu0 %v594
    %1127 = vmatprep.subr.mxu0 %v601
    %1128 = vmatpush1.msra.mxu0 %v600
    %1129 = vmatprep.subr.mxu0 %v607
    %1130 = vmatpush1.msra.mxu0 %v606
    %1131 = vmatprep.subr.mxu0 %v613
    %1132 = vmatpush1.msra.mxu0 %v612
    %1133 = vmatprep.subr.mxu0 %v619
    %1134 = vmatpush1.msra.mxu0 %v618
    %1135 = vmatprep.subr.mxu0 %v625
    %1136 = vmatpush1.msra.mxu0 %v624
    %1137 = vmatprep.subr.mxu0 %v631
    %1138 = vmatpush1.msra.mxu0 %v630
    %1139 = vmatprep.subr.mxu0 %v637
    %1140 = vmatpush1.msra.mxu0 %v636
    %1141 = vmatprep.subr.mxu0 %v643
    %1142 = vmatpush1.msra.mxu0 %v642
    %1143 = vmatprep.subr.mxu0 %v649
    %1144 = vmatpush1.msra.mxu0 %v648
    %1145 = vmatprep.subr.mxu0 %v655
    %1146 = vmatpush1.msra.mxu0 %v654
    %1147 = vmatprep.subr.mxu0 %v661
    %1148 = vmatpush1.msra.mxu0 %v660
    %1149 = vmatprep.subr.mxu0 %v667
    %1150 = vmatpush1.msra.mxu0 %v666
    %1151 = vmatprep.mubr.f32.mxu0 %v87
    %1152 = vmatmul.mubr.f32.gmra.mrb[0].mxu0 %v86
    %v1153 = vpop.f32.mrb[0].mxu0
    %v1154 = vadd.f32 %v1077, %v1153
    %v1155 = vpop.f32.mrb[0].mxu0
    %v1156 = vadd.f32 %v1079, %v1155
    %1157 = vmatprep.mubr.f32.mxu0 %v93
    %1158 = vmatmul.mubr.f32.gmra.mrb[0].mxu0 %v92
    %v1159 = vpop.f32.mrb[0].mxu0
    %v1160 = vadd.f32 %v1083, %v1159
    %v1161 = vpop.f32.mrb[0].mxu0
    %v1162 = vadd.f32 %v1085, %v1161
    %1163 = vdwg.mxu0
    %1164 = vmatprep.subr.mxu0 %v99
    %1165 = vmatpush1.msra.mxu0 %v98
    %1166 = vmatprep.subr.mxu0 %v105
    %1167 = vmatpush1.msra.mxu0 %v104
    %1168 = vmatprep.subr.mxu0 %v111
    %1169 = vmatpush1.msra.mxu0 %v110
    %1170 = vmatprep.subr.mxu0 %v117
    %1171 = vmatpush1.msra.mxu0 %v116
    %1172 = vmatprep.subr.mxu0 %v123
    %1173 = vmatpush1.msra.mxu0 %v122
    %1174 = vmatprep.subr.mxu0 %v129
    %1175 = vmatpush1.msra.mxu0 %v128
    %1176 = vmatprep.subr.mxu0 %v135
    %1177 = vmatpush1.msra.mxu0 %v134
    %1178 = vmatprep.subr.mxu0 %v141
    %1179 = vmatpush1.msra.mxu0 %v140
    %1180 = vmatprep.subr.mxu0 %v147
    %1181 = vmatpush1.msra.mxu0 %v146
    %1182 = vmatprep.subr.mxu0 %v153
    %1183 = vmatpush1.msra.mxu0 %v152
    %1184 = vmatprep.subr.mxu0 %v159
    %1185 = vmatpush1.msra.mxu0 %v158
    %1186 = vmatprep.subr.mxu0 %v165
    %1187 = vmatpush1.msra.mxu0 %v164
    %1188 = vmatprep.subr.mxu0 %v171
    %1189 = vmatpush1.msra.mxu0 %v170
    %1190 = vmatprep.subr.mxu0 %v177
    %1191 = vmatpush1.msra.mxu0 %v176
    %1192 = vmatprep.subr.mxu0 %v183
    %1193 = vmatpush1.msra.mxu0 %v182
    %1194 = vmatprep.subr.mxu0 %v189
    %1195 = vmatpush1.msra.mxu0 %v188
    %1196 = vmatprep.subr.mxu0 %v195
    %1197 = vmatpush1.msra.mxu0 %v194
    %1198 = vmatprep.subr.mxu0 %v201
    %1199 = vmatpush1.msra.mxu0 %v200
    %1200 = vmatprep.subr.mxu0 %v207
    %1201 = vmatpush1.msra.mxu0 %v206
    %1202 = vmatprep.subr.mxu0 %v213
    %1203 = vmatpush1.msra.mxu0 %v212
    %1204 = vmatprep.subr.mxu0 %v219
    %1205 = vmatpush1.msra.mxu0 %v218
    %1206 = vmatprep.subr.mxu0 %v225
    %1207 = vmatpush1.msra.mxu0 %v224
    %1208 = vmatprep.subr.mxu0 %v231
    %1209 = vmatpush1.msra.mxu0 %v230
    %1210 = vmatprep.subr.mxu0 %v237
    %1211 = vmatpush1.msra.mxu0 %v236
    %1212 = vmatprep.subr.mxu0 %v243
    %1213 = vmatpush1.msra.mxu0 %v242
    %1214 = vmatprep.subr.mxu0 %v249
    %1215 = vmatpush1.msra.mxu0 %v248
    %1216 = vmatprep.subr.mxu0 %v255
    %1217 = vmatpush1.msra.mxu0 %v254
    %1218 = vmatprep.subr.mxu0 %v261
    %1219 = vmatpush1.msra.mxu0 %v260
    %1220 = vmatprep.subr.mxu0 %v267
    %1221 = vmatpush1.msra.mxu0 %v266
    %1222 = vmatprep.subr.mxu0 %v273
    %1223 = vmatpush1.msra.mxu0 %v272
    %1224 = vmatprep.subr.mxu0 %v279
    %1225 = vmatpush1.msra.mxu0 %v278
    %1226 = vmatprep.subr.mxu0 %v285
    %1227 = vmatpush1.msra.mxu0 %v284
    %1228 = vmatprep.mubr.f32.mxu0 %v83
    %1229 = vmatmul.mubr.f32.gmra.mrb[0].mxu0 %v82
    %v1230 = vpop.f32.mrb[0].mxu0
    %v1231 = vadd.f32 %v691, %v1230
    %v1232 = vpop.f32.mrb[0].mxu0
    %v1233 = vadd.f32 %v695, %v1232
    %1234 = vmatprep.mubr.f32.mxu0 %v89
    %1235 = vmatmul.mubr.f32.gmra.mrb[0].mxu0 %v88
    %v1236 = vpop.f32.mrb[0].mxu0
    %v1237 = vadd.f32 %v691, %v1236
    %v1238 = vpop.f32.mrb[0].mxu0
    %v1239 = vadd.f32 %v695, %v1238
    %1240 = vdwg.mxu0
    %1241 = vmatprep.subr.mxu0 %v291
    %1242 = vmatpush1.msra.mxu0 %v290
    %1243 = vmatprep.subr.mxu0 %v297
    %1244 = vmatpush1.msra.mxu0 %v296
    %1245 = vmatprep.subr.mxu0 %v303
    %1246 = vmatpush1.msra.mxu0 %v302
    %1247 = vmatprep.subr.mxu0 %v309
    %1248 = vmatpush1.msra.mxu0 %v308
    %1249 = vmatprep.subr.mxu0 %v315
    %1250 = vmatpush1.msra.mxu0 %v314
    %1251 = vmatprep.subr.mxu0 %v321
    %1252 = vmatpush1.msra.mxu0 %v320
    %1253 = vmatprep.subr.mxu0 %v327
    %1254 = vmatpush1.msra.mxu0 %v326
    %1255 = vmatprep.subr.mxu0 %v333
    %1256 = vmatpush1.msra.mxu0 %v332
    %1257 = vmatprep.subr.mxu0 %v339
    %1258 = vmatpush1.msra.mxu0 %v338
    %1259 = vmatprep.subr.mxu0 %v345
    %1260 = vmatpush1.msra.mxu0 %v344
    %1261 = vmatprep.subr.mxu0 %v351
    %1262 = vmatpush1.msra.mxu0 %v350
    %1263 = vmatprep.subr.mxu0 %v357
    %1264 = vmatpush1.msra.mxu0 %v356
    %1265 = vmatprep.subr.mxu0 %v363
    %1266 = vmatpush1.msra.mxu0 %v362
    %1267 = vmatprep.subr.mxu0 %v369
    %1268 = vmatpush1.msra.mxu0 %v368
    %1269 = vmatprep.subr.mxu0 %v375
    %1270 = vmatpush1.msra.mxu0 %v374
    %1271 = vmatprep.subr.mxu0 %v381
    %1272 = vmatpush1.msra.mxu0 %v380
    %1273 = vmatprep.subr.mxu0 %v387
    %1274 = vmatpush1.msra.mxu0 %v386
    %1275 = vmatprep.subr.mxu0 %v393
    %1276 = vmatpush1.msra.mxu0 %v392
    %1277 = vmatprep.subr.mxu0 %v399
    %1278 = vmatpush1.msra.mxu0 %v398
    %1279 = vmatprep.subr.mxu0 %v405
    %1280 = vmatpush1.msra.mxu0 %v404
    %1281 = vmatprep.subr.mxu0 %v411
    %1282 = vmatpush1.msra.mxu0 %v410
    %1283 = vmatprep.subr.mxu0 %v417
    %1284 = vmatpush1.msra.mxu0 %v416
    %1285 = vmatprep.subr.mxu0 %v423
    %1286 = vmatpush1.msra.mxu0 %v422
    %1287 = vmatprep.subr.mxu0 %v429
    %1288 = vmatpush1.msra.mxu0 %v428
    %1289 = vmatprep.subr.mxu0 %v435
    %1290 = vmatpush1.msra.mxu0 %v434
    %1291 = vmatprep.subr.mxu0 %v441
    %1292 = vmatpush1.msra.mxu0 %v440
    %1293 = vmatprep.subr.mxu0 %v447
    %1294 = vmatpush1.msra.mxu0 %v446
    %1295 = vmatprep.subr.mxu0 %v453
    %1296 = vmatpush1.msra.mxu0 %v452
    %1297 = vmatprep.subr.mxu0 %v459
    %1298 = vmatpush1.msra.mxu0 %v458
    %1299 = vmatprep.subr.mxu0 %v465
    %1300 = vmatpush1.msra.mxu0 %v464
    %1301 = vmatprep.subr.mxu0 %v471
    %1302 = vmatpush1.msra.mxu0 %v470
    %1303 = vmatprep.subr.mxu0 %v477
    %1304 = vmatpush1.msra.mxu0 %v476
    %1305 = vmatprep.mubr.f32.mxu0 %v85
    %1306 = vmatmul.mubr.f32.gmra.mrb[0].mxu0 %v84
    %v1307 = vpop.f32.mrb[0].mxu0
    %v1308 = vadd.f32 %v1231, %v1307
    %v1309 = vpop.f32.mrb[0].mxu0
    %v1310 = vadd.f32 %v1233, %v1309
    %1311 = vmatprep.mubr.f32.mxu0 %v91
    %1312 = vmatmul.mubr.f32.gmra.mrb[0].mxu0 %v90
    %v1313 = vpop.f32.mrb[0].mxu0
    %v1314 = vadd.f32 %v1237, %v1313
    %v1315 = vpop.f32.mrb[0].mxu0
    %v1316 = vadd.f32 %v1239, %v1315
    %1317 = vdwg.mxu0
    %1318 = vmatprep.subr.mxu0 %v483
    %1319 = vmatpush1.msra.mxu0 %v482
    %1320 = vmatprep.subr.mxu0 %v489
    %1321 = vmatpush1.msra.mxu0 %v488
    %1322 = vmatprep.subr.mxu0 %v495
    %1323 = vmatpush1.msra.mxu0 %v494
    %1324 = vmatprep.subr.mxu0 %v501
    %1325 = vmatpush1.msra.mxu0 %v500
    %1326 = vmatprep.subr.mxu0 %v507
    %1327 = vmatpush1.msra.mxu0 %v506
    %1328 = vmatprep.subr.mxu0 %v513
    %1329 = vmatpush1.msra.mxu0 %v512
    %1330 = vmatprep.subr.mxu0 %v519
    %1331 = vmatpush1.msra.mxu0 %v518
    %1332 = vmatprep.subr.mxu0 %v525
    %1333 = vmatpush1.msra.mxu0 %v524
    %1334 = vmatprep.subr.mxu0 %v531
    %1335 = vmatpush1.msra.mxu0 %v530
    %1336 = vmatprep.subr.mxu0 %v537
    %1337 = vmatpush1.msra.mxu0 %v536
    %1338 = vmatprep.subr.mxu0 %v543
    %1339 = vmatpush1.msra.mxu0 %v542
    %1340 = vmatprep.subr.mxu0 %v549
    %1341 = vmatpush1.msra.mxu0 %v548
    %1342 = vmatprep.subr.mxu0 %v555
    %1343 = vmatpush1.msra.mxu0 %v554
    %1344 = vmatprep.subr.mxu0 %v561
    %1345 = vmatpush1.msra.mxu0 %v560
    %1346 = vmatprep.subr.mxu0 %v567
    %1347 = vmatpush1.msra.mxu0 %v566
    %1348 = vmatprep.subr.mxu0 %v573
    %1349 = vmatpush1.msra.mxu0 %v572
    %1350 = vmatprep.subr.mxu0 %v579
    %1351 = vmatpush1.msra.mxu0 %v578
    %1352 = vmatprep.subr.mxu0 %v585
    %1353 = vmatpush1.msra.mxu0 %v584
    %1354 = vmatprep.subr.mxu0 %v591
    %1355 = vmatpush1.msra.mxu0 %v590
    %1356 = vmatprep.subr.mxu0 %v597
    %1357 = vmatpush1.msra.mxu0 %v596
    %1358 = vmatprep.subr.mxu0 %v603
    %1359 = vmatpush1.msra.mxu0 %v602
    %1360 = vmatprep.subr.mxu0 %v609
    %1361 = vmatpush1.msra.mxu0 %v608
    %1362 = vmatprep.subr.mxu0 %v615
    %1363 = vmatpush1.msra.mxu0 %v614
    %1364 = vmatprep.subr.mxu0 %v621
    %1365 = vmatpush1.msra.mxu0 %v620
    %1366 = vmatprep.subr.mxu0 %v627
    %1367 = vmatpush1.msra.mxu0 %v626
    %1368 = vmatprep.subr.mxu0 %v633
    %1369 = vmatpush1.msra.mxu0 %v632
    %1370 = vmatprep.subr.mxu0 %v639
    %1371 = vmatpush1.msra.mxu0 %v638
    %1372 = vmatprep.subr.mxu0 %v645
    %1373 = vmatpush1.msra.mxu0 %v644
    %1374 = vmatprep.subr.mxu0 %v651
    %1375 = vmatpush1.msra.mxu0 %v650
    %1376 = vmatprep.subr.mxu0 %v657
    %1377 = vmatpush1.msra.mxu0 %v656
    %1378 = vmatprep.subr.mxu0 %v663
    %1379 = vmatpush1.msra.mxu0 %v662
    %1380 = vmatprep.subr.mxu0 %v669
    %1381 = vmatpush1.msra.mxu0 %v668
    %1382 = vmatprep.mubr.f32.mxu0 %v87
    %1383 = vmatmul.mubr.f32.gmra.mrb[0].mxu0 %v86
    %v1384 = vpop.f32.mrb[0].mxu0
    %v1385 = vadd.f32 %v1308, %v1384
    %v1386 = vpop.f32.mrb[0].mxu0
    %v1387 = vadd.f32 %v1310, %v1386
    %1388 = vmatprep.mubr.f32.mxu0 %v93
    %1389 = vmatmul.mubr.f32.gmra.mrb[0].mxu0 %v92
    %v1390 = vpop.f32.mrb[0].mxu0
    %v1391 = vadd.f32 %v1314, %v1390
    %v1392 = vpop.f32.mrb[0].mxu0
    %v1393 = vadd.f32 %v1316, %v1392
    %1394 = vdwg.mxu0
    %v1395 = vmul.f32 %v923, 0.5
    %v1396 = vmul.f32 %v925, 0.5
    %v1397 = vmul.f32 %v1154, 0.5
    %v1398 = vmul.f32 %v1156, 0.5
    %v1399 = vmul.f32 %v1385, 0.5
    %v1400 = vmul.f32 %v1387, 0.5
    %v1401 = vmul.f32 %v929, 0.5
    %v1402 = vmul.f32 %v931, 0.5
    %v1403 = vmul.f32 %v1160, 0.5
    %v1404 = vmul.f32 %v1162, 0.5
    %v1405 = vmul.f32 %v1391, 0.5
    %v1406 = vmul.f32 %v1393, 0.5
    %v1407 = vmul.f32 %v923, 0.70710677
    %v1408 = vmul.f32 %v925, 0.70710677
    %v1409 = vmul.f32 %v1154, 0.70710677
    %v1410 = vmul.f32 %v1156, 0.70710677
    %v1411 = vmul.f32 %v1385, 0.70710677
    %v1412 = vmul.f32 %v1387, 0.70710677
    %v1413 = vmul.f32 %v929, 0.70710677
    %v1414 = vmul.f32 %v931, 0.70710677
    %v1415 = vmul.f32 %v1160, 0.70710677
    %v1416 = vmul.f32 %v1162, 0.70710677
    %v1417 = vmul.f32 %v1391, 0.70710677
    %v1418 = vmul.f32 %v1393, 0.70710677
    %v1419 = verf.f32.pop %v1407
    %v1420 = verf.f32.pop %v1408
    %v1421 = verf.f32.pop %v1409
    %v1422 = verf.f32.pop %v1410
    %v1423 = verf.f32.pop %v1411
    %v1424 = verf.f32.pop %v1412
    %v1425 = verf.f32.pop %v1413
    %v1426 = verf.f32.pop %v1414
    %v1427 = verf.f32.pop %v1415
    %v1428 = verf.f32.pop %v1416
    %v1429 = verf.f32.pop %v1417
    %v1430 = verf.f32.pop %v1418
    %v1431 = vadd.f32 %v1419, 1.0
    %v1432 = vadd.f32 %v1420, 1.0
    %v1433 = vadd.f32 %v1421, 1.0
    %v1434 = vadd.f32 %v1422, 1.0
    %v1435 = vadd.f32 %v1423, 1.0
    %v1436 = vadd.f32 %v1424, 1.0
    %v1437 = vadd.f32 %v1425, 1.0
    %v1438 = vadd.f32 %v1426, 1.0
    %v1439 = vadd.f32 %v1427, 1.0
    %v1440 = vadd.f32 %v1428, 1.0
    %v1441 = vadd.f32 %v1429, 1.0
    %v1442 = vadd.f32 %v1430, 1.0
    %v1443 = vmul.f32 %v1395, %v1431
    %v1444 = vmul.f32 %v1396, %v1432
    %v1445 = vmul.f32 %v1397, %v1433
    %v1446 = vmul.f32 %v1398, %v1434
    %v1447 = vmul.f32 %v1399, %v1435
    %v1448 = vmul.f32 %v1400, %v1436
    %v1449 = vmul.f32 %v1401, %v1437
    %v1450 = vmul.f32 %v1402, %v1438
    %v1451 = vmul.f32 %v1403, %v1439
    %v1452 = vmul.f32 %v1404, %v1440
    %v1453 = vmul.f32 %v1405, %v1441
    %v1454 = vmul.f32 %v1406, %v1442
    %v1455 = vadd.f32 %v1443, %v1444
    %v1456 = vadd.f32 %v1455, %v1445
    %v1457 = vadd.f32 %v1456, %v1446
    %v1458 = vadd.f32 %v1457, %v1447
    %v1459 = vadd.f32 %v1458, %v1448
    %1460 = vadd.xlane.f32.xlu0 %v1459
    %v1461 = vpop.xlane.xlu0 %1460
    %v1462 = vadd.f32 %v1449, %v1450
    %v1463 = vadd.f32 %v1462, %v1451
    %v1464 = vadd.f32 %v1463, %v1452
    %v1465 = vadd.f32 %v1464, %v1453
    %v1466 = vadd.f32 %v1465, %v1454
    %1467 = vadd.xlane.f32.xlu0 %v1466
    %v1468 = vpop.xlane.xlu0 %1467
    %v1469 = vrcp.pop 768.0
    %v1470 = vmul.f32 %v1461, %v1469
    %v1471 = vmul.f32 %v1468, %v1469
    %v1472 = vsub.f32 %v1443, %v1470
    %v1473 = vsub.f32 %v1444, %v1470
    %v1474 = vsub.f32 %v1445, %v1470
    %v1475 = vsub.f32 %v1446, %v1470
    %v1476 = vsub.f32 %v1447, %v1470
    %v1477 = vsub.f32 %v1448, %v1470
    %v1478 = vsub.f32 %v1449, %v1471
    %v1479 = vsub.f32 %v1450, %v1471
    %v1480 = vsub.f32 %v1451, %v1471
    %v1481 = vsub.f32 %v1452, %v1471
    %v1482 = vsub.f32 %v1453, %v1471
    %v1483 = vsub.f32 %v1454, %v1471
    %v1484 = vmul.f32 %v1472, %v1472
    %v1485 = vmul.f32 %v1473, %v1473
    %v1486 = vmul.f32 %v1474, %v1474
    %v1487 = vmul.f32 %v1475, %v1475
    %v1488 = vmul.f32 %v1476, %v1476
    %v1489 = vmul.f32 %v1477, %v1477
    %v1490 = vmul.f32 %v1478, %v1478
    %v1491 = vmul.f32 %v1479, %v1479
    %v1492 = vmul.f32 %v1480, %v1480
    %v1493 = vmul.f32 %v1481, %v1481
    %v1494 = vmul.f32 %v1482, %v1482
    %v1495 = vmul.f32 %v1483, %v1483
    %v1496 = vadd.f32 %v1484, %v1485
    %v1497 = vadd.f32 %v1496, %v1486
    %v1498 = vadd.f32 %v1497, %v1487
    %v1499 = vadd.f32 %v1498, %v1488
    %v1500 = vadd.f32 %v1499, %v1489
    %1501 = vadd.xlane.f32.xlu0 %v1500
    %v1502 = vpop.xlane.xlu0 %1501
    %v1503 = vadd.f32 %v1490, %v1491
    %v1504 = vadd.f32 %v1503, %v1492
    %v1505 = vadd.f32 %v1504, %v1493
    %v1506 = vadd.f32 %v1505, %v1494
    %v1507 = vadd.f32 %v1506, %v1495
    %1508 = vadd.xlane.f32.xlu0 %v1507
    %v1509 = vpop.xlane.xlu0 %1508
    %v1510 = vmul.f32 %v1502, %v1469
    %v1511 = vmul.f32 %v1509, %v1469
    %v1512 = vadd.f32 %v1510, 1e-12
    %v1513 = vadd.f32 %v1511, 1e-12
    %v1514 = vrsqrt.pop %v1512
    %v1515 = vrsqrt.pop %v1513
    %v1516 = vmul.f32 %v1472, %v1514
    %v1517 = vmul.f32 %v1473, %v1514
    %v1518 = vmul.f32 %v1474, %v1514
    %v1519 = vmul.f32 %v1475, %v1514
    %v1520 = vmul.f32 %v1476, %v1514
    %v1521 = vmul.f32 %v1477, %v1514
    %v1522 = vmul.f32 %v1478, %v1515
    %v1523 = vmul.f32 %v1479, %v1515
    %v1524 = vmul.f32 %v1480, %v1515
    %v1525 = vmul.f32 %v1481, %v1515
    %v1526 = vmul.f32 %v1482, %v1515
    %v1527 = vmul.f32 %v1483, %v1515
    %v1528 = vld [vmem:[#allocation7] sm:$0x3f]
    %v1530 = vlaneseq
    %v1531 = vshrl.u32 %v1530, 7
    %v1532 = vsub.s32 0, %v1531
    %v1533 = vrot.slane %v1528, %v1532
    %v1534 = vlaneseq
    %v1535 = vshrl.u32 %v1534, 7
    %v1536 = vsub.s32 1, %v1535
    %v1537 = vrot.slane %v1528, %v1536
    %v1538 = vlaneseq
    %v1539 = vshrl.u32 %v1538, 7
    %v1540 = vsub.s32 2, %v1539
    %v1541 = vrot.slane %v1528, %v1540
    %v1542 = vlaneseq
    %v1543 = vshrl.u32 %v1542, 7
    %v1544 = vsub.s32 3, %v1543
    %v1545 = vrot.slane %v1528, %v1544
    %v1546 = vlaneseq
    %v1547 = vshrl.u32 %v1546, 7
    %v1548 = vsub.s32 4, %v1547
    %v1549 = vrot.slane %v1528, %v1548
    %v1550 = vlaneseq
    %v1551 = vshrl.u32 %v1550, 7
    %v1552 = vsub.s32 5, %v1551
    %v1553 = vrot.slane %v1528, %v1552
    %v1560 = vmul.f32 %v1516, %v1533
    %v1561 = vmul.f32 %v1517, %v1537
    %v1562 = vmul.f32 %v1518, %v1541
    %v1563 = vmul.f32 %v1519, %v1545
    %v1564 = vmul.f32 %v1520, %v1549
    %v1565 = vmul.f32 %v1521, %v1553
    %v1566 = vmul.f32 %v1522, %v1533
    %v1567 = vmul.f32 %v1523, %v1537
    %v1568 = vmul.f32 %v1524, %v1541
    %v1569 = vmul.f32 %v1525, %v1545
    %v1570 = vmul.f32 %v1526, %v1549
    %v1571 = vmul.f32 %v1527, %v1553
    %v1572 = vld [vmem:[#allocation9] sm:$0x3f]
    %v1574 = vlaneseq
    %v1575 = vshrl.u32 %v1574, 7
    %v1576 = vsub.s32 0, %v1575
    %v1577 = vrot.slane %v1572, %v1576
    %v1578 = vlaneseq
    %v1579 = vshrl.u32 %v1578, 7
    %v1580 = vsub.s32 1, %v1579
    %v1581 = vrot.slane %v1572, %v1580
    %v1582 = vlaneseq
    %v1583 = vshrl.u32 %v1582, 7
    %v1584 = vsub.s32 2, %v1583
    %v1585 = vrot.slane %v1572, %v1584
    %v1586 = vlaneseq
    %v1587 = vshrl.u32 %v1586, 7
    %v1588 = vsub.s32 3, %v1587
    %v1589 = vrot.slane %v1572, %v1588
    %v1590 = vlaneseq
    %v1591 = vshrl.u32 %v1590, 7
    %v1592 = vsub.s32 4, %v1591
    %v1593 = vrot.slane %v1572, %v1592
    %v1594 = vlaneseq
    %v1595 = vshrl.u32 %v1594, 7
    %v1596 = vsub.s32 5, %v1595
    %v1597 = vrot.slane %v1572, %v1596
    %v1604 = vadd.f32 %v1560, %v1577
    %v1605 = vadd.f32 %v1561, %v1581
    %v1606 = vadd.f32 %v1562, %v1585
    %v1607 = vadd.f32 %v1563, %v1589
    %v1608 = vadd.f32 %v1564, %v1593
    %v1609 = vadd.f32 %v1565, %v1597
    %v1610 = vadd.f32 %v1566, %v1577
    %v1611 = vadd.f32 %v1567, %v1581
    %v1612 = vadd.f32 %v1568, %v1585
    %v1613 = vadd.f32 %v1569, %v1589
    %v1614 = vadd.f32 %v1570, %v1593
    %v1615 = vadd.f32 %v1571, %v1597
    %v1616 = vpack.c.bf16 %v1610, %v1604
    %v1617 = vpack.c.bf16 %v1611, %v1605
    %v1618 = vpack.c.bf16 %v1612, %v1606
    %v1619 = vpack.c.bf16 %v1613, %v1607
    %v1620 = vpack.c.bf16 %v1614, %v1608
    %v1621 = vpack.c.bf16 %v1615, %v1609
    %v1628 = vunpack.c.l.b16 %v1616
    %v1629 = vunpack.c.l.b16 %v1617
    %v1630 = vunpack.c.l.b16 %v1618
    %v1631 = vunpack.c.l.b16 %v1619
    %v1632 = vunpack.c.l.b16 %v1620
    %v1633 = vunpack.c.l.b16 %v1621
    %v1634 = vunpack.c.h.b16 %v1616
    %v1635 = vunpack.c.h.b16 %v1617
    %v1636 = vunpack.c.h.b16 %v1618
    %v1637 = vunpack.c.h.b16 %v1619
    %v1638 = vunpack.c.h.b16 %v1620
    %v1639 = vunpack.c.h.b16 %v1621
    %v1640 = vpack.c.b16 %v1629, %v1628
    %v1641 = vpack.c.b16 %v1631, %v1630
    %v1642 = vpack.c.b16 %v1633, %v1632
    %v1643 = vpack.c.b16 %v1635, %v1634
    %v1644 = vpack.c.b16 %v1637, %v1636
    %v1645 = vpack.c.b16 %v1639, %v1638
    %1652 = vst [vmem:[%s5] sm:$0xff] %v1640
    %1653 = vst [vmem:[%s5 + $0x8] sm:$0xff] %v1641
    %1654 = vst [vmem:[%s5 + $0x10] sm:$0xff] %v1642
    %1655 = vst [vmem:[%s5 + $0x18] sm:$0xff] %v1643
    %1656 = vst [vmem:[%s5 + $0x20] sm:$0xff] %v1644
    %1657 = vst [vmem:[%s5 + $0x28] sm:$0xff] %v1645
    // Predicated region
    $region42: #{mlm_head.2} parent=1 // pred_check
      _
    $region43: #{mlm_head.2} parent=1 // pred_check_branch
      %1659 = sbr.rel (0) target = $region45
    $region44: #{mlm_head.2} parent=1 // pred_region
      _
    $region45: #{mlm_head.2} parent=1 // pred_fallthru
      _
    // Predicated region
    $region46: #{mlm_head.2} parent=1 // pred_check
      _
    $region47: #{mlm_head.2} parent=1 // pred_check_branch
      %1661 = sbr.rel (0) target = $region49
    $region48: #{mlm_head.2} parent=1 // pred_region
      _
    $region49: #{mlm_head.2} parent=1 // pred_fallthru
      _
    %1662 = vsyncpa [#allocation3], 1
    %1663 = vsyncpa [#allocation5], 1
    %1664 = vsyncpa [#allocation8], 1

// kernel: mlm_head.3
$region0: #{mlm_head.3}
  #allocation0 [shape = 'u32[]', space=smem, size = 0x4, offset = 0x4, fixed_abs, tag = 'smem constant byte address 0x4 - core index']
  #allocation1 [shape = 'u32[144,128]{1,0:T(1,128)}', space=vmem, size = 0x12000, scoped, tag = 'internal scratch']
  %s0 = inlined_call_operand.vmem [shape: bf16[16,768], index: 0, kind: input, shape index: {}]
  %s1 = inlined_call_operand.hbm [shape: bf16[768,51200], index: 1, kind: input, shape index: {}]
  %s2 = inlined_call_operand.hbm [shape: f32[1,51200], index: 2, kind: input, shape index: {}]
  %s3 = inlined_call_operand.hbm [shape: f32[16,49411], index: 3, kind: output, shape index: {}]
  %s4 = sld [smem:[#allocation0]]
  $region53: #{mlm_head.3} parent=0
    _
  %s6 = ssub.s32 1, %s4
  %s7 = scalar_select 0, %s6, %s4
  $region1: #{mlm_head.3} parent=0
    #allocation2 [shape = 'u8[6291456]{0}', space=vmem, size = 0x600000, scoped, tag = 'input window, operand 1']
    #allocation3 [shape = 's32[2]{0}', space=sflag, size = 0x8, scoped, tag = 'scoped memory for mlm_head.3']
    #allocation4 [shape = 's32[2]{0}', space=sflag, size = 0x8, scoped, tag = 'scoped memory for mlm_head.3']
    #allocation5 [shape = 'u8[16384]{0}', space=vmem, size = 0x4000, scoped, tag = 'input window, operand 2']
    #allocation6 [shape = 's32[2]{0}', space=sflag, size = 0x8, scoped, tag = 'scoped memory for mlm_head.3']
    #allocation7 [shape = 'u8[262144]{0}', space=vmem, size = 0x40000, scoped, tag = 'output window, operand 0']
    %8 = vsyncpa [#allocation3], 0
    %s9 = scalar_lea.sflag [#allocation3], 1
    %10 = vsyncpa %s9, 0
    %11 = vsyncpa [#allocation6], 0
    %s12 = scalar_lea.sflag [#allocation6], 1
    %13 = vsyncpa %s12, 0
    %14 = vsyncpa [#allocation4], 0
    %s15 = scalar_lea.sflag [#allocation4], 1
    %16 = vsyncpa %s15, 0
    loop: start=0, step=1, limit=27
    $region2: #{mlm_head.3} parent=1 // loop_pre_header
      _
    $region3: #{mlm_head.3} parent=1 // loop_header
      %s18 = sphi 0, %s22
      %p19 = scmp.ge.s32.totalorder %s18, 27
      %s25 = sphi 0, %s37
      %s26 = sphi 0, %s33
      %s27 = sphi 0, %s25
      %s28 = sphi 0, %s26
      %s29 = sphi 0, %s27
      %s30 = sphi 0, %s28
      %s40 = sphi 0, %s42
      %s43 = sphi 0, %s40
      %s44 = sphi 0, %s43
      %s60 = sphi 0, %s44
      %s66 = sphi 0, %s68
      %s69 = sphi 0, %s66
      %s70 = sphi 0, %s69
      %s86 = sphi 0, %s70
      %s92 = sphi 0, %s94
      %s95 = sphi 0, %s92
      %s96 = sphi 0, %s95
      %s112 = sphi 0, %s96
      %s120 = sphi 0, %s122
      %s123 = sphi 0, %s120
      %s124 = sphi 0, %s123
      %s140 = sphi 0, %s124
    $region4: #{mlm_head.3} parent=1 // loop_header_branch
      %21 = sbr.rel (%p19) target = $region8
    $region5: #{mlm_head.3} parent=1 // loop_body
      %s23 = ssub.s32 %s18, 1
      %s24 = ssub.s32 %s18, 2
      %s31 = sadd.s32 1, %s26
      %p32 = scmp.ge.s32.totalorder %s31, 25
      %s33 = scalar_select %p32, 0, %s31
      %s34 = sadd.s32 1, %s25
      %s35 = scalar_select %p32, %s34, %s25
      %p36 = scmp.ge.s32.totalorder %s35, 1
      %s37 = scalar_select %p36, 0, %s35
      %s38 = ssub.s32 %s25, %s37
      %p39 = scmp.eq.s32.totalorder %s38, 0
      %s41 = sadd.s32 %s40, 1
      %s42 = scalar_select %p39, %s40, %s41
      %p45 = pneg %p39
      %p46 = scmp.eq.s32.totalorder %s18, 24
      %p47 = por %p45, %p46
      %p48 = scmp.ne.s32.totalorder %s40, %s43
      %p49 = scmp.eq.s32.totalorder %s18, 0
      %p50 = por %p48, %p49
      %p51 = scmp.ne.s32.totalorder %s40, %s43
      %p52 = scmp.eq.s32.totalorder %s23, 24
      %p53 = por %p51, %p52
      %p54 = scmp.ne.s32.totalorder %s43, %s44
      %p55 = scmp.eq.s32.totalorder %s23, 0
      %p56 = por %p54, %p55
      %p57 = scmp.ne.s32.totalorder %s43, %s44
      %p58 = scmp.eq.s32.totalorder %s24, 24
      %p59 = por %p57, %p58
      %p61 = scmp.ne.s32.totalorder %s44, %s60
      %p62 = scmp.eq.s32.totalorder %s24, 0
      %p63 = por %p61, %p62
      %s64 = ssub.s32 %s26, %s33
      %p65 = scmp.eq.s32.totalorder %s64, 0
      %s67 = sadd.s32 %s66, 1
      %s68 = scalar_select %p65, %s66, %s67
      %p71 = pneg %p65
      %p72 = scmp.eq.s32.totalorder %s18, 24
      %p73 = por %p71, %p72
      %p74 = scmp.ne.s32.totalorder %s66, %s69
      %p75 = scmp.eq.s32.totalorder %s18, 0
      %p76 = por %p74, %p75
      %p77 = scmp.ne.s32.totalorder %s66, %s69
      %p78 = scmp.eq.s32.totalorder %s23, 24
      %p79 = por %p77, %p78
      %p80 = scmp.ne.s32.totalorder %s69, %s70
      %p81 = scmp.eq.s32.totalorder %s23, 0
      %p82 = por %p80, %p81
      %p83 = scmp.ne.s32.totalorder %s69, %s70
      %p84 = scmp.eq.s32.totalorder %s24, 24
      %p85 = por %p83, %p84
      %p87 = scmp.ne.s32.totalorder %s70, %s86
      %p88 = scmp.eq.s32.totalorder %s24, 0
      %p89 = por %p87, %p88
      %s90 = ssub.s32 %s26, %s33
      %p91 = scmp.eq.s32.totalorder %s90, 0
      %s93 = sadd.s32 %s92, 1
      %s94 = scalar_select %p91, %s92, %s93
      %p97 = pneg %p91
      %p98 = scmp.eq.s32.totalorder %s18, 24
      %p99 = por %p97, %p98
      %p100 = scmp.ne.s32.totalorder %s92, %s95
      %p101 = scmp.eq.s32.totalorder %s18, 0
      %p102 = por %p100, %p101
      %p103 = scmp.ne.s32.totalorder %s92, %s95
      %p104 = scmp.eq.s32.totalorder %s23, 24
      %p105 = por %p103, %p104
      %p106 = scmp.ne.s32.totalorder %s95, %s96
      %p107 = scmp.eq.s32.totalorder %s23, 0
      %p108 = por %p106, %p107
      %p109 = scmp.ne.s32.totalorder %s95, %s96
      %p110 = scmp.eq.s32.totalorder %s24, 24
      %p111 = por %p109, %p110
      %p113 = scmp.ne.s32.totalorder %s96, %s112
      %p114 = scmp.eq.s32.totalorder %s24, 0
      %p115 = por %p113, %p114
      %s116 = ssub.s32 %s25, %s37
      %s117 = ssub.s32 %s26, %s33
      %s118 = sor.u32 %s116, %s117
      %p119 = scmp.eq.s32.totalorder %s118, 0
      %s121 = sadd.s32 %s120, 1
      %s122 = scalar_select %p119, %s120, %s121
      %p125 = pneg %p119
      %p126 = scmp.eq.s32.totalorder %s18, 24
      %p127 = por %p125, %p126
      %p128 = scmp.ne.s32.totalorder %s120, %s123
      %p129 = scmp.eq.s32.totalorder %s18, 0
      %p130 = por %p128, %p129
      %p131 = scmp.ne.s32.totalorder %s120, %s123
      %p132 = scmp.eq.s32.totalorder %s23, 24
      %p133 = por %p131, %p132
      %p134 = scmp.ne.s32.totalorder %s123, %s124
      %p135 = scmp.eq.s32.totalorder %s23, 0
      %p136 = por %p134, %p135
      %p137 = scmp.ne.s32.totalorder %s123, %s124
      %p138 = scmp.eq.s32.totalorder %s24, 24
      %p139 = por %p137, %p138
      %p141 = scmp.ne.s32.totalorder %s124, %s140
      %p142 = scmp.eq.s32.totalorder %s24, 0
      %p143 = por %p141, %p142
      %p144 = scmp.le.s32.totalorder 1, %s18
      %p145 = scmp.lt.s32.totalorder %s18, 26
      %p146 = pnand %p144, %p145
      %p147 = pneg %p146
      // Predicated region
      $region9: #{mlm_head.3} parent=5 // pred_check
        _
      $region10: #{mlm_head.3} parent=5 // pred_check_branch
        %149 = sbr.rel (%p146) target = $region12
      $region11: #{mlm_head.3} parent=5 // pred_region
        %s150 = ssub.s32 %s18, 1
        // Predicated region
        $region13: #{mlm_head.3} parent=11 // pred_check
          %p151 = pneg %p56
        $region14: #{mlm_head.3} parent=11 // pred_check_branch
          %153 = sbr.rel (%p151) target = $region16
        $region15: #{mlm_head.3} parent=11 // pred_region
          %s154 = smul.u32 2, %s27
          %p155 = scmp.lt.s32.totalorder %s154, 1
          %s156 = scalar_select %p155, %s154, 1
          %s157 = smul.addr %s156, 6
          %s158 = smul.addr %s157, 4
          %s159 = scalar_lea.vmem %s0, %s158
          %s160 = smul.u32 2, %s27
        $region16: #{mlm_head.3} parent=11 // pred_fallthru
          _
      $region12: #{mlm_head.3} parent=5 // pred_fallthru
        _
      %p161 = scmp.lt.s32.totalorder %s18, 25
      // Predicated region
      $region17: #{mlm_head.3} parent=5 // pred_check
        %p162 = pneg %p161
      $region18: #{mlm_head.3} parent=5 // pred_check_branch
        %164 = sbr.rel (%p162) target = $region20
      $region19: #{mlm_head.3} parent=5 // pred_region
        // Predicated region
        $region21: #{mlm_head.3} parent=19 // pred_check
          %p165 = pneg %p76
        $region22: #{mlm_head.3} parent=19 // pred_check_branch
          %167 = sbr.rel (%p165) target = $region24
        $region23: #{mlm_head.3} parent=19 // pred_region
          %s168 = sand.u32 %s66, 1
          %s169 = scalar_lea.sflag [#allocation3], %s168
          %s170 = sand.u32 %s66, 1
          %s171 = smul.addr %s170, 6144
          %s172 = scalar_lea.vmem [#allocation2], %s171
          %s173 = smul.u32 16, %s26
          %s175 = ssub.s32 98304, 98304
          %176 = vsyncadd %s169, %s175
          %s177 = smul.addr %s173, 64
          %s178 = scalar_lea.hbm %s1, %s177
          %s179 = sshll.u32 %s172, 4
          %s180 = int_to_ptr.vmem [resolvable:$true] %s179
          %185 = dma.hbm_to_vmem [thread:$0]  %s178, 98304, %s180, %s169, 25600, 1024, 64
        $region24: #{mlm_head.3} parent=19 // pred_fallthru
          _
        // Predicated region
        $region25: #{mlm_head.3} parent=19 // pred_check
          %p186 = pneg %p102
        $region26: #{mlm_head.3} parent=19 // pred_check_branch
          %188 = sbr.rel (%p186) target = $region28
        $region27: #{mlm_head.3} parent=19 // pred_region
          %s189 = sand.u32 %s92, 1
          %s190 = scalar_lea.sflag [#allocation6], %s189
          %s191 = sand.u32 %s92, 1
          %s192 = smul.addr %s191, 16
          %s193 = scalar_lea.vmem [#allocation5], %s192
          %s194 = smul.u32 16, %s26
          %s196 = ssub.s32 256, 256
          %197 = vsyncadd %s190, %s196
          %s198 = smul.addr %s194, 16
          %s199 = scalar_lea.hbm %s2, %s198
          %s201 = sshll.u32 %s193, 4
          %s202 = int_to_ptr.vmem [resolvable:$true] %s201
          %204 = dma.hbm_to_vmem [thread:$0]  %s199, 256, %s202, %s190
        $region28: #{mlm_head.3} parent=19 // pred_fallthru
          _
      $region20: #{mlm_head.3} parent=5 // pred_fallthru
        _
      %p205 = scmp.le.s32.totalorder 1, %s18
      %p206 = scmp.lt.s32.totalorder %s18, 26
      %p207 = pnand %p205, %p206
      %p208 = pneg %p207
      // Predicated region
      $region29: #{mlm_head.3} parent=5 // pred_check
        _
      $region30: #{mlm_head.3} parent=5 // pred_check_branch
        %210 = sbr.rel (%p207) target = $region32
      $region31: #{mlm_head.3} parent=5 // pred_region
        %s211 = ssub.s32 %s18, 1
        %s212 = sand.u32 %s69, 1
        %s213 = scalar_lea.sflag [#allocation3], %s212
        %s214 = sand.u32 %s69, 1
        %s215 = smul.addr %s214, 6144
        %s216 = scalar_lea.vmem [#allocation2], %s215
        // Predicated region
        $region33: #{mlm_head.3} parent=31 // pred_check
          %p217 = pneg %p82
        $region34: #{mlm_head.3} parent=31 // pred_check_branch
          %219 = sbr.rel (%p217) target = $region36
        $region35: #{mlm_head.3} parent=31 // pred_region
          %220 = dma.done %s213, 98304
        $region36: #{mlm_head.3} parent=31 // pred_fallthru
          _
        %s221 = sand.u32 %s95, 1
        %s222 = scalar_lea.sflag [#allocation6], %s221
        %s223 = sand.u32 %s95, 1
        %s224 = smul.addr %s223, 16
        %s225 = scalar_lea.vmem [#allocation5], %s224
        // Predicated region
        $region37: #{mlm_head.3} parent=31 // pred_check
          %p226 = pneg %p108
        $region38: #{mlm_head.3} parent=31 // pred_check_branch
          %228 = sbr.rel (%p226) target = $region40
        $region39: #{mlm_head.3} parent=31 // pred_region
          %229 = dma.done %s222, 256
        $region40: #{mlm_head.3} parent=31 // pred_fallthru
          _
        %s230 = smul.u32 2, %s27
        %p231 = scmp.lt.s32.totalorder %s230, 1
        %s232 = scalar_select %p231, %s230, 1
        %s233 = smul.addr %s232, 6
        %s234 = smul.addr %s233, 4
        %s235 = scalar_lea.vmem %s0, %s234
        %p236 = pneg %p56
        %p237 = pneg %p53
        %s238 = sand.u32 %s69, 1
        %s239 = scalar_lea.sflag [#allocation3], %s238
        %s240 = sand.u32 %s69, 1
        %s241 = smul.addr %s240, 6144
        %s242 = scalar_lea.vmem [#allocation2], %s241
        %p243 = pneg %p82
        %p244 = pneg %p79
        %s245 = sand.u32 %s95, 1
        %s246 = scalar_lea.sflag [#allocation6], %s245
        %s247 = sand.u32 %s95, 1
        %s248 = smul.addr %s247, 16
        %s249 = scalar_lea.vmem [#allocation5], %s248
        %p250 = pneg %p108
        %p251 = pneg %p105
        %p252 = pneg %p136
        %p253 = pneg %p133
        %s254 = sand.u32 %s123, 1
        %s255 = scalar_lea.sflag [#allocation4], %s254
        %s256 = sand.u32 %s123, 1
        %s257 = smul.addr %s256, 256
        %s258 = scalar_lea.vmem [#allocation7], %s257
        %s259 = smul.u32 2, %s27
        %p260 = scmp.lt.s32.totalorder %s259, 1
        %s261 = scalar_select %p260, %s259, 1
        %s262 = smul.addr %s261, 6
        %s263 = smul.addr %s262, 4
        %s264 = scalar_lea.vmem %s0, %s263
        %s265 = smul.u32 2, %s27
        %s266 = smul.u32 16, %s28
        %s267 = smul.u32 16, %s28
        %s268 = smul.u32 2, %s27
        %s269 = smul.u32 16, %s28
        %s270 = ssub.s32 387, %s269
        %p271 = scmp.lt.s32.totalorder %s270, 16
        %s272 = scalar_select %p271, %s270, 16
        %s273 = smul.u32 256, %s272
        %v274 = vld [vmem:[%s264] sm:$0xff]
        %v275 = vld [vmem:[%s264 + $0x8] sm:$0xff]
        %v276 = vld [vmem:[%s264 + $0x10] sm:$0xff]
        %v277 = vld [vmem:[%s264 + $0x18] sm:$0xff]
        %v278 = vld [vmem:[%s264 + $0x20] sm:$0xff]
        %v279 = vld [vmem:[%s264 + $0x28] sm:$0xff]
        %v280 = vld [vmem:[%s216] sm:$0xff]
        %v281 = vld [vmem:[%s216 + $0x8] sm:$0xff]
        %v282 = vld [vmem:[%s216 + $0x10] sm:$0xff]
        %v283 = vld [vmem:[%s216 + $0x18] sm:$0xff]
        %v284 = vld [vmem:[%s216 + $0x20] sm:$0xff]
        %v285 = vld [vmem:[%s216 + $0x28] sm:$0xff]
        %v286 = vld [vmem:[%s216 + $0x30] sm:$0xff]
        %v287 = vld [vmem:[%s216 + $0x38] sm:$0xff]
        %v288 = vld [vmem:[%s216 + $0x40] sm:$0xff]
        %v289 = vld [vmem:[%s216 + $0x48] sm:$0xff]
        %v290 = vld [vmem:[%s216 + $0x50] sm:$0xff]
        %v291 = vld [vmem:[%s216 + $0x58] sm:$0xff]
        %v292 = vld [vmem:[%s216 + $0x60] sm:$0xff]
        %v293 = vld [vmem:[%s216 + $0x68] sm:$0xff]
        %v294 = vld [vmem:[%s216 + $0x70] sm:$0xff]
        %v295 = vld [vmem:[%s216 + $0x78] sm:$0xff]
        %v296 = vld [vmem:[%s216 + $0x80] sm:$0xff]
        %v297 = vld [vmem:[%s216 + $0x88] sm:$0xff]
        %v298 = vld [vmem:[%s216 + $0x90] sm:$0xff]
        %v299 = vld [vmem:[%s216 + $0x98] sm:$0xff]
        %v300 = vld [vmem:[%s216 + $0xa0] sm:$0xff]
        %v301 = vld [vmem:[%s216 + $0xa8] sm:$0xff]
        %v302 = vld [vmem:[%s216 + $0xb0] sm:$0xff]
        %v303 = vld [vmem:[%s216 + $0xb8] sm:$0xff]
        %v304 = vld [vmem:[%s216 + $0xc0] sm:$0xff]
        %v305 = vld [vmem:[%s216 + $0xc8] sm:$0xff]
        %v306 = vld [vmem:[%s216 + $0xd0] sm:$0xff]
        %v307 = vld [vmem:[%s216 + $0xd8] sm:$0xff]
        %v308 = vld [vmem:[%s216 + $0xe0] sm:$0xff]
        %v309 = vld [vmem:[%s216 + $0xe8] sm:$0xff]
        %v310 = vld [vmem:[%s216 + $0xf0] sm:$0xff]
        %v311 = vld [vmem:[%s216 + $0xf8] sm:$0xff]
        %v312 = vld [vmem:[%s216 + $0x100] sm:$0xff]
        %v313 = vld [vmem:[%s216 + $0x108] sm:$0xff]
        %v314 = vld [vmem:[%s216 + $0x110] sm:$0xff]
        %v315 = vld [vmem:[%s216 + $0x118] sm:$0xff]
        %v316 = vld [vmem:[%s216 + $0x120] sm:$0xff]
        %v317 = vld [vmem:[%s216 + $0x128] sm:$0xff]
        %v318 = vld [vmem:[%s216 + $0x130] sm:$0xff]
        %v319 = vld [vmem:[%s216 + $0x138] sm:$0xff]
        %v320 = vld [vmem:[%s216 + $0x140] sm:$0xff]
        %v321 = vld [vmem:[%s216 + $0x148] sm:$0xff]
        %v322 = vld [vmem:[%s216 + $0x150] sm:$0xff]
        %v323 = vld [vmem:[%s216 + $0x158] sm:$0xff]
        %v324 = vld [vmem:[%s216 + $0x160] sm:$0xff]
        %v325 = vld [vmem:[%s216 + $0x168] sm:$0xff]
        %v326 = vld [vmem:[%s216 + $0x170] sm:$0xff]
        %v327 = vld [vmem:[%s216 + $0x178] sm:$0xff]
        %v328 = vld [vmem:[%s216 + $0x180] sm:$0xff]
        %v329 = vld [vmem:[%s216 + $0x188] sm:$0xff]
        %v330 = vld [vmem:[%s216 + $0x190] sm:$0xff]
        %v331 = vld [vmem:[%s216 + $0x198] sm:$0xff]
        %v332 = vld [vmem:[%s216 + $0x1a0] sm:$0xff]
        %v333 = vld [vmem:[%s216 + $0x1a8] sm:$0xff]
        %v334 = vld [vmem:[%s216 + $0x1b0] sm:$0xff]
        %v335 = vld [vmem:[%s216 + $0x1b8] sm:$0xff]
        %v336 = vld [vmem:[%s216 + $0x1c0] sm:$0xff]
        %v337 = vld [vmem:[%s216 + $0x1c8] sm:$0xff]
        %v338 = vld [vmem:[%s216 + $0x1d0] sm:$0xff]
        %v339 = vld [vmem:[%s216 + $0x1d8] sm:$0xff]
        %v340 = vld [vmem:[%s216 + $0x1e0] sm:$0xff]
        %v341 = vld [vmem:[%s216 + $0x1e8] sm:$0xff]
        %v342 = vld [vmem:[%s216 + $0x1f0] sm:$0xff]
        %v343 = vld [vmem:[%s216 + $0x1f8] sm:$0xff]
        %v344 = vld [vmem:[%s216 + $0x200] sm:$0xff]
        %v345 = vld [vmem:[%s216 + $0x208] sm:$0xff]
        %v346 = vld [vmem:[%s216 + $0x210] sm:$0xff]
        %v347 = vld [vmem:[%s216 + $0x218] sm:$0xff]
        %v348 = vld [vmem:[%s216 + $0x220] sm:$0xff]
        %v349 = vld [vmem:[%s216 + $0x228] sm:$0xff]
        %v350 = vld [vmem:[%s216 + $0x230] sm:$0xff]
        %v351 = vld [vmem:[%s216 + $0x238] sm:$0xff]
        %v352 = vld [vmem:[%s216 + $0x240] sm:$0xff]
        %v353 = vld [vmem:[%s216 + $0x248] sm:$0xff]
        %v354 = vld [vmem:[%s216 + $0x250] sm:$0xff]
        %v355 = vld [vmem:[%s216 + $0x258] sm:$0xff]
        %v356 = vld [vmem:[%s216 + $0x260] sm:$0xff]
        %v357 = vld [vmem:[%s216 + $0x268] sm:$0xff]
        %v358 = vld [vmem:[%s216 + $0x270] sm:$0xff]
        %v359 = vld [vmem:[%s216 + $0x278] sm:$0xff]
        %v360 = vld [vmem:[%s216 + $0x280] sm:$0xff]
        %v361 = vld [vmem:[%s216 + $0x288] sm:$0xff]
        %v362 = vld [vmem:[%s216 + $0x290] sm:$0xff]
        %v363 = vld [vmem:[%s216 + $0x298] sm:$0xff]
        %v364 = vld [vmem:[%s216 + $0x2a0] sm:$0xff]
        %v365 = vld [vmem:[%s216 + $0x2a8] sm:$0xff]
        %v366 = vld [vmem:[%s216 + $0x2b0] sm:$0xff]
        %v367 = vld [vmem:[%s216 + $0x2b8] sm:$0xff]
        %v368 = vld [vmem:[%s216 + $0x2c0] sm:$0xff]
        %v369 = vld [vmem:[%s216 + $0x2c8] sm:$0xff]
        %v370 = vld [vmem:[%s216 + $0x2d0] sm:$0xff]
        %v371 = vld [vmem:[%s216 + $0x2d8] sm:$0xff]
        %v372 = vld [vmem:[%s216 + $0x2e0] sm:$0xff]
        %v373 = vld [vmem:[%s216 + $0x2e8] sm:$0xff]
        %v374 = vld [vmem:[%s216 + $0x2f0] sm:$0xff]
        %v375 = vld [vmem:[%s216 + $0x2f8] sm:$0xff]
        %v376 = vld [vmem:[%s216 + $0x300] sm:$0xff]
        %v377 = vld [vmem:[%s216 + $0x308] sm:$0xff]
        %v378 = vld [vmem:[%s216 + $0x310] sm:$0xff]
        %v379 = vld [vmem:[%s216 + $0x318] sm:$0xff]
        %v380 = vld [vmem:[%s216 + $0x320] sm:$0xff]
        %v381 = vld [vmem:[%s216 + $0x328] sm:$0xff]
        %v382 = vld [vmem:[%s216 + $0x330] sm:$0xff]
        %v383 = vld [vmem:[%s216 + $0x338] sm:$0xff]
        %v384 = vld [vmem:[%s216 + $0x340] sm:$0xff]
        %v385 = vld [vmem:[%s216 + $0x348] sm:$0xff]
        %v386 = vld [vmem:[%s216 + $0x350] sm:$0xff]
        %v387 = vld [vmem:[%s216 + $0x358] sm:$0xff]
        %v388 = vld [vmem:[%s216 + $0x360] sm:$0xff]
        %v389 = vld [vmem:[%s216 + $0x368] sm:$0xff]
        %v390 = vld [vmem:[%s216 + $0x370] sm:$0xff]
        %v391 = vld [vmem:[%s216 + $0x378] sm:$0xff]
        %v392 = vld [vmem:[%s216 + $0x380] sm:$0xff]
        %v393 = vld [vmem:[%s216 + $0x388] sm:$0xff]
        %v394 = vld [vmem:[%s216 + $0x390] sm:$0xff]
        %v395 = vld [vmem:[%s216 + $0x398] sm:$0xff]
        %v396 = vld [vmem:[%s216 + $0x3a0] sm:$0xff]
        %v397 = vld [vmem:[%s216 + $0x3a8] sm:$0xff]
        %v398 = vld [vmem:[%s216 + $0x3b0] sm:$0xff]
        %v399 = vld [vmem:[%s216 + $0x3b8] sm:$0xff]
        %v400 = vld [vmem:[%s216 + $0x3c0] sm:$0xff]
        %v401 = vld [vmem:[%s216 + $0x3c8] sm:$0xff]
        %v402 = vld [vmem:[%s216 + $0x3d0] sm:$0xff]
        %v403 = vld [vmem:[%s216 + $0x3d8] sm:$0xff]
        %v404 = vld [vmem:[%s216 + $0x3e0] sm:$0xff]
        %v405 = vld [vmem:[%s216 + $0x3e8] sm:$0xff]
        %v406 = vld [vmem:[%s216 + $0x3f0] sm:$0xff]
        %v407 = vld [vmem:[%s216 + $0x3f8] sm:$0xff]
        %v408 = vld [vmem:[%s216 + $0x400] sm:$0xff]
        %v409 = vld [vmem:[%s216 + $0x408] sm:$0xff]
        %v410 = vld [vmem:[%s216 + $0x410] sm:$0xff]
        %v411 = vld [vmem:[%s216 + $0x418] sm:$0xff]
        %v412 = vld [vmem:[%s216 + $0x420] sm:$0xff]
        %v413 = vld [vmem:[%s216 + $0x428] sm:$0xff]
        %v414 = vld [vmem:[%s216 + $0x430] sm:$0xff]
        %v415 = vld [vmem:[%s216 + $0x438] sm:$0xff]
        %v416 = vld [vmem:[%s216 + $0x440] sm:$0xff]
        %v417 = vld [vmem:[%s216 + $0x448] sm:$0xff]
        %v418 = vld [vmem:[%s216 + $0x450] sm:$0xff]
        %v419 = vld [vmem:[%s216 + $0x458] sm:$0xff]
        %v420 = vld [vmem:[%s216 + $0x460] sm:$0xff]
        %v421 = vld [vmem:[%s216 + $0x468] sm:$0xff]
        %v422 = vld [vmem:[%s216 + $0x470] sm:$0xff]
        %v423 = vld [vmem:[%s216 + $0x478] sm:$0xff]
        %v424 = vld [vmem:[%s216 + $0x480] sm:$0xff]
        %v425 = vld [vmem:[%s216 + $0x488] sm:$0xff]
        %v426 = vld [vmem:[%s216 + $0x490] sm:$0xff]
        %v427 = vld [vmem:[%s216 + $0x498] sm:$0xff]
        %v428 = vld [vmem:[%s216 + $0x4a0] sm:$0xff]
        %v429 = vld [vmem:[%s216 + $0x4a8] sm:$0xff]
        %v430 = vld [vmem:[%s216 + $0x4b0] sm:$0xff]
        %v431 = vld [vmem:[%s216 + $0x4b8] sm:$0xff]
        %v432 = vld [vmem:[%s216 + $0x4c0] sm:$0xff]
        %v433 = vld [vmem:[%s216 + $0x4c8] sm:$0xff]
        %v434 = vld [vmem:[%s216 + $0x4d0] sm:$0xff]
        %v435 = vld [vmem:[%s216 + $0x4d8] sm:$0xff]
        %v436 = vld [vmem:[%s216 + $0x4e0] sm:$0xff]
        %v437 = vld [vmem:[%s216 + $0x4e8] sm:$0xff]
        %v438 = vld [vmem:[%s216 + $0x4f0] sm:$0xff]
        %v439 = vld [vmem:[%s216 + $0x4f8] sm:$0xff]
        %v440 = vld [vmem:[%s216 + $0x500] sm:$0xff]
        %v441 = vld [vmem:[%s216 + $0x508] sm:$0xff]
        %v442 = vld [vmem:[%s216 + $0x510] sm:$0xff]
        %v443 = vld [vmem:[%s216 + $0x518] sm:$0xff]
        %v444 = vld [vmem:[%s216 + $0x520] sm:$0xff]
        %v445 = vld [vmem:[%s216 + $0x528] sm:$0xff]
        %v446 = vld [vmem:[%s216 + $0x530] sm:$0xff]
        %v447 = vld [vmem:[%s216 + $0x538] sm:$0xff]
        %v448 = vld [vmem:[%s216 + $0x540] sm:$0xff]
        %v449 = vld [vmem:[%s216 + $0x548] sm:$0xff]
        %v450 = vld [vmem:[%s216 + $0x550] sm:$0xff]
        %v451 = vld [vmem:[%s216 + $0x558] sm:$0xff]
        %v452 = vld [vmem:[%s216 + $0x560] sm:$0xff]
        %v453 = vld [vmem:[%s216 + $0x568] sm:$0xff]
        %v454 = vld [vmem:[%s216 + $0x570] sm:$0xff]
        %v455 = vld [vmem:[%s216 + $0x578] sm:$0xff]
        %v456 = vld [vmem:[%s216 + $0x580] sm:$0xff]
        %v457 = vld [vmem:[%s216 + $0x588] sm:$0xff]
        %v458 = vld [vmem:[%s216 + $0x590] sm:$0xff]
        %v459 = vld [vmem:[%s216 + $0x598] sm:$0xff]
        %v460 = vld [vmem:[%s216 + $0x5a0] sm:$0xff]
        %v461 = vld [vmem:[%s216 + $0x5a8] sm:$0xff]
        %v462 = vld [vmem:[%s216 + $0x5b0] sm:$0xff]
        %v463 = vld [vmem:[%s216 + $0x5b8] sm:$0xff]
        %v464 = vld [vmem:[%s216 + $0x5c0] sm:$0xff]
        %v465 = vld [vmem:[%s216 + $0x5c8] sm:$0xff]
        %v466 = vld [vmem:[%s216 + $0x5d0] sm:$0xff]
        %v467 = vld [vmem:[%s216 + $0x5d8] sm:$0xff]
        %v468 = vld [vmem:[%s216 + $0x5e0] sm:$0xff]
        %v469 = vld [vmem:[%s216 + $0x5e8] sm:$0xff]
        %v470 = vld [vmem:[%s216 + $0x5f0] sm:$0xff]
        %v471 = vld [vmem:[%s216 + $0x5f8] sm:$0xff]
        %v472 = vld [vmem:[%s216 + $0x600] sm:$0xff]
        %v473 = vld [vmem:[%s216 + $0x608] sm:$0xff]
        %v474 = vld [vmem:[%s216 + $0x610] sm:$0xff]
        %v475 = vld [vmem:[%s216 + $0x618] sm:$0xff]
        %v476 = vld [vmem:[%s216 + $0x620] sm:$0xff]
        %v477 = vld [vmem:[%s216 + $0x628] sm:$0xff]
        %v478 = vld [vmem:[%s216 + $0x630] sm:$0xff]
        %v479 = vld [vmem:[%s216 + $0x638] sm:$0xff]
        %v480 = vld [vmem:[%s216 + $0x640] sm:$0xff]
        %v481 = vld [vmem:[%s216 + $0x648] sm:$0xff]
        %v482 = vld [vmem:[%s216 + $0x650] sm:$0xff]
        %v483 = vld [vmem:[%s216 + $0x658] sm:$0xff]
        %v484 = vld [vmem:[%s216 + $0x660] sm:$0xff]
        %v485 = vld [vmem:[%s216 + $0x668] sm:$0xff]
        %v486 = vld [vmem:[%s216 + $0x670] sm:$0xff]
        %v487 = vld [vmem:[%s216 + $0x678] sm:$0xff]
        %v488 = vld [vmem:[%s216 + $0x680] sm:$0xff]
        %v489 = vld [vmem:[%s216 + $0x688] sm:$0xff]
        %v490 = vld [vmem:[%s216 + $0x690] sm:$0xff]
        %v491 = vld [vmem:[%s216 + $0x698] sm:$0xff]
        %v492 = vld [vmem:[%s216 + $0x6a0] sm:$0xff]
        %v493 = vld [vmem:[%s216 + $0x6a8] sm:$0xff]
        %v494 = vld [vmem:[%s216 + $0x6b0] sm:$0xff]
        %v495 = vld [vmem:[%s216 + $0x6b8] sm:$0xff]
        %v496 = vld [vmem:[%s216 + $0x6c0] sm:$0xff]
        %v497 = vld [vmem:[%s216 + $0x6c8] sm:$0xff]
        %v498 = vld [vmem:[%s216 + $0x6d0] sm:$0xff]
        %v499 = vld [vmem:[%s216 + $0x6d8] sm:$0xff]
        %v500 = vld [vmem:[%s216 + $0x6e0] sm:$0xff]
        %v501 = vld [vmem:[%s216 + $0x6e8] sm:$0xff]
        %v502 = vld [vmem:[%s216 + $0x6f0] sm:$0xff]
        %v503 = vld [vmem:[%s216 + $0x6f8] sm:$0xff]
        %v504 = vld [vmem:[%s216 + $0x700] sm:$0xff]
        %v505 = vld [vmem:[%s216 + $0x708] sm:$0xff]
        %v506 = vld [vmem:[%s216 + $0x710] sm:$0xff]
        %v507 = vld [vmem:[%s216 + $0x718] sm:$0xff]
        %v508 = vld [vmem:[%s216 + $0x720] sm:$0xff]
        %v509 = vld [vmem:[%s216 + $0x728] sm:$0xff]
        %v510 = vld [vmem:[%s216 + $0x730] sm:$0xff]
        %v511 = vld [vmem:[%s216 + $0x738] sm:$0xff]
        %v512 = vld [vmem:[%s216 + $0x740] sm:$0xff]
        %v513 = vld [vmem:[%s216 + $0x748] sm:$0xff]
        %v514 = vld [vmem:[%s216 + $0x750] sm:$0xff]
        %v515 = vld [vmem:[%s216 + $0x758] sm:$0xff]
        %v516 = vld [vmem:[%s216 + $0x760] sm:$0xff]
        %v517 = vld [vmem:[%s216 + $0x768] sm:$0xff]
        %v518 = vld [vmem:[%s216 + $0x770] sm:$0xff]
        %v519 = vld [vmem:[%s216 + $0x778] sm:$0xff]
        %v520 = vld [vmem:[%s216 + $0x780] sm:$0xff]
        %v521 = vld [vmem:[%s216 + $0x788] sm:$0xff]
        %v522 = vld [vmem:[%s216 + $0x790] sm:$0xff]
        %v523 = vld [vmem:[%s216 + $0x798] sm:$0xff]
        %v524 = vld [vmem:[%s216 + $0x7a0] sm:$0xff]
        %v525 = vld [vmem:[%s216 + $0x7a8] sm:$0xff]
        %v526 = vld [vmem:[%s216 + $0x7b0] sm:$0xff]
        %v527 = vld [vmem:[%s216 + $0x7b8] sm:$0xff]
        %v528 = vld [vmem:[%s216 + $0x7c0] sm:$0xff]
        %v529 = vld [vmem:[%s216 + $0x7c8] sm:$0xff]
        %v530 = vld [vmem:[%s216 + $0x7d0] sm:$0xff]
        %v531 = vld [vmem:[%s216 + $0x7d8] sm:$0xff]
        %v532 = vld [vmem:[%s216 + $0x7e0] sm:$0xff]
        %v533 = vld [vmem:[%s216 + $0x7e8] sm:$0xff]
        %v534 = vld [vmem:[%s216 + $0x7f0] sm:$0xff]
        %v535 = vld [vmem:[%s216 + $0x7f8] sm:$0xff]
        %v536 = vld [vmem:[%s216 + $0x800] sm:$0xff]
        %v537 = vld [vmem:[%s216 + $0x808] sm:$0xff]
        %v538 = vld [vmem:[%s216 + $0x810] sm:$0xff]
        %v539 = vld [vmem:[%s216 + $0x818] sm:$0xff]
        %v540 = vld [vmem:[%s216 + $0x820] sm:$0xff]
        %v541 = vld [vmem:[%s216 + $0x828] sm:$0xff]
        %v542 = vld [vmem:[%s216 + $0x830] sm:$0xff]
        %v543 = vld [vmem:[%s216 + $0x838] sm:$0xff]
        %v544 = vld [vmem:[%s216 + $0x840] sm:$0xff]
        %v545 = vld [vmem:[%s216 + $0x848] sm:$0xff]
        %v546 = vld [vmem:[%s216 + $0x850] sm:$0xff]
        %v547 = vld [vmem:[%s216 + $0x858] sm:$0xff]
        %v548 = vld [vmem:[%s216 + $0x860] sm:$0xff]
        %v549 = vld [vmem:[%s216 + $0x868] sm:$0xff]
        %v550 = vld [vmem:[%s216 + $0x870] sm:$0xff]
        %v551 = vld [vmem:[%s216 + $0x878] sm:$0xff]
        %v552 = vld [vmem:[%s216 + $0x880] sm:$0xff]
        %v553 = vld [vmem:[%s216 + $0x888] sm:$0xff]
        %v554 = vld [vmem:[%s216 + $0x890] sm:$0xff]
        %v555 = vld [vmem:[%s216 + $0x898] sm:$0xff]
        %v556 = vld [vmem:[%s216 + $0x8a0] sm:$0xff]
        %v557 = vld [vmem:[%s216 + $0x8a8] sm:$0xff]
        %v558 = vld [vmem:[%s216 + $0x8b0] sm:$0xff]
        %v559 = vld [vmem:[%s216 + $0x8b8] sm:$0xff]
        %v560 = vld [vmem:[%s216 + $0x8c0] sm:$0xff]
        %v561 = vld [vmem:[%s216 + $0x8c8] sm:$0xff]
        %v562 = vld [vmem:[%s216 + $0x8d0] sm:$0xff]
        %v563 = vld [vmem:[%s216 + $0x8d8] sm:$0xff]
        %v564 = vld [vmem:[%s216 + $0x8e0] sm:$0xff]
        %v565 = vld [vmem:[%s216 + $0x8e8] sm:$0xff]
        %v566 = vld [vmem:[%s216 + $0x8f0] sm:$0xff]
        %v567 = vld [vmem:[%s216 + $0x8f8] sm:$0xff]
        %v568 = vld [vmem:[%s216 + $0x900] sm:$0xff]
        %v569 = vld [vmem:[%s216 + $0x908] sm:$0xff]
        %v570 = vld [vmem:[%s216 + $0x910] sm:$0xff]
        %v571 = vld [vmem:[%s216 + $0x918] sm:$0xff]
        %v572 = vld [vmem:[%s216 + $0x920] sm:$0xff]
        %v573 = vld [vmem:[%s216 + $0x928] sm:$0xff]
        %v574 = vld [vmem:[%s216 + $0x930] sm:$0xff]
        %v575 = vld [vmem:[%s216 + $0x938] sm:$0xff]
        %v576 = vld [vmem:[%s216 + $0x940] sm:$0xff]
        %v577 = vld [vmem:[%s216 + $0x948] sm:$0xff]
        %v578 = vld [vmem:[%s216 + $0x950] sm:$0xff]
        %v579 = vld [vmem:[%s216 + $0x958] sm:$0xff]
        %v580 = vld [vmem:[%s216 + $0x960] sm:$0xff]
        %v581 = vld [vmem:[%s216 + $0x968] sm:$0xff]
        %v582 = vld [vmem:[%s216 + $0x970] sm:$0xff]
        %v583 = vld [vmem:[%s216 + $0x978] sm:$0xff]
        %v584 = vld [vmem:[%s216 + $0x980] sm:$0xff]
        %v585 = vld [vmem:[%s216 + $0x988] sm:$0xff]
        %v586 = vld [vmem:[%s216 + $0x990] sm:$0xff]
        %v587 = vld [vmem:[%s216 + $0x998] sm:$0xff]
        %v588 = vld [vmem:[%s216 + $0x9a0] sm:$0xff]
        %v589 = vld [vmem:[%s216 + $0x9a8] sm:$0xff]
        %v590 = vld [vmem:[%s216 + $0x9b0] sm:$0xff]
        %v591 = vld [vmem:[%s216 + $0x9b8] sm:$0xff]
        %v592 = vld [vmem:[%s216 + $0x9c0] sm:$0xff]
        %v593 = vld [vmem:[%s216 + $0x9c8] sm:$0xff]
        %v594 = vld [vmem:[%s216 + $0x9d0] sm:$0xff]
        %v595 = vld [vmem:[%s216 + $0x9d8] sm:$0xff]
        %v596 = vld [vmem:[%s216 + $0x9e0] sm:$0xff]
        %v597 = vld [vmem:[%s216 + $0x9e8] sm:$0xff]
        %v598 = vld [vmem:[%s216 + $0x9f0] sm:$0xff]
        %v599 = vld [vmem:[%s216 + $0x9f8] sm:$0xff]
        %v600 = vld [vmem:[%s216 + $0xa00] sm:$0xff]
        %v601 = vld [vmem:[%s216 + $0xa08] sm:$0xff]
        %v602 = vld [vmem:[%s216 + $0xa10] sm:$0xff]
        %v603 = vld [vmem:[%s216 + $0xa18] sm:$0xff]
        %v604 = vld [vmem:[%s216 + $0xa20] sm:$0xff]
        %v605 = vld [vmem:[%s216 + $0xa28] sm:$0xff]
        %v606 = vld [vmem:[%s216 + $0xa30] sm:$0xff]
        %v607 = vld [vmem:[%s216 + $0xa38] sm:$0xff]
        %v608 = vld [vmem:[%s216 + $0xa40] sm:$0xff]
        %v609 = vld [vmem:[%s216 + $0xa48] sm:$0xff]
        %v610 = vld [vmem:[%s216 + $0xa50] sm:$0xff]
        %v611 = vld [vmem:[%s216 + $0xa58] sm:$0xff]
        %v612 = vld [vmem:[%s216 + $0xa60] sm:$0xff]
        %v613 = vld [vmem:[%s216 + $0xa68] sm:$0xff]
        %v614 = vld [vmem:[%s216 + $0xa70] sm:$0xff]
        %v615 = vld [vmem:[%s216 + $0xa78] sm:$0xff]
        %v616 = vld [vmem:[%s216 + $0xa80] sm:$0xff]
        %v617 = vld [vmem:[%s216 + $0xa88] sm:$0xff]
        %v618 = vld [vmem:[%s216 + $0xa90] sm:$0xff]
        %v619 = vld [vmem:[%s216 + $0xa98] sm:$0xff]
        %v620 = vld [vmem:[%s216 + $0xaa0] sm:$0xff]
        %v621 = vld [vmem:[%s216 + $0xaa8] sm:$0xff]
        %v622 = vld [vmem:[%s216 + $0xab0] sm:$0xff]
        %v623 = vld [vmem:[%s216 + $0xab8] sm:$0xff]
        %v624 = vld [vmem:[%s216 + $0xac0] sm:$0xff]
        %v625 = vld [vmem:[%s216 + $0xac8] sm:$0xff]
        %v626 = vld [vmem:[%s216 + $0xad0] sm:$0xff]
        %v627 = vld [vmem:[%s216 + $0xad8] sm:$0xff]
        %v628 = vld [vmem:[%s216 + $0xae0] sm:$0xff]
        %v629 = vld [vmem:[%s216 + $0xae8] sm:$0xff]
        %v630 = vld [vmem:[%s216 + $0xaf0] sm:$0xff]
        %v631 = vld [vmem:[%s216 + $0xaf8] sm:$0xff]
        %v632 = vld [vmem:[%s216 + $0xb00] sm:$0xff]
        %v633 = vld [vmem:[%s216 + $0xb08] sm:$0xff]
        %v634 = vld [vmem:[%s216 + $0xb10] sm:$0xff]
        %v635 = vld [vmem:[%s216 + $0xb18] sm:$0xff]
        %v636 = vld [vmem:[%s216 + $0xb20] sm:$0xff]
        %v637 = vld [vmem:[%s216 + $0xb28] sm:$0xff]
        %v638 = vld [vmem:[%s216 + $0xb30] sm:$0xff]
        %v639 = vld [vmem:[%s216 + $0xb38] sm:$0xff]
        %v640 = vld [vmem:[%s216 + $0xb40] sm:$0xff]
        %v641 = vld [vmem:[%s216 + $0xb48] sm:$0xff]
        %v642 = vld [vmem:[%s216 + $0xb50] sm:$0xff]
        %v643 = vld [vmem:[%s216 + $0xb58] sm:$0xff]
        %v644 = vld [vmem:[%s216 + $0xb60] sm:$0xff]
        %v645 = vld [vmem:[%s216 + $0xb68] sm:$0xff]
        %v646 = vld [vmem:[%s216 + $0xb70] sm:$0xff]
        %v647 = vld [vmem:[%s216 + $0xb78] sm:$0xff]
        %v648 = vld [vmem:[%s216 + $0xb80] sm:$0xff]
        %v649 = vld [vmem:[%s216 + $0xb88] sm:$0xff]
        %v650 = vld [vmem:[%s216 + $0xb90] sm:$0xff]
        %v651 = vld [vmem:[%s216 + $0xb98] sm:$0xff]
        %v652 = vld [vmem:[%s216 + $0xba0] sm:$0xff]
        %v653 = vld [vmem:[%s216 + $0xba8] sm:$0xff]
        %v654 = vld [vmem:[%s216 + $0xbb0] sm:$0xff]
        %v655 = vld [vmem:[%s216 + $0xbb8] sm:$0xff]
        %v656 = vld [vmem:[%s216 + $0xbc0] sm:$0xff]
        %v657 = vld [vmem:[%s216 + $0xbc8] sm:$0xff]
        %v658 = vld [vmem:[%s216 + $0xbd0] sm:$0xff]
        %v659 = vld [vmem:[%s216 + $0xbd8] sm:$0xff]
        %v660 = vld [vmem:[%s216 + $0xbe0] sm:$0xff]
        %v661 = vld [vmem:[%s216 + $0xbe8] sm:$0xff]
        %v662 = vld [vmem:[%s216 + $0xbf0] sm:$0xff]
        %v663 = vld [vmem:[%s216 + $0xbf8] sm:$0xff]
        %v664 = vld [vmem:[%s216 + $0xc00] sm:$0xff]
        %v665 = vld [vmem:[%s216 + $0xc08] sm:$0xff]
        %v666 = vld [vmem:[%s216 + $0xc10] sm:$0xff]
        %v667 = vld [vmem:[%s216 + $0xc18] sm:$0xff]
        %v668 = vld [vmem:[%s216 + $0xc20] sm:$0xff]
        %v669 = vld [vmem:[%s216 + $0xc28] sm:$0xff]
        %v670 = vld [vmem:[%s216 + $0xc30] sm:$0xff]
        %v671 = vld [vmem:[%s216 + $0xc38] sm:$0xff]
        %v672 = vld [vmem:[%s216 + $0xc40] sm:$0xff]
        %v673 = vld [vmem:[%s216 + $0xc48] sm:$0xff]
        %v674 = vld [vmem:[%s216 + $0xc50] sm:$0xff]
        %v675 = vld [vmem:[%s216 + $0xc58] sm:$0xff]
        %v676 = vld [vmem:[%s216 + $0xc60] sm:$0xff]
        %v677 = vld [vmem:[%s216 + $0xc68] sm:$0xff]
        %v678 = vld [vmem:[%s216 + $0xc70] sm:$0xff]
        %v679 = vld [vmem:[%s216 + $0xc78] sm:$0xff]
        %v680 = vld [vmem:[%s216 + $0xc80] sm:$0xff]
        %v681 = vld [vmem:[%s216 + $0xc88] sm:$0xff]
        %v682 = vld [vmem:[%s216 + $0xc90] sm:$0xff]
        %v683 = vld [vmem:[%s216 + $0xc98] sm:$0xff]
        %v684 = vld [vmem:[%s216 + $0xca0] sm:$0xff]
        %v685 = vld [vmem:[%s216 + $0xca8] sm:$0xff]
        %v686 = vld [vmem:[%s216 + $0xcb0] sm:$0xff]
        %v687 = vld [vmem:[%s216 + $0xcb8] sm:$0xff]
        %v688 = vld [vmem:[%s216 + $0xcc0] sm:$0xff]
        %v689 = vld [vmem:[%s216 + $0xcc8] sm:$0xff]
        %v690 = vld [vmem:[%s216 + $0xcd0] sm:$0xff]
        %v691 = vld [vmem:[%s216 + $0xcd8] sm:$0xff]
        %v692 = vld [vmem:[%s216 + $0xce0] sm:$0xff]
        %v693 = vld [vmem:[%s216 + $0xce8] sm:$0xff]
        %v694 = vld [vmem:[%s216 + $0xcf0] sm:$0xff]
        %v695 = vld [vmem:[%s216 + $0xcf8] sm:$0xff]
        %v696 = vld [vmem:[%s216 + $0xd00] sm:$0xff]
        %v697 = vld [vmem:[%s216 + $0xd08] sm:$0xff]
        %v698 = vld [vmem:[%s216 + $0xd10] sm:$0xff]
        %v699 = vld [vmem:[%s216 + $0xd18] sm:$0xff]
        %v700 = vld [vmem:[%s216 + $0xd20] sm:$0xff]
        %v701 = vld [vmem:[%s216 + $0xd28] sm:$0xff]
        %v702 = vld [vmem:[%s216 + $0xd30] sm:$0xff]
        %v703 = vld [vmem:[%s216 + $0xd38] sm:$0xff]
        %v704 = vld [vmem:[%s216 + $0xd40] sm:$0xff]
        %v705 = vld [vmem:[%s216 + $0xd48] sm:$0xff]
        %v706 = vld [vmem:[%s216 + $0xd50] sm:$0xff]
        %v707 = vld [vmem:[%s216 + $0xd58] sm:$0xff]
        %v708 = vld [vmem:[%s216 + $0xd60] sm:$0xff]
        %v709 = vld [vmem:[%s216 + $0xd68] sm:$0xff]
        %v710 = vld [vmem:[%s216 + $0xd70] sm:$0xff]
        %v711 = vld [vmem:[%s216 + $0xd78] sm:$0xff]
        %v712 = vld [vmem:[%s216 + $0xd80] sm:$0xff]
        %v713 = vld [vmem:[%s216 + $0xd88] sm:$0xff]
        %v714 = vld [vmem:[%s216 + $0xd90] sm:$0xff]
        %v715 = vld [vmem:[%s216 + $0xd98] sm:$0xff]
        %v716 = vld [vmem:[%s216 + $0xda0] sm:$0xff]
        %v717 = vld [vmem:[%s216 + $0xda8] sm:$0xff]
        %v718 = vld [vmem:[%s216 + $0xdb0] sm:$0xff]
        %v719 = vld [vmem:[%s216 + $0xdb8] sm:$0xff]
        %v720 = vld [vmem:[%s216 + $0xdc0] sm:$0xff]
        %v721 = vld [vmem:[%s216 + $0xdc8] sm:$0xff]
        %v722 = vld [vmem:[%s216 + $0xdd0] sm:$0xff]
        %v723 = vld [vmem:[%s216 + $0xdd8] sm:$0xff]
        %v724 = vld [vmem:[%s216 + $0xde0] sm:$0xff]
        %v725 = vld [vmem:[%s216 + $0xde8] sm:$0xff]
        %v726 = vld [vmem:[%s216 + $0xdf0] sm:$0xff]
        %v727 = vld [vmem:[%s216 + $0xdf8] sm:$0xff]
        %v728 = vld [vmem:[%s216 + $0xe00] sm:$0xff]
        %v729 = vld [vmem:[%s216 + $0xe08] sm:$0xff]
        %v730 = vld [vmem:[%s216 + $0xe10] sm:$0xff]
        %v731 = vld [vmem:[%s216 + $0xe18] sm:$0xff]
        %v732 = vld [vmem:[%s216 + $0xe20] sm:$0xff]
        %v733 = vld [vmem:[%s216 + $0xe28] sm:$0xff]
        %v734 = vld [vmem:[%s216 + $0xe30] sm:$0xff]
        %v735 = vld [vmem:[%s216 + $0xe38] sm:$0xff]
        %v736 = vld [vmem:[%s216 + $0xe40] sm:$0xff]
        %v737 = vld [vmem:[%s216 + $0xe48] sm:$0xff]
        %v738 = vld [vmem:[%s216 + $0xe50] sm:$0xff]
        %v739 = vld [vmem:[%s216 + $0xe58] sm:$0xff]
        %v740 = vld [vmem:[%s216 + $0xe60] sm:$0xff]
        %v741 = vld [vmem:[%s216 + $0xe68] sm:$0xff]
        %v742 = vld [vmem:[%s216 + $0xe70] sm:$0xff]
        %v743 = vld [vmem:[%s216 + $0xe78] sm:$0xff]
        %v744 = vld [vmem:[%s216 + $0xe80] sm:$0xff]
        %v745 = vld [vmem:[%s216 + $0xe88] sm:$0xff]
        %v746 = vld [vmem:[%s216 + $0xe90] sm:$0xff]
        %v747 = vld [vmem:[%s216 + $0xe98] sm:$0xff]
        %v748 = vld [vmem:[%s216 + $0xea0] sm:$0xff]
        %v749 = vld [vmem:[%s216 + $0xea8] sm:$0xff]
        %v750 = vld [vmem:[%s216 + $0xeb0] sm:$0xff]
        %v751 = vld [vmem:[%s216 + $0xeb8] sm:$0xff]
        %v752 = vld [vmem:[%s216 + $0xec0] sm:$0xff]
        %v753 = vld [vmem:[%s216 + $0xec8] sm:$0xff]
        %v754 = vld [vmem:[%s216 + $0xed0] sm:$0xff]
        %v755 = vld [vmem:[%s216 + $0xed8] sm:$0xff]
        %v756 = vld [vmem:[%s216 + $0xee0] sm:$0xff]
        %v757 = vld [vmem:[%s216 + $0xee8] sm:$0xff]
        %v758 = vld [vmem:[%s216 + $0xef0] sm:$0xff]
        %v759 = vld [vmem:[%s216 + $0xef8] sm:$0xff]
        %v760 = vld [vmem:[%s216 + $0xf00] sm:$0xff]
        %v761 = vld [vmem:[%s216 + $0xf08] sm:$0xff]
        %v762 = vld [vmem:[%s216 + $0xf10] sm:$0xff]
        %v763 = vld [vmem:[%s216 + $0xf18] sm:$0xff]
        %v764 = vld [vmem:[%s216 + $0xf20] sm:$0xff]
        %v765 = vld [vmem:[%s216 + $0xf28] sm:$0xff]
        %v766 = vld [vmem:[%s216 + $0xf30] sm:$0xff]
        %v767 = vld [vmem:[%s216 + $0xf38] sm:$0xff]
        %v768 = vld [vmem:[%s216 + $0xf40] sm:$0xff]
        %v769 = vld [vmem:[%s216 + $0xf48] sm:$0xff]
        %v770 = vld [vmem:[%s216 + $0xf50] sm:$0xff]
        %v771 = vld [vmem:[%s216 + $0xf58] sm:$0xff]
        %v772 = vld [vmem:[%s216 + $0xf60] sm:$0xff]
        %v773 = vld [vmem:[%s216 + $0xf68] sm:$0xff]
        %v774 = vld [vmem:[%s216 + $0xf70] sm:$0xff]
        %v775 = vld [vmem:[%s216 + $0xf78] sm:$0xff]
        %v776 = vld [vmem:[%s216 + $0xf80] sm:$0xff]
        %v777 = vld [vmem:[%s216 + $0xf88] sm:$0xff]
        %v778 = vld [vmem:[%s216 + $0xf90] sm:$0xff]
        %v779 = vld [vmem:[%s216 + $0xf98] sm:$0xff]
        %v780 = vld [vmem:[%s216 + $0xfa0] sm:$0xff]
        %v781 = vld [vmem:[%s216 + $0xfa8] sm:$0xff]
        %v782 = vld [vmem:[%s216 + $0xfb0] sm:$0xff]
        %v783 = vld [vmem:[%s216 + $0xfb8] sm:$0xff]
        %v784 = vld [vmem:[%s216 + $0xfc0] sm:$0xff]
        %v785 = vld [vmem:[%s216 + $0xfc8] sm:$0xff]
        %v786 = vld [vmem:[%s216 + $0xfd0] sm:$0xff]
        %v787 = vld [vmem:[%s216 + $0xfd8] sm:$0xff]
        %v788 = vld [vmem:[%s216 + $0xfe0] sm:$0xff]
        %v789 = vld [vmem:[%s216 + $0xfe8] sm:$0xff]
        %v790 = vld [vmem:[%s216 + $0xff0] sm:$0xff]
        %v791 = vld [vmem:[%s216 + $0xff8] sm:$0xff]
        %v792 = vld [vmem:[%s216 + $0x1000] sm:$0xff]
        %v793 = vld [vmem:[%s216 + $0x1008] sm:$0xff]
        %v794 = vld [vmem:[%s216 + $0x1010] sm:$0xff]
        %v795 = vld [vmem:[%s216 + $0x1018] sm:$0xff]
        %v796 = vld [vmem:[%s216 + $0x1020] sm:$0xff]
        %v797 = vld [vmem:[%s216 + $0x1028] sm:$0xff]
        %v798 = vld [vmem:[%s216 + $0x1030] sm:$0xff]
        %v799 = vld [vmem:[%s216 + $0x1038] sm:$0xff]
        %v800 = vld [vmem:[%s216 + $0x1040] sm:$0xff]
        %v801 = vld [vmem:[%s216 + $0x1048] sm:$0xff]
        %v802 = vld [vmem:[%s216 + $0x1050] sm:$0xff]
        %v803 = vld [vmem:[%s216 + $0x1058] sm:$0xff]
        %v804 = vld [vmem:[%s216 + $0x1060] sm:$0xff]
        %v805 = vld [vmem:[%s216 + $0x1068] sm:$0xff]
        %v806 = vld [vmem:[%s216 + $0x1070] sm:$0xff]
        %v807 = vld [vmem:[%s216 + $0x1078] sm:$0xff]
        %v808 = vld [vmem:[%s216 + $0x1080] sm:$0xff]
        %v809 = vld [vmem:[%s216 + $0x1088] sm:$0xff]
        %v810 = vld [vmem:[%s216 + $0x1090] sm:$0xff]
        %v811 = vld [vmem:[%s216 + $0x1098] sm:$0xff]
        %v812 = vld [vmem:[%s216 + $0x10a0] sm:$0xff]
        %v813 = vld [vmem:[%s216 + $0x10a8] sm:$0xff]
        %v814 = vld [vmem:[%s216 + $0x10b0] sm:$0xff]
        %v815 = vld [vmem:[%s216 + $0x10b8] sm:$0xff]
        %v816 = vld [vmem:[%s216 + $0x10c0] sm:$0xff]
        %v817 = vld [vmem:[%s216 + $0x10c8] sm:$0xff]
        %v818 = vld [vmem:[%s216 + $0x10d0] sm:$0xff]
        %v819 = vld [vmem:[%s216 + $0x10d8] sm:$0xff]
        %v820 = vld [vmem:[%s216 + $0x10e0] sm:$0xff]
        %v821 = vld [vmem:[%s216 + $0x10e8] sm:$0xff]
        %v822 = vld [vmem:[%s216 + $0x10f0] sm:$0xff]
        %v823 = vld [vmem:[%s216 + $0x10f8] sm:$0xff]
        %v824 = vld [vmem:[%s216 + $0x1100] sm:$0xff]
        %v825 = vld [vmem:[%s216 + $0x1108] sm:$0xff]
        %v826 = vld [vmem:[%s216 + $0x1110] sm:$0xff]
        %v827 = vld [vmem:[%s216 + $0x1118] sm:$0xff]
        %v828 = vld [vmem:[%s216 + $0x1120] sm:$0xff]
        %v829 = vld [vmem:[%s216 + $0x1128] sm:$0xff]
        %v830 = vld [vmem:[%s216 + $0x1130] sm:$0xff]
        %v831 = vld [vmem:[%s216 + $0x1138] sm:$0xff]
        %v832 = vld [vmem:[%s216 + $0x1140] sm:$0xff]
        %v833 = vld [vmem:[%s216 + $0x1148] sm:$0xff]
        %v834 = vld [vmem:[%s216 + $0x1150] sm:$0xff]
        %v835 = vld [vmem:[%s216 + $0x1158] sm:$0xff]
        %v836 = vld [vmem:[%s216 + $0x1160] sm:$0xff]
        %v837 = vld [vmem:[%s216 + $0x1168] sm:$0xff]
        %v838 = vld [vmem:[%s216 + $0x1170] sm:$0xff]
        %v839 = vld [vmem:[%s216 + $0x1178] sm:$0xff]
        %v840 = vld [vmem:[%s216 + $0x1180] sm:$0xff]
        %v841 = vld [vmem:[%s216 + $0x1188] sm:$0xff]
        %v842 = vld [vmem:[%s216 + $0x1190] sm:$0xff]
        %v843 = vld [vmem:[%s216 + $0x1198] sm:$0xff]
        %v844 = vld [vmem:[%s216 + $0x11a0] sm:$0xff]
        %v845 = vld [vmem:[%s216 + $0x11a8] sm:$0xff]
        %v846 = vld [vmem:[%s216 + $0x11b0] sm:$0xff]
        %v847 = vld [vmem:[%s216 + $0x11b8] sm:$0xff]
        %v848 = vld [vmem:[%s216 + $0x11c0] sm:$0xff]
        %v849 = vld [vmem:[%s216 + $0x11c8] sm:$0xff]
        %v850 = vld [vmem:[%s216 + $0x11d0] sm:$0xff]
        %v851 = vld [vmem:[%s216 + $0x11d8] sm:$0xff]
        %v852 = vld [vmem:[%s216 + $0x11e0] sm:$0xff]
        %v853 = vld [vmem:[%s216 + $0x11e8] sm:$0xff]
        %v854 = vld [vmem:[%s216 + $0x11f0] sm:$0xff]
        %v855 = vld [vmem:[%s216 + $0x11f8] sm:$0xff]
        %v856 = vld [vmem:[%s216 + $0x1200] sm:$0xff]
        %v857 = vld [vmem:[%s216 + $0x1208] sm:$0xff]
        %v858 = vld [vmem:[%s216 + $0x1210] sm:$0xff]
        %v859 = vld [vmem:[%s216 + $0x1218] sm:$0xff]
        %v860 = vld [vmem:[%s216 + $0x1220] sm:$0xff]
        %v861 = vld [vmem:[%s216 + $0x1228] sm:$0xff]
        %v862 = vld [vmem:[%s216 + $0x1230] sm:$0xff]
        %v863 = vld [vmem:[%s216 + $0x1238] sm:$0xff]
        %v864 = vld [vmem:[%s216 + $0x1240] sm:$0xff]
        %v865 = vld [vmem:[%s216 + $0x1248] sm:$0xff]
        %v866 = vld [vmem:[%s216 + $0x1250] sm:$0xff]
        %v867 = vld [vmem:[%s216 + $0x1258] sm:$0xff]
        %v868 = vld [vmem:[%s216 + $0x1260] sm:$0xff]
        %v869 = vld [vmem:[%s216 + $0x1268] sm:$0xff]
        %v870 = vld [vmem:[%s216 + $0x1270] sm:$0xff]
        %v871 = vld [vmem:[%s216 + $0x1278] sm:$0xff]
        %v872 = vld [vmem:[%s216 + $0x1280] sm:$0xff]
        %v873 = vld [vmem:[%s216 + $0x1288] sm:$0xff]
        %v874 = vld [vmem:[%s216 + $0x1290] sm:$0xff]
        %v875 = vld [vmem:[%s216 + $0x1298] sm:$0xff]
        %v876 = vld [vmem:[%s216 + $0x12a0] sm:$0xff]
        %v877 = vld [vmem:[%s216 + $0x12a8] sm:$0xff]
        %v878 = vld [vmem:[%s216 + $0x12b0] sm:$0xff]
        %v879 = vld [vmem:[%s216 + $0x12b8] sm:$0xff]
        %v880 = vld [vmem:[%s216 + $0x12c0] sm:$0xff]
        %v881 = vld [vmem:[%s216 + $0x12c8] sm:$0xff]
        %v882 = vld [vmem:[%s216 + $0x12d0] sm:$0xff]
        %v883 = vld [vmem:[%s216 + $0x12d8] sm:$0xff]
        %v884 = vld [vmem:[%s216 + $0x12e0] sm:$0xff]
        %v885 = vld [vmem:[%s216 + $0x12e8] sm:$0xff]
        %v886 = vld [vmem:[%s216 + $0x12f0] sm:$0xff]
        %v887 = vld [vmem:[%s216 + $0x12f8] sm:$0xff]
        %v888 = vld [vmem:[%s216 + $0x1300] sm:$0xff]
        %v889 = vld [vmem:[%s216 + $0x1308] sm:$0xff]
        %v890 = vld [vmem:[%s216 + $0x1310] sm:$0xff]
        %v891 = vld [vmem:[%s216 + $0x1318] sm:$0xff]
        %v892 = vld [vmem:[%s216 + $0x1320] sm:$0xff]
        %v893 = vld [vmem:[%s216 + $0x1328] sm:$0xff]
        %v894 = vld [vmem:[%s216 + $0x1330] sm:$0xff]
        %v895 = vld [vmem:[%s216 + $0x1338] sm:$0xff]
        %v896 = vld [vmem:[%s216 + $0x1340] sm:$0xff]
        %v897 = vld [vmem:[%s216 + $0x1348] sm:$0xff]
        %v898 = vld [vmem:[%s216 + $0x1350] sm:$0xff]
        %v899 = vld [vmem:[%s216 + $0x1358] sm:$0xff]
        %v900 = vld [vmem:[%s216 + $0x1360] sm:$0xff]
        %v901 = vld [vmem:[%s216 + $0x1368] sm:$0xff]
        %v902 = vld [vmem:[%s216 + $0x1370] sm:$0xff]
        %v903 = vld [vmem:[%s216 + $0x1378] sm:$0xff]
        %v904 = vld [vmem:[%s216 + $0x1380] sm:$0xff]
        %v905 = vld [vmem:[%s216 + $0x1388] sm:$0xff]
        %v906 = vld [vmem:[%s216 + $0x1390] sm:$0xff]
        %v907 = vld [vmem:[%s216 + $0x1398] sm:$0xff]
        %v908 = vld [vmem:[%s216 + $0x13a0] sm:$0xff]
        %v909 = vld [vmem:[%s216 + $0x13a8] sm:$0xff]
        %v910 = vld [vmem:[%s216 + $0x13b0] sm:$0xff]
        %v911 = vld [vmem:[%s216 + $0x13b8] sm:$0xff]
        %v912 = vld [vmem:[%s216 + $0x13c0] sm:$0xff]
        %v913 = vld [vmem:[%s216 + $0x13c8] sm:$0xff]
        %v914 = vld [vmem:[%s216 + $0x13d0] sm:$0xff]
        %v915 = vld [vmem:[%s216 + $0x13d8] sm:$0xff]
        %v916 = vld [vmem:[%s216 + $0x13e0] sm:$0xff]
        %v917 = vld [vmem:[%s216 + $0x13e8] sm:$0xff]
        %v918 = vld [vmem:[%s216 + $0x13f0] sm:$0xff]
        %v919 = vld [vmem:[%s216 + $0x13f8] sm:$0xff]
        %v920 = vld [vmem:[%s216 + $0x1400] sm:$0xff]
        %v921 = vld [vmem:[%s216 + $0x1408] sm:$0xff]
        %v922 = vld [vmem:[%s216 + $0x1410] sm:$0xff]
        %v923 = vld [vmem:[%s216 + $0x1418] sm:$0xff]
        %v924 = vld [vmem:[%s216 + $0x1420] sm:$0xff]
        %v925 = vld [vmem:[%s216 + $0x1428] sm:$0xff]
        %v926 = vld [vmem:[%s216 + $0x1430] sm:$0xff]
        %v927 = vld [vmem:[%s216 + $0x1438] sm:$0xff]
        %v928 = vld [vmem:[%s216 + $0x1440] sm:$0xff]
        %v929 = vld [vmem:[%s216 + $0x1448] sm:$0xff]
        %v930 = vld [vmem:[%s216 + $0x1450] sm:$0xff]
        %v931 = vld [vmem:[%s216 + $0x1458] sm:$0xff]
        %v932 = vld [vmem:[%s216 + $0x1460] sm:$0xff]
        %v933 = vld [vmem:[%s216 + $0x1468] sm:$0xff]
        %v934 = vld [vmem:[%s216 + $0x1470] sm:$0xff]
        %v935 = vld [vmem:[%s216 + $0x1478] sm:$0xff]
        %v936 = vld [vmem:[%s216 + $0x1480] sm:$0xff]
        %v937 = vld [vmem:[%s216 + $0x1488] sm:$0xff]
        %v938 = vld [vmem:[%s216 + $0x1490] sm:$0xff]
        %v939 = vld [vmem:[%s216 + $0x1498] sm:$0xff]
        %v940 = vld [vmem:[%s216 + $0x14a0] sm:$0xff]
        %v941 = vld [vmem:[%s216 + $0x14a8] sm:$0xff]
        %v942 = vld [vmem:[%s216 + $0x14b0] sm:$0xff]
        %v943 = vld [vmem:[%s216 + $0x14b8] sm:$0xff]
        %v944 = vld [vmem:[%s216 + $0x14c0] sm:$0xff]
        %v945 = vld [vmem:[%s216 + $0x14c8] sm:$0xff]
        %v946 = vld [vmem:[%s216 + $0x14d0] sm:$0xff]
        %v947 = vld [vmem:[%s216 + $0x14d8] sm:$0xff]
        %v948 = vld [vmem:[%s216 + $0x14e0] sm:$0xff]
        %v949 = vld [vmem:[%s216 + $0x14e8] sm:$0xff]
        %v950 = vld [vmem:[%s216 + $0x14f0] sm:$0xff]
        %v951 = vld [vmem:[%s216 + $0x14f8] sm:$0xff]
        %v952 = vld [vmem:[%s216 + $0x1500] sm:$0xff]
        %v953 = vld [vmem:[%s216 + $0x1508] sm:$0xff]
        %v954 = vld [vmem:[%s216 + $0x1510] sm:$0xff]
        %v955 = vld [vmem:[%s216 + $0x1518] sm:$0xff]
        %v956 = vld [vmem:[%s216 + $0x1520] sm:$0xff]
        %v957 = vld [vmem:[%s216 + $0x1528] sm:$0xff]
        %v958 = vld [vmem:[%s216 + $0x1530] sm:$0xff]
        %v959 = vld [vmem:[%s216 + $0x1538] sm:$0xff]
        %v960 = vld [vmem:[%s216 + $0x1540] sm:$0xff]
        %v961 = vld [vmem:[%s216 + $0x1548] sm:$0xff]
        %v962 = vld [vmem:[%s216 + $0x1550] sm:$0xff]
        %v963 = vld [vmem:[%s216 + $0x1558] sm:$0xff]
        %v964 = vld [vmem:[%s216 + $0x1560] sm:$0xff]
        %v965 = vld [vmem:[%s216 + $0x1568] sm:$0xff]
        %v966 = vld [vmem:[%s216 + $0x1570] sm:$0xff]
        %v967 = vld [vmem:[%s216 + $0x1578] sm:$0xff]
        %v968 = vld [vmem:[%s216 + $0x1580] sm:$0xff]
        %v969 = vld [vmem:[%s216 + $0x1588] sm:$0xff]
        %v970 = vld [vmem:[%s216 + $0x1590] sm:$0xff]
        %v971 = vld [vmem:[%s216 + $0x1598] sm:$0xff]
        %v972 = vld [vmem:[%s216 + $0x15a0] sm:$0xff]
        %v973 = vld [vmem:[%s216 + $0x15a8] sm:$0xff]
        %v974 = vld [vmem:[%s216 + $0x15b0] sm:$0xff]
        %v975 = vld [vmem:[%s216 + $0x15b8] sm:$0xff]
        %v976 = vld [vmem:[%s216 + $0x15c0] sm:$0xff]
        %v977 = vld [vmem:[%s216 + $0x15c8] sm:$0xff]
        %v978 = vld [vmem:[%s216 + $0x15d0] sm:$0xff]
        %v979 = vld [vmem:[%s216 + $0x15d8] sm:$0xff]
        %v980 = vld [vmem:[%s216 + $0x15e0] sm:$0xff]
        %v981 = vld [vmem:[%s216 + $0x15e8] sm:$0xff]
        %v982 = vld [vmem:[%s216 + $0x15f0] sm:$0xff]
        %v983 = vld [vmem:[%s216 + $0x15f8] sm:$0xff]
        %v984 = vld [vmem:[%s216 + $0x1600] sm:$0xff]
        %v985 = vld [vmem:[%s216 + $0x1608] sm:$0xff]
        %v986 = vld [vmem:[%s216 + $0x1610] sm:$0xff]
        %v987 = vld [vmem:[%s216 + $0x1618] sm:$0xff]
        %v988 = vld [vmem:[%s216 + $0x1620] sm:$0xff]
        %v989 = vld [vmem:[%s216 + $0x1628] sm:$0xff]
        %v990 = vld [vmem:[%s216 + $0x1630] sm:$0xff]
        %v991 = vld [vmem:[%s216 + $0x1638] sm:$0xff]
        %v992 = vld [vmem:[%s216 + $0x1640] sm:$0xff]
        %v993 = vld [vmem:[%s216 + $0x1648] sm:$0xff]
        %v994 = vld [vmem:[%s216 + $0x1650] sm:$0xff]
        %v995 = vld [vmem:[%s216 + $0x1658] sm:$0xff]
        %v996 = vld [vmem:[%s216 + $0x1660] sm:$0xff]
        %v997 = vld [vmem:[%s216 + $0x1668] sm:$0xff]
        %v998 = vld [vmem:[%s216 + $0x1670] sm:$0xff]
        %v999 = vld [vmem:[%s216 + $0x1678] sm:$0xff]
        %v1000 = vld [vmem:[%s216 + $0x1680] sm:$0xff]
        %v1001 = vld [vmem:[%s216 + $0x1688] sm:$0xff]
        %v1002 = vld [vmem:[%s216 + $0x1690] sm:$0xff]
        %v1003 = vld [vmem:[%s216 + $0x1698] sm:$0xff]
        %v1004 = vld [vmem:[%s216 + $0x16a0] sm:$0xff]
        %v1005 = vld [vmem:[%s216 + $0x16a8] sm:$0xff]
        %v1006 = vld [vmem:[%s216 + $0x16b0] sm:$0xff]
        %v1007 = vld [vmem:[%s216 + $0x16b8] sm:$0xff]
        %v1008 = vld [vmem:[%s216 + $0x16c0] sm:$0xff]
        %v1009 = vld [vmem:[%s216 + $0x16c8] sm:$0xff]
        %v1010 = vld [vmem:[%s216 + $0x16d0] sm:$0xff]
        %v1011 = vld [vmem:[%s216 + $0x16d8] sm:$0xff]
        %v1012 = vld [vmem:[%s216 + $0x16e0] sm:$0xff]
        %v1013 = vld [vmem:[%s216 + $0x16e8] sm:$0xff]
        %v1014 = vld [vmem:[%s216 + $0x16f0] sm:$0xff]
        %v1015 = vld [vmem:[%s216 + $0x16f8] sm:$0xff]
        %v1016 = vld [vmem:[%s216 + $0x1700] sm:$0xff]
        %v1017 = vld [vmem:[%s216 + $0x1708] sm:$0xff]
        %v1018 = vld [vmem:[%s216 + $0x1710] sm:$0xff]
        %v1019 = vld [vmem:[%s216 + $0x1718] sm:$0xff]
        %v1020 = vld [vmem:[%s216 + $0x1720] sm:$0xff]
        %v1021 = vld [vmem:[%s216 + $0x1728] sm:$0xff]
        %v1022 = vld [vmem:[%s216 + $0x1730] sm:$0xff]
        %v1023 = vld [vmem:[%s216 + $0x1738] sm:$0xff]
        %v1024 = vld [vmem:[%s216 + $0x1740] sm:$0xff]
        %v1025 = vld [vmem:[%s216 + $0x1748] sm:$0xff]
        %v1026 = vld [vmem:[%s216 + $0x1750] sm:$0xff]
        %v1027 = vld [vmem:[%s216 + $0x1758] sm:$0xff]
        %v1028 = vld [vmem:[%s216 + $0x1760] sm:$0xff]
        %v1029 = vld [vmem:[%s216 + $0x1768] sm:$0xff]
        %v1030 = vld [vmem:[%s216 + $0x1770] sm:$0xff]
        %v1031 = vld [vmem:[%s216 + $0x1778] sm:$0xff]
        %v1032 = vld [vmem:[%s216 + $0x1780] sm:$0xff]
        %v1033 = vld [vmem:[%s216 + $0x1788] sm:$0xff]
        %v1034 = vld [vmem:[%s216 + $0x1790] sm:$0xff]
        %v1035 = vld [vmem:[%s216 + $0x1798] sm:$0xff]
        %v1036 = vld [vmem:[%s216 + $0x17a0] sm:$0xff]
        %v1037 = vld [vmem:[%s216 + $0x17a8] sm:$0xff]
        %v1038 = vld [vmem:[%s216 + $0x17b0] sm:$0xff]
        %v1039 = vld [vmem:[%s216 + $0x17b8] sm:$0xff]
        %v1040 = vld [vmem:[%s216 + $0x17c0] sm:$0xff]
        %v1041 = vld [vmem:[%s216 + $0x17c8] sm:$0xff]
        %v1042 = vld [vmem:[%s216 + $0x17d0] sm:$0xff]
        %v1043 = vld [vmem:[%s216 + $0x17d8] sm:$0xff]
        %v1044 = vld [vmem:[%s216 + $0x17e0] sm:$0xff]
        %v1045 = vld [vmem:[%s216 + $0x17e8] sm:$0xff]
        %v1046 = vld [vmem:[%s216 + $0x17f0] sm:$0xff]
        %v1047 = vld [vmem:[%s216 + $0x17f8] sm:$0xff]
        %v1048 = vld [vmem:[%s225] sm:$0xff]
        %v1049 = vld [vmem:[%s225 + $0x8] sm:$0xff]
        %v1052 = vlaneseq
        %v1053 = vshrl.u32 %v1052, 7
        %v1054 = vsub.s32 0, %v1053
        %v1055 = vrot.slane %v1048, %v1054
        %v1056 = vlaneseq
        %v1057 = vshrl.u32 %v1056, 7
        %v1058 = vsub.s32 1, %v1057
        %v1059 = vrot.slane %v1048, %v1058
        %v1060 = vlaneseq
        %v1061 = vshrl.u32 %v1060, 7
        %v1062 = vsub.s32 2, %v1061
        %v1063 = vrot.slane %v1048, %v1062
        %v1064 = vlaneseq
        %v1065 = vshrl.u32 %v1064, 7
        %v1066 = vsub.s32 3, %v1065
        %v1067 = vrot.slane %v1048, %v1066
        %v1068 = vlaneseq
        %v1069 = vshrl.u32 %v1068, 7
        %v1070 = vsub.s32 4, %v1069
        %v1071 = vrot.slane %v1048, %v1070
        %v1072 = vlaneseq
        %v1073 = vshrl.u32 %v1072, 7
        %v1074 = vsub.s32 5, %v1073
        %v1075 = vrot.slane %v1048, %v1074
        %v1076 = vlaneseq
        %v1077 = vshrl.u32 %v1076, 7
        %v1078 = vsub.s32 6, %v1077
        %v1079 = vrot.slane %v1048, %v1078
        %v1080 = vlaneseq
        %v1081 = vshrl.u32 %v1080, 7
        %v1082 = vsub.s32 7, %v1081
        %v1083 = vrot.slane %v1048, %v1082
        %v1084 = vlaneseq
        %v1085 = vshrl.u32 %v1084, 7
        %v1086 = vsub.s32 0, %v1085
        %v1087 = vrot.slane %v1049, %v1086
        %v1088 = vlaneseq
        %v1089 = vshrl.u32 %v1088, 7
        %v1090 = vsub.s32 1, %v1089
        %v1091 = vrot.slane %v1049, %v1090
        %v1092 = vlaneseq
        %v1093 = vshrl.u32 %v1092, 7
        %v1094 = vsub.s32 2, %v1093
        %v1095 = vrot.slane %v1049, %v1094
        %v1096 = vlaneseq
        %v1097 = vshrl.u32 %v1096, 7
        %v1098 = vsub.s32 3, %v1097
        %v1099 = vrot.slane %v1049, %v1098
        %v1100 = vlaneseq
        %v1101 = vshrl.u32 %v1100, 7
        %v1102 = vsub.s32 4, %v1101
        %v1103 = vrot.slane %v1049, %v1102
        %v1104 = vlaneseq
        %v1105 = vshrl.u32 %v1104, 7
        %v1106 = vsub.s32 5, %v1105
        %v1107 = vrot.slane %v1049, %v1106
        %v1108 = vlaneseq
        %v1109 = vshrl.u32 %v1108, 7
        %v1110 = vsub.s32 6, %v1109
        %v1111 = vrot.slane %v1049, %v1110
        %v1112 = vlaneseq
        %v1113 = vshrl.u32 %v1112, 7
        %v1114 = vsub.s32 7, %v1113
        %v1115 = vrot.slane %v1049, %v1114
        %v1138 = vunpack.c.l.b16 %v274
        %v1139 = vunpack.c.h.b16 %v274
        %v1140 = vunpack.c.l.b16 %v275
        %v1141 = vunpack.c.h.b16 %v275
        %v1142 = vunpack.c.l.b16 %v276
        %v1143 = vunpack.c.h.b16 %v276
        %v1144 = vunpack.c.l.b16 %v277
        %v1145 = vunpack.c.h.b16 %v277
        %v1146 = vunpack.c.l.b16 %v278
        %v1147 = vunpack.c.h.b16 %v278
        %v1148 = vunpack.c.l.b16 %v279
        %v1149 = vunpack.c.h.b16 %v279
        %v1150 = vpack.c.b16 %v1144, %v1138
        %v1151 = vpack.c.b16 %v1145, %v1139
        %v1152 = vpack.c.b16 %v1146, %v1140
        %v1153 = vpack.c.b16 %v1147, %v1141
        %v1154 = vpack.c.b16 %v1148, %v1142
        %v1155 = vpack.c.b16 %v1149, %v1143
        %v1930 = vunpack.c.l.b16 %v280
        %v1931 = vunpack.c.h.b16 %v280
        %v1932 = vunpack.c.l.b16 %v281
        %v1933 = vunpack.c.h.b16 %v281
        %v1934 = vunpack.c.l.b16 %v282
        %v1935 = vunpack.c.h.b16 %v282
        %v1936 = vunpack.c.l.b16 %v283
        %v1937 = vunpack.c.h.b16 %v283
        %v1938 = vunpack.c.l.b16 %v284
        %v1939 = vunpack.c.h.b16 %v284
        %v1940 = vunpack.c.l.b16 %v285
        %v1941 = vunpack.c.h.b16 %v285
        %v1942 = vunpack.c.l.b16 %v286
        %v1943 = vunpack.c.h.b16 %v286
        %v1944 = vunpack.c.l.b16 %v287
        %v1945 = vunpack.c.h.b16 %v287
        %v1946 = vunpack.c.l.b16 %v288
        %v1947 = vunpack.c.h.b16 %v288
        %v1948 = vunpack.c.l.b16 %v289
        %v1949 = vunpack.c.h.b16 %v289
        %v1950 = vunpack.c.l.b16 %v290
        %v1951 = vunpack.c.h.b16 %v290
        %v1952 = vunpack.c.l.b16 %v291
        %v1953 = vunpack.c.h.b16 %v291
        %v1954 = vunpack.c.l.b16 %v292
        %v1955 = vunpack.c.h.b16 %v292
        %v1956 = vunpack.c.l.b16 %v293
        %v1957 = vunpack.c.h.b16 %v293
        %v1958 = vunpack.c.l.b16 %v294
        %v1959 = vunpack.c.h.b16 %v294
        %v1960 = vunpack.c.l.b16 %v295
        %v1961 = vunpack.c.h.b16 %v295
        %v1962 = vunpack.c.l.b16 %v296
        %v1963 = vunpack.c.h.b16 %v296
        %v1964 = vunpack.c.l.b16 %v297
        %v1965 = vunpack.c.h.b16 %v297
        %v1966 = vunpack.c.l.b16 %v298
        %v1967 = vunpack.c.h.b16 %v298
        %v1968 = vunpack.c.l.b16 %v299
        %v1969 = vunpack.c.h.b16 %v299
        %v1970 = vunpack.c.l.b16 %v300
        %v1971 = vunpack.c.h.b16 %v300
        %v1972 = vunpack.c.l.b16 %v301
        %v1973 = vunpack.c.h.b16 %v301
        %v1974 = vunpack.c.l.b16 %v302
        %v1975 = vunpack.c.h.b16 %v302
        %v1976 = vunpack.c.l.b16 %v303
        %v1977 = vunpack.c.h.b16 %v303
        %v1978 = vunpack.c.l.b16 %v304
        %v1979 = vunpack.c.h.b16 %v304
        %v1980 = vunpack.c.l.b16 %v305
        %v1981 = vunpack.c.h.b16 %v305
        %v1982 = vunpack.c.l.b16 %v306
        %v1983 = vunpack.c.h.b16 %v306
        %v1984 = vunpack.c.l.b16 %v307
        %v1985 = vunpack.c.h.b16 %v307
        %v1986 = vunpack.c.l.b16 %v308
        %v1987 = vunpack.c.h.b16 %v308
        %v1988 = vunpack.c.l.b16 %v309
        %v1989 = vunpack.c.h.b16 %v309
        %v1990 = vunpack.c.l.b16 %v310
        %v1991 = vunpack.c.h.b16 %v310
        %v1992 = vunpack.c.l.b16 %v311
        %v1993 = vunpack.c.h.b16 %v311
        %v1994 = vunpack.c.l.b16 %v312
        %v1995 = vunpack.c.h.b16 %v312
        %v1996 = vunpack.c.l.b16 %v313
        %v1997 = vunpack.c.h.b16 %v313
        %v1998 = vunpack.c.l.b16 %v314
        %v1999 = vunpack.c.h.b16 %v314
        %v2000 = vunpack.c.l.b16 %v315
        %v2001 = vunpack.c.h.b16 %v315
        %v2002 = vunpack.c.l.b16 %v316
        %v2003 = vunpack.c.h.b16 %v316
        %v2004 = vunpack.c.l.b16 %v317
        %v2005 = vunpack.c.h.b16 %v317
        %v2006 = vunpack.c.l.b16 %v318
        %v2007 = vunpack.c.h.b16 %v318
        %v2008 = vunpack.c.l.b16 %v319
        %v2009 = vunpack.c.h.b16 %v319
        %v2010 = vunpack.c.l.b16 %v320
        %v2011 = vunpack.c.h.b16 %v320
        %v2012 = vunpack.c.l.b16 %v321
        %v2013 = vunpack.c.h.b16 %v321
        %v2014 = vunpack.c.l.b16 %v322
        %v2015 = vunpack.c.h.b16 %v322
        %v2016 = vunpack.c.l.b16 %v323
        %v2017 = vunpack.c.h.b16 %v323
        %v2018 = vunpack.c.l.b16 %v324
        %v2019 = vunpack.c.h.b16 %v324
        %v2020 = vunpack.c.l.b16 %v325
        %v2021 = vunpack.c.h.b16 %v325
        %v2022 = vunpack.c.l.b16 %v326
        %v2023 = vunpack.c.h.b16 %v326
        %v2024 = vunpack.c.l.b16 %v327
        %v2025 = vunpack.c.h.b16 %v327
        %v2026 = vunpack.c.l.b16 %v328
        %v2027 = vunpack.c.h.b16 %v328
        %v2028 = vunpack.c.l.b16 %v329
        %v2029 = vunpack.c.h.b16 %v329
        %v2030 = vunpack.c.l.b16 %v330
        %v2031 = vunpack.c.h.b16 %v330
        %v2032 = vunpack.c.l.b16 %v331
        %v2033 = vunpack.c.h.b16 %v331
        %v2034 = vunpack.c.l.b16 %v332
        %v2035 = vunpack.c.h.b16 %v332
        %v2036 = vunpack.c.l.b16 %v333
        %v2037 = vunpack.c.h.b16 %v333
        %v2038 = vunpack.c.l.b16 %v334
        %v2039 = vunpack.c.h.b16 %v334
        %v2040 = vunpack.c.l.b16 %v335
        %v2041 = vunpack.c.h.b16 %v335
        %v2042 = vunpack.c.l.b16 %v336
        %v2043 = vunpack.c.h.b16 %v336
        %v2044 = vunpack.c.l.b16 %v337
        %v2045 = vunpack.c.h.b16 %v337
        %v2046 = vunpack.c.l.b16 %v338
        %v2047 = vunpack.c.h.b16 %v338
        %v2048 = vunpack.c.l.b16 %v339
        %v2049 = vunpack.c.h.b16 %v339
        %v2050 = vunpack.c.l.b16 %v340
        %v2051 = vunpack.c.h.b16 %v340
        %v2052 = vunpack.c.l.b16 %v341
        %v2053 = vunpack.c.h.b16 %v341
        %v2054 = vunpack.c.l.b16 %v342
        %v2055 = vunpack.c.h.b16 %v342
        %v2056 = vunpack.c.l.b16 %v343
        %v2057 = vunpack.c.h.b16 %v343
        %v2058 = vunpack.c.l.b16 %v344
        %v2059 = vunpack.c.h.b16 %v344
        %v2060 = vunpack.c.l.b16 %v345
        %v2061 = vunpack.c.h.b16 %v345
        %v2062 = vunpack.c.l.b16 %v346
        %v2063 = vunpack.c.h.b16 %v346
        %v2064 = vunpack.c.l.b16 %v347
        %v2065 = vunpack.c.h.b16 %v347
        %v2066 = vunpack.c.l.b16 %v348
        %v2067 = vunpack.c.h.b16 %v348
        %v2068 = vunpack.c.l.b16 %v349
        %v2069 = vunpack.c.h.b16 %v349
        %v2070 = vunpack.c.l.b16 %v350
        %v2071 = vunpack.c.h.b16 %v350
        %v2072 = vunpack.c.l.b16 %v351
        %v2073 = vunpack.c.h.b16 %v351
        %v2074 = vunpack.c.l.b16 %v352
        %v2075 = vunpack.c.h.b16 %v352
        %v2076 = vunpack.c.l.b16 %v353
        %v2077 = vunpack.c.h.b16 %v353
        %v2078 = vunpack.c.l.b16 %v354
        %v2079 = vunpack.c.h.b16 %v354
        %v2080 = vunpack.c.l.b16 %v355
        %v2081 = vunpack.c.h.b16 %v355
        %v2082 = vunpack.c.l.b16 %v356
        %v2083 = vunpack.c.h.b16 %v356
        %v2084 = vunpack.c.l.b16 %v357
        %v2085 = vunpack.c.h.b16 %v357
        %v2086 = vunpack.c.l.b16 %v358
        %v2087 = vunpack.c.h.b16 %v358
        %v2088 = vunpack.c.l.b16 %v359
        %v2089 = vunpack.c.h.b16 %v359
        %v2090 = vunpack.c.l.b16 %v360
        %v2091 = vunpack.c.h.b16 %v360
        %v2092 = vunpack.c.l.b16 %v361
        %v2093 = vunpack.c.h.b16 %v361
        %v2094 = vunpack.c.l.b16 %v362
        %v2095 = vunpack.c.h.b16 %v362
        %v2096 = vunpack.c.l.b16 %v363
        %v2097 = vunpack.c.h.b16 %v363
        %v2098 = vunpack.c.l.b16 %v364
        %v2099 = vunpack.c.h.b16 %v364
        %v2100 = vunpack.c.l.b16 %v365
        %v2101 = vunpack.c.h.b16 %v365
        %v2102 = vunpack.c.l.b16 %v366
        %v2103 = vunpack.c.h.b16 %v366
        %v2104 = vunpack.c.l.b16 %v367
        %v2105 = vunpack.c.h.b16 %v367
        %v2106 = vunpack.c.l.b16 %v368
        %v2107 = vunpack.c.h.b16 %v368
        %v2108 = vunpack.c.l.b16 %v369
        %v2109 = vunpack.c.h.b16 %v369
        %v2110 = vunpack.c.l.b16 %v370
        %v2111 = vunpack.c.h.b16 %v370
        %v2112 = vunpack.c.l.b16 %v371
        %v2113 = vunpack.c.h.b16 %v371
        %v2114 = vunpack.c.l.b16 %v372
        %v2115 = vunpack.c.h.b16 %v372
        %v2116 = vunpack.c.l.b16 %v373
        %v2117 = vunpack.c.h.b16 %v373
        %v2118 = vunpack.c.l.b16 %v374
        %v2119 = vunpack.c.h.b16 %v374
        %v2120 = vunpack.c.l.b16 %v375
        %v2121 = vunpack.c.h.b16 %v375
        %v2122 = vunpack.c.l.b16 %v376
        %v2123 = vunpack.c.h.b16 %v376
        %v2124 = vunpack.c.l.b16 %v377
        %v2125 = vunpack.c.h.b16 %v377
        %v2126 = vunpack.c.l.b16 %v378
        %v2127 = vunpack.c.h.b16 %v378
        %v2128 = vunpack.c.l.b16 %v379
        %v2129 = vunpack.c.h.b16 %v379
        %v2130 = vunpack.c.l.b16 %v380
        %v2131 = vunpack.c.h.b16 %v380
        %v2132 = vunpack.c.l.b16 %v381
        %v2133 = vunpack.c.h.b16 %v381
        %v2134 = vunpack.c.l.b16 %v382
        %v2135 = vunpack.c.h.b16 %v382
        %v2136 = vunpack.c.l.b16 %v383
        %v2137 = vunpack.c.h.b16 %v383
        %v2138 = vunpack.c.l.b16 %v384
        %v2139 = vunpack.c.h.b16 %v384
        %v2140 = vunpack.c.l.b16 %v385
        %v2141 = vunpack.c.h.b16 %v385
        %v2142 = vunpack.c.l.b16 %v386
        %v2143 = vunpack.c.h.b16 %v386
        %v2144 = vunpack.c.l.b16 %v387
        %v2145 = vunpack.c.h.b16 %v387
        %v2146 = vunpack.c.l.b16 %v388
        %v2147 = vunpack.c.h.b16 %v388
        %v2148 = vunpack.c.l.b16 %v389
        %v2149 = vunpack.c.h.b16 %v389
        %v2150 = vunpack.c.l.b16 %v390
        %v2151 = vunpack.c.h.b16 %v390
        %v2152 = vunpack.c.l.b16 %v391
        %v2153 = vunpack.c.h.b16 %v391
        %v2154 = vunpack.c.l.b16 %v392
        %v2155 = vunpack.c.h.b16 %v392
        %v2156 = vunpack.c.l.b16 %v393
        %v2157 = vunpack.c.h.b16 %v393
        %v2158 = vunpack.c.l.b16 %v394
        %v2159 = vunpack.c.h.b16 %v394
        %v2160 = vunpack.c.l.b16 %v395
        %v2161 = vunpack.c.h.b16 %v395
        %v2162 = vunpack.c.l.b16 %v396
        %v2163 = vunpack.c.h.b16 %v396
        %v2164 = vunpack.c.l.b16 %v397
        %v2165 = vunpack.c.h.b16 %v397
        %v2166 = vunpack.c.l.b16 %v398
        %v2167 = vunpack.c.h.b16 %v398
        %v2168 = vunpack.c.l.b16 %v399
        %v2169 = vunpack.c.h.b16 %v399
        %v2170 = vunpack.c.l.b16 %v400
        %v2171 = vunpack.c.h.b16 %v400
        %v2172 = vunpack.c.l.b16 %v401
        %v2173 = vunpack.c.h.b16 %v401
        %v2174 = vunpack.c.l.b16 %v402
        %v2175 = vunpack.c.h.b16 %v402
        %v2176 = vunpack.c.l.b16 %v403
        %v2177 = vunpack.c.h.b16 %v403
        %v2178 = vunpack.c.l.b16 %v404
        %v2179 = vunpack.c.h.b16 %v404
        %v2180 = vunpack.c.l.b16 %v405
        %v2181 = vunpack.c.h.b16 %v405
        %v2182 = vunpack.c.l.b16 %v406
        %v2183 = vunpack.c.h.b16 %v406
        %v2184 = vunpack.c.l.b16 %v407
        %v2185 = vunpack.c.h.b16 %v407
        %v2186 = vunpack.c.l.b16 %v408
        %v2187 = vunpack.c.h.b16 %v408
        %v2188 = vunpack.c.l.b16 %v409
        %v2189 = vunpack.c.h.b16 %v409
        %v2190 = vunpack.c.l.b16 %v410
        %v2191 = vunpack.c.h.b16 %v410
        %v2192 = vunpack.c.l.b16 %v411
        %v2193 = vunpack.c.h.b16 %v411
        %v2194 = vunpack.c.l.b16 %v412
        %v2195 = vunpack.c.h.b16 %v412
        %v2196 = vunpack.c.l.b16 %v413
        %v2197 = vunpack.c.h.b16 %v413
        %v2198 = vunpack.c.l.b16 %v414
        %v2199 = vunpack.c.h.b16 %v414
        %v2200 = vunpack.c.l.b16 %v415
        %v2201 = vunpack.c.h.b16 %v415
        %v2202 = vunpack.c.l.b16 %v416
        %v2203 = vunpack.c.h.b16 %v416
        %v2204 = vunpack.c.l.b16 %v417
        %v2205 = vunpack.c.h.b16 %v417
        %v2206 = vunpack.c.l.b16 %v418
        %v2207 = vunpack.c.h.b16 %v418
        %v2208 = vunpack.c.l.b16 %v419
        %v2209 = vunpack.c.h.b16 %v419
        %v2210 = vunpack.c.l.b16 %v420
        %v2211 = vunpack.c.h.b16 %v420
        %v2212 = vunpack.c.l.b16 %v421
        %v2213 = vunpack.c.h.b16 %v421
        %v2214 = vunpack.c.l.b16 %v422
        %v2215 = vunpack.c.h.b16 %v422
        %v2216 = vunpack.c.l.b16 %v423
        %v2217 = vunpack.c.h.b16 %v423
        %v2218 = vunpack.c.l.b16 %v424
        %v2219 = vunpack.c.h.b16 %v424
        %v2220 = vunpack.c.l.b16 %v425
        %v2221 = vunpack.c.h.b16 %v425
        %v2222 = vunpack.c.l.b16 %v426
        %v2223 = vunpack.c.h.b16 %v426
        %v2224 = vunpack.c.l.b16 %v427
        %v2225 = vunpack.c.h.b16 %v427
        %v2226 = vunpack.c.l.b16 %v428
        %v2227 = vunpack.c.h.b16 %v428
        %v2228 = vunpack.c.l.b16 %v429
        %v2229 = vunpack.c.h.b16 %v429
        %v2230 = vunpack.c.l.b16 %v430
        %v2231 = vunpack.c.h.b16 %v430
        %v2232 = vunpack.c.l.b16 %v431
        %v2233 = vunpack.c.h.b16 %v431
        %v2234 = vunpack.c.l.b16 %v432
        %v2235 = vunpack.c.h.b16 %v432
        %v2236 = vunpack.c.l.b16 %v433
        %v2237 = vunpack.c.h.b16 %v433
        %v2238 = vunpack.c.l.b16 %v434
        %v2239 = vunpack.c.h.b16 %v434
        %v2240 = vunpack.c.l.b16 %v435
        %v2241 = vunpack.c.h.b16 %v435
        %v2242 = vunpack.c.l.b16 %v436
        %v2243 = vunpack.c.h.b16 %v436
        %v2244 = vunpack.c.l.b16 %v437
        %v2245 = vunpack.c.h.b16 %v437
        %v2246 = vunpack.c.l.b16 %v438
        %v2247 = vunpack.c.h.b16 %v438
        %v2248 = vunpack.c.l.b16 %v439
        %v2249 = vunpack.c.h.b16 %v439
        %v2250 = vunpack.c.l.b16 %v440
        %v2251 = vunpack.c.h.b16 %v440
        %v2252 = vunpack.c.l.b16 %v441
        %v2253 = vunpack.c.h.b16 %v441
        %v2254 = vunpack.c.l.b16 %v442
        %v2255 = vunpack.c.h.b16 %v442
        %v2256 = vunpack.c.l.b16 %v443
        %v2257 = vunpack.c.h.b16 %v443
        %v2258 = vunpack.c.l.b16 %v444
        %v2259 = vunpack.c.h.b16 %v444
        %v2260 = vunpack.c.l.b16 %v445
        %v2261 = vunpack.c.h.b16 %v445
        %v2262 = vunpack.c.l.b16 %v446
        %v2263 = vunpack.c.h.b16 %v446
        %v2264 = vunpack.c.l.b16 %v447
        %v2265 = vunpack.c.h.b16 %v447
        %v2266 = vunpack.c.l.b16 %v448
        %v2267 = vunpack.c.h.b16 %v448
        %v2268 = vunpack.c.l.b16 %v449
        %v2269 = vunpack.c.h.b16 %v449
        %v2270 = vunpack.c.l.b16 %v450
        %v2271 = vunpack.c.h.b16 %v450
        %v2272 = vunpack.c.l.b16 %v451
        %v2273 = vunpack.c.h.b16 %v451
        %v2274 = vunpack.c.l.b16 %v452
        %v2275 = vunpack.c.h.b16 %v452
        %v2276 = vunpack.c.l.b16 %v453
        %v2277 = vunpack.c.h.b16 %v453
        %v2278 = vunpack.c.l.b16 %v454
        %v2279 = vunpack.c.h.b16 %v454
        %v2280 = vunpack.c.l.b16 %v455
        %v2281 = vunpack.c.h.b16 %v455
        %v2282 = vunpack.c.l.b16 %v456
        %v2283 = vunpack.c.h.b16 %v456
        %v2284 = vunpack.c.l.b16 %v457
        %v2285 = vunpack.c.h.b16 %v457
        %v2286 = vunpack.c.l.b16 %v458
        %v2287 = vunpack.c.h.b16 %v458
        %v2288 = vunpack.c.l.b16 %v459
        %v2289 = vunpack.c.h.b16 %v459
        %v2290 = vunpack.c.l.b16 %v460
        %v2291 = vunpack.c.h.b16 %v460
        %v2292 = vunpack.c.l.b16 %v461
        %v2293 = vunpack.c.h.b16 %v461
        %v2294 = vunpack.c.l.b16 %v462
        %v2295 = vunpack.c.h.b16 %v462
        %v2296 = vunpack.c.l.b16 %v463
        %v2297 = vunpack.c.h.b16 %v463
        %v2298 = vunpack.c.l.b16 %v464
        %v2299 = vunpack.c.h.b16 %v464
        %v2300 = vunpack.c.l.b16 %v465
        %v2301 = vunpack.c.h.b16 %v465
        %v2302 = vunpack.c.l.b16 %v466
        %v2303 = vunpack.c.h.b16 %v466
        %v2304 = vunpack.c.l.b16 %v467
        %v2305 = vunpack.c.h.b16 %v467
        %v2306 = vunpack.c.l.b16 %v468
        %v2307 = vunpack.c.h.b16 %v468
        %v2308 = vunpack.c.l.b16 %v469
        %v2309 = vunpack.c.h.b16 %v469
        %v2310 = vunpack.c.l.b16 %v470
        %v2311 = vunpack.c.h.b16 %v470
        %v2312 = vunpack.c.l.b16 %v471
        %v2313 = vunpack.c.h.b16 %v471
        %v2314 = vunpack.c.l.b16 %v472
        %v2315 = vunpack.c.h.b16 %v472
        %v2316 = vunpack.c.l.b16 %v473
        %v2317 = vunpack.c.h.b16 %v473
        %v2318 = vunpack.c.l.b16 %v474
        %v2319 = vunpack.c.h.b16 %v474
        %v2320 = vunpack.c.l.b16 %v475
        %v2321 = vunpack.c.h.b16 %v475
        %v2322 = vunpack.c.l.b16 %v476
        %v2323 = vunpack.c.h.b16 %v476
        %v2324 = vunpack.c.l.b16 %v477
        %v2325 = vunpack.c.h.b16 %v477
        %v2326 = vunpack.c.l.b16 %v478
        %v2327 = vunpack.c.h.b16 %v478
        %v2328 = vunpack.c.l.b16 %v479
        %v2329 = vunpack.c.h.b16 %v479
        %v2330 = vunpack.c.l.b16 %v480
        %v2331 = vunpack.c.h.b16 %v480
        %v2332 = vunpack.c.l.b16 %v481
        %v2333 = vunpack.c.h.b16 %v481
        %v2334 = vunpack.c.l.b16 %v482
        %v2335 = vunpack.c.h.b16 %v482
        %v2336 = vunpack.c.l.b16 %v483
        %v2337 = vunpack.c.h.b16 %v483
        %v2338 = vunpack.c.l.b16 %v484
        %v2339 = vunpack.c.h.b16 %v484
        %v2340 = vunpack.c.l.b16 %v485
        %v2341 = vunpack.c.h.b16 %v485
        %v2342 = vunpack.c.l.b16 %v486
        %v2343 = vunpack.c.h.b16 %v486
        %v2344 = vunpack.c.l.b16 %v487
        %v2345 = vunpack.c.h.b16 %v487
        %v2346 = vunpack.c.l.b16 %v488
        %v2347 = vunpack.c.h.b16 %v488
        %v2348 = vunpack.c.l.b16 %v489
        %v2349 = vunpack.c.h.b16 %v489
        %v2350 = vunpack.c.l.b16 %v490
        %v2351 = vunpack.c.h.b16 %v490
        %v2352 = vunpack.c.l.b16 %v491
        %v2353 = vunpack.c.h.b16 %v491
        %v2354 = vunpack.c.l.b16 %v492
        %v2355 = vunpack.c.h.b16 %v492
        %v2356 = vunpack.c.l.b16 %v493
        %v2357 = vunpack.c.h.b16 %v493
        %v2358 = vunpack.c.l.b16 %v494
        %v2359 = vunpack.c.h.b16 %v494
        %v2360 = vunpack.c.l.b16 %v495
        %v2361 = vunpack.c.h.b16 %v495
        %v2362 = vunpack.c.l.b16 %v496
        %v2363 = vunpack.c.h.b16 %v496
        %v2364 = vunpack.c.l.b16 %v497
        %v2365 = vunpack.c.h.b16 %v497
        %v2366 = vunpack.c.l.b16 %v498
        %v2367 = vunpack.c.h.b16 %v498
        %v2368 = vunpack.c.l.b16 %v499
        %v2369 = vunpack.c.h.b16 %v499
        %v2370 = vunpack.c.l.b16 %v500
        %v2371 = vunpack.c.h.b16 %v500
        %v2372 = vunpack.c.l.b16 %v501
        %v2373 = vunpack.c.h.b16 %v501
        %v2374 = vunpack.c.l.b16 %v502
        %v2375 = vunpack.c.h.b16 %v502
        %v2376 = vunpack.c.l.b16 %v503
        %v2377 = vunpack.c.h.b16 %v503
        %v2378 = vunpack.c.l.b16 %v504
        %v2379 = vunpack.c.h.b16 %v504
        %v2380 = vunpack.c.l.b16 %v505
        %v2381 = vunpack.c.h.b16 %v505
        %v2382 = vunpack.c.l.b16 %v506
        %v2383 = vunpack.c.h.b16 %v506
        %v2384 = vunpack.c.l.b16 %v507
        %v2385 = vunpack.c.h.b16 %v507
        %v2386 = vunpack.c.l.b16 %v508
        %v2387 = vunpack.c.h.b16 %v508
        %v2388 = vunpack.c.l.b16 %v509
        %v2389 = vunpack.c.h.b16 %v509
        %v2390 = vunpack.c.l.b16 %v510
        %v2391 = vunpack.c.h.b16 %v510
        %v2392 = vunpack.c.l.b16 %v511
        %v2393 = vunpack.c.h.b16 %v511
        %v2394 = vunpack.c.l.b16 %v512
        %v2395 = vunpack.c.h.b16 %v512
        %v2396 = vunpack.c.l.b16 %v513
        %v2397 = vunpack.c.h.b16 %v513
        %v2398 = vunpack.c.l.b16 %v514
        %v2399 = vunpack.c.h.b16 %v514
        %v2400 = vunpack.c.l.b16 %v515
        %v2401 = vunpack.c.h.b16 %v515
        %v2402 = vunpack.c.l.b16 %v516
        %v2403 = vunpack.c.h.b16 %v516
        %v2404 = vunpack.c.l.b16 %v517
        %v2405 = vunpack.c.h.b16 %v517
        %v2406 = vunpack.c.l.b16 %v518
        %v2407 = vunpack.c.h.b16 %v518
        %v2408 = vunpack.c.l.b16 %v519
        %v2409 = vunpack.c.h.b16 %v519
        %v2410 = vunpack.c.l.b16 %v520
        %v2411 = vunpack.c.h.b16 %v520
        %v2412 = vunpack.c.l.b16 %v521
        %v2413 = vunpack.c.h.b16 %v521
        %v2414 = vunpack.c.l.b16 %v522
        %v2415 = vunpack.c.h.b16 %v522
        %v2416 = vunpack.c.l.b16 %v523
        %v2417 = vunpack.c.h.b16 %v523
        %v2418 = vunpack.c.l.b16 %v524
        %v2419 = vunpack.c.h.b16 %v524
        %v2420 = vunpack.c.l.b16 %v525
        %v2421 = vunpack.c.h.b16 %v525
        %v2422 = vunpack.c.l.b16 %v526
        %v2423 = vunpack.c.h.b16 %v526
        %v2424 = vunpack.c.l.b16 %v527
        %v2425 = vunpack.c.h.b16 %v527
        %v2426 = vunpack.c.l.b16 %v528
        %v2427 = vunpack.c.h.b16 %v528
        %v2428 = vunpack.c.l.b16 %v529
        %v2429 = vunpack.c.h.b16 %v529
        %v2430 = vunpack.c.l.b16 %v530
        %v2431 = vunpack.c.h.b16 %v530
        %v2432 = vunpack.c.l.b16 %v531
        %v2433 = vunpack.c.h.b16 %v531
        %v2434 = vunpack.c.l.b16 %v532
        %v2435 = vunpack.c.h.b16 %v532
        %v2436 = vunpack.c.l.b16 %v533
        %v2437 = vunpack.c.h.b16 %v533
        %v2438 = vunpack.c.l.b16 %v534
        %v2439 = vunpack.c.h.b16 %v534
        %v2440 = vunpack.c.l.b16 %v535
        %v2441 = vunpack.c.h.b16 %v535
        %v2442 = vunpack.c.l.b16 %v536
        %v2443 = vunpack.c.h.b16 %v536
        %v2444 = vunpack.c.l.b16 %v537
        %v2445 = vunpack.c.h.b16 %v537
        %v2446 = vunpack.c.l.b16 %v538
        %v2447 = vunpack.c.h.b16 %v538
        %v2448 = vunpack.c.l.b16 %v539
        %v2449 = vunpack.c.h.b16 %v539
        %v2450 = vunpack.c.l.b16 %v540
        %v2451 = vunpack.c.h.b16 %v540
        %v2452 = vunpack.c.l.b16 %v541
        %v2453 = vunpack.c.h.b16 %v541
        %v2454 = vunpack.c.l.b16 %v542
        %v2455 = vunpack.c.h.b16 %v542
        %v2456 = vunpack.c.l.b16 %v543
        %v2457 = vunpack.c.h.b16 %v543
        %v2458 = vunpack.c.l.b16 %v544
        %v2459 = vunpack.c.h.b16 %v544
        %v2460 = vunpack.c.l.b16 %v545
        %v2461 = vunpack.c.h.b16 %v545
        %v2462 = vunpack.c.l.b16 %v546
        %v2463 = vunpack.c.h.b16 %v546
        %v2464 = vunpack.c.l.b16 %v547
        %v2465 = vunpack.c.h.b16 %v547
        %v2466 = vunpack.c.l.b16 %v548
        %v2467 = vunpack.c.h.b16 %v548
        %v2468 = vunpack.c.l.b16 %v549
        %v2469 = vunpack.c.h.b16 %v549
        %v2470 = vunpack.c.l.b16 %v550
        %v2471 = vunpack.c.h.b16 %v550
        %v2472 = vunpack.c.l.b16 %v551
        %v2473 = vunpack.c.h.b16 %v551
        %v2474 = vunpack.c.l.b16 %v552
        %v2475 = vunpack.c.h.b16 %v552
        %v2476 = vunpack.c.l.b16 %v553
        %v2477 = vunpack.c.h.b16 %v553
        %v2478 = vunpack.c.l.b16 %v554
        %v2479 = vunpack.c.h.b16 %v554
        %v2480 = vunpack.c.l.b16 %v555
        %v2481 = vunpack.c.h.b16 %v555
        %v2482 = vunpack.c.l.b16 %v556
        %v2483 = vunpack.c.h.b16 %v556
        %v2484 = vunpack.c.l.b16 %v557
        %v2485 = vunpack.c.h.b16 %v557
        %v2486 = vunpack.c.l.b16 %v558
        %v2487 = vunpack.c.h.b16 %v558
        %v2488 = vunpack.c.l.b16 %v559
        %v2489 = vunpack.c.h.b16 %v559
        %v2490 = vunpack.c.l.b16 %v560
        %v2491 = vunpack.c.h.b16 %v560
        %v2492 = vunpack.c.l.b16 %v561
        %v2493 = vunpack.c.h.b16 %v561
        %v2494 = vunpack.c.l.b16 %v562
        %v2495 = vunpack.c.h.b16 %v562
        %v2496 = vunpack.c.l.b16 %v563
        %v2497 = vunpack.c.h.b16 %v563
        %v2498 = vunpack.c.l.b16 %v564
        %v2499 = vunpack.c.h.b16 %v564
        %v2500 = vunpack.c.l.b16 %v565
        %v2501 = vunpack.c.h.b16 %v565
        %v2502 = vunpack.c.l.b16 %v566
        %v2503 = vunpack.c.h.b16 %v566
        %v2504 = vunpack.c.l.b16 %v567
        %v2505 = vunpack.c.h.b16 %v567
        %v2506 = vunpack.c.l.b16 %v568
        %v2507 = vunpack.c.h.b16 %v568
        %v2508 = vunpack.c.l.b16 %v569
        %v2509 = vunpack.c.h.b16 %v569
        %v2510 = vunpack.c.l.b16 %v570
        %v2511 = vunpack.c.h.b16 %v570
        %v2512 = vunpack.c.l.b16 %v571
        %v2513 = vunpack.c.h.b16 %v571
        %v2514 = vunpack.c.l.b16 %v572
        %v2515 = vunpack.c.h.b16 %v572
        %v2516 = vunpack.c.l.b16 %v573
        %v2517 = vunpack.c.h.b16 %v573
        %v2518 = vunpack.c.l.b16 %v574
        %v2519 = vunpack.c.h.b16 %v574
        %v2520 = vunpack.c.l.b16 %v575
        %v2521 = vunpack.c.h.b16 %v575
        %v2522 = vunpack.c.l.b16 %v576
        %v2523 = vunpack.c.h.b16 %v576
        %v2524 = vunpack.c.l.b16 %v577
        %v2525 = vunpack.c.h.b16 %v577
        %v2526 = vunpack.c.l.b16 %v578
        %v2527 = vunpack.c.h.b16 %v578
        %v2528 = vunpack.c.l.b16 %v579
        %v2529 = vunpack.c.h.b16 %v579
        %v2530 = vunpack.c.l.b16 %v580
        %v2531 = vunpack.c.h.b16 %v580
        %v2532 = vunpack.c.l.b16 %v581
        %v2533 = vunpack.c.h.b16 %v581
        %v2534 = vunpack.c.l.b16 %v582
        %v2535 = vunpack.c.h.b16 %v582
        %v2536 = vunpack.c.l.b16 %v583
        %v2537 = vunpack.c.h.b16 %v583
        %v2538 = vunpack.c.l.b16 %v584
        %v2539 = vunpack.c.h.b16 %v584
        %v2540 = vunpack.c.l.b16 %v585
        %v2541 = vunpack.c.h.b16 %v585
        %v2542 = vunpack.c.l.b16 %v586
        %v2543 = vunpack.c.h.b16 %v586
        %v2544 = vunpack.c.l.b16 %v587
        %v2545 = vunpack.c.h.b16 %v587
        %v2546 = vunpack.c.l.b16 %v588
        %v2547 = vunpack.c.h.b16 %v588
        %v2548 = vunpack.c.l.b16 %v589
        %v2549 = vunpack.c.h.b16 %v589
        %v2550 = vunpack.c.l.b16 %v590
        %v2551 = vunpack.c.h.b16 %v590
        %v2552 = vunpack.c.l.b16 %v591
        %v2553 = vunpack.c.h.b16 %v591
        %v2554 = vunpack.c.l.b16 %v592
        %v2555 = vunpack.c.h.b16 %v592
        %v2556 = vunpack.c.l.b16 %v593
        %v2557 = vunpack.c.h.b16 %v593
        %v2558 = vunpack.c.l.b16 %v594
        %v2559 = vunpack.c.h.b16 %v594
        %v2560 = vunpack.c.l.b16 %v595
        %v2561 = vunpack.c.h.b16 %v595
        %v2562 = vunpack.c.l.b16 %v596
        %v2563 = vunpack.c.h.b16 %v596
        %v2564 = vunpack.c.l.b16 %v597
        %v2565 = vunpack.c.h.b16 %v597
        %v2566 = vunpack.c.l.b16 %v598
        %v2567 = vunpack.c.h.b16 %v598
        %v2568 = vunpack.c.l.b16 %v599
        %v2569 = vunpack.c.h.b16 %v599
        %v2570 = vunpack.c.l.b16 %v600
        %v2571 = vunpack.c.h.b16 %v600
        %v2572 = vunpack.c.l.b16 %v601
        %v2573 = vunpack.c.h.b16 %v601
        %v2574 = vunpack.c.l.b16 %v602
        %v2575 = vunpack.c.h.b16 %v602
        %v2576 = vunpack.c.l.b16 %v603
        %v2577 = vunpack.c.h.b16 %v603
        %v2578 = vunpack.c.l.b16 %v604
        %v2579 = vunpack.c.h.b16 %v604
        %v2580 = vunpack.c.l.b16 %v605
        %v2581 = vunpack.c.h.b16 %v605
        %v2582 = vunpack.c.l.b16 %v606
        %v2583 = vunpack.c.h.b16 %v606
        %v2584 = vunpack.c.l.b16 %v607
        %v2585 = vunpack.c.h.b16 %v607
        %v2586 = vunpack.c.l.b16 %v608
        %v2587 = vunpack.c.h.b16 %v608
        %v2588 = vunpack.c.l.b16 %v609
        %v2589 = vunpack.c.h.b16 %v609
        %v2590 = vunpack.c.l.b16 %v610
        %v2591 = vunpack.c.h.b16 %v610
        %v2592 = vunpack.c.l.b16 %v611
        %v2593 = vunpack.c.h.b16 %v611
        %v2594 = vunpack.c.l.b16 %v612
        %v2595 = vunpack.c.h.b16 %v612
        %v2596 = vunpack.c.l.b16 %v613
        %v2597 = vunpack.c.h.b16 %v613
        %v2598 = vunpack.c.l.b16 %v614
        %v2599 = vunpack.c.h.b16 %v614
        %v2600 = vunpack.c.l.b16 %v615
        %v2601 = vunpack.c.h.b16 %v615
        %v2602 = vunpack.c.l.b16 %v616
        %v2603 = vunpack.c.h.b16 %v616
        %v2604 = vunpack.c.l.b16 %v617
        %v2605 = vunpack.c.h.b16 %v617
        %v2606 = vunpack.c.l.b16 %v618
        %v2607 = vunpack.c.h.b16 %v618
        %v2608 = vunpack.c.l.b16 %v619
        %v2609 = vunpack.c.h.b16 %v619
        %v2610 = vunpack.c.l.b16 %v620
        %v2611 = vunpack.c.h.b16 %v620
        %v2612 = vunpack.c.l.b16 %v621
        %v2613 = vunpack.c.h.b16 %v621
        %v2614 = vunpack.c.l.b16 %v622
        %v2615 = vunpack.c.h.b16 %v622
        %v2616 = vunpack.c.l.b16 %v623
        %v2617 = vunpack.c.h.b16 %v623
        %v2618 = vunpack.c.l.b16 %v624
        %v2619 = vunpack.c.h.b16 %v624
        %v2620 = vunpack.c.l.b16 %v625
        %v2621 = vunpack.c.h.b16 %v625
        %v2622 = vunpack.c.l.b16 %v626
        %v2623 = vunpack.c.h.b16 %v626
        %v2624 = vunpack.c.l.b16 %v627
        %v2625 = vunpack.c.h.b16 %v627
        %v2626 = vunpack.c.l.b16 %v628
        %v2627 = vunpack.c.h.b16 %v628
        %v2628 = vunpack.c.l.b16 %v629
        %v2629 = vunpack.c.h.b16 %v629
        %v2630 = vunpack.c.l.b16 %v630
        %v2631 = vunpack.c.h.b16 %v630
        %v2632 = vunpack.c.l.b16 %v631
        %v2633 = vunpack.c.h.b16 %v631
        %v2634 = vunpack.c.l.b16 %v632
        %v2635 = vunpack.c.h.b16 %v632
        %v2636 = vunpack.c.l.b16 %v633
        %v2637 = vunpack.c.h.b16 %v633
        %v2638 = vunpack.c.l.b16 %v634
        %v2639 = vunpack.c.h.b16 %v634
        %v2640 = vunpack.c.l.b16 %v635
        %v2641 = vunpack.c.h.b16 %v635
        %v2642 = vunpack.c.l.b16 %v636
        %v2643 = vunpack.c.h.b16 %v636
        %v2644 = vunpack.c.l.b16 %v637
        %v2645 = vunpack.c.h.b16 %v637
        %v2646 = vunpack.c.l.b16 %v638
        %v2647 = vunpack.c.h.b16 %v638
        %v2648 = vunpack.c.l.b16 %v639
        %v2649 = vunpack.c.h.b16 %v639
        %v2650 = vunpack.c.l.b16 %v640
        %v2651 = vunpack.c.h.b16 %v640
        %v2652 = vunpack.c.l.b16 %v641
        %v2653 = vunpack.c.h.b16 %v641
        %v2654 = vunpack.c.l.b16 %v642
        %v2655 = vunpack.c.h.b16 %v642
        %v2656 = vunpack.c.l.b16 %v643
        %v2657 = vunpack.c.h.b16 %v643
        %v2658 = vunpack.c.l.b16 %v644
        %v2659 = vunpack.c.h.b16 %v644
        %v2660 = vunpack.c.l.b16 %v645
        %v2661 = vunpack.c.h.b16 %v645
        %v2662 = vunpack.c.l.b16 %v646
        %v2663 = vunpack.c.h.b16 %v646
        %v2664 = vunpack.c.l.b16 %v647
        %v2665 = vunpack.c.h.b16 %v647
        %v2666 = vunpack.c.l.b16 %v648
        %v2667 = vunpack.c.h.b16 %v648
        %v2668 = vunpack.c.l.b16 %v649
        %v2669 = vunpack.c.h.b16 %v649
        %v2670 = vunpack.c.l.b16 %v650
        %v2671 = vunpack.c.h.b16 %v650
        %v2672 = vunpack.c.l.b16 %v651
        %v2673 = vunpack.c.h.b16 %v651
        %v2674 = vunpack.c.l.b16 %v652
        %v2675 = vunpack.c.h.b16 %v652
        %v2676 = vunpack.c.l.b16 %v653
        %v2677 = vunpack.c.h.b16 %v653
        %v2678 = vunpack.c.l.b16 %v654
        %v2679 = vunpack.c.h.b16 %v654
        %v2680 = vunpack.c.l.b16 %v655
        %v2681 = vunpack.c.h.b16 %v655
        %v2682 = vunpack.c.l.b16 %v656
        %v2683 = vunpack.c.h.b16 %v656
        %v2684 = vunpack.c.l.b16 %v657
        %v2685 = vunpack.c.h.b16 %v657
        %v2686 = vunpack.c.l.b16 %v658
        %v2687 = vunpack.c.h.b16 %v658
        %v2688 = vunpack.c.l.b16 %v659
        %v2689 = vunpack.c.h.b16 %v659
        %v2690 = vunpack.c.l.b16 %v660
        %v2691 = vunpack.c.h.b16 %v660
        %v2692 = vunpack.c.l.b16 %v661
        %v2693 = vunpack.c.h.b16 %v661
        %v2694 = vunpack.c.l.b16 %v662
        %v2695 = vunpack.c.h.b16 %v662
        %v2696 = vunpack.c.l.b16 %v663
        %v2697 = vunpack.c.h.b16 %v663
        %v2698 = vunpack.c.l.b16 %v664
        %v2699 = vunpack.c.h.b16 %v664
        %v2700 = vunpack.c.l.b16 %v665
        %v2701 = vunpack.c.h.b16 %v665
        %v2702 = vunpack.c.l.b16 %v666
        %v2703 = vunpack.c.h.b16 %v666
        %v2704 = vunpack.c.l.b16 %v667
        %v2705 = vunpack.c.h.b16 %v667
        %v2706 = vunpack.c.l.b16 %v668
        %v2707 = vunpack.c.h.b16 %v668
        %v2708 = vunpack.c.l.b16 %v669
        %v2709 = vunpack.c.h.b16 %v669
        %v2710 = vunpack.c.l.b16 %v670
        %v2711 = vunpack.c.h.b16 %v670
        %v2712 = vunpack.c.l.b16 %v671
        %v2713 = vunpack.c.h.b16 %v671
        %v2714 = vunpack.c.l.b16 %v672
        %v2715 = vunpack.c.h.b16 %v672
        %v2716 = vunpack.c.l.b16 %v673
        %v2717 = vunpack.c.h.b16 %v673
        %v2718 = vunpack.c.l.b16 %v674
        %v2719 = vunpack.c.h.b16 %v674
        %v2720 = vunpack.c.l.b16 %v675
        %v2721 = vunpack.c.h.b16 %v675
        %v2722 = vunpack.c.l.b16 %v676
        %v2723 = vunpack.c.h.b16 %v676
        %v2724 = vunpack.c.l.b16 %v677
        %v2725 = vunpack.c.h.b16 %v677
        %v2726 = vunpack.c.l.b16 %v678
        %v2727 = vunpack.c.h.b16 %v678
        %v2728 = vunpack.c.l.b16 %v679
        %v2729 = vunpack.c.h.b16 %v679
        %v2730 = vunpack.c.l.b16 %v680
        %v2731 = vunpack.c.h.b16 %v680
        %v2732 = vunpack.c.l.b16 %v681
        %v2733 = vunpack.c.h.b16 %v681
        %v2734 = vunpack.c.l.b16 %v682
        %v2735 = vunpack.c.h.b16 %v682
        %v2736 = vunpack.c.l.b16 %v683
        %v2737 = vunpack.c.h.b16 %v683
        %v2738 = vunpack.c.l.b16 %v684
        %v2739 = vunpack.c.h.b16 %v684
        %v2740 = vunpack.c.l.b16 %v685
        %v2741 = vunpack.c.h.b16 %v685
        %v2742 = vunpack.c.l.b16 %v686
        %v2743 = vunpack.c.h.b16 %v686
        %v2744 = vunpack.c.l.b16 %v687
        %v2745 = vunpack.c.h.b16 %v687
        %v2746 = vunpack.c.l.b16 %v688
        %v2747 = vunpack.c.h.b16 %v688
        %v2748 = vunpack.c.l.b16 %v689
        %v2749 = vunpack.c.h.b16 %v689
        %v2750 = vunpack.c.l.b16 %v690
        %v2751 = vunpack.c.h.b16 %v690
        %v2752 = vunpack.c.l.b16 %v691
        %v2753 = vunpack.c.h.b16 %v691
        %v2754 = vunpack.c.l.b16 %v692
        %v2755 = vunpack.c.h.b16 %v692
        %v2756 = vunpack.c.l.b16 %v693
        %v2757 = vunpack.c.h.b16 %v693
        %v2758 = vunpack.c.l.b16 %v694
        %v2759 = vunpack.c.h.b16 %v694
        %v2760 = vunpack.c.l.b16 %v695
        %v2761 = vunpack.c.h.b16 %v695
        %v2762 = vunpack.c.l.b16 %v696
        %v2763 = vunpack.c.h.b16 %v696
        %v2764 = vunpack.c.l.b16 %v697
        %v2765 = vunpack.c.h.b16 %v697
        %v2766 = vunpack.c.l.b16 %v698
        %v2767 = vunpack.c.h.b16 %v698
        %v2768 = vunpack.c.l.b16 %v699
        %v2769 = vunpack.c.h.b16 %v699
        %v2770 = vunpack.c.l.b16 %v700
        %v2771 = vunpack.c.h.b16 %v700
        %v2772 = vunpack.c.l.b16 %v701
        %v2773 = vunpack.c.h.b16 %v701
        %v2774 = vunpack.c.l.b16 %v702
        %v2775 = vunpack.c.h.b16 %v702
        %v2776 = vunpack.c.l.b16 %v703
        %v2777 = vunpack.c.h.b16 %v703
        %v2778 = vunpack.c.l.b16 %v704
        %v2779 = vunpack.c.h.b16 %v704
        %v2780 = vunpack.c.l.b16 %v705
        %v2781 = vunpack.c.h.b16 %v705
        %v2782 = vunpack.c.l.b16 %v706
        %v2783 = vunpack.c.h.b16 %v706
        %v2784 = vunpack.c.l.b16 %v707
        %v2785 = vunpack.c.h.b16 %v707
        %v2786 = vunpack.c.l.b16 %v708
        %v2787 = vunpack.c.h.b16 %v708
        %v2788 = vunpack.c.l.b16 %v709
        %v2789 = vunpack.c.h.b16 %v709
        %v2790 = vunpack.c.l.b16 %v710
        %v2791 = vunpack.c.h.b16 %v710
        %v2792 = vunpack.c.l.b16 %v711
        %v2793 = vunpack.c.h.b16 %v711
        %v2794 = vunpack.c.l.b16 %v712
        %v2795 = vunpack.c.h.b16 %v712
        %v2796 = vunpack.c.l.b16 %v713
        %v2797 = vunpack.c.h.b16 %v713
        %v2798 = vunpack.c.l.b16 %v714
        %v2799 = vunpack.c.h.b16 %v714
        %v2800 = vunpack.c.l.b16 %v715
        %v2801 = vunpack.c.h.b16 %v715
        %v2802 = vunpack.c.l.b16 %v716
        %v2803 = vunpack.c.h.b16 %v716
        %v2804 = vunpack.c.l.b16 %v717
        %v2805 = vunpack.c.h.b16 %v717
        %v2806 = vunpack.c.l.b16 %v718
        %v2807 = vunpack.c.h.b16 %v718
        %v2808 = vunpack.c.l.b16 %v719
        %v2809 = vunpack.c.h.b16 %v719
        %v2810 = vunpack.c.l.b16 %v720
        %v2811 = vunpack.c.h.b16 %v720
        %v2812 = vunpack.c.l.b16 %v721
        %v2813 = vunpack.c.h.b16 %v721
        %v2814 = vunpack.c.l.b16 %v722
        %v2815 = vunpack.c.h.b16 %v722
        %v2816 = vunpack.c.l.b16 %v723
        %v2817 = vunpack.c.h.b16 %v723
        %v2818 = vunpack.c.l.b16 %v724
        %v2819 = vunpack.c.h.b16 %v724
        %v2820 = vunpack.c.l.b16 %v725
        %v2821 = vunpack.c.h.b16 %v725
        %v2822 = vunpack.c.l.b16 %v726
        %v2823 = vunpack.c.h.b16 %v726
        %v2824 = vunpack.c.l.b16 %v727
        %v2825 = vunpack.c.h.b16 %v727
        %v2826 = vunpack.c.l.b16 %v728
        %v2827 = vunpack.c.h.b16 %v728
        %v2828 = vunpack.c.l.b16 %v729
        %v2829 = vunpack.c.h.b16 %v729
        %v2830 = vunpack.c.l.b16 %v730
        %v2831 = vunpack.c.h.b16 %v730
        %v2832 = vunpack.c.l.b16 %v731
        %v2833 = vunpack.c.h.b16 %v731
        %v2834 = vunpack.c.l.b16 %v732
        %v2835 = vunpack.c.h.b16 %v732
        %v2836 = vunpack.c.l.b16 %v733
        %v2837 = vunpack.c.h.b16 %v733
        %v2838 = vunpack.c.l.b16 %v734
        %v2839 = vunpack.c.h.b16 %v734
        %v2840 = vunpack.c.l.b16 %v735
        %v2841 = vunpack.c.h.b16 %v735
        %v2842 = vunpack.c.l.b16 %v736
        %v2843 = vunpack.c.h.b16 %v736
        %v2844 = vunpack.c.l.b16 %v737
        %v2845 = vunpack.c.h.b16 %v737
        %v2846 = vunpack.c.l.b16 %v738
        %v2847 = vunpack.c.h.b16 %v738
        %v2848 = vunpack.c.l.b16 %v739
        %v2849 = vunpack.c.h.b16 %v739
        %v2850 = vunpack.c.l.b16 %v740
        %v2851 = vunpack.c.h.b16 %v740
        %v2852 = vunpack.c.l.b16 %v741
        %v2853 = vunpack.c.h.b16 %v741
        %v2854 = vunpack.c.l.b16 %v742
        %v2855 = vunpack.c.h.b16 %v742
        %v2856 = vunpack.c.l.b16 %v743
        %v2857 = vunpack.c.h.b16 %v743
        %v2858 = vunpack.c.l.b16 %v744
        %v2859 = vunpack.c.h.b16 %v744
        %v2860 = vunpack.c.l.b16 %v745
        %v2861 = vunpack.c.h.b16 %v745
        %v2862 = vunpack.c.l.b16 %v746
        %v2863 = vunpack.c.h.b16 %v746
        %v2864 = vunpack.c.l.b16 %v747
        %v2865 = vunpack.c.h.b16 %v747
        %v2866 = vunpack.c.l.b16 %v748
        %v2867 = vunpack.c.h.b16 %v748
        %v2868 = vunpack.c.l.b16 %v749
        %v2869 = vunpack.c.h.b16 %v749
        %v2870 = vunpack.c.l.b16 %v750
        %v2871 = vunpack.c.h.b16 %v750
        %v2872 = vunpack.c.l.b16 %v751
        %v2873 = vunpack.c.h.b16 %v751
        %v2874 = vunpack.c.l.b16 %v752
        %v2875 = vunpack.c.h.b16 %v752
        %v2876 = vunpack.c.l.b16 %v753
        %v2877 = vunpack.c.h.b16 %v753
        %v2878 = vunpack.c.l.b16 %v754
        %v2879 = vunpack.c.h.b16 %v754
        %v2880 = vunpack.c.l.b16 %v755
        %v2881 = vunpack.c.h.b16 %v755
        %v2882 = vunpack.c.l.b16 %v756
        %v2883 = vunpack.c.h.b16 %v756
        %v2884 = vunpack.c.l.b16 %v757
        %v2885 = vunpack.c.h.b16 %v757
        %v2886 = vunpack.c.l.b16 %v758
        %v2887 = vunpack.c.h.b16 %v758
        %v2888 = vunpack.c.l.b16 %v759
        %v2889 = vunpack.c.h.b16 %v759
        %v2890 = vunpack.c.l.b16 %v760
        %v2891 = vunpack.c.h.b16 %v760
        %v2892 = vunpack.c.l.b16 %v761
        %v2893 = vunpack.c.h.b16 %v761
        %v2894 = vunpack.c.l.b16 %v762
        %v2895 = vunpack.c.h.b16 %v762
        %v2896 = vunpack.c.l.b16 %v763
        %v2897 = vunpack.c.h.b16 %v763
        %v2898 = vunpack.c.l.b16 %v764
        %v2899 = vunpack.c.h.b16 %v764
        %v2900 = vunpack.c.l.b16 %v765
        %v2901 = vunpack.c.h.b16 %v765
        %v2902 = vunpack.c.l.b16 %v766
        %v2903 = vunpack.c.h.b16 %v766
        %v2904 = vunpack.c.l.b16 %v767
        %v2905 = vunpack.c.h.b16 %v767
        %v2906 = vunpack.c.l.b16 %v768
        %v2907 = vunpack.c.h.b16 %v768
        %v2908 = vunpack.c.l.b16 %v769
        %v2909 = vunpack.c.h.b16 %v769
        %v2910 = vunpack.c.l.b16 %v770
        %v2911 = vunpack.c.h.b16 %v770
        %v2912 = vunpack.c.l.b16 %v771
        %v2913 = vunpack.c.h.b16 %v771
        %v2914 = vunpack.c.l.b16 %v772
        %v2915 = vunpack.c.h.b16 %v772
        %v2916 = vunpack.c.l.b16 %v773
        %v2917 = vunpack.c.h.b16 %v773
        %v2918 = vunpack.c.l.b16 %v774
        %v2919 = vunpack.c.h.b16 %v774
        %v2920 = vunpack.c.l.b16 %v775
        %v2921 = vunpack.c.h.b16 %v775
        %v2922 = vunpack.c.l.b16 %v776
        %v2923 = vunpack.c.h.b16 %v776
        %v2924 = vunpack.c.l.b16 %v777
        %v2925 = vunpack.c.h.b16 %v777
        %v2926 = vunpack.c.l.b16 %v778
        %v2927 = vunpack.c.h.b16 %v778
        %v2928 = vunpack.c.l.b16 %v779
        %v2929 = vunpack.c.h.b16 %v779
        %v2930 = vunpack.c.l.b16 %v780
        %v2931 = vunpack.c.h.b16 %v780
        %v2932 = vunpack.c.l.b16 %v781
        %v2933 = vunpack.c.h.b16 %v781
        %v2934 = vunpack.c.l.b16 %v782
        %v2935 = vunpack.c.h.b16 %v782
        %v2936 = vunpack.c.l.b16 %v783
        %v2937 = vunpack.c.h.b16 %v783
        %v2938 = vunpack.c.l.b16 %v784
        %v2939 = vunpack.c.h.b16 %v784
        %v2940 = vunpack.c.l.b16 %v785
        %v2941 = vunpack.c.h.b16 %v785
        %v2942 = vunpack.c.l.b16 %v786
        %v2943 = vunpack.c.h.b16 %v786
        %v2944 = vunpack.c.l.b16 %v787
        %v2945 = vunpack.c.h.b16 %v787
        %v2946 = vunpack.c.l.b16 %v788
        %v2947 = vunpack.c.h.b16 %v788
        %v2948 = vunpack.c.l.b16 %v789
        %v2949 = vunpack.c.h.b16 %v789
        %v2950 = vunpack.c.l.b16 %v790
        %v2951 = vunpack.c.h.b16 %v790
        %v2952 = vunpack.c.l.b16 %v791
        %v2953 = vunpack.c.h.b16 %v791
        %v2954 = vunpack.c.l.b16 %v792
        %v2955 = vunpack.c.h.b16 %v792
        %v2956 = vunpack.c.l.b16 %v793
        %v2957 = vunpack.c.h.b16 %v793
        %v2958 = vunpack.c.l.b16 %v794
        %v2959 = vunpack.c.h.b16 %v794
        %v2960 = vunpack.c.l.b16 %v795
        %v2961 = vunpack.c.h.b16 %v795
        %v2962 = vunpack.c.l.b16 %v796
        %v2963 = vunpack.c.h.b16 %v796
        %v2964 = vunpack.c.l.b16 %v797
        %v2965 = vunpack.c.h.b16 %v797
        %v2966 = vunpack.c.l.b16 %v798
        %v2967 = vunpack.c.h.b16 %v798
        %v2968 = vunpack.c.l.b16 %v799
        %v2969 = vunpack.c.h.b16 %v799
        %v2970 = vunpack.c.l.b16 %v800
        %v2971 = vunpack.c.h.b16 %v800
        %v2972 = vunpack.c.l.b16 %v801
        %v2973 = vunpack.c.h.b16 %v801
        %v2974 = vunpack.c.l.b16 %v802
        %v2975 = vunpack.c.h.b16 %v802
        %v2976 = vunpack.c.l.b16 %v803
        %v2977 = vunpack.c.h.b16 %v803
        %v2978 = vunpack.c.l.b16 %v804
        %v2979 = vunpack.c.h.b16 %v804
        %v2980 = vunpack.c.l.b16 %v805
        %v2981 = vunpack.c.h.b16 %v805
        %v2982 = vunpack.c.l.b16 %v806
        %v2983 = vunpack.c.h.b16 %v806
        %v2984 = vunpack.c.l.b16 %v807
        %v2985 = vunpack.c.h.b16 %v807
        %v2986 = vunpack.c.l.b16 %v808
        %v2987 = vunpack.c.h.b16 %v808
        %v2988 = vunpack.c.l.b16 %v809
        %v2989 = vunpack.c.h.b16 %v809
        %v2990 = vunpack.c.l.b16 %v810
        %v2991 = vunpack.c.h.b16 %v810
        %v2992 = vunpack.c.l.b16 %v811
        %v2993 = vunpack.c.h.b16 %v811
        %v2994 = vunpack.c.l.b16 %v812
        %v2995 = vunpack.c.h.b16 %v812
        %v2996 = vunpack.c.l.b16 %v813
        %v2997 = vunpack.c.h.b16 %v813
        %v2998 = vunpack.c.l.b16 %v814
        %v2999 = vunpack.c.h.b16 %v814
        %v3000 = vunpack.c.l.b16 %v815
        %v3001 = vunpack.c.h.b16 %v815
        %v3002 = vunpack.c.l.b16 %v816
        %v3003 = vunpack.c.h.b16 %v816
        %v3004 = vunpack.c.l.b16 %v817
        %v3005 = vunpack.c.h.b16 %v817
        %v3006 = vunpack.c.l.b16 %v818
        %v3007 = vunpack.c.h.b16 %v818
        %v3008 = vunpack.c.l.b16 %v819
        %v3009 = vunpack.c.h.b16 %v819
        %v3010 = vunpack.c.l.b16 %v820
        %v3011 = vunpack.c.h.b16 %v820
        %v3012 = vunpack.c.l.b16 %v821
        %v3013 = vunpack.c.h.b16 %v821
        %v3014 = vunpack.c.l.b16 %v822
        %v3015 = vunpack.c.h.b16 %v822
        %v3016 = vunpack.c.l.b16 %v823
        %v3017 = vunpack.c.h.b16 %v823
        %v3018 = vunpack.c.l.b16 %v824
        %v3019 = vunpack.c.h.b16 %v824
        %v3020 = vunpack.c.l.b16 %v825
        %v3021 = vunpack.c.h.b16 %v825
        %v3022 = vunpack.c.l.b16 %v826
        %v3023 = vunpack.c.h.b16 %v826
        %v3024 = vunpack.c.l.b16 %v827
        %v3025 = vunpack.c.h.b16 %v827
        %v3026 = vunpack.c.l.b16 %v828
        %v3027 = vunpack.c.h.b16 %v828
        %v3028 = vunpack.c.l.b16 %v829
        %v3029 = vunpack.c.h.b16 %v829
        %v3030 = vunpack.c.l.b16 %v830
        %v3031 = vunpack.c.h.b16 %v830
        %v3032 = vunpack.c.l.b16 %v831
        %v3033 = vunpack.c.h.b16 %v831
        %v3034 = vunpack.c.l.b16 %v832
        %v3035 = vunpack.c.h.b16 %v832
        %v3036 = vunpack.c.l.b16 %v833
        %v3037 = vunpack.c.h.b16 %v833
        %v3038 = vunpack.c.l.b16 %v834
        %v3039 = vunpack.c.h.b16 %v834
        %v3040 = vunpack.c.l.b16 %v835
        %v3041 = vunpack.c.h.b16 %v835
        %v3042 = vunpack.c.l.b16 %v836
        %v3043 = vunpack.c.h.b16 %v836
        %v3044 = vunpack.c.l.b16 %v837
        %v3045 = vunpack.c.h.b16 %v837
        %v3046 = vunpack.c.l.b16 %v838
        %v3047 = vunpack.c.h.b16 %v838
        %v3048 = vunpack.c.l.b16 %v839
        %v3049 = vunpack.c.h.b16 %v839
        %v3050 = vunpack.c.l.b16 %v840
        %v3051 = vunpack.c.h.b16 %v840
        %v3052 = vunpack.c.l.b16 %v841
        %v3053 = vunpack.c.h.b16 %v841
        %v3054 = vunpack.c.l.b16 %v842
        %v3055 = vunpack.c.h.b16 %v842
        %v3056 = vunpack.c.l.b16 %v843
        %v3057 = vunpack.c.h.b16 %v843
        %v3058 = vunpack.c.l.b16 %v844
        %v3059 = vunpack.c.h.b16 %v844
        %v3060 = vunpack.c.l.b16 %v845
        %v3061 = vunpack.c.h.b16 %v845
        %v3062 = vunpack.c.l.b16 %v846
        %v3063 = vunpack.c.h.b16 %v846
        %v3064 = vunpack.c.l.b16 %v847
        %v3065 = vunpack.c.h.b16 %v847
        %v3066 = vunpack.c.l.b16 %v848
        %v3067 = vunpack.c.h.b16 %v848
        %v3068 = vunpack.c.l.b16 %v849
        %v3069 = vunpack.c.h.b16 %v849
        %v3070 = vunpack.c.l.b16 %v850
        %v3071 = vunpack.c.h.b16 %v850
        %v3072 = vunpack.c.l.b16 %v851
        %v3073 = vunpack.c.h.b16 %v851
        %v3074 = vunpack.c.l.b16 %v852
        %v3075 = vunpack.c.h.b16 %v852
        %v3076 = vunpack.c.l.b16 %v853
        %v3077 = vunpack.c.h.b16 %v853
        %v3078 = vunpack.c.l.b16 %v854
        %v3079 = vunpack.c.h.b16 %v854
        %v3080 = vunpack.c.l.b16 %v855
        %v3081 = vunpack.c.h.b16 %v855
        %v3082 = vunpack.c.l.b16 %v856
        %v3083 = vunpack.c.h.b16 %v856
        %v3084 = vunpack.c.l.b16 %v857
        %v3085 = vunpack.c.h.b16 %v857
        %v3086 = vunpack.c.l.b16 %v858
        %v3087 = vunpack.c.h.b16 %v858
        %v3088 = vunpack.c.l.b16 %v859
        %v3089 = vunpack.c.h.b16 %v859
        %v3090 = vunpack.c.l.b16 %v860
        %v3091 = vunpack.c.h.b16 %v860
        %v3092 = vunpack.c.l.b16 %v861
        %v3093 = vunpack.c.h.b16 %v861
        %v3094 = vunpack.c.l.b16 %v862
        %v3095 = vunpack.c.h.b16 %v862
        %v3096 = vunpack.c.l.b16 %v863
        %v3097 = vunpack.c.h.b16 %v863
        %v3098 = vunpack.c.l.b16 %v864
        %v3099 = vunpack.c.h.b16 %v864
        %v3100 = vunpack.c.l.b16 %v865
        %v3101 = vunpack.c.h.b16 %v865
        %v3102 = vunpack.c.l.b16 %v866
        %v3103 = vunpack.c.h.b16 %v866
        %v3104 = vunpack.c.l.b16 %v867
        %v3105 = vunpack.c.h.b16 %v867
        %v3106 = vunpack.c.l.b16 %v868
        %v3107 = vunpack.c.h.b16 %v868
        %v3108 = vunpack.c.l.b16 %v869
        %v3109 = vunpack.c.h.b16 %v869
        %v3110 = vunpack.c.l.b16 %v870
        %v3111 = vunpack.c.h.b16 %v870
        %v3112 = vunpack.c.l.b16 %v871
        %v3113 = vunpack.c.h.b16 %v871
        %v3114 = vunpack.c.l.b16 %v872
        %v3115 = vunpack.c.h.b16 %v872
        %v3116 = vunpack.c.l.b16 %v873
        %v3117 = vunpack.c.h.b16 %v873
        %v3118 = vunpack.c.l.b16 %v874
        %v3119 = vunpack.c.h.b16 %v874
        %v3120 = vunpack.c.l.b16 %v875
        %v3121 = vunpack.c.h.b16 %v875
        %v3122 = vunpack.c.l.b16 %v876
        %v3123 = vunpack.c.h.b16 %v876
        %v3124 = vunpack.c.l.b16 %v877
        %v3125 = vunpack.c.h.b16 %v877
        %v3126 = vunpack.c.l.b16 %v878
        %v3127 = vunpack.c.h.b16 %v878
        %v3128 = vunpack.c.l.b16 %v879
        %v3129 = vunpack.c.h.b16 %v879
        %v3130 = vunpack.c.l.b16 %v880
        %v3131 = vunpack.c.h.b16 %v880
        %v3132 = vunpack.c.l.b16 %v881
        %v3133 = vunpack.c.h.b16 %v881
        %v3134 = vunpack.c.l.b16 %v882
        %v3135 = vunpack.c.h.b16 %v882
        %v3136 = vunpack.c.l.b16 %v883
        %v3137 = vunpack.c.h.b16 %v883
        %v3138 = vunpack.c.l.b16 %v884
        %v3139 = vunpack.c.h.b16 %v884
        %v3140 = vunpack.c.l.b16 %v885
        %v3141 = vunpack.c.h.b16 %v885
        %v3142 = vunpack.c.l.b16 %v886
        %v3143 = vunpack.c.h.b16 %v886
        %v3144 = vunpack.c.l.b16 %v887
        %v3145 = vunpack.c.h.b16 %v887
        %v3146 = vunpack.c.l.b16 %v888
        %v3147 = vunpack.c.h.b16 %v888
        %v3148 = vunpack.c.l.b16 %v889
        %v3149 = vunpack.c.h.b16 %v889
        %v3150 = vunpack.c.l.b16 %v890
        %v3151 = vunpack.c.h.b16 %v890
        %v3152 = vunpack.c.l.b16 %v891
        %v3153 = vunpack.c.h.b16 %v891
        %v3154 = vunpack.c.l.b16 %v892
        %v3155 = vunpack.c.h.b16 %v892
        %v3156 = vunpack.c.l.b16 %v893
        %v3157 = vunpack.c.h.b16 %v893
        %v3158 = vunpack.c.l.b16 %v894
        %v3159 = vunpack.c.h.b16 %v894
        %v3160 = vunpack.c.l.b16 %v895
        %v3161 = vunpack.c.h.b16 %v895
        %v3162 = vunpack.c.l.b16 %v896
        %v3163 = vunpack.c.h.b16 %v896
        %v3164 = vunpack.c.l.b16 %v897
        %v3165 = vunpack.c.h.b16 %v897
        %v3166 = vunpack.c.l.b16 %v898
        %v3167 = vunpack.c.h.b16 %v898
        %v3168 = vunpack.c.l.b16 %v899
        %v3169 = vunpack.c.h.b16 %v899
        %v3170 = vunpack.c.l.b16 %v900
        %v3171 = vunpack.c.h.b16 %v900
        %v3172 = vunpack.c.l.b16 %v901
        %v3173 = vunpack.c.h.b16 %v901
        %v3174 = vunpack.c.l.b16 %v902
        %v3175 = vunpack.c.h.b16 %v902
        %v3176 = vunpack.c.l.b16 %v903
        %v3177 = vunpack.c.h.b16 %v903
        %v3178 = vunpack.c.l.b16 %v904
        %v3179 = vunpack.c.h.b16 %v904
        %v3180 = vunpack.c.l.b16 %v905
        %v3181 = vunpack.c.h.b16 %v905
        %v3182 = vunpack.c.l.b16 %v906
        %v3183 = vunpack.c.h.b16 %v906
        %v3184 = vunpack.c.l.b16 %v907
        %v3185 = vunpack.c.h.b16 %v907
        %v3186 = vunpack.c.l.b16 %v908
        %v3187 = vunpack.c.h.b16 %v908
        %v3188 = vunpack.c.l.b16 %v909
        %v3189 = vunpack.c.h.b16 %v909
        %v3190 = vunpack.c.l.b16 %v910
        %v3191 = vunpack.c.h.b16 %v910
        %v3192 = vunpack.c.l.b16 %v911
        %v3193 = vunpack.c.h.b16 %v911
        %v3194 = vunpack.c.l.b16 %v912
        %v3195 = vunpack.c.h.b16 %v912
        %v3196 = vunpack.c.l.b16 %v913
        %v3197 = vunpack.c.h.b16 %v913
        %v3198 = vunpack.c.l.b16 %v914
        %v3199 = vunpack.c.h.b16 %v914
        %v3200 = vunpack.c.l.b16 %v915
        %v3201 = vunpack.c.h.b16 %v915
        %v3202 = vunpack.c.l.b16 %v916
        %v3203 = vunpack.c.h.b16 %v916
        %v3204 = vunpack.c.l.b16 %v917
        %v3205 = vunpack.c.h.b16 %v917
        %v3206 = vunpack.c.l.b16 %v918
        %v3207 = vunpack.c.h.b16 %v918
        %v3208 = vunpack.c.l.b16 %v919
        %v3209 = vunpack.c.h.b16 %v919
        %v3210 = vunpack.c.l.b16 %v920
        %v3211 = vunpack.c.h.b16 %v920
        %v3212 = vunpack.c.l.b16 %v921
        %v3213 = vunpack.c.h.b16 %v921
        %v3214 = vunpack.c.l.b16 %v922
        %v3215 = vunpack.c.h.b16 %v922
        %v3216 = vunpack.c.l.b16 %v923
        %v3217 = vunpack.c.h.b16 %v923
        %v3218 = vunpack.c.l.b16 %v924
        %v3219 = vunpack.c.h.b16 %v924
        %v3220 = vunpack.c.l.b16 %v925
        %v3221 = vunpack.c.h.b16 %v925
        %v3222 = vunpack.c.l.b16 %v926
        %v3223 = vunpack.c.h.b16 %v926
        %v3224 = vunpack.c.l.b16 %v927
        %v3225 = vunpack.c.h.b16 %v927
        %v3226 = vunpack.c.l.b16 %v928
        %v3227 = vunpack.c.h.b16 %v928
        %v3228 = vunpack.c.l.b16 %v929
        %v3229 = vunpack.c.h.b16 %v929
        %v3230 = vunpack.c.l.b16 %v930
        %v3231 = vunpack.c.h.b16 %v930
        %v3232 = vunpack.c.l.b16 %v931
        %v3233 = vunpack.c.h.b16 %v931
        %v3234 = vunpack.c.l.b16 %v932
        %v3235 = vunpack.c.h.b16 %v932
        %v3236 = vunpack.c.l.b16 %v933
        %v3237 = vunpack.c.h.b16 %v933
        %v3238 = vunpack.c.l.b16 %v934
        %v3239 = vunpack.c.h.b16 %v934
        %v3240 = vunpack.c.l.b16 %v935
        %v3241 = vunpack.c.h.b16 %v935
        %v3242 = vunpack.c.l.b16 %v936
        %v3243 = vunpack.c.h.b16 %v936
        %v3244 = vunpack.c.l.b16 %v937
        %v3245 = vunpack.c.h.b16 %v937
        %v3246 = vunpack.c.l.b16 %v938
        %v3247 = vunpack.c.h.b16 %v938
        %v3248 = vunpack.c.l.b16 %v939
        %v3249 = vunpack.c.h.b16 %v939
        %v3250 = vunpack.c.l.b16 %v940
        %v3251 = vunpack.c.h.b16 %v940
        %v3252 = vunpack.c.l.b16 %v941
        %v3253 = vunpack.c.h.b16 %v941
        %v3254 = vunpack.c.l.b16 %v942
        %v3255 = vunpack.c.h.b16 %v942
        %v3256 = vunpack.c.l.b16 %v943
        %v3257 = vunpack.c.h.b16 %v943
        %v3258 = vunpack.c.l.b16 %v944
        %v3259 = vunpack.c.h.b16 %v944
        %v3260 = vunpack.c.l.b16 %v945
        %v3261 = vunpack.c.h.b16 %v945
        %v3262 = vunpack.c.l.b16 %v946
        %v3263 = vunpack.c.h.b16 %v946
        %v3264 = vunpack.c.l.b16 %v947
        %v3265 = vunpack.c.h.b16 %v947
        %v3266 = vunpack.c.l.b16 %v948
        %v3267 = vunpack.c.h.b16 %v948
        %v3268 = vunpack.c.l.b16 %v949
        %v3269 = vunpack.c.h.b16 %v949
        %v3270 = vunpack.c.l.b16 %v950
        %v3271 = vunpack.c.h.b16 %v950
        %v3272 = vunpack.c.l.b16 %v951
        %v3273 = vunpack.c.h.b16 %v951
        %v3274 = vunpack.c.l.b16 %v952
        %v3275 = vunpack.c.h.b16 %v952
        %v3276 = vunpack.c.l.b16 %v953
        %v3277 = vunpack.c.h.b16 %v953
        %v3278 = vunpack.c.l.b16 %v954
        %v3279 = vunpack.c.h.b16 %v954
        %v3280 = vunpack.c.l.b16 %v955
        %v3281 = vunpack.c.h.b16 %v955
        %v3282 = vunpack.c.l.b16 %v956
        %v3283 = vunpack.c.h.b16 %v956
        %v3284 = vunpack.c.l.b16 %v957
        %v3285 = vunpack.c.h.b16 %v957
        %v3286 = vunpack.c.l.b16 %v958
        %v3287 = vunpack.c.h.b16 %v958
        %v3288 = vunpack.c.l.b16 %v959
        %v3289 = vunpack.c.h.b16 %v959
        %v3290 = vunpack.c.l.b16 %v960
        %v3291 = vunpack.c.h.b16 %v960
        %v3292 = vunpack.c.l.b16 %v961
        %v3293 = vunpack.c.h.b16 %v961
        %v3294 = vunpack.c.l.b16 %v962
        %v3295 = vunpack.c.h.b16 %v962
        %v3296 = vunpack.c.l.b16 %v963
        %v3297 = vunpack.c.h.b16 %v963
        %v3298 = vunpack.c.l.b16 %v964
        %v3299 = vunpack.c.h.b16 %v964
        %v3300 = vunpack.c.l.b16 %v965
        %v3301 = vunpack.c.h.b16 %v965
        %v3302 = vunpack.c.l.b16 %v966
        %v3303 = vunpack.c.h.b16 %v966
        %v3304 = vunpack.c.l.b16 %v967
        %v3305 = vunpack.c.h.b16 %v967
        %v3306 = vunpack.c.l.b16 %v968
        %v3307 = vunpack.c.h.b16 %v968
        %v3308 = vunpack.c.l.b16 %v969
        %v3309 = vunpack.c.h.b16 %v969
        %v3310 = vunpack.c.l.b16 %v970
        %v3311 = vunpack.c.h.b16 %v970
        %v3312 = vunpack.c.l.b16 %v971
        %v3313 = vunpack.c.h.b16 %v971
        %v3314 = vunpack.c.l.b16 %v972
        %v3315 = vunpack.c.h.b16 %v972
        %v3316 = vunpack.c.l.b16 %v973
        %v3317 = vunpack.c.h.b16 %v973
        %v3318 = vunpack.c.l.b16 %v974
        %v3319 = vunpack.c.h.b16 %v974
        %v3320 = vunpack.c.l.b16 %v975
        %v3321 = vunpack.c.h.b16 %v975
        %v3322 = vunpack.c.l.b16 %v976
        %v3323 = vunpack.c.h.b16 %v976
        %v3324 = vunpack.c.l.b16 %v977
        %v3325 = vunpack.c.h.b16 %v977
        %v3326 = vunpack.c.l.b16 %v978
        %v3327 = vunpack.c.h.b16 %v978
        %v3328 = vunpack.c.l.b16 %v979
        %v3329 = vunpack.c.h.b16 %v979
        %v3330 = vunpack.c.l.b16 %v980
        %v3331 = vunpack.c.h.b16 %v980
        %v3332 = vunpack.c.l.b16 %v981
        %v3333 = vunpack.c.h.b16 %v981
        %v3334 = vunpack.c.l.b16 %v982
        %v3335 = vunpack.c.h.b16 %v982
        %v3336 = vunpack.c.l.b16 %v983
        %v3337 = vunpack.c.h.b16 %v983
        %v3338 = vunpack.c.l.b16 %v984
        %v3339 = vunpack.c.h.b16 %v984
        %v3340 = vunpack.c.l.b16 %v985
        %v3341 = vunpack.c.h.b16 %v985
        %v3342 = vunpack.c.l.b16 %v986
        %v3343 = vunpack.c.h.b16 %v986
        %v3344 = vunpack.c.l.b16 %v987
        %v3345 = vunpack.c.h.b16 %v987
        %v3346 = vunpack.c.l.b16 %v988
        %v3347 = vunpack.c.h.b16 %v988
        %v3348 = vunpack.c.l.b16 %v989
        %v3349 = vunpack.c.h.b16 %v989
        %v3350 = vunpack.c.l.b16 %v990
        %v3351 = vunpack.c.h.b16 %v990
        %v3352 = vunpack.c.l.b16 %v991
        %v3353 = vunpack.c.h.b16 %v991
        %v3354 = vunpack.c.l.b16 %v992
        %v3355 = vunpack.c.h.b16 %v992
        %v3356 = vunpack.c.l.b16 %v993
        %v3357 = vunpack.c.h.b16 %v993
        %v3358 = vunpack.c.l.b16 %v994
        %v3359 = vunpack.c.h.b16 %v994
        %v3360 = vunpack.c.l.b16 %v995
        %v3361 = vunpack.c.h.b16 %v995
        %v3362 = vunpack.c.l.b16 %v996
        %v3363 = vunpack.c.h.b16 %v996
        %v3364 = vunpack.c.l.b16 %v997
        %v3365 = vunpack.c.h.b16 %v997
        %v3366 = vunpack.c.l.b16 %v998
        %v3367 = vunpack.c.h.b16 %v998
        %v3368 = vunpack.c.l.b16 %v999
        %v3369 = vunpack.c.h.b16 %v999
        %v3370 = vunpack.c.l.b16 %v1000
        %v3371 = vunpack.c.h.b16 %v1000
        %v3372 = vunpack.c.l.b16 %v1001
        %v3373 = vunpack.c.h.b16 %v1001
        %v3374 = vunpack.c.l.b16 %v1002
        %v3375 = vunpack.c.h.b16 %v1002
        %v3376 = vunpack.c.l.b16 %v1003
        %v3377 = vunpack.c.h.b16 %v1003
        %v3378 = vunpack.c.l.b16 %v1004
        %v3379 = vunpack.c.h.b16 %v1004
        %v3380 = vunpack.c.l.b16 %v1005
        %v3381 = vunpack.c.h.b16 %v1005
        %v3382 = vunpack.c.l.b16 %v1006
        %v3383 = vunpack.c.h.b16 %v1006
        %v3384 = vunpack.c.l.b16 %v1007
        %v3385 = vunpack.c.h.b16 %v1007
        %v3386 = vunpack.c.l.b16 %v1008
        %v3387 = vunpack.c.h.b16 %v1008
        %v3388 = vunpack.c.l.b16 %v1009
        %v3389 = vunpack.c.h.b16 %v1009
        %v3390 = vunpack.c.l.b16 %v1010
        %v3391 = vunpack.c.h.b16 %v1010
        %v3392 = vunpack.c.l.b16 %v1011
        %v3393 = vunpack.c.h.b16 %v1011
        %v3394 = vunpack.c.l.b16 %v1012
        %v3395 = vunpack.c.h.b16 %v1012
        %v3396 = vunpack.c.l.b16 %v1013
        %v3397 = vunpack.c.h.b16 %v1013
        %v3398 = vunpack.c.l.b16 %v1014
        %v3399 = vunpack.c.h.b16 %v1014
        %v3400 = vunpack.c.l.b16 %v1015
        %v3401 = vunpack.c.h.b16 %v1015
        %v3402 = vunpack.c.l.b16 %v1016
        %v3403 = vunpack.c.h.b16 %v1016
        %v3404 = vunpack.c.l.b16 %v1017
        %v3405 = vunpack.c.h.b16 %v1017
        %v3406 = vunpack.c.l.b16 %v1018
        %v3407 = vunpack.c.h.b16 %v1018
        %v3408 = vunpack.c.l.b16 %v1019
        %v3409 = vunpack.c.h.b16 %v1019
        %v3410 = vunpack.c.l.b16 %v1020
        %v3411 = vunpack.c.h.b16 %v1020
        %v3412 = vunpack.c.l.b16 %v1021
        %v3413 = vunpack.c.h.b16 %v1021
        %v3414 = vunpack.c.l.b16 %v1022
        %v3415 = vunpack.c.h.b16 %v1022
        %v3416 = vunpack.c.l.b16 %v1023
        %v3417 = vunpack.c.h.b16 %v1023
        %v3418 = vunpack.c.l.b16 %v1024
        %v3419 = vunpack.c.h.b16 %v1024
        %v3420 = vunpack.c.l.b16 %v1025
        %v3421 = vunpack.c.h.b16 %v1025
        %v3422 = vunpack.c.l.b16 %v1026
        %v3423 = vunpack.c.h.b16 %v1026
        %v3424 = vunpack.c.l.b16 %v1027
        %v3425 = vunpack.c.h.b16 %v1027
        %v3426 = vunpack.c.l.b16 %v1028
        %v3427 = vunpack.c.h.b16 %v1028
        %v3428 = vunpack.c.l.b16 %v1029
        %v3429 = vunpack.c.h.b16 %v1029
        %v3430 = vunpack.c.l.b16 %v1030
        %v3431 = vunpack.c.h.b16 %v1030
        %v3432 = vunpack.c.l.b16 %v1031
        %v3433 = vunpack.c.h.b16 %v1031
        %v3434 = vunpack.c.l.b16 %v1032
        %v3435 = vunpack.c.h.b16 %v1032
        %v3436 = vunpack.c.l.b16 %v1033
        %v3437 = vunpack.c.h.b16 %v1033
        %v3438 = vunpack.c.l.b16 %v1034
        %v3439 = vunpack.c.h.b16 %v1034
        %v3440 = vunpack.c.l.b16 %v1035
        %v3441 = vunpack.c.h.b16 %v1035
        %v3442 = vunpack.c.l.b16 %v1036
        %v3443 = vunpack.c.h.b16 %v1036
        %v3444 = vunpack.c.l.b16 %v1037
        %v3445 = vunpack.c.h.b16 %v1037
        %v3446 = vunpack.c.l.b16 %v1038
        %v3447 = vunpack.c.h.b16 %v1038
        %v3448 = vunpack.c.l.b16 %v1039
        %v3449 = vunpack.c.h.b16 %v1039
        %v3450 = vunpack.c.l.b16 %v1040
        %v3451 = vunpack.c.h.b16 %v1040
        %v3452 = vunpack.c.l.b16 %v1041
        %v3453 = vunpack.c.h.b16 %v1041
        %v3454 = vunpack.c.l.b16 %v1042
        %v3455 = vunpack.c.h.b16 %v1042
        %v3456 = vunpack.c.l.b16 %v1043
        %v3457 = vunpack.c.h.b16 %v1043
        %v3458 = vunpack.c.l.b16 %v1044
        %v3459 = vunpack.c.h.b16 %v1044
        %v3460 = vunpack.c.l.b16 %v1045
        %v3461 = vunpack.c.h.b16 %v1045
        %v3462 = vunpack.c.l.b16 %v1046
        %v3463 = vunpack.c.h.b16 %v1046
        %v3464 = vunpack.c.l.b16 %v1047
        %v3465 = vunpack.c.h.b16 %v1047
        %v3466 = vpack.c.b16 %v1946, %v1930
        %v3467 = vpack.c.b16 %v1947, %v1931
        %v3468 = vpack.c.b16 %v1948, %v1932
        %v3469 = vpack.c.b16 %v1949, %v1933
        %v3470 = vpack.c.b16 %v1950, %v1934
        %v3471 = vpack.c.b16 %v1951, %v1935
        %v3472 = vpack.c.b16 %v1952, %v1936
        %v3473 = vpack.c.b16 %v1953, %v1937
        %v3474 = vpack.c.b16 %v1954, %v1938
        %v3475 = vpack.c.b16 %v1955, %v1939
        %v3476 = vpack.c.b16 %v1956, %v1940
        %v3477 = vpack.c.b16 %v1957, %v1941
        %v3478 = vpack.c.b16 %v1958, %v1942
        %v3479 = vpack.c.b16 %v1959, %v1943
        %v3480 = vpack.c.b16 %v1960, %v1944
        %v3481 = vpack.c.b16 %v1961, %v1945
        %v3482 = vpack.c.b16 %v1978, %v1962
        %v3483 = vpack.c.b16 %v1979, %v1963
        %v3484 = vpack.c.b16 %v1980, %v1964
        %v3485 = vpack.c.b16 %v1981, %v1965
        %v3486 = vpack.c.b16 %v1982, %v1966
        %v3487 = vpack.c.b16 %v1983, %v1967
        %v3488 = vpack.c.b16 %v1984, %v1968
        %v3489 = vpack.c.b16 %v1985, %v1969
        %v3490 = vpack.c.b16 %v1986, %v1970
        %v3491 = vpack.c.b16 %v1987, %v1971
        %v3492 = vpack.c.b16 %v1988, %v1972
        %v3493 = vpack.c.b16 %v1989, %v1973
        %v3494 = vpack.c.b16 %v1990, %v1974
        %v3495 = vpack.c.b16 %v1991, %v1975
        %v3496 = vpack.c.b16 %v1992, %v1976
        %v3497 = vpack.c.b16 %v1993, %v1977
        %v3498 = vpack.c.b16 %v2010, %v1994
        %v3499 = vpack.c.b16 %v2011, %v1995
        %v3500 = vpack.c.b16 %v2012, %v1996
        %v3501 = vpack.c.b16 %v2013, %v1997
        %v3502 = vpack.c.b16 %v2014, %v1998
        %v3503 = vpack.c.b16 %v2015, %v1999
        %v3504 = vpack.c.b16 %v2016, %v2000
        %v3505 = vpack.c.b16 %v2017, %v2001
        %v3506 = vpack.c.b16 %v2018, %v2002
        %v3507 = vpack.c.b16 %v2019, %v2003
        %v3508 = vpack.c.b16 %v2020, %v2004
        %v3509 = vpack.c.b16 %v2021, %v2005
        %v3510 = vpack.c.b16 %v2022, %v2006
        %v3511 = vpack.c.b16 %v2023, %v2007
        %v3512 = vpack.c.b16 %v2024, %v2008
        %v3513 = vpack.c.b16 %v2025, %v2009
        %v3514 = vpack.c.b16 %v2042, %v2026
        %v3515 = vpack.c.b16 %v2043, %v2027
        %v3516 = vpack.c.b16 %v2044, %v2028
        %v3517 = vpack.c.b16 %v2045, %v2029
        %v3518 = vpack.c.b16 %v2046, %v2030
        %v3519 = vpack.c.b16 %v2047, %v2031
        %v3520 = vpack.c.b16 %v2048, %v2032
        %v3521 = vpack.c.b16 %v2049, %v2033
        %v3522 = vpack.c.b16 %v2050, %v2034
        %v3523 = vpack.c.b16 %v2051, %v2035
        %v3524 = vpack.c.b16 %v2052, %v2036
        %v3525 = vpack.c.b16 %v2053, %v2037
        %v3526 = vpack.c.b16 %v2054, %v2038
        %v3527 = vpack.c.b16 %v2055, %v2039
        %v3528 = vpack.c.b16 %v2056, %v2040
        %v3529 = vpack.c.b16 %v2057, %v2041
        %v3530 = vpack.c.b16 %v2074, %v2058
        %v3531 = vpack.c.b16 %v2075, %v2059
        %v3532 = vpack.c.b16 %v2076, %v2060
        %v3533 = vpack.c.b16 %v2077, %v2061
        %v3534 = vpack.c.b16 %v2078, %v2062
        %v3535 = vpack.c.b16 %v2079, %v2063
        %v3536 = vpack.c.b16 %v2080, %v2064
        %v3537 = vpack.c.b16 %v2081, %v2065
        %v3538 = vpack.c.b16 %v2082, %v2066
        %v3539 = vpack.c.b16 %v2083, %v2067
        %v3540 = vpack.c.b16 %v2084, %v2068
        %v3541 = vpack.c.b16 %v2085, %v2069
        %v3542 = vpack.c.b16 %v2086, %v2070
        %v3543 = vpack.c.b16 %v2087, %v2071
        %v3544 = vpack.c.b16 %v2088, %v2072
        %v3545 = vpack.c.b16 %v2089, %v2073
        %v3546 = vpack.c.b16 %v2106, %v2090
        %v3547 = vpack.c.b16 %v2107, %v2091
        %v3548 = vpack.c.b16 %v2108, %v2092
        %v3549 = vpack.c.b16 %v2109, %v2093
        %v3550 = vpack.c.b16 %v2110, %v2094
        %v3551 = vpack.c.b16 %v2111, %v2095
        %v3552 = vpack.c.b16 %v2112, %v2096
        %v3553 = vpack.c.b16 %v2113, %v2097
        %v3554 = vpack.c.b16 %v2114, %v2098
        %v3555 = vpack.c.b16 %v2115, %v2099
        %v3556 = vpack.c.b16 %v2116, %v2100
        %v3557 = vpack.c.b16 %v2117, %v2101
        %v3558 = vpack.c.b16 %v2118, %v2102
        %v3559 = vpack.c.b16 %v2119, %v2103
        %v3560 = vpack.c.b16 %v2120, %v2104
        %v3561 = vpack.c.b16 %v2121, %v2105
        %v3562 = vpack.c.b16 %v2138, %v2122
        %v3563 = vpack.c.b16 %v2139, %v2123
        %v3564 = vpack.c.b16 %v2140, %v2124
        %v3565 = vpack.c.b16 %v2141, %v2125
        %v3566 = vpack.c.b16 %v2142, %v2126
        %v3567 = vpack.c.b16 %v2143, %v2127
        %v3568 = vpack.c.b16 %v2144, %v2128
        %v3569 = vpack.c.b16 %v2145, %v2129
        %v3570 = vpack.c.b16 %v2146, %v2130
        %v3571 = vpack.c.b16 %v2147, %v2131
        %v3572 = vpack.c.b16 %v2148, %v2132
        %v3573 = vpack.c.b16 %v2149, %v2133
        %v3574 = vpack.c.b16 %v2150, %v2134
        %v3575 = vpack.c.b16 %v2151, %v2135
        %v3576 = vpack.c.b16 %v2152, %v2136
        %v3577 = vpack.c.b16 %v2153, %v2137
        %v3578 = vpack.c.b16 %v2170, %v2154
        %v3579 = vpack.c.b16 %v2171, %v2155
        %v3580 = vpack.c.b16 %v2172, %v2156
        %v3581 = vpack.c.b16 %v2173, %v2157
        %v3582 = vpack.c.b16 %v2174, %v2158
        %v3583 = vpack.c.b16 %v2175, %v2159
        %v3584 = vpack.c.b16 %v2176, %v2160
        %v3585 = vpack.c.b16 %v2177, %v2161
        %v3586 = vpack.c.b16 %v2178, %v2162
        %v3587 = vpack.c.b16 %v2179, %v2163
        %v3588 = vpack.c.b16 %v2180, %v2164
        %v3589 = vpack.c.b16 %v2181, %v2165
        %v3590 = vpack.c.b16 %v2182, %v2166
        %v3591 = vpack.c.b16 %v2183, %v2167
        %v3592 = vpack.c.b16 %v2184, %v2168
        %v3593 = vpack.c.b16 %v2185, %v2169
        %v3594 = vpack.c.b16 %v2202, %v2186
        %v3595 = vpack.c.b16 %v2203, %v2187
        %v3596 = vpack.c.b16 %v2204, %v2188
        %v3597 = vpack.c.b16 %v2205, %v2189
        %v3598 = vpack.c.b16 %v2206, %v2190
        %v3599 = vpack.c.b16 %v2207, %v2191
        %v3600 = vpack.c.b16 %v2208, %v2192
        %v3601 = vpack.c.b16 %v2209, %v2193
        %v3602 = vpack.c.b16 %v2210, %v2194
        %v3603 = vpack.c.b16 %v2211, %v2195
        %v3604 = vpack.c.b16 %v2212, %v2196
        %v3605 = vpack.c.b16 %v2213, %v2197
        %v3606 = vpack.c.b16 %v2214, %v2198
        %v3607 = vpack.c.b16 %v2215, %v2199
        %v3608 = vpack.c.b16 %v2216, %v2200
        %v3609 = vpack.c.b16 %v2217, %v2201
        %v3610 = vpack.c.b16 %v2234, %v2218
        %v3611 = vpack.c.b16 %v2235, %v2219
        %v3612 = vpack.c.b16 %v2236, %v2220
        %v3613 = vpack.c.b16 %v2237, %v2221
        %v3614 = vpack.c.b16 %v2238, %v2222
        %v3615 = vpack.c.b16 %v2239, %v2223
        %v3616 = vpack.c.b16 %v2240, %v2224
        %v3617 = vpack.c.b16 %v2241, %v2225
        %v3618 = vpack.c.b16 %v2242, %v2226
        %v3619 = vpack.c.b16 %v2243, %v2227
        %v3620 = vpack.c.b16 %v2244, %v2228
        %v3621 = vpack.c.b16 %v2245, %v2229
        %v3622 = vpack.c.b16 %v2246, %v2230
        %v3623 = vpack.c.b16 %v2247, %v2231
        %v3624 = vpack.c.b16 %v2248, %v2232
        %v3625 = vpack.c.b16 %v2249, %v2233
        %v3626 = vpack.c.b16 %v2266, %v2250
        %v3627 = vpack.c.b16 %v2267, %v2251
        %v3628 = vpack.c.b16 %v2268, %v2252
        %v3629 = vpack.c.b16 %v2269, %v2253
        %v3630 = vpack.c.b16 %v2270, %v2254
        %v3631 = vpack.c.b16 %v2271, %v2255
        %v3632 = vpack.c.b16 %v2272, %v2256
        %v3633 = vpack.c.b16 %v2273, %v2257
        %v3634 = vpack.c.b16 %v2274, %v2258
        %v3635 = vpack.c.b16 %v2275, %v2259
        %v3636 = vpack.c.b16 %v2276, %v2260
        %v3637 = vpack.c.b16 %v2277, %v2261
        %v3638 = vpack.c.b16 %v2278, %v2262
        %v3639 = vpack.c.b16 %v2279, %v2263
        %v3640 = vpack.c.b16 %v2280, %v2264
        %v3641 = vpack.c.b16 %v2281, %v2265
        %v3642 = vpack.c.b16 %v2298, %v2282
        %v3643 = vpack.c.b16 %v2299, %v2283
        %v3644 = vpack.c.b16 %v2300, %v2284
        %v3645 = vpack.c.b16 %v2301, %v2285
        %v3646 = vpack.c.b16 %v2302, %v2286
        %v3647 = vpack.c.b16 %v2303, %v2287
        %v3648 = vpack.c.b16 %v2304, %v2288
        %v3649 = vpack.c.b16 %v2305, %v2289
        %v3650 = vpack.c.b16 %v2306, %v2290
        %v3651 = vpack.c.b16 %v2307, %v2291
        %v3652 = vpack.c.b16 %v2308, %v2292
        %v3653 = vpack.c.b16 %v2309, %v2293
        %v3654 = vpack.c.b16 %v2310, %v2294
        %v3655 = vpack.c.b16 %v2311, %v2295
        %v3656 = vpack.c.b16 %v2312, %v2296
        %v3657 = vpack.c.b16 %v2313, %v2297
        %v3658 = vpack.c.b16 %v2330, %v2314
        %v3659 = vpack.c.b16 %v2331, %v2315
        %v3660 = vpack.c.b16 %v2332, %v2316
        %v3661 = vpack.c.b16 %v2333, %v2317
        %v3662 = vpack.c.b16 %v2334, %v2318
        %v3663 = vpack.c.b16 %v2335, %v2319
        %v3664 = vpack.c.b16 %v2336, %v2320
        %v3665 = vpack.c.b16 %v2337, %v2321
        %v3666 = vpack.c.b16 %v2338, %v2322
        %v3667 = vpack.c.b16 %v2339, %v2323
        %v3668 = vpack.c.b16 %v2340, %v2324
        %v3669 = vpack.c.b16 %v2341, %v2325
        %v3670 = vpack.c.b16 %v2342, %v2326
        %v3671 = vpack.c.b16 %v2343, %v2327
        %v3672 = vpack.c.b16 %v2344, %v2328
        %v3673 = vpack.c.b16 %v2345, %v2329
        %v3674 = vpack.c.b16 %v2362, %v2346
        %v3675 = vpack.c.b16 %v2363, %v2347
        %v3676 = vpack.c.b16 %v2364, %v2348
        %v3677 = vpack.c.b16 %v2365, %v2349
        %v3678 = vpack.c.b16 %v2366, %v2350
        %v3679 = vpack.c.b16 %v2367, %v2351
        %v3680 = vpack.c.b16 %v2368, %v2352
        %v3681 = vpack.c.b16 %v2369, %v2353
        %v3682 = vpack.c.b16 %v2370, %v2354
        %v3683 = vpack.c.b16 %v2371, %v2355
        %v3684 = vpack.c.b16 %v2372, %v2356
        %v3685 = vpack.c.b16 %v2373, %v2357
        %v3686 = vpack.c.b16 %v2374, %v2358
        %v3687 = vpack.c.b16 %v2375, %v2359
        %v3688 = vpack.c.b16 %v2376, %v2360
        %v3689 = vpack.c.b16 %v2377, %v2361
        %v3690 = vpack.c.b16 %v2394, %v2378
        %v3691 = vpack.c.b16 %v2395, %v2379
        %v3692 = vpack.c.b16 %v2396, %v2380
        %v3693 = vpack.c.b16 %v2397, %v2381
        %v3694 = vpack.c.b16 %v2398, %v2382
        %v3695 = vpack.c.b16 %v2399, %v2383
        %v3696 = vpack.c.b16 %v2400, %v2384
        %v3697 = vpack.c.b16 %v2401, %v2385
        %v3698 = vpack.c.b16 %v2402, %v2386
        %v3699 = vpack.c.b16 %v2403, %v2387
        %v3700 = vpack.c.b16 %v2404, %v2388
        %v3701 = vpack.c.b16 %v2405, %v2389
        %v3702 = vpack.c.b16 %v2406, %v2390
        %v3703 = vpack.c.b16 %v2407, %v2391
        %v3704 = vpack.c.b16 %v2408, %v2392
        %v3705 = vpack.c.b16 %v2409, %v2393
        %v3706 = vpack.c.b16 %v2426, %v2410
        %v3707 = vpack.c.b16 %v2427, %v2411
        %v3708 = vpack.c.b16 %v2428, %v2412
        %v3709 = vpack.c.b16 %v2429, %v2413
        %v3710 = vpack.c.b16 %v2430, %v2414
        %v3711 = vpack.c.b16 %v2431, %v2415
        %v3712 = vpack.c.b16 %v2432, %v2416
        %v3713 = vpack.c.b16 %v2433, %v2417
        %v3714 = vpack.c.b16 %v2434, %v2418
        %v3715 = vpack.c.b16 %v2435, %v2419
        %v3716 = vpack.c.b16 %v2436, %v2420
        %v3717 = vpack.c.b16 %v2437, %v2421
        %v3718 = vpack.c.b16 %v2438, %v2422
        %v3719 = vpack.c.b16 %v2439, %v2423
        %v3720 = vpack.c.b16 %v2440, %v2424
        %v3721 = vpack.c.b16 %v2441, %v2425
        %v3722 = vpack.c.b16 %v2458, %v2442
        %v3723 = vpack.c.b16 %v2459, %v2443
        %v3724 = vpack.c.b16 %v2460, %v2444
        %v3725 = vpack.c.b16 %v2461, %v2445
        %v3726 = vpack.c.b16 %v2462, %v2446
        %v3727 = vpack.c.b16 %v2463, %v2447
        %v3728 = vpack.c.b16 %v2464, %v2448
        %v3729 = vpack.c.b16 %v2465, %v2449
        %v3730 = vpack.c.b16 %v2466, %v2450
        %v3731 = vpack.c.b16 %v2467, %v2451
        %v3732 = vpack.c.b16 %v2468, %v2452
        %v3733 = vpack.c.b16 %v2469, %v2453
        %v3734 = vpack.c.b16 %v2470, %v2454
        %v3735 = vpack.c.b16 %v2471, %v2455
        %v3736 = vpack.c.b16 %v2472, %v2456
        %v3737 = vpack.c.b16 %v2473, %v2457
        %v3738 = vpack.c.b16 %v2490, %v2474
        %v3739 = vpack.c.b16 %v2491, %v2475
        %v3740 = vpack.c.b16 %v2492, %v2476
        %v3741 = vpack.c.b16 %v2493, %v2477
        %v3742 = vpack.c.b16 %v2494, %v2478
        %v3743 = vpack.c.b16 %v2495, %v2479
        %v3744 = vpack.c.b16 %v2496, %v2480
        %v3745 = vpack.c.b16 %v2497, %v2481
        %v3746 = vpack.c.b16 %v2498, %v2482
        %v3747 = vpack.c.b16 %v2499, %v2483
        %v3748 = vpack.c.b16 %v2500, %v2484
        %v3749 = vpack.c.b16 %v2501, %v2485
        %v3750 = vpack.c.b16 %v2502, %v2486
        %v3751 = vpack.c.b16 %v2503, %v2487
        %v3752 = vpack.c.b16 %v2504, %v2488
        %v3753 = vpack.c.b16 %v2505, %v2489
        %v3754 = vpack.c.b16 %v2522, %v2506
        %v3755 = vpack.c.b16 %v2523, %v2507
        %v3756 = vpack.c.b16 %v2524, %v2508
        %v3757 = vpack.c.b16 %v2525, %v2509
        %v3758 = vpack.c.b16 %v2526, %v2510
        %v3759 = vpack.c.b16 %v2527, %v2511
        %v3760 = vpack.c.b16 %v2528, %v2512
        %v3761 = vpack.c.b16 %v2529, %v2513
        %v3762 = vpack.c.b16 %v2530, %v2514
        %v3763 = vpack.c.b16 %v2531, %v2515
        %v3764 = vpack.c.b16 %v2532, %v2516
        %v3765 = vpack.c.b16 %v2533, %v2517
        %v3766 = vpack.c.b16 %v2534, %v2518
        %v3767 = vpack.c.b16 %v2535, %v2519
        %v3768 = vpack.c.b16 %v2536, %v2520
        %v3769 = vpack.c.b16 %v2537, %v2521
        %v3770 = vpack.c.b16 %v2554, %v2538
        %v3771 = vpack.c.b16 %v2555, %v2539
        %v3772 = vpack.c.b16 %v2556, %v2540
        %v3773 = vpack.c.b16 %v2557, %v2541
        %v3774 = vpack.c.b16 %v2558, %v2542
        %v3775 = vpack.c.b16 %v2559, %v2543
        %v3776 = vpack.c.b16 %v2560, %v2544
        %v3777 = vpack.c.b16 %v2561, %v2545
        %v3778 = vpack.c.b16 %v2562, %v2546
        %v3779 = vpack.c.b16 %v2563, %v2547
        %v3780 = vpack.c.b16 %v2564, %v2548
        %v3781 = vpack.c.b16 %v2565, %v2549
        %v3782 = vpack.c.b16 %v2566, %v2550
        %v3783 = vpack.c.b16 %v2567, %v2551
        %v3784 = vpack.c.b16 %v2568, %v2552
        %v3785 = vpack.c.b16 %v2569, %v2553
        %v3786 = vpack.c.b16 %v2586, %v2570
        %v3787 = vpack.c.b16 %v2587, %v2571
        %v3788 = vpack.c.b16 %v2588, %v2572
        %v3789 = vpack.c.b16 %v2589, %v2573
        %v3790 = vpack.c.b16 %v2590, %v2574
        %v3791 = vpack.c.b16 %v2591, %v2575
        %v3792 = vpack.c.b16 %v2592, %v2576
        %v3793 = vpack.c.b16 %v2593, %v2577
        %v3794 = vpack.c.b16 %v2594, %v2578
        %v3795 = vpack.c.b16 %v2595, %v2579
        %v3796 = vpack.c.b16 %v2596, %v2580
        %v3797 = vpack.c.b16 %v2597, %v2581
        %v3798 = vpack.c.b16 %v2598, %v2582
        %v3799 = vpack.c.b16 %v2599, %v2583
        %v3800 = vpack.c.b16 %v2600, %v2584
        %v3801 = vpack.c.b16 %v2601, %v2585
        %v3802 = vpack.c.b16 %v2618, %v2602
        %v3803 = vpack.c.b16 %v2619, %v2603
        %v3804 = vpack.c.b16 %v2620, %v2604
        %v3805 = vpack.c.b16 %v2621, %v2605
        %v3806 = vpack.c.b16 %v2622, %v2606
        %v3807 = vpack.c.b16 %v2623, %v2607
        %v3808 = vpack.c.b16 %v2624, %v2608
        %v3809 = vpack.c.b16 %v2625, %v2609
        %v3810 = vpack.c.b16 %v2626, %v2610
        %v3811 = vpack.c.b16 %v2627, %v2611
        %v3812 = vpack.c.b16 %v2628, %v2612
        %v3813 = vpack.c.b16 %v2629, %v2613
        %v3814 = vpack.c.b16 %v2630, %v2614
        %v3815 = vpack.c.b16 %v2631, %v2615
        %v3816 = vpack.c.b16 %v2632, %v2616
        %v3817 = vpack.c.b16 %v2633, %v2617
        %v3818 = vpack.c.b16 %v2650, %v2634
        %v3819 = vpack.c.b16 %v2651, %v2635
        %v3820 = vpack.c.b16 %v2652, %v2636
        %v3821 = vpack.c.b16 %v2653, %v2637
        %v3822 = vpack.c.b16 %v2654, %v2638
        %v3823 = vpack.c.b16 %v2655, %v2639
        %v3824 = vpack.c.b16 %v2656, %v2640
        %v3825 = vpack.c.b16 %v2657, %v2641
        %v3826 = vpack.c.b16 %v2658, %v2642
        %v3827 = vpack.c.b16 %v2659, %v2643
        %v3828 = vpack.c.b16 %v2660, %v2644
        %v3829 = vpack.c.b16 %v2661, %v2645
        %v3830 = vpack.c.b16 %v2662, %v2646
        %v3831 = vpack.c.b16 %v2663, %v2647
        %v3832 = vpack.c.b16 %v2664, %v2648
        %v3833 = vpack.c.b16 %v2665, %v2649
        %v3834 = vpack.c.b16 %v2682, %v2666
        %v3835 = vpack.c.b16 %v2683, %v2667
        %v3836 = vpack.c.b16 %v2684, %v2668
        %v3837 = vpack.c.b16 %v2685, %v2669
        %v3838 = vpack.c.b16 %v2686, %v2670
        %v3839 = vpack.c.b16 %v2687, %v2671
        %v3840 = vpack.c.b16 %v2688, %v2672
        %v3841 = vpack.c.b16 %v2689, %v2673
        %v3842 = vpack.c.b16 %v2690, %v2674
        %v3843 = vpack.c.b16 %v2691, %v2675
        %v3844 = vpack.c.b16 %v2692, %v2676
        %v3845 = vpack.c.b16 %v2693, %v2677
        %v3846 = vpack.c.b16 %v2694, %v2678
        %v3847 = vpack.c.b16 %v2695, %v2679
        %v3848 = vpack.c.b16 %v2696, %v2680
        %v3849 = vpack.c.b16 %v2697, %v2681
        %v3850 = vpack.c.b16 %v2714, %v2698
        %v3851 = vpack.c.b16 %v2715, %v2699
        %v3852 = vpack.c.b16 %v2716, %v2700
        %v3853 = vpack.c.b16 %v2717, %v2701
        %v3854 = vpack.c.b16 %v2718, %v2702
        %v3855 = vpack.c.b16 %v2719, %v2703
        %v3856 = vpack.c.b16 %v2720, %v2704
        %v3857 = vpack.c.b16 %v2721, %v2705
        %v3858 = vpack.c.b16 %v2722, %v2706
        %v3859 = vpack.c.b16 %v2723, %v2707
        %v3860 = vpack.c.b16 %v2724, %v2708
        %v3861 = vpack.c.b16 %v2725, %v2709
        %v3862 = vpack.c.b16 %v2726, %v2710
        %v3863 = vpack.c.b16 %v2727, %v2711
        %v3864 = vpack.c.b16 %v2728, %v2712
        %v3865 = vpack.c.b16 %v2729, %v2713
        %v3866 = vpack.c.b16 %v2746, %v2730
        %v3867 = vpack.c.b16 %v2747, %v2731
        %v3868 = vpack.c.b16 %v2748, %v2732
        %v3869 = vpack.c.b16 %v2749, %v2733
        %v3870 = vpack.c.b16 %v2750, %v2734
        %v3871 = vpack.c.b16 %v2751, %v2735
        %v3872 = vpack.c.b16 %v2752, %v2736
        %v3873 = vpack.c.b16 %v2753, %v2737
        %v3874 = vpack.c.b16 %v2754, %v2738
        %v3875 = vpack.c.b16 %v2755, %v2739
        %v3876 = vpack.c.b16 %v2756, %v2740
        %v3877 = vpack.c.b16 %v2757, %v2741
        %v3878 = vpack.c.b16 %v2758, %v2742
        %v3879 = vpack.c.b16 %v2759, %v2743
        %v3880 = vpack.c.b16 %v2760, %v2744
        %v3881 = vpack.c.b16 %v2761, %v2745
        %v3882 = vpack.c.b16 %v2778, %v2762
        %v3883 = vpack.c.b16 %v2779, %v2763
        %v3884 = vpack.c.b16 %v2780, %v2764
        %v3885 = vpack.c.b16 %v2781, %v2765
        %v3886 = vpack.c.b16 %v2782, %v2766
        %v3887 = vpack.c.b16 %v2783, %v2767
        %v3888 = vpack.c.b16 %v2784, %v2768
        %v3889 = vpack.c.b16 %v2785, %v2769
        %v3890 = vpack.c.b16 %v2786, %v2770
        %v3891 = vpack.c.b16 %v2787, %v2771
        %v3892 = vpack.c.b16 %v2788, %v2772
        %v3893 = vpack.c.b16 %v2789, %v2773
        %v3894 = vpack.c.b16 %v2790, %v2774
        %v3895 = vpack.c.b16 %v2791, %v2775
        %v3896 = vpack.c.b16 %v2792, %v2776
        %v3897 = vpack.c.b16 %v2793, %v2777
        %v3898 = vpack.c.b16 %v2810, %v2794
        %v3899 = vpack.c.b16 %v2811, %v2795
        %v3900 = vpack.c.b16 %v2812, %v2796
        %v3901 = vpack.c.b16 %v2813, %v2797
        %v3902 = vpack.c.b16 %v2814, %v2798
        %v3903 = vpack.c.b16 %v2815, %v2799
        %v3904 = vpack.c.b16 %v2816, %v2800
        %v3905 = vpack.c.b16 %v2817, %v2801
        %v3906 = vpack.c.b16 %v2818, %v2802
        %v3907 = vpack.c.b16 %v2819, %v2803
        %v3908 = vpack.c.b16 %v2820, %v2804
        %v3909 = vpack.c.b16 %v2821, %v2805
        %v3910 = vpack.c.b16 %v2822, %v2806
        %v3911 = vpack.c.b16 %v2823, %v2807
        %v3912 = vpack.c.b16 %v2824, %v2808
        %v3913 = vpack.c.b16 %v2825, %v2809
        %v3914 = vpack.c.b16 %v2842, %v2826
        %v3915 = vpack.c.b16 %v2843, %v2827
        %v3916 = vpack.c.b16 %v2844, %v2828
        %v3917 = vpack.c.b16 %v2845, %v2829
        %v3918 = vpack.c.b16 %v2846, %v2830
        %v3919 = vpack.c.b16 %v2847, %v2831
        %v3920 = vpack.c.b16 %v2848, %v2832
        %v3921 = vpack.c.b16 %v2849, %v2833
        %v3922 = vpack.c.b16 %v2850, %v2834
        %v3923 = vpack.c.b16 %v2851, %v2835
        %v3924 = vpack.c.b16 %v2852, %v2836
        %v3925 = vpack.c.b16 %v2853, %v2837
        %v3926 = vpack.c.b16 %v2854, %v2838
        %v3927 = vpack.c.b16 %v2855, %v2839
        %v3928 = vpack.c.b16 %v2856, %v2840
        %v3929 = vpack.c.b16 %v2857, %v2841
        %v3930 = vpack.c.b16 %v2874, %v2858
        %v3931 = vpack.c.b16 %v2875, %v2859
        %v3932 = vpack.c.b16 %v2876, %v2860
        %v3933 = vpack.c.b16 %v2877, %v2861
        %v3934 = vpack.c.b16 %v2878, %v2862
        %v3935 = vpack.c.b16 %v2879, %v2863
        %v3936 = vpack.c.b16 %v2880, %v2864
        %v3937 = vpack.c.b16 %v2881, %v2865
        %v3938 = vpack.c.b16 %v2882, %v2866
        %v3939 = vpack.c.b16 %v2883, %v2867
        %v3940 = vpack.c.b16 %v2884, %v2868
        %v3941 = vpack.c.b16 %v2885, %v2869
        %v3942 = vpack.c.b16 %v2886, %v2870
        %v3943 = vpack.c.b16 %v2887, %v2871
        %v3944 = vpack.c.b16 %v2888, %v2872
        %v3945 = vpack.c.b16 %v2889, %v2873
        %v3946 = vpack.c.b16 %v2906, %v2890
        %v3947 = vpack.c.b16 %v2907, %v2891
        %v3948 = vpack.c.b16 %v2908, %v2892
        %v3949 = vpack.c.b16 %v2909, %v2893
        %v3950 = vpack.c.b16 %v2910, %v2894
        %v3951 = vpack.c.b16 %v2911, %v2895
        %v3952 = vpack.c.b16 %v2912, %v2896
        %v3953 = vpack.c.b16 %v2913, %v2897
        %v3954 = vpack.c.b16 %v2914, %v2898
        %v3955 = vpack.c.b16 %v2915, %v2899
        %v3956 = vpack.c.b16 %v2916, %v2900
        %v3957 = vpack.c.b16 %v2917, %v2901
        %v3958 = vpack.c.b16 %v2918, %v2902
        %v3959 = vpack.c.b16 %v2919, %v2903
        %v3960 = vpack.c.b16 %v2920, %v2904
        %v3961 = vpack.c.b16 %v2921, %v2905
        %v3962 = vpack.c.b16 %v2938, %v2922
        %v3963 = vpack.c.b16 %v2939, %v2923
        %v3964 = vpack.c.b16 %v2940, %v2924
        %v3965 = vpack.c.b16 %v2941, %v2925
        %v3966 = vpack.c.b16 %v2942, %v2926
        %v3967 = vpack.c.b16 %v2943, %v2927
        %v3968 = vpack.c.b16 %v2944, %v2928
        %v3969 = vpack.c.b16 %v2945, %v2929
        %v3970 = vpack.c.b16 %v2946, %v2930
        %v3971 = vpack.c.b16 %v2947, %v2931
        %v3972 = vpack.c.b16 %v2948, %v2932
        %v3973 = vpack.c.b16 %v2949, %v2933
        %v3974 = vpack.c.b16 %v2950, %v2934
        %v3975 = vpack.c.b16 %v2951, %v2935
        %v3976 = vpack.c.b16 %v2952, %v2936
        %v3977 = vpack.c.b16 %v2953, %v2937
        %v3978 = vpack.c.b16 %v2970, %v2954
        %v3979 = vpack.c.b16 %v2971, %v2955
        %v3980 = vpack.c.b16 %v2972, %v2956
        %v3981 = vpack.c.b16 %v2973, %v2957
        %v3982 = vpack.c.b16 %v2974, %v2958
        %v3983 = vpack.c.b16 %v2975, %v2959
        %v3984 = vpack.c.b16 %v2976, %v2960
        %v3985 = vpack.c.b16 %v2977, %v2961
        %v3986 = vpack.c.b16 %v2978, %v2962
        %v3987 = vpack.c.b16 %v2979, %v2963
        %v3988 = vpack.c.b16 %v2980, %v2964
        %v3989 = vpack.c.b16 %v2981, %v2965
        %v3990 = vpack.c.b16 %v2982, %v2966
        %v3991 = vpack.c.b16 %v2983, %v2967
        %v3992 = vpack.c.b16 %v2984, %v2968
        %v3993 = vpack.c.b16 %v2985, %v2969
        %v3994 = vpack.c.b16 %v3002, %v2986
        %v3995 = vpack.c.b16 %v3003, %v2987
        %v3996 = vpack.c.b16 %v3004, %v2988
        %v3997 = vpack.c.b16 %v3005, %v2989
        %v3998 = vpack.c.b16 %v3006, %v2990
        %v3999 = vpack.c.b16 %v3007, %v2991
        %v4000 = vpack.c.b16 %v3008, %v2992
        %v4001 = vpack.c.b16 %v3009, %v2993
        %v4002 = vpack.c.b16 %v3010, %v2994
        %v4003 = vpack.c.b16 %v3011, %v2995
        %v4004 = vpack.c.b16 %v3012, %v2996
        %v4005 = vpack.c.b16 %v3013, %v2997
        %v4006 = vpack.c.b16 %v3014, %v2998
        %v4007 = vpack.c.b16 %v3015, %v2999
        %v4008 = vpack.c.b16 %v3016, %v3000
        %v4009 = vpack.c.b16 %v3017, %v3001
        %v4010 = vpack.c.b16 %v3034, %v3018
        %v4011 = vpack.c.b16 %v3035, %v3019
        %v4012 = vpack.c.b16 %v3036, %v3020
        %v4013 = vpack.c.b16 %v3037, %v3021
        %v4014 = vpack.c.b16 %v3038, %v3022
        %v4015 = vpack.c.b16 %v3039, %v3023
        %v4016 = vpack.c.b16 %v3040, %v3024
        %v4017 = vpack.c.b16 %v3041, %v3025
        %v4018 = vpack.c.b16 %v3042, %v3026
        %v4019 = vpack.c.b16 %v3043, %v3027
        %v4020 = vpack.c.b16 %v3044, %v3028
        %v4021 = vpack.c.b16 %v3045, %v3029
        %v4022 = vpack.c.b16 %v3046, %v3030
        %v4023 = vpack.c.b16 %v3047, %v3031
        %v4024 = vpack.c.b16 %v3048, %v3032
        %v4025 = vpack.c.b16 %v3049, %v3033
        %v4026 = vpack.c.b16 %v3066, %v3050
        %v4027 = vpack.c.b16 %v3067, %v3051
        %v4028 = vpack.c.b16 %v3068, %v3052
        %v4029 = vpack.c.b16 %v3069, %v3053
        %v4030 = vpack.c.b16 %v3070, %v3054
        %v4031 = vpack.c.b16 %v3071, %v3055
        %v4032 = vpack.c.b16 %v3072, %v3056
        %v4033 = vpack.c.b16 %v3073, %v3057
        %v4034 = vpack.c.b16 %v3074, %v3058
        %v4035 = vpack.c.b16 %v3075, %v3059
        %v4036 = vpack.c.b16 %v3076, %v3060
        %v4037 = vpack.c.b16 %v3077, %v3061
        %v4038 = vpack.c.b16 %v3078, %v3062
        %v4039 = vpack.c.b16 %v3079, %v3063
        %v4040 = vpack.c.b16 %v3080, %v3064
        %v4041 = vpack.c.b16 %v3081, %v3065
        %v4042 = vpack.c.b16 %v3098, %v3082
        %v4043 = vpack.c.b16 %v3099, %v3083
        %v4044 = vpack.c.b16 %v3100, %v3084
        %v4045 = vpack.c.b16 %v3101, %v3085
        %v4046 = vpack.c.b16 %v3102, %v3086
        %v4047 = vpack.c.b16 %v3103, %v3087
        %v4048 = vpack.c.b16 %v3104, %v3088
        %v4049 = vpack.c.b16 %v3105, %v3089
        %v4050 = vpack.c.b16 %v3106, %v3090
        %v4051 = vpack.c.b16 %v3107, %v3091
        %v4052 = vpack.c.b16 %v3108, %v3092
        %v4053 = vpack.c.b16 %v3109, %v3093
        %v4054 = vpack.c.b16 %v3110, %v3094
        %v4055 = vpack.c.b16 %v3111, %v3095
        %v4056 = vpack.c.b16 %v3112, %v3096
        %v4057 = vpack.c.b16 %v3113, %v3097
        %v4058 = vpack.c.b16 %v3130, %v3114
        %v4059 = vpack.c.b16 %v3131, %v3115
        %v4060 = vpack.c.b16 %v3132, %v3116
        %v4061 = vpack.c.b16 %v3133, %v3117
        %v4062 = vpack.c.b16 %v3134, %v3118
        %v4063 = vpack.c.b16 %v3135, %v3119
        %v4064 = vpack.c.b16 %v3136, %v3120
        %v4065 = vpack.c.b16 %v3137, %v3121
        %v4066 = vpack.c.b16 %v3138, %v3122
        %v4067 = vpack.c.b16 %v3139, %v3123
        %v4068 = vpack.c.b16 %v3140, %v3124
        %v4069 = vpack.c.b16 %v3141, %v3125
        %v4070 = vpack.c.b16 %v3142, %v3126
        %v4071 = vpack.c.b16 %v3143, %v3127
        %v4072 = vpack.c.b16 %v3144, %v3128
        %v4073 = vpack.c.b16 %v3145, %v3129
        %v4074 = vpack.c.b16 %v3162, %v3146
        %v4075 = vpack.c.b16 %v3163, %v3147
        %v4076 = vpack.c.b16 %v3164, %v3148
        %v4077 = vpack.c.b16 %v3165, %v3149
        %v4078 = vpack.c.b16 %v3166, %v3150
        %v4079 = vpack.c.b16 %v3167, %v3151
        %v4080 = vpack.c.b16 %v3168, %v3152
        %v4081 = vpack.c.b16 %v3169, %v3153
        %v4082 = vpack.c.b16 %v3170, %v3154
        %v4083 = vpack.c.b16 %v3171, %v3155
        %v4084 = vpack.c.b16 %v3172, %v3156
        %v4085 = vpack.c.b16 %v3173, %v3157
        %v4086 = vpack.c.b16 %v3174, %v3158
        %v4087 = vpack.c.b16 %v3175, %v3159
        %v4088 = vpack.c.b16 %v3176, %v3160
        %v4089 = vpack.c.b16 %v3177, %v3161
        %v4090 = vpack.c.b16 %v3194, %v3178
        %v4091 = vpack.c.b16 %v3195, %v3179
        %v4092 = vpack.c.b16 %v3196, %v3180
        %v4093 = vpack.c.b16 %v3197, %v3181
        %v4094 = vpack.c.b16 %v3198, %v3182
        %v4095 = vpack.c.b16 %v3199, %v3183
        %v4096 = vpack.c.b16 %v3200, %v3184
        %v4097 = vpack.c.b16 %v3201, %v3185
        %v4098 = vpack.c.b16 %v3202, %v3186
        %v4099 = vpack.c.b16 %v3203, %v3187
        %v4100 = vpack.c.b16 %v3204, %v3188
        %v4101 = vpack.c.b16 %v3205, %v3189
        %v4102 = vpack.c.b16 %v3206, %v3190
        %v4103 = vpack.c.b16 %v3207, %v3191
        %v4104 = vpack.c.b16 %v3208, %v3192
        %v4105 = vpack.c.b16 %v3209, %v3193
        %v4106 = vpack.c.b16 %v3226, %v3210
        %v4107 = vpack.c.b16 %v3227, %v3211
        %v4108 = vpack.c.b16 %v3228, %v3212
        %v4109 = vpack.c.b16 %v3229, %v3213
        %v4110 = vpack.c.b16 %v3230, %v3214
        %v4111 = vpack.c.b16 %v3231, %v3215
        %v4112 = vpack.c.b16 %v3232, %v3216
        %v4113 = vpack.c.b16 %v3233, %v3217
        %v4114 = vpack.c.b16 %v3234, %v3218
        %v4115 = vpack.c.b16 %v3235, %v3219
        %v4116 = vpack.c.b16 %v3236, %v3220
        %v4117 = vpack.c.b16 %v3237, %v3221
        %v4118 = vpack.c.b16 %v3238, %v3222
        %v4119 = vpack.c.b16 %v3239, %v3223
        %v4120 = vpack.c.b16 %v3240, %v3224
        %v4121 = vpack.c.b16 %v3241, %v3225
        %v4122 = vpack.c.b16 %v3258, %v3242
        %v4123 = vpack.c.b16 %v3259, %v3243
        %v4124 = vpack.c.b16 %v3260, %v3244
        %v4125 = vpack.c.b16 %v3261, %v3245
        %v4126 = vpack.c.b16 %v3262, %v3246
        %v4127 = vpack.c.b16 %v3263, %v3247
        %v4128 = vpack.c.b16 %v3264, %v3248
        %v4129 = vpack.c.b16 %v3265, %v3249
        %v4130 = vpack.c.b16 %v3266, %v3250
        %v4131 = vpack.c.b16 %v3267, %v3251
        %v4132 = vpack.c.b16 %v3268, %v3252
        %v4133 = vpack.c.b16 %v3269, %v3253
        %v4134 = vpack.c.b16 %v3270, %v3254
        %v4135 = vpack.c.b16 %v3271, %v3255
        %v4136 = vpack.c.b16 %v3272, %v3256
        %v4137 = vpack.c.b16 %v3273, %v3257
        %v4138 = vpack.c.b16 %v3290, %v3274
        %v4139 = vpack.c.b16 %v3291, %v3275
        %v4140 = vpack.c.b16 %v3292, %v3276
        %v4141 = vpack.c.b16 %v3293, %v3277
        %v4142 = vpack.c.b16 %v3294, %v3278
        %v4143 = vpack.c.b16 %v3295, %v3279
        %v4144 = vpack.c.b16 %v3296, %v3280
        %v4145 = vpack.c.b16 %v3297, %v3281
        %v4146 = vpack.c.b16 %v3298, %v3282
        %v4147 = vpack.c.b16 %v3299, %v3283
        %v4148 = vpack.c.b16 %v3300, %v3284
        %v4149 = vpack.c.b16 %v3301, %v3285
        %v4150 = vpack.c.b16 %v3302, %v3286
        %v4151 = vpack.c.b16 %v3303, %v3287
        %v4152 = vpack.c.b16 %v3304, %v3288
        %v4153 = vpack.c.b16 %v3305, %v3289
        %v4154 = vpack.c.b16 %v3322, %v3306
        %v4155 = vpack.c.b16 %v3323, %v3307
        %v4156 = vpack.c.b16 %v3324, %v3308
        %v4157 = vpack.c.b16 %v3325, %v3309
        %v4158 = vpack.c.b16 %v3326, %v3310
        %v4159 = vpack.c.b16 %v3327, %v3311
        %v4160 = vpack.c.b16 %v3328, %v3312
        %v4161 = vpack.c.b16 %v3329, %v3313
        %v4162 = vpack.c.b16 %v3330, %v3314
        %v4163 = vpack.c.b16 %v3331, %v3315
        %v4164 = vpack.c.b16 %v3332, %v3316
        %v4165 = vpack.c.b16 %v3333, %v3317
        %v4166 = vpack.c.b16 %v3334, %v3318
        %v4167 = vpack.c.b16 %v3335, %v3319
        %v4168 = vpack.c.b16 %v3336, %v3320
        %v4169 = vpack.c.b16 %v3337, %v3321
        %v4170 = vpack.c.b16 %v3354, %v3338
        %v4171 = vpack.c.b16 %v3355, %v3339
        %v4172 = vpack.c.b16 %v3356, %v3340
        %v4173 = vpack.c.b16 %v3357, %v3341
        %v4174 = vpack.c.b16 %v3358, %v3342
        %v4175 = vpack.c.b16 %v3359, %v3343
        %v4176 = vpack.c.b16 %v3360, %v3344
        %v4177 = vpack.c.b16 %v3361, %v3345
        %v4178 = vpack.c.b16 %v3362, %v3346
        %v4179 = vpack.c.b16 %v3363, %v3347
        %v4180 = vpack.c.b16 %v3364, %v3348
        %v4181 = vpack.c.b16 %v3365, %v3349
        %v4182 = vpack.c.b16 %v3366, %v3350
        %v4183 = vpack.c.b16 %v3367, %v3351
        %v4184 = vpack.c.b16 %v3368, %v3352
        %v4185 = vpack.c.b16 %v3369, %v3353
        %v4186 = vpack.c.b16 %v3386, %v3370
        %v4187 = vpack.c.b16 %v3387, %v3371
        %v4188 = vpack.c.b16 %v3388, %v3372
        %v4189 = vpack.c.b16 %v3389, %v3373
        %v4190 = vpack.c.b16 %v3390, %v3374
        %v4191 = vpack.c.b16 %v3391, %v3375
        %v4192 = vpack.c.b16 %v3392, %v3376
        %v4193 = vpack.c.b16 %v3393, %v3377
        %v4194 = vpack.c.b16 %v3394, %v3378
        %v4195 = vpack.c.b16 %v3395, %v3379
        %v4196 = vpack.c.b16 %v3396, %v3380
        %v4197 = vpack.c.b16 %v3397, %v3381
        %v4198 = vpack.c.b16 %v3398, %v3382
        %v4199 = vpack.c.b16 %v3399, %v3383
        %v4200 = vpack.c.b16 %v3400, %v3384
        %v4201 = vpack.c.b16 %v3401, %v3385
        %v4202 = vpack.c.b16 %v3418, %v3402
        %v4203 = vpack.c.b16 %v3419, %v3403
        %v4204 = vpack.c.b16 %v3420, %v3404
        %v4205 = vpack.c.b16 %v3421, %v3405
        %v4206 = vpack.c.b16 %v3422, %v3406
        %v4207 = vpack.c.b16 %v3423, %v3407
        %v4208 = vpack.c.b16 %v3424, %v3408
        %v4209 = vpack.c.b16 %v3425, %v3409
        %v4210 = vpack.c.b16 %v3426, %v3410
        %v4211 = vpack.c.b16 %v3427, %v3411
        %v4212 = vpack.c.b16 %v3428, %v3412
        %v4213 = vpack.c.b16 %v3429, %v3413
        %v4214 = vpack.c.b16 %v3430, %v3414
        %v4215 = vpack.c.b16 %v3431, %v3415
        %v4216 = vpack.c.b16 %v3432, %v3416
        %v4217 = vpack.c.b16 %v3433, %v3417
        %v4218 = vpack.c.b16 %v3450, %v3434
        %v4219 = vpack.c.b16 %v3451, %v3435
        %v4220 = vpack.c.b16 %v3452, %v3436
        %v4221 = vpack.c.b16 %v3453, %v3437
        %v4222 = vpack.c.b16 %v3454, %v3438
        %v4223 = vpack.c.b16 %v3455, %v3439
        %v4224 = vpack.c.b16 %v3456, %v3440
        %v4225 = vpack.c.b16 %v3457, %v3441
        %v4226 = vpack.c.b16 %v3458, %v3442
        %v4227 = vpack.c.b16 %v3459, %v3443
        %v4228 = vpack.c.b16 %v3460, %v3444
        %v4229 = vpack.c.b16 %v3461, %v3445
        %v4230 = vpack.c.b16 %v3462, %v3446
        %v4231 = vpack.c.b16 %v3463, %v3447
        %v4232 = vpack.c.b16 %v3464, %v3448
        %v4233 = vpack.c.b16 %v3465, %v3449
        %5002 = vmatprep.subr.bf16.mxu0 %v3467
        %5003 = vmatpush1.bf16.msra.mxu0 %v3466
        %5004 = vmatprep.subr.bf16.mxu0 %v3483
        %5005 = vmatpush1.bf16.msra.mxu0 %v3482
        %5006 = vmatprep.subr.bf16.mxu0 %v3499
        %5007 = vmatpush1.bf16.msra.mxu0 %v3498
        %5008 = vmatprep.subr.bf16.mxu0 %v3515
        %5009 = vmatpush1.bf16.msra.mxu0 %v3514
        %5010 = vmatprep.subr.bf16.mxu0 %v3531
        %5011 = vmatpush1.bf16.msra.mxu0 %v3530
        %5012 = vmatprep.subr.bf16.mxu0 %v3547
        %5013 = vmatpush1.bf16.msra.mxu0 %v3546
        %5014 = vmatprep.subr.bf16.mxu0 %v3563
        %5015 = vmatpush1.bf16.msra.mxu0 %v3562
        %5016 = vmatprep.subr.bf16.mxu0 %v3579
        %5017 = vmatpush1.bf16.msra.mxu0 %v3578
        %5018 = vmatprep.subr.bf16.mxu0 %v3595
        %5019 = vmatpush1.bf16.msra.mxu0 %v3594
        %5020 = vmatprep.subr.bf16.mxu0 %v3611
        %5021 = vmatpush1.bf16.msra.mxu0 %v3610
        %5022 = vmatprep.subr.bf16.mxu0 %v3627
        %5023 = vmatpush1.bf16.msra.mxu0 %v3626
        %5024 = vmatprep.subr.bf16.mxu0 %v3643
        %5025 = vmatpush1.bf16.msra.mxu0 %v3642
        %5026 = vmatprep.subr.bf16.mxu0 %v3659
        %5027 = vmatpush1.bf16.msra.mxu0 %v3658
        %5028 = vmatprep.subr.bf16.mxu0 %v3675
        %5029 = vmatpush1.bf16.msra.mxu0 %v3674
        %5030 = vmatprep.subr.bf16.mxu0 %v3691
        %5031 = vmatpush1.bf16.msra.mxu0 %v3690
        %5032 = vmatprep.subr.bf16.mxu0 %v3707
        %5033 = vmatpush1.bf16.msra.mxu0 %v3706
        %5034 = vmatprep.mubr.bf16.mxu0 %v1151
        %5035 = vmatmul.mubr.bf16.gmra.mrb[0].mxu0 %v1150
        %v5036 = vpop.f32.mrb[0].mxu0
        %v5037 = vadd.f32 %v1055, %v5036
        %v5038 = vpop.f32.mrb[0].mxu0
        %v5039 = vadd.f32 %v1059, %v5038
        %v5040 = vpop.f32.mrb[0].mxu0
        %v5041 = vadd.f32 %v1055, %v5040
        %v5042 = vpop.f32.mrb[0].mxu0
        %v5043 = vadd.f32 %v1059, %v5042
        %5044 = vdwg.mxu0
        %5045 = vmatprep.subr.bf16.mxu0 %v3723
        %5046 = vmatpush1.bf16.msra.mxu0 %v3722
        %5047 = vmatprep.subr.bf16.mxu0 %v3739
        %5048 = vmatpush1.bf16.msra.mxu0 %v3738
        %5049 = vmatprep.subr.bf16.mxu0 %v3755
        %5050 = vmatpush1.bf16.msra.mxu0 %v3754
        %5051 = vmatprep.subr.bf16.mxu0 %v3771
        %5052 = vmatpush1.bf16.msra.mxu0 %v3770
        %5053 = vmatprep.subr.bf16.mxu0 %v3787
        %5054 = vmatpush1.bf16.msra.mxu0 %v3786
        %5055 = vmatprep.subr.bf16.mxu0 %v3803
        %5056 = vmatpush1.bf16.msra.mxu0 %v3802
        %5057 = vmatprep.subr.bf16.mxu0 %v3819
        %5058 = vmatpush1.bf16.msra.mxu0 %v3818
        %5059 = vmatprep.subr.bf16.mxu0 %v3835
        %5060 = vmatpush1.bf16.msra.mxu0 %v3834
        %5061 = vmatprep.subr.bf16.mxu0 %v3851
        %5062 = vmatpush1.bf16.msra.mxu0 %v3850
        %5063 = vmatprep.subr.bf16.mxu0 %v3867
        %5064 = vmatpush1.bf16.msra.mxu0 %v3866
        %5065 = vmatprep.subr.bf16.mxu0 %v3883
        %5066 = vmatpush1.bf16.msra.mxu0 %v3882
        %5067 = vmatprep.subr.bf16.mxu0 %v3899
        %5068 = vmatpush1.bf16.msra.mxu0 %v3898
        %5069 = vmatprep.subr.bf16.mxu0 %v3915
        %5070 = vmatpush1.bf16.msra.mxu0 %v3914
        %5071 = vmatprep.subr.bf16.mxu0 %v3931
        %5072 = vmatpush1.bf16.msra.mxu0 %v3930
        %5073 = vmatprep.subr.bf16.mxu0 %v3947
        %5074 = vmatpush1.bf16.msra.mxu0 %v3946
        %5075 = vmatprep.subr.bf16.mxu0 %v3963
        %5076 = vmatpush1.bf16.msra.mxu0 %v3962
        %5077 = vmatprep.mubr.bf16.mxu0 %v1153
        %5078 = vmatmul.mubr.bf16.gmra.mrb[0].mxu0 %v1152
        %v5079 = vpop.f32.mrb[0].mxu0
        %v5080 = vadd.f32 %v5037, %v5079
        %v5081 = vpop.f32.mrb[0].mxu0
        %v5082 = vadd.f32 %v5039, %v5081
        %v5083 = vpop.f32.mrb[0].mxu0
        %v5084 = vadd.f32 %v5041, %v5083
        %v5085 = vpop.f32.mrb[0].mxu0
        %v5086 = vadd.f32 %v5043, %v5085
        %5087 = vdwg.mxu0
        %5088 = vmatprep.subr.bf16.mxu0 %v3979
        %5089 = vmatpush1.bf16.msra.mxu0 %v3978
        %5090 = vmatprep.subr.bf16.mxu0 %v3995
        %5091 = vmatpush1.bf16.msra.mxu0 %v3994
        %5092 = vmatprep.subr.bf16.mxu0 %v4011
        %5093 = vmatpush1.bf16.msra.mxu0 %v4010
        %5094 = vmatprep.subr.bf16.mxu0 %v4027
        %5095 = vmatpush1.bf16.msra.mxu0 %v4026
        %5096 = vmatprep.subr.bf16.mxu0 %v4043
        %5097 = vmatpush1.bf16.msra.mxu0 %v4042
        %5098 = vmatprep.subr.bf16.mxu0 %v4059
        %5099 = vmatpush1.bf16.msra.mxu0 %v4058
        %5100 = vmatprep.subr.bf16.mxu0 %v4075
        %5101 = vmatpush1.bf16.msra.mxu0 %v4074
        %5102 = vmatprep.subr.bf16.mxu0 %v4091
        %5103 = vmatpush1.bf16.msra.mxu0 %v4090
        %5104 = vmatprep.subr.bf16.mxu0 %v4107
        %5105 = vmatpush1.bf16.msra.mxu0 %v4106
        %5106 = vmatprep.subr.bf16.mxu0 %v4123
        %5107 = vmatpush1.bf16.msra.mxu0 %v4122
        %5108 = vmatprep.subr.bf16.mxu0 %v4139
        %5109 = vmatpush1.bf16.msra.mxu0 %v4138
        %5110 = vmatprep.subr.bf16.mxu0 %v4155
        %5111 = vmatpush1.bf16.msra.mxu0 %v4154
        %5112 = vmatprep.subr.bf16.mxu0 %v4171
        %5113 = vmatpush1.bf16.msra.mxu0 %v4170
        %5114 = vmatprep.subr.bf16.mxu0 %v4187
        %5115 = vmatpush1.bf16.msra.mxu0 %v4186
        %5116 = vmatprep.subr.bf16.mxu0 %v4203
        %5117 = vmatpush1.bf16.msra.mxu0 %v4202
        %5118 = vmatprep.subr.bf16.mxu0 %v4219
        %5119 = vmatpush1.bf16.msra.mxu0 %v4218
        %5120 = vmatprep.mubr.bf16.mxu0 %v1155
        %5121 = vmatmul.mubr.bf16.gmra.mrb[0].mxu0 %v1154
        %v5122 = vpop.f32.mrb[0].mxu0
        %v5123 = vadd.f32 %v5080, %v5122
        %v5124 = vpop.f32.mrb[0].mxu0
        %v5125 = vadd.f32 %v5082, %v5124
        %v5126 = vpop.f32.mrb[0].mxu0
        %v5127 = vadd.f32 %v5084, %v5126
        %v5128 = vpop.f32.mrb[0].mxu0
        %v5129 = vadd.f32 %v5086, %v5128
        %5130 = vdwg.mxu0
        %5131 = vmatprep.subr.bf16.mxu0 %v3469
        %5132 = vmatpush1.bf16.msra.mxu0 %v3468
        %5133 = vmatprep.subr.bf16.mxu0 %v3485
        %5134 = vmatpush1.bf16.msra.mxu0 %v3484
        %5135 = vmatprep.subr.bf16.mxu0 %v3501
        %5136 = vmatpush1.bf16.msra.mxu0 %v3500
        %5137 = vmatprep.subr.bf16.mxu0 %v3517
        %5138 = vmatpush1.bf16.msra.mxu0 %v3516
        %5139 = vmatprep.subr.bf16.mxu0 %v3533
        %5140 = vmatpush1.bf16.msra.mxu0 %v3532
        %5141 = vmatprep.subr.bf16.mxu0 %v3549
        %5142 = vmatpush1.bf16.msra.mxu0 %v3548
        %5143 = vmatprep.subr.bf16.mxu0 %v3565
        %5144 = vmatpush1.bf16.msra.mxu0 %v3564
        %5145 = vmatprep.subr.bf16.mxu0 %v3581
        %5146 = vmatpush1.bf16.msra.mxu0 %v3580
        %5147 = vmatprep.subr.bf16.mxu0 %v3597
        %5148 = vmatpush1.bf16.msra.mxu0 %v3596
        %5149 = vmatprep.subr.bf16.mxu0 %v3613
        %5150 = vmatpush1.bf16.msra.mxu0 %v3612
        %5151 = vmatprep.subr.bf16.mxu0 %v3629
        %5152 = vmatpush1.bf16.msra.mxu0 %v3628
        %5153 = vmatprep.subr.bf16.mxu0 %v3645
        %5154 = vmatpush1.bf16.msra.mxu0 %v3644
        %5155 = vmatprep.subr.bf16.mxu0 %v3661
        %5156 = vmatpush1.bf16.msra.mxu0 %v3660
        %5157 = vmatprep.subr.bf16.mxu0 %v3677
        %5158 = vmatpush1.bf16.msra.mxu0 %v3676
        %5159 = vmatprep.subr.bf16.mxu0 %v3693
        %5160 = vmatpush1.bf16.msra.mxu0 %v3692
        %5161 = vmatprep.subr.bf16.mxu0 %v3709
        %5162 = vmatpush1.bf16.msra.mxu0 %v3708
        %5163 = vmatprep.mubr.bf16.mxu0 %v1151
        %5164 = vmatmul.mubr.bf16.gmra.mrb[0].mxu0 %v1150
        %v5165 = vpop.f32.mrb[0].mxu0
        %v5166 = vadd.f32 %v1063, %v5165
        %v5167 = vpop.f32.mrb[0].mxu0
        %v5168 = vadd.f32 %v1067, %v5167
        %v5169 = vpop.f32.mrb[0].mxu0
        %v5170 = vadd.f32 %v1063, %v5169
        %v5171 = vpop.f32.mrb[0].mxu0
        %v5172 = vadd.f32 %v1067, %v5171
        %5173 = vdwg.mxu0
        %5174 = vmatprep.subr.bf16.mxu0 %v3725
        %5175 = vmatpush1.bf16.msra.mxu0 %v3724
        %5176 = vmatprep.subr.bf16.mxu0 %v3741
        %5177 = vmatpush1.bf16.msra.mxu0 %v3740
        %5178 = vmatprep.subr.bf16.mxu0 %v3757
        %5179 = vmatpush1.bf16.msra.mxu0 %v3756
        %5180 = vmatprep.subr.bf16.mxu0 %v3773
        %5181 = vmatpush1.bf16.msra.mxu0 %v3772
        %5182 = vmatprep.subr.bf16.mxu0 %v3789
        %5183 = vmatpush1.bf16.msra.mxu0 %v3788
        %5184 = vmatprep.subr.bf16.mxu0 %v3805
        %5185 = vmatpush1.bf16.msra.mxu0 %v3804
        %5186 = vmatprep.subr.bf16.mxu0 %v3821
        %5187 = vmatpush1.bf16.msra.mxu0 %v3820
        %5188 = vmatprep.subr.bf16.mxu0 %v3837
        %5189 = vmatpush1.bf16.msra.mxu0 %v3836
        %5190 = vmatprep.subr.bf16.mxu0 %v3853
        %5191 = vmatpush1.bf16.msra.mxu0 %v3852
        %5192 = vmatprep.subr.bf16.mxu0 %v3869
        %5193 = vmatpush1.bf16.msra.mxu0 %v3868
        %5194 = vmatprep.subr.bf16.mxu0 %v3885
        %5195 = vmatpush1.bf16.msra.mxu0 %v3884
        %5196 = vmatprep.subr.bf16.mxu0 %v3901
        %5197 = vmatpush1.bf16.msra.mxu0 %v3900
        %5198 = vmatprep.subr.bf16.mxu0 %v3917
        %5199 = vmatpush1.bf16.msra.mxu0 %v3916
        %5200 = vmatprep.subr.bf16.mxu0 %v3933
        %5201 = vmatpush1.bf16.msra.mxu0 %v3932
        %5202 = vmatprep.subr.bf16.mxu0 %v3949
        %5203 = vmatpush1.bf16.msra.mxu0 %v3948
        %5204 = vmatprep.subr.bf16.mxu0 %v3965
        %5205 = vmatpush1.bf16.msra.mxu0 %v3964
        %5206 = vmatprep.mubr.bf16.mxu0 %v1153
        %5207 = vmatmul.mubr.bf16.gmra.mrb[0].mxu0 %v1152
        %v5208 = vpop.f32.mrb[0].mxu0
        %v5209 = vadd.f32 %v5166, %v5208
        %v5210 = vpop.f32.mrb[0].mxu0
        %v5211 = vadd.f32 %v5168, %v5210
        %v5212 = vpop.f32.mrb[0].mxu0
        %v5213 = vadd.f32 %v5170, %v5212
        %v5214 = vpop.f32.mrb[0].mxu0
        %v5215 = vadd.f32 %v5172, %v5214
        %5216 = vdwg.mxu0
        %5217 = vmatprep.subr.bf16.mxu0 %v3981
        %5218 = vmatpush1.bf16.msra.mxu0 %v3980
        %5219 = vmatprep.subr.bf16.mxu0 %v3997
        %5220 = vmatpush1.bf16.msra.mxu0 %v3996
        %5221 = vmatprep.subr.bf16.mxu0 %v4013
        %5222 = vmatpush1.bf16.msra.mxu0 %v4012
        %5223 = vmatprep.subr.bf16.mxu0 %v4029
        %5224 = vmatpush1.bf16.msra.mxu0 %v4028
        %5225 = vmatprep.subr.bf16.mxu0 %v4045
        %5226 = vmatpush1.bf16.msra.mxu0 %v4044
        %5227 = vmatprep.subr.bf16.mxu0 %v4061
        %5228 = vmatpush1.bf16.msra.mxu0 %v4060
        %5229 = vmatprep.subr.bf16.mxu0 %v4077
        %5230 = vmatpush1.bf16.msra.mxu0 %v4076
        %5231 = vmatprep.subr.bf16.mxu0 %v4093
        %5232 = vmatpush1.bf16.msra.mxu0 %v4092
        %5233 = vmatprep.subr.bf16.mxu0 %v4109
        %5234 = vmatpush1.bf16.msra.mxu0 %v4108
        %5235 = vmatprep.subr.bf16.mxu0 %v4125
        %5236 = vmatpush1.bf16.msra.mxu0 %v4124
        %5237 = vmatprep.subr.bf16.mxu0 %v4141
        %5238 = vmatpush1.bf16.msra.mxu0 %v4140
        %5239 = vmatprep.subr.bf16.mxu0 %v4157
        %5240 = vmatpush1.bf16.msra.mxu0 %v4156
        %5241 = vmatprep.subr.bf16.mxu0 %v4173
        %5242 = vmatpush1.bf16.msra.mxu0 %v4172
        %5243 = vmatprep.subr.bf16.mxu0 %v4189
        %5244 = vmatpush1.bf16.msra.mxu0 %v4188
        %5245 = vmatprep.subr.bf16.mxu0 %v4205
        %5246 = vmatpush1.bf16.msra.mxu0 %v4204
        %5247 = vmatprep.subr.bf16.mxu0 %v4221
        %5248 = vmatpush1.bf16.msra.mxu0 %v4220
        %5249 = vmatprep.mubr.bf16.mxu0 %v1155
        %5250 = vmatmul.mubr.bf16.gmra.mrb[0].mxu0 %v1154
        %v5251 = vpop.f32.mrb[0].mxu0
        %v5252 = vadd.f32 %v5209, %v5251
        %v5253 = vpop.f32.mrb[0].mxu0
        %v5254 = vadd.f32 %v5211, %v5253
        %v5255 = vpop.f32.mrb[0].mxu0
        %v5256 = vadd.f32 %v5213, %v5255
        %v5257 = vpop.f32.mrb[0].mxu0
        %v5258 = vadd.f32 %v5215, %v5257
        %5259 = vdwg.mxu0
        %5260 = vmatprep.subr.bf16.mxu0 %v3471
        %5261 = vmatpush1.bf16.msra.mxu0 %v3470
        %5262 = vmatprep.subr.bf16.mxu0 %v3487
        %5263 = vmatpush1.bf16.msra.mxu0 %v3486
        %5264 = vmatprep.subr.bf16.mxu0 %v3503
        %5265 = vmatpush1.bf16.msra.mxu0 %v3502
        %5266 = vmatprep.subr.bf16.mxu0 %v3519
        %5267 = vmatpush1.bf16.msra.mxu0 %v3518
        %5268 = vmatprep.subr.bf16.mxu0 %v3535
        %5269 = vmatpush1.bf16.msra.mxu0 %v3534
        %5270 = vmatprep.subr.bf16.mxu0 %v3551
        %5271 = vmatpush1.bf16.msra.mxu0 %v3550
        %5272 = vmatprep.subr.bf16.mxu0 %v3567
        %5273 = vmatpush1.bf16.msra.mxu0 %v3566
        %5274 = vmatprep.subr.bf16.mxu0 %v3583
        %5275 = vmatpush1.bf16.msra.mxu0 %v3582
        %5276 = vmatprep.subr.bf16.mxu0 %v3599
        %5277 = vmatpush1.bf16.msra.mxu0 %v3598
        %5278 = vmatprep.subr.bf16.mxu0 %v3615
        %5279 = vmatpush1.bf16.msra.mxu0 %v3614
        %5280 = vmatprep.subr.bf16.mxu0 %v3631
        %5281 = vmatpush1.bf16.msra.mxu0 %v3630
        %5282 = vmatprep.subr.bf16.mxu0 %v3647
        %5283 = vmatpush1.bf16.msra.mxu0 %v3646
        %5284 = vmatprep.subr.bf16.mxu0 %v3663
        %5285 = vmatpush1.bf16.msra.mxu0 %v3662
        %5286 = vmatprep.subr.bf16.mxu0 %v3679
        %5287 = vmatpush1.bf16.msra.mxu0 %v3678
        %5288 = vmatprep.subr.bf16.mxu0 %v3695
        %5289 = vmatpush1.bf16.msra.mxu0 %v3694
        %5290 = vmatprep.subr.bf16.mxu0 %v3711
        %5291 = vmatpush1.bf16.msra.mxu0 %v3710
        %5292 = vmatprep.mubr.bf16.mxu0 %v1151
        %5293 = vmatmul.mubr.bf16.gmra.mrb[0].mxu0 %v1150
        %v5294 = vpop.f32.mrb[0].mxu0
        %v5295 = vadd.f32 %v1071, %v5294
        %v5296 = vpop.f32.mrb[0].mxu0
        %v5297 = vadd.f32 %v1075, %v5296
        %v5298 = vpop.f32.mrb[0].mxu0
        %v5299 = vadd.f32 %v1071, %v5298
        %v5300 = vpop.f32.mrb[0].mxu0
        %v5301 = vadd.f32 %v1075, %v5300
        %5302 = vdwg.mxu0
        %5303 = vmatprep.subr.bf16.mxu0 %v3727
        %5304 = vmatpush1.bf16.msra.mxu0 %v3726
        %5305 = vmatprep.subr.bf16.mxu0 %v3743
        %5306 = vmatpush1.bf16.msra.mxu0 %v3742
        %5307 = vmatprep.subr.bf16.mxu0 %v3759
        %5308 = vmatpush1.bf16.msra.mxu0 %v3758
        %5309 = vmatprep.subr.bf16.mxu0 %v3775
        %5310 = vmatpush1.bf16.msra.mxu0 %v3774
        %5311 = vmatprep.subr.bf16.mxu0 %v3791
        %5312 = vmatpush1.bf16.msra.mxu0 %v3790
        %5313 = vmatprep.subr.bf16.mxu0 %v3807
        %5314 = vmatpush1.bf16.msra.mxu0 %v3806
        %5315 = vmatprep.subr.bf16.mxu0 %v3823
        %5316 = vmatpush1.bf16.msra.mxu0 %v3822
        %5317 = vmatprep.subr.bf16.mxu0 %v3839
        %5318 = vmatpush1.bf16.msra.mxu0 %v3838
        %5319 = vmatprep.subr.bf16.mxu0 %v3855
        %5320 = vmatpush1.bf16.msra.mxu0 %v3854
        %5321 = vmatprep.subr.bf16.mxu0 %v3871
        %5322 = vmatpush1.bf16.msra.mxu0 %v3870
        %5323 = vmatprep.subr.bf16.mxu0 %v3887
        %5324 = vmatpush1.bf16.msra.mxu0 %v3886
        %5325 = vmatprep.subr.bf16.mxu0 %v3903
        %5326 = vmatpush1.bf16.msra.mxu0 %v3902
        %5327 = vmatprep.subr.bf16.mxu0 %v3919
        %5328 = vmatpush1.bf16.msra.mxu0 %v3918
        %5329 = vmatprep.subr.bf16.mxu0 %v3935
        %5330 = vmatpush1.bf16.msra.mxu0 %v3934
        %5331 = vmatprep.subr.bf16.mxu0 %v3951
        %5332 = vmatpush1.bf16.msra.mxu0 %v3950
        %5333 = vmatprep.subr.bf16.mxu0 %v3967
        %5334 = vmatpush1.bf16.msra.mxu0 %v3966
        %5335 = vmatprep.mubr.bf16.mxu0 %v1153
        %5336 = vmatmul.mubr.bf16.gmra.mrb[0].mxu0 %v1152
        %v5337 = vpop.f32.mrb[0].mxu0
        %v5338 = vadd.f32 %v5295, %v5337
        %v5339 = vpop.f32.mrb[0].mxu0
        %v5340 = vadd.f32 %v5297, %v5339
        %v5341 = vpop.f32.mrb[0].mxu0
        %v5342 = vadd.f32 %v5299, %v5341
        %v5343 = vpop.f32.mrb[0].mxu0
        %v5344 = vadd.f32 %v5301, %v5343
        %5345 = vdwg.mxu0
        %5346 = vmatprep.subr.bf16.mxu0 %v3983
        %5347 = vmatpush1.bf16.msra.mxu0 %v3982
        %5348 = vmatprep.subr.bf16.mxu0 %v3999
        %5349 = vmatpush1.bf16.msra.mxu0 %v3998
        %5350 = vmatprep.subr.bf16.mxu0 %v4015
        %5351 = vmatpush1.bf16.msra.mxu0 %v4014
        %5352 = vmatprep.subr.bf16.mxu0 %v4031
        %5353 = vmatpush1.bf16.msra.mxu0 %v4030
        %5354 = vmatprep.subr.bf16.mxu0 %v4047
        %5355 = vmatpush1.bf16.msra.mxu0 %v4046
        %5356 = vmatprep.subr.bf16.mxu0 %v4063
        %5357 = vmatpush1.bf16.msra.mxu0 %v4062
        %5358 = vmatprep.subr.bf16.mxu0 %v4079
        %5359 = vmatpush1.bf16.msra.mxu0 %v4078
        %5360 = vmatprep.subr.bf16.mxu0 %v4095
        %5361 = vmatpush1.bf16.msra.mxu0 %v4094
        %5362 = vmatprep.subr.bf16.mxu0 %v4111
        %5363 = vmatpush1.bf16.msra.mxu0 %v4110
        %5364 = vmatprep.subr.bf16.mxu0 %v4127
        %5365 = vmatpush1.bf16.msra.mxu0 %v4126
        %5366 = vmatprep.subr.bf16.mxu0 %v4143
        %5367 = vmatpush1.bf16.msra.mxu0 %v4142
        %5368 = vmatprep.subr.bf16.mxu0 %v4159
        %5369 = vmatpush1.bf16.msra.mxu0 %v4158
        %5370 = vmatprep.subr.bf16.mxu0 %v4175
        %5371 = vmatpush1.bf16.msra.mxu0 %v4174
        %5372 = vmatprep.subr.bf16.mxu0 %v4191
        %5373 = vmatpush1.bf16.msra.mxu0 %v4190
        %5374 = vmatprep.subr.bf16.mxu0 %v4207
        %5375 = vmatpush1.bf16.msra.mxu0 %v4206
        %5376 = vmatprep.subr.bf16.mxu0 %v4223
        %5377 = vmatpush1.bf16.msra.mxu0 %v4222
        %5378 = vmatprep.mubr.bf16.mxu0 %v1155
        %5379 = vmatmul.mubr.bf16.gmra.mrb[0].mxu0 %v1154
        %v5380 = vpop.f32.mrb[0].mxu0
        %v5381 = vadd.f32 %v5338, %v5380
        %v5382 = vpop.f32.mrb[0].mxu0
        %v5383 = vadd.f32 %v5340, %v5382
        %v5384 = vpop.f32.mrb[0].mxu0
        %v5385 = vadd.f32 %v5342, %v5384
        %v5386 = vpop.f32.mrb[0].mxu0
        %v5387 = vadd.f32 %v5344, %v5386
        %5388 = vdwg.mxu0
        %5389 = vmatprep.subr.bf16.mxu0 %v3473
        %5390 = vmatpush1.bf16.msra.mxu0 %v3472
        %5391 = vmatprep.subr.bf16.mxu0 %v3489
        %5392 = vmatpush1.bf16.msra.mxu0 %v3488
        %5393 = vmatprep.subr.bf16.mxu0 %v3505
        %5394 = vmatpush1.bf16.msra.mxu0 %v3504
        %5395 = vmatprep.subr.bf16.mxu0 %v3521
        %5396 = vmatpush1.bf16.msra.mxu0 %v3520
        %5397 = vmatprep.subr.bf16.mxu0 %v3537
        %5398 = vmatpush1.bf16.msra.mxu0 %v3536
        %5399 = vmatprep.subr.bf16.mxu0 %v3553
        %5400 = vmatpush1.bf16.msra.mxu0 %v3552
        %5401 = vmatprep.subr.bf16.mxu0 %v3569
        %5402 = vmatpush1.bf16.msra.mxu0 %v3568
        %5403 = vmatprep.subr.bf16.mxu0 %v3585
        %5404 = vmatpush1.bf16.msra.mxu0 %v3584
        %5405 = vmatprep.subr.bf16.mxu0 %v3601
        %5406 = vmatpush1.bf16.msra.mxu0 %v3600
        %5407 = vmatprep.subr.bf16.mxu0 %v3617
        %5408 = vmatpush1.bf16.msra.mxu0 %v3616
        %5409 = vmatprep.subr.bf16.mxu0 %v3633
        %5410 = vmatpush1.bf16.msra.mxu0 %v3632
        %5411 = vmatprep.subr.bf16.mxu0 %v3649
        %5412 = vmatpush1.bf16.msra.mxu0 %v3648
        %5413 = vmatprep.subr.bf16.mxu0 %v3665
        %5414 = vmatpush1.bf16.msra.mxu0 %v3664
        %5415 = vmatprep.subr.bf16.mxu0 %v3681
        %5416 = vmatpush1.bf16.msra.mxu0 %v3680
        %5417 = vmatprep.subr.bf16.mxu0 %v3697
        %5418 = vmatpush1.bf16.msra.mxu0 %v3696
        %5419 = vmatprep.subr.bf16.mxu0 %v3713
        %5420 = vmatpush1.bf16.msra.mxu0 %v3712
        %5421 = vmatprep.mubr.bf16.mxu0 %v1151
        %5422 = vmatmul.mubr.bf16.gmra.mrb[0].mxu0 %v1150
        %v5423 = vpop.f32.mrb[0].mxu0
        %v5424 = vadd.f32 %v1079, %v5423
        %v5425 = vpop.f32.mrb[0].mxu0
        %v5426 = vadd.f32 %v1083, %v5425
        %v5427 = vpop.f32.mrb[0].mxu0
        %v5428 = vadd.f32 %v1079, %v5427
        %v5429 = vpop.f32.mrb[0].mxu0
        %v5430 = vadd.f32 %v1083, %v5429
        %5431 = vdwg.mxu0
        %5432 = vmatprep.subr.bf16.mxu0 %v3729
        %5433 = vmatpush1.bf16.msra.mxu0 %v3728
        %5434 = vmatprep.subr.bf16.mxu0 %v3745
        %5435 = vmatpush1.bf16.msra.mxu0 %v3744
        %5436 = vmatprep.subr.bf16.mxu0 %v3761
        %5437 = vmatpush1.bf16.msra.mxu0 %v3760
        %5438 = vmatprep.subr.bf16.mxu0 %v3777
        %5439 = vmatpush1.bf16.msra.mxu0 %v3776
        %5440 = vmatprep.subr.bf16.mxu0 %v3793
        %5441 = vmatpush1.bf16.msra.mxu0 %v3792
        %5442 = vmatprep.subr.bf16.mxu0 %v3809
        %5443 = vmatpush1.bf16.msra.mxu0 %v3808
        %5444 = vmatprep.subr.bf16.mxu0 %v3825
        %5445 = vmatpush1.bf16.msra.mxu0 %v3824
        %5446 = vmatprep.subr.bf16.mxu0 %v3841
        %5447 = vmatpush1.bf16.msra.mxu0 %v3840
        %5448 = vmatprep.subr.bf16.mxu0 %v3857
        %5449 = vmatpush1.bf16.msra.mxu0 %v3856
        %5450 = vmatprep.subr.bf16.mxu0 %v3873
        %5451 = vmatpush1.bf16.msra.mxu0 %v3872
        %5452 = vmatprep.subr.bf16.mxu0 %v3889
        %5453 = vmatpush1.bf16.msra.mxu0 %v3888
        %5454 = vmatprep.subr.bf16.mxu0 %v3905
        %5455 = vmatpush1.bf16.msra.mxu0 %v3904
        %5456 = vmatprep.subr.bf16.mxu0 %v3921
        %5457 = vmatpush1.bf16.msra.mxu0 %v3920
        %5458 = vmatprep.subr.bf16.mxu0 %v3937
        %5459 = vmatpush1.bf16.msra.mxu0 %v3936
        %5460 = vmatprep.subr.bf16.mxu0 %v3953
        %5461 = vmatpush1.bf16.msra.mxu0 %v3952
        %5462 = vmatprep.subr.bf16.mxu0 %v3969
        %5463 = vmatpush1.bf16.msra.mxu0 %v3968
        %5464 = vmatprep.mubr.bf16.mxu0 %v1153
        %5465 = vmatmul.mubr.bf16.gmra.mrb[0].mxu0 %v1152
        %v5466 = vpop.f32.mrb[0].mxu0
        %v5467 = vadd.f32 %v5424, %v5466
        %v5468 = vpop.f32.mrb[0].mxu0
        %v5469 = vadd.f32 %v5426, %v5468
        %v5470 = vpop.f32.mrb[0].mxu0
        %v5471 = vadd.f32 %v5428, %v5470
        %v5472 = vpop.f32.mrb[0].mxu0
        %v5473 = vadd.f32 %v5430, %v5472
        %5474 = vdwg.mxu0
        %5475 = vmatprep.subr.bf16.mxu0 %v3985
        %5476 = vmatpush1.bf16.msra.mxu0 %v3984
        %5477 = vmatprep.subr.bf16.mxu0 %v4001
        %5478 = vmatpush1.bf16.msra.mxu0 %v4000
        %5479 = vmatprep.subr.bf16.mxu0 %v4017
        %5480 = vmatpush1.bf16.msra.mxu0 %v4016
        %5481 = vmatprep.subr.bf16.mxu0 %v4033
        %5482 = vmatpush1.bf16.msra.mxu0 %v4032
        %5483 = vmatprep.subr.bf16.mxu0 %v4049
        %5484 = vmatpush1.bf16.msra.mxu0 %v4048
        %5485 = vmatprep.subr.bf16.mxu0 %v4065
        %5486 = vmatpush1.bf16.msra.mxu0 %v4064
        %5487 = vmatprep.subr.bf16.mxu0 %v4081
        %5488 = vmatpush1.bf16.msra.mxu0 %v4080
        %5489 = vmatprep.subr.bf16.mxu0 %v4097
        %5490 = vmatpush1.bf16.msra.mxu0 %v4096
        %5491 = vmatprep.subr.bf16.mxu0 %v4113
        %5492 = vmatpush1.bf16.msra.mxu0 %v4112
        %5493 = vmatprep.subr.bf16.mxu0 %v4129
        %5494 = vmatpush1.bf16.msra.mxu0 %v4128
        %5495 = vmatprep.subr.bf16.mxu0 %v4145
        %5496 = vmatpush1.bf16.msra.mxu0 %v4144
        %5497 = vmatprep.subr.bf16.mxu0 %v4161
        %5498 = vmatpush1.bf16.msra.mxu0 %v4160
        %5499 = vmatprep.subr.bf16.mxu0 %v4177
        %5500 = vmatpush1.bf16.msra.mxu0 %v4176
        %5501 = vmatprep.subr.bf16.mxu0 %v4193
        %5502 = vmatpush1.bf16.msra.mxu0 %v4192
        %5503 = vmatprep.subr.bf16.mxu0 %v4209
        %5504 = vmatpush1.bf16.msra.mxu0 %v4208
        %5505 = vmatprep.subr.bf16.mxu0 %v4225
        %5506 = vmatpush1.bf16.msra.mxu0 %v4224
        %5507 = vmatprep.mubr.bf16.mxu0 %v1155
        %5508 = vmatmul.mubr.bf16.gmra.mrb[0].mxu0 %v1154
        %v5509 = vpop.f32.mrb[0].mxu0
        %v5510 = vadd.f32 %v5467, %v5509
        %v5511 = vpop.f32.mrb[0].mxu0
        %v5512 = vadd.f32 %v5469, %v5511
        %v5513 = vpop.f32.mrb[0].mxu0
        %v5514 = vadd.f32 %v5471, %v5513
        %v5515 = vpop.f32.mrb[0].mxu0
        %v5516 = vadd.f32 %v5473, %v5515
        %5517 = vdwg.mxu0
        %5518 = vmatprep.subr.bf16.mxu0 %v3475
        %5519 = vmatpush1.bf16.msra.mxu0 %v3474
        %5520 = vmatprep.subr.bf16.mxu0 %v3491
        %5521 = vmatpush1.bf16.msra.mxu0 %v3490
        %5522 = vmatprep.subr.bf16.mxu0 %v3507
        %5523 = vmatpush1.bf16.msra.mxu0 %v3506
        %5524 = vmatprep.subr.bf16.mxu0 %v3523
        %5525 = vmatpush1.bf16.msra.mxu0 %v3522
        %5526 = vmatprep.subr.bf16.mxu0 %v3539
        %5527 = vmatpush1.bf16.msra.mxu0 %v3538
        %5528 = vmatprep.subr.bf16.mxu0 %v3555
        %5529 = vmatpush1.bf16.msra.mxu0 %v3554
        %5530 = vmatprep.subr.bf16.mxu0 %v3571
        %5531 = vmatpush1.bf16.msra.mxu0 %v3570
        %5532 = vmatprep.subr.bf16.mxu0 %v3587
        %5533 = vmatpush1.bf16.msra.mxu0 %v3586
        %5534 = vmatprep.subr.bf16.mxu0 %v3603
        %5535 = vmatpush1.bf16.msra.mxu0 %v3602
        %5536 = vmatprep.subr.bf16.mxu0 %v3619
        %5537 = vmatpush1.bf16.msra.mxu0 %v3618
        %5538 = vmatprep.subr.bf16.mxu0 %v3635
        %5539 = vmatpush1.bf16.msra.mxu0 %v3634
        %5540 = vmatprep.subr.bf16.mxu0 %v3651
        %5541 = vmatpush1.bf16.msra.mxu0 %v3650
        %5542 = vmatprep.subr.bf16.mxu0 %v3667
        %5543 = vmatpush1.bf16.msra.mxu0 %v3666
        %5544 = vmatprep.subr.bf16.mxu0 %v3683
        %5545 = vmatpush1.bf16.msra.mxu0 %v3682
        %5546 = vmatprep.subr.bf16.mxu0 %v3699
        %5547 = vmatpush1.bf16.msra.mxu0 %v3698
        %5548 = vmatprep.subr.bf16.mxu0 %v3715
        %5549 = vmatpush1.bf16.msra.mxu0 %v3714
        %5550 = vmatprep.mubr.bf16.mxu0 %v1151
        %5551 = vmatmul.mubr.bf16.gmra.mrb[0].mxu0 %v1150
        %v5552 = vpop.f32.mrb[0].mxu0
        %v5553 = vadd.f32 %v1087, %v5552
        %v5554 = vpop.f32.mrb[0].mxu0
        %v5555 = vadd.f32 %v1091, %v5554
        %v5556 = vpop.f32.mrb[0].mxu0
        %v5557 = vadd.f32 %v1087, %v5556
        %v5558 = vpop.f32.mrb[0].mxu0
        %v5559 = vadd.f32 %v1091, %v5558
        %5560 = vdwg.mxu0
        %5561 = vmatprep.subr.bf16.mxu0 %v3731
        %5562 = vmatpush1.bf16.msra.mxu0 %v3730
        %5563 = vmatprep.subr.bf16.mxu0 %v3747
        %5564 = vmatpush1.bf16.msra.mxu0 %v3746
        %5565 = vmatprep.subr.bf16.mxu0 %v3763
        %5566 = vmatpush1.bf16.msra.mxu0 %v3762
        %5567 = vmatprep.subr.bf16.mxu0 %v3779
        %5568 = vmatpush1.bf16.msra.mxu0 %v3778
        %5569 = vmatprep.subr.bf16.mxu0 %v3795
        %5570 = vmatpush1.bf16.msra.mxu0 %v3794
        %5571 = vmatprep.subr.bf16.mxu0 %v3811
        %5572 = vmatpush1.bf16.msra.mxu0 %v3810
        %5573 = vmatprep.subr.bf16.mxu0 %v3827
        %5574 = vmatpush1.bf16.msra.mxu0 %v3826
        %5575 = vmatprep.subr.bf16.mxu0 %v3843
        %5576 = vmatpush1.bf16.msra.mxu0 %v3842
        %5577 = vmatprep.subr.bf16.mxu0 %v3859
        %5578 = vmatpush1.bf16.msra.mxu0 %v3858
        %5579 = vmatprep.subr.bf16.mxu0 %v3875
        %5580 = vmatpush1.bf16.msra.mxu0 %v3874
        %5581 = vmatprep.subr.bf16.mxu0 %v3891
        %5582 = vmatpush1.bf16.msra.mxu0 %v3890
        %5583 = vmatprep.subr.bf16.mxu0 %v3907
        %5584 = vmatpush1.bf16.msra.mxu0 %v3906
        %5585 = vmatprep.subr.bf16.mxu0 %v3923
        %5586 = vmatpush1.bf16.msra.mxu0 %v3922
        %5587 = vmatprep.subr.bf16.mxu0 %v3939
        %5588 = vmatpush1.bf16.msra.mxu0 %v3938
        %5589 = vmatprep.subr.bf16.mxu0 %v3955
        %5590 = vmatpush1.bf16.msra.mxu0 %v3954
        %5591 = vmatprep.subr.bf16.mxu0 %v3971
        %5592 = vmatpush1.bf16.msra.mxu0 %v3970
        %5593 = vmatprep.mubr.bf16.mxu0 %v1153
        %5594 = vmatmul.mubr.bf16.gmra.mrb[0].mxu0 %v1152
        %v5595 = vpop.f32.mrb[0].mxu0
        %v5596 = vadd.f32 %v5553, %v5595
        %v5597 = vpop.f32.mrb[0].mxu0
        %v5598 = vadd.f32 %v5555, %v5597
        %v5599 = vpop.f32.mrb[0].mxu0
        %v5600 = vadd.f32 %v5557, %v5599
        %v5601 = vpop.f32.mrb[0].mxu0
        %v5602 = vadd.f32 %v5559, %v5601
        %5603 = vdwg.mxu0
        %5604 = vmatprep.subr.bf16.mxu0 %v3987
        %5605 = vmatpush1.bf16.msra.mxu0 %v3986
        %5606 = vmatprep.subr.bf16.mxu0 %v4003
        %5607 = vmatpush1.bf16.msra.mxu0 %v4002
        %5608 = vmatprep.subr.bf16.mxu0 %v4019
        %5609 = vmatpush1.bf16.msra.mxu0 %v4018
        %5610 = vmatprep.subr.bf16.mxu0 %v4035
        %5611 = vmatpush1.bf16.msra.mxu0 %v4034
        %5612 = vmatprep.subr.bf16.mxu0 %v4051
        %5613 = vmatpush1.bf16.msra.mxu0 %v4050
        %5614 = vmatprep.subr.bf16.mxu0 %v4067
        %5615 = vmatpush1.bf16.msra.mxu0 %v4066
        %5616 = vmatprep.subr.bf16.mxu0 %v4083
        %5617 = vmatpush1.bf16.msra.mxu0 %v4082
        %5618 = vmatprep.subr.bf16.mxu0 %v4099
        %5619 = vmatpush1.bf16.msra.mxu0 %v4098
        %5620 = vmatprep.subr.bf16.mxu0 %v4115
        %5621 = vmatpush1.bf16.msra.mxu0 %v4114
        %5622 = vmatprep.subr.bf16.mxu0 %v4131
        %5623 = vmatpush1.bf16.msra.mxu0 %v4130
        %5624 = vmatprep.subr.bf16.mxu0 %v4147
        %5625 = vmatpush1.bf16.msra.mxu0 %v4146
        %5626 = vmatprep.subr.bf16.mxu0 %v4163
        %5627 = vmatpush1.bf16.msra.mxu0 %v4162
        %5628 = vmatprep.subr.bf16.mxu0 %v4179
        %5629 = vmatpush1.bf16.msra.mxu0 %v4178
        %5630 = vmatprep.subr.bf16.mxu0 %v4195
        %5631 = vmatpush1.bf16.msra.mxu0 %v4194
        %5632 = vmatprep.subr.bf16.mxu0 %v4211
        %5633 = vmatpush1.bf16.msra.mxu0 %v4210
        %5634 = vmatprep.subr.bf16.mxu0 %v4227
        %5635 = vmatpush1.bf16.msra.mxu0 %v4226
        %5636 = vmatprep.mubr.bf16.mxu0 %v1155
        %5637 = vmatmul.mubr.bf16.gmra.mrb[0].mxu0 %v1154
        %v5638 = vpop.f32.mrb[0].mxu0
        %v5639 = vadd.f32 %v5596, %v5638
        %v5640 = vpop.f32.mrb[0].mxu0
        %v5641 = vadd.f32 %v5598, %v5640
        %v5642 = vpop.f32.mrb[0].mxu0
        %v5643 = vadd.f32 %v5600, %v5642
        %v5644 = vpop.f32.mrb[0].mxu0
        %v5645 = vadd.f32 %v5602, %v5644
        %5646 = vdwg.mxu0
        %5647 = vmatprep.subr.bf16.mxu0 %v3477
        %5648 = vmatpush1.bf16.msra.mxu0 %v3476
        %5649 = vmatprep.subr.bf16.mxu0 %v3493
        %5650 = vmatpush1.bf16.msra.mxu0 %v3492
        %5651 = vmatprep.subr.bf16.mxu0 %v3509
        %5652 = vmatpush1.bf16.msra.mxu0 %v3508
        %5653 = vmatprep.subr.bf16.mxu0 %v3525
        %5654 = vmatpush1.bf16.msra.mxu0 %v3524
        %5655 = vmatprep.subr.bf16.mxu0 %v3541
        %5656 = vmatpush1.bf16.msra.mxu0 %v3540
        %5657 = vmatprep.subr.bf16.mxu0 %v3557
        %5658 = vmatpush1.bf16.msra.mxu0 %v3556
        %5659 = vmatprep.subr.bf16.mxu0 %v3573
        %5660 = vmatpush1.bf16.msra.mxu0 %v3572
        %5661 = vmatprep.subr.bf16.mxu0 %v3589
        %5662 = vmatpush1.bf16.msra.mxu0 %v3588
        %5663 = vmatprep.subr.bf16.mxu0 %v3605
        %5664 = vmatpush1.bf16.msra.mxu0 %v3604
        %5665 = vmatprep.subr.bf16.mxu0 %v3621
        %5666 = vmatpush1.bf16.msra.mxu0 %v3620
        %5667 = vmatprep.subr.bf16.mxu0 %v3637
        %5668 = vmatpush1.bf16.msra.mxu0 %v3636
        %5669 = vmatprep.subr.bf16.mxu0 %v3653
        %5670 = vmatpush1.bf16.msra.mxu0 %v3652
        %5671 = vmatprep.subr.bf16.mxu0 %v3669
        %5672 = vmatpush1.bf16.msra.mxu0 %v3668
        %5673 = vmatprep.subr.bf16.mxu0 %v3685
        %5674 = vmatpush1.bf16.msra.mxu0 %v3684
        %5675 = vmatprep.subr.bf16.mxu0 %v3701
        %5676 = vmatpush1.bf16.msra.mxu0 %v3700
        %5677 = vmatprep.subr.bf16.mxu0 %v3717
        %5678 = vmatpush1.bf16.msra.mxu0 %v3716
        %5679 = vmatprep.mubr.bf16.mxu0 %v1151
        %5680 = vmatmul.mubr.bf16.gmra.mrb[0].mxu0 %v1150
        %v5681 = vpop.f32.mrb[0].mxu0
        %v5682 = vadd.f32 %v1095, %v5681
        %v5683 = vpop.f32.mrb[0].mxu0
        %v5684 = vadd.f32 %v1099, %v5683
        %v5685 = vpop.f32.mrb[0].mxu0
        %v5686 = vadd.f32 %v1095, %v5685
        %v5687 = vpop.f32.mrb[0].mxu0
        %v5688 = vadd.f32 %v1099, %v5687
        %5689 = vdwg.mxu0
        %5690 = vmatprep.subr.bf16.mxu0 %v3733
        %5691 = vmatpush1.bf16.msra.mxu0 %v3732
        %5692 = vmatprep.subr.bf16.mxu0 %v3749
        %5693 = vmatpush1.bf16.msra.mxu0 %v3748
        %5694 = vmatprep.subr.bf16.mxu0 %v3765
        %5695 = vmatpush1.bf16.msra.mxu0 %v3764
        %5696 = vmatprep.subr.bf16.mxu0 %v3781
        %5697 = vmatpush1.bf16.msra.mxu0 %v3780
        %5698 = vmatprep.subr.bf16.mxu0 %v3797
        %5699 = vmatpush1.bf16.msra.mxu0 %v3796
        %5700 = vmatprep.subr.bf16.mxu0 %v3813
        %5701 = vmatpush1.bf16.msra.mxu0 %v3812
        %5702 = vmatprep.subr.bf16.mxu0 %v3829
        %5703 = vmatpush1.bf16.msra.mxu0 %v3828
        %5704 = vmatprep.subr.bf16.mxu0 %v3845
        %5705 = vmatpush1.bf16.msra.mxu0 %v3844
        %5706 = vmatprep.subr.bf16.mxu0 %v3861
        %5707 = vmatpush1.bf16.msra.mxu0 %v3860
        %5708 = vmatprep.subr.bf16.mxu0 %v3877
        %5709 = vmatpush1.bf16.msra.mxu0 %v3876
        %5710 = vmatprep.subr.bf16.mxu0 %v3893
        %5711 = vmatpush1.bf16.msra.mxu0 %v3892
        %5712 = vmatprep.subr.bf16.mxu0 %v3909
        %5713 = vmatpush1.bf16.msra.mxu0 %v3908
        %5714 = vmatprep.subr.bf16.mxu0 %v3925
        %5715 = vmatpush1.bf16.msra.mxu0 %v3924
        %5716 = vmatprep.subr.bf16.mxu0 %v3941
        %5717 = vmatpush1.bf16.msra.mxu0 %v3940
        %5718 = vmatprep.subr.bf16.mxu0 %v3957
        %5719 = vmatpush1.bf16.msra.mxu0 %v3956
        %5720 = vmatprep.subr.bf16.mxu0 %v3973
        %5721 = vmatpush1.bf16.msra.mxu0 %v3972
        %5722 = vmatprep.mubr.bf16.mxu0 %v1153
        %5723 = vmatmul.mubr.bf16.gmra.mrb[0].mxu0 %v1152
        %v5724 = vpop.f32.mrb[0].mxu0
        %v5725 = vadd.f32 %v5682, %v5724
        %v5726 = vpop.f32.mrb[0].mxu0
        %v5727 = vadd.f32 %v5684, %v5726
        %v5728 = vpop.f32.mrb[0].mxu0
        %v5729 = vadd.f32 %v5686, %v5728
        %v5730 = vpop.f32.mrb[0].mxu0
        %v5731 = vadd.f32 %v5688, %v5730
        %5732 = vdwg.mxu0
        %5733 = vmatprep.subr.bf16.mxu0 %v3989
        %5734 = vmatpush1.bf16.msra.mxu0 %v3988
        %5735 = vmatprep.subr.bf16.mxu0 %v4005
        %5736 = vmatpush1.bf16.msra.mxu0 %v4004
        %5737 = vmatprep.subr.bf16.mxu0 %v4021
        %5738 = vmatpush1.bf16.msra.mxu0 %v4020
        %5739 = vmatprep.subr.bf16.mxu0 %v4037
        %5740 = vmatpush1.bf16.msra.mxu0 %v4036
        %5741 = vmatprep.subr.bf16.mxu0 %v4053
        %5742 = vmatpush1.bf16.msra.mxu0 %v4052
        %5743 = vmatprep.subr.bf16.mxu0 %v4069
        %5744 = vmatpush1.bf16.msra.mxu0 %v4068
        %5745 = vmatprep.subr.bf16.mxu0 %v4085
        %5746 = vmatpush1.bf16.msra.mxu0 %v4084
        %5747 = vmatprep.subr.bf16.mxu0 %v4101
        %5748 = vmatpush1.bf16.msra.mxu0 %v4100
        %5749 = vmatprep.subr.bf16.mxu0 %v4117
        %5750 = vmatpush1.bf16.msra.mxu0 %v4116
        %5751 = vmatprep.subr.bf16.mxu0 %v4133
        %5752 = vmatpush1.bf16.msra.mxu0 %v4132
        %5753 = vmatprep.subr.bf16.mxu0 %v4149
        %5754 = vmatpush1.bf16.msra.mxu0 %v4148
        %5755 = vmatprep.subr.bf16.mxu0 %v4165
        %5756 = vmatpush1.bf16.msra.mxu0 %v4164
        %5757 = vmatprep.subr.bf16.mxu0 %v4181
        %5758 = vmatpush1.bf16.msra.mxu0 %v4180
        %5759 = vmatprep.subr.bf16.mxu0 %v4197
        %5760 = vmatpush1.bf16.msra.mxu0 %v4196
        %5761 = vmatprep.subr.bf16.mxu0 %v4213
        %5762 = vmatpush1.bf16.msra.mxu0 %v4212
        %5763 = vmatprep.subr.bf16.mxu0 %v4229
        %5764 = vmatpush1.bf16.msra.mxu0 %v4228
        %5765 = vmatprep.mubr.bf16.mxu0 %v1155
        %5766 = vmatmul.mubr.bf16.gmra.mrb[0].mxu0 %v1154
        %v5767 = vpop.f32.mrb[0].mxu0
        %v5768 = vadd.f32 %v5725, %v5767
        %v5769 = vpop.f32.mrb[0].mxu0
        %v5770 = vadd.f32 %v5727, %v5769
        %v5771 = vpop.f32.mrb[0].mxu0
        %v5772 = vadd.f32 %v5729, %v5771
        %v5773 = vpop.f32.mrb[0].mxu0
        %v5774 = vadd.f32 %v5731, %v5773
        %5775 = vdwg.mxu0
        %5776 = vmatprep.subr.bf16.mxu0 %v3479
        %5777 = vmatpush1.bf16.msra.mxu0 %v3478
        %5778 = vmatprep.subr.bf16.mxu0 %v3495
        %5779 = vmatpush1.bf16.msra.mxu0 %v3494
        %5780 = vmatprep.subr.bf16.mxu0 %v3511
        %5781 = vmatpush1.bf16.msra.mxu0 %v3510
        %5782 = vmatprep.subr.bf16.mxu0 %v3527
        %5783 = vmatpush1.bf16.msra.mxu0 %v3526
        %5784 = vmatprep.subr.bf16.mxu0 %v3543
        %5785 = vmatpush1.bf16.msra.mxu0 %v3542
        %5786 = vmatprep.subr.bf16.mxu0 %v3559
        %5787 = vmatpush1.bf16.msra.mxu0 %v3558
        %5788 = vmatprep.subr.bf16.mxu0 %v3575
        %5789 = vmatpush1.bf16.msra.mxu0 %v3574
        %5790 = vmatprep.subr.bf16.mxu0 %v3591
        %5791 = vmatpush1.bf16.msra.mxu0 %v3590
        %5792 = vmatprep.subr.bf16.mxu0 %v3607
        %5793 = vmatpush1.bf16.msra.mxu0 %v3606
        %5794 = vmatprep.subr.bf16.mxu0 %v3623
        %5795 = vmatpush1.bf16.msra.mxu0 %v3622
        %5796 = vmatprep.subr.bf16.mxu0 %v3639
        %5797 = vmatpush1.bf16.msra.mxu0 %v3638
        %5798 = vmatprep.subr.bf16.mxu0 %v3655
        %5799 = vmatpush1.bf16.msra.mxu0 %v3654
        %5800 = vmatprep.subr.bf16.mxu0 %v3671
        %5801 = vmatpush1.bf16.msra.mxu0 %v3670
        %5802 = vmatprep.subr.bf16.mxu0 %v3687
        %5803 = vmatpush1.bf16.msra.mxu0 %v3686
        %5804 = vmatprep.subr.bf16.mxu0 %v3703
        %5805 = vmatpush1.bf16.msra.mxu0 %v3702
        %5806 = vmatprep.subr.bf16.mxu0 %v3719
        %5807 = vmatpush1.bf16.msra.mxu0 %v3718
        %5808 = vmatprep.mubr.bf16.mxu0 %v1151
        %5809 = vmatmul.mubr.bf16.gmra.mrb[0].mxu0 %v1150
        %v5810 = vpop.f32.mrb[0].mxu0
        %v5811 = vadd.f32 %v1103, %v5810
        %v5812 = vpop.f32.mrb[0].mxu0
        %v5813 = vadd.f32 %v1107, %v5812
        %v5814 = vpop.f32.mrb[0].mxu0
        %v5815 = vadd.f32 %v1103, %v5814
        %v5816 = vpop.f32.mrb[0].mxu0
        %v5817 = vadd.f32 %v1107, %v5816
        %5818 = vdwg.mxu0
        %5819 = vmatprep.subr.bf16.mxu0 %v3735
        %5820 = vmatpush1.bf16.msra.mxu0 %v3734
        %5821 = vmatprep.subr.bf16.mxu0 %v3751
        %5822 = vmatpush1.bf16.msra.mxu0 %v3750
        %5823 = vmatprep.subr.bf16.mxu0 %v3767
        %5824 = vmatpush1.bf16.msra.mxu0 %v3766
        %5825 = vmatprep.subr.bf16.mxu0 %v3783
        %5826 = vmatpush1.bf16.msra.mxu0 %v3782
        %5827 = vmatprep.subr.bf16.mxu0 %v3799
        %5828 = vmatpush1.bf16.msra.mxu0 %v3798
        %5829 = vmatprep.subr.bf16.mxu0 %v3815
        %5830 = vmatpush1.bf16.msra.mxu0 %v3814
        %5831 = vmatprep.subr.bf16.mxu0 %v3831
        %5832 = vmatpush1.bf16.msra.mxu0 %v3830
        %5833 = vmatprep.subr.bf16.mxu0 %v3847
        %5834 = vmatpush1.bf16.msra.mxu0 %v3846
        %5835 = vmatprep.subr.bf16.mxu0 %v3863
        %5836 = vmatpush1.bf16.msra.mxu0 %v3862
        %5837 = vmatprep.subr.bf16.mxu0 %v3879
        %5838 = vmatpush1.bf16.msra.mxu0 %v3878
        %5839 = vmatprep.subr.bf16.mxu0 %v3895
        %5840 = vmatpush1.bf16.msra.mxu0 %v3894
        %5841 = vmatprep.subr.bf16.mxu0 %v3911
        %5842 = vmatpush1.bf16.msra.mxu0 %v3910
        %5843 = vmatprep.subr.bf16.mxu0 %v3927
        %5844 = vmatpush1.bf16.msra.mxu0 %v3926
        %5845 = vmatprep.subr.bf16.mxu0 %v3943
        %5846 = vmatpush1.bf16.msra.mxu0 %v3942
        %5847 = vmatprep.subr.bf16.mxu0 %v3959
        %5848 = vmatpush1.bf16.msra.mxu0 %v3958
        %5849 = vmatprep.subr.bf16.mxu0 %v3975
        %5850 = vmatpush1.bf16.msra.mxu0 %v3974
        %5851 = vmatprep.mubr.bf16.mxu0 %v1153
        %5852 = vmatmul.mubr.bf16.gmra.mrb[0].mxu0 %v1152
        %v5853 = vpop.f32.mrb[0].mxu0
        %v5854 = vadd.f32 %v5811, %v5853
        %v5855 = vpop.f32.mrb[0].mxu0
        %v5856 = vadd.f32 %v5813, %v5855
        %v5857 = vpop.f32.mrb[0].mxu0
        %v5858 = vadd.f32 %v5815, %v5857
        %v5859 = vpop.f32.mrb[0].mxu0
        %v5860 = vadd.f32 %v5817, %v5859
        %5861 = vdwg.mxu0
        %5862 = vmatprep.subr.bf16.mxu0 %v3991
        %5863 = vmatpush1.bf16.msra.mxu0 %v3990
        %5864 = vmatprep.subr.bf16.mxu0 %v4007
        %5865 = vmatpush1.bf16.msra.mxu0 %v4006
        %5866 = vmatprep.subr.bf16.mxu0 %v4023
        %5867 = vmatpush1.bf16.msra.mxu0 %v4022
        %5868 = vmatprep.subr.bf16.mxu0 %v4039
        %5869 = vmatpush1.bf16.msra.mxu0 %v4038
        %5870 = vmatprep.subr.bf16.mxu0 %v4055
        %5871 = vmatpush1.bf16.msra.mxu0 %v4054
        %5872 = vmatprep.subr.bf16.mxu0 %v4071
        %5873 = vmatpush1.bf16.msra.mxu0 %v4070
        %5874 = vmatprep.subr.bf16.mxu0 %v4087
        %5875 = vmatpush1.bf16.msra.mxu0 %v4086
        %5876 = vmatprep.subr.bf16.mxu0 %v4103
        %5877 = vmatpush1.bf16.msra.mxu0 %v4102
        %5878 = vmatprep.subr.bf16.mxu0 %v4119
        %5879 = vmatpush1.bf16.msra.mxu0 %v4118
        %5880 = vmatprep.subr.bf16.mxu0 %v4135
        %5881 = vmatpush1.bf16.msra.mxu0 %v4134
        %5882 = vmatprep.subr.bf16.mxu0 %v4151
        %5883 = vmatpush1.bf16.msra.mxu0 %v4150
        %5884 = vmatprep.subr.bf16.mxu0 %v4167
        %5885 = vmatpush1.bf16.msra.mxu0 %v4166
        %5886 = vmatprep.subr.bf16.mxu0 %v4183
        %5887 = vmatpush1.bf16.msra.mxu0 %v4182
        %5888 = vmatprep.subr.bf16.mxu0 %v4199
        %5889 = vmatpush1.bf16.msra.mxu0 %v4198
        %5890 = vmatprep.subr.bf16.mxu0 %v4215
        %5891 = vmatpush1.bf16.msra.mxu0 %v4214
        %5892 = vmatprep.subr.bf16.mxu0 %v4231
        %5893 = vmatpush1.bf16.msra.mxu0 %v4230
        %5894 = vmatprep.mubr.bf16.mxu0 %v1155
        %5895 = vmatmul.mubr.bf16.gmra.mrb[0].mxu0 %v1154
        %v5896 = vpop.f32.mrb[0].mxu0
        %v5897 = vadd.f32 %v5854, %v5896
        %v5898 = vpop.f32.mrb[0].mxu0
        %v5899 = vadd.f32 %v5856, %v5898
        %v5900 = vpop.f32.mrb[0].mxu0
        %v5901 = vadd.f32 %v5858, %v5900
        %v5902 = vpop.f32.mrb[0].mxu0
        %v5903 = vadd.f32 %v5860, %v5902
        %5904 = vdwg.mxu0
        %5905 = vmatprep.subr.bf16.mxu0 %v3481
        %5906 = vmatpush1.bf16.msra.mxu0 %v3480
        %5907 = vmatprep.subr.bf16.mxu0 %v3497
        %5908 = vmatpush1.bf16.msra.mxu0 %v3496
        %5909 = vmatprep.subr.bf16.mxu0 %v3513
        %5910 = vmatpush1.bf16.msra.mxu0 %v3512
        %5911 = vmatprep.subr.bf16.mxu0 %v3529
        %5912 = vmatpush1.bf16.msra.mxu0 %v3528
        %5913 = vmatprep.subr.bf16.mxu0 %v3545
        %5914 = vmatpush1.bf16.msra.mxu0 %v3544
        %5915 = vmatprep.subr.bf16.mxu0 %v3561
        %5916 = vmatpush1.bf16.msra.mxu0 %v3560
        %5917 = vmatprep.subr.bf16.mxu0 %v3577
        %5918 = vmatpush1.bf16.msra.mxu0 %v3576
        %5919 = vmatprep.subr.bf16.mxu0 %v3593
        %5920 = vmatpush1.bf16.msra.mxu0 %v3592
        %5921 = vmatprep.subr.bf16.mxu0 %v3609
        %5922 = vmatpush1.bf16.msra.mxu0 %v3608
        %5923 = vmatprep.subr.bf16.mxu0 %v3625
        %5924 = vmatpush1.bf16.msra.mxu0 %v3624
        %5925 = vmatprep.subr.bf16.mxu0 %v3641
        %5926 = vmatpush1.bf16.msra.mxu0 %v3640
        %5927 = vmatprep.subr.bf16.mxu0 %v3657
        %5928 = vmatpush1.bf16.msra.mxu0 %v3656
        %5929 = vmatprep.subr.bf16.mxu0 %v3673
        %5930 = vmatpush1.bf16.msra.mxu0 %v3672
        %5931 = vmatprep.subr.bf16.mxu0 %v3689
        %5932 = vmatpush1.bf16.msra.mxu0 %v3688
        %5933 = vmatprep.subr.bf16.mxu0 %v3705
        %5934 = vmatpush1.bf16.msra.mxu0 %v3704
        %5935 = vmatprep.subr.bf16.mxu0 %v3721
        %5936 = vmatpush1.bf16.msra.mxu0 %v3720
        %5937 = vmatprep.mubr.bf16.mxu0 %v1151
        %5938 = vmatmul.mubr.bf16.gmra.mrb[0].mxu0 %v1150
        %v5939 = vpop.f32.mrb[0].mxu0
        %v5940 = vadd.f32 %v1111, %v5939
        %v5941 = vpop.f32.mrb[0].mxu0
        %v5942 = vadd.f32 %v1115, %v5941
        %v5943 = vpop.f32.mrb[0].mxu0
        %v5944 = vadd.f32 %v1111, %v5943
        %v5945 = vpop.f32.mrb[0].mxu0
        %v5946 = vadd.f32 %v1115, %v5945
        %5947 = vdwg.mxu0
        %5948 = vmatprep.subr.bf16.mxu0 %v3737
        %5949 = vmatpush1.bf16.msra.mxu0 %v3736
        %5950 = vmatprep.subr.bf16.mxu0 %v3753
        %5951 = vmatpush1.bf16.msra.mxu0 %v3752
        %5952 = vmatprep.subr.bf16.mxu0 %v3769
        %5953 = vmatpush1.bf16.msra.mxu0 %v3768
        %5954 = vmatprep.subr.bf16.mxu0 %v3785
        %5955 = vmatpush1.bf16.msra.mxu0 %v3784
        %5956 = vmatprep.subr.bf16.mxu0 %v3801
        %5957 = vmatpush1.bf16.msra.mxu0 %v3800
        %5958 = vmatprep.subr.bf16.mxu0 %v3817
        %5959 = vmatpush1.bf16.msra.mxu0 %v3816
        %5960 = vmatprep.subr.bf16.mxu0 %v3833
        %5961 = vmatpush1.bf16.msra.mxu0 %v3832
        %5962 = vmatprep.subr.bf16.mxu0 %v3849
        %5963 = vmatpush1.bf16.msra.mxu0 %v3848
        %5964 = vmatprep.subr.bf16.mxu0 %v3865
        %5965 = vmatpush1.bf16.msra.mxu0 %v3864
        %5966 = vmatprep.subr.bf16.mxu0 %v3881
        %5967 = vmatpush1.bf16.msra.mxu0 %v3880
        %5968 = vmatprep.subr.bf16.mxu0 %v3897
        %5969 = vmatpush1.bf16.msra.mxu0 %v3896
        %5970 = vmatprep.subr.bf16.mxu0 %v3913
        %5971 = vmatpush1.bf16.msra.mxu0 %v3912
        %5972 = vmatprep.subr.bf16.mxu0 %v3929
        %5973 = vmatpush1.bf16.msra.mxu0 %v3928
        %5974 = vmatprep.subr.bf16.mxu0 %v3945
        %5975 = vmatpush1.bf16.msra.mxu0 %v3944
        %5976 = vmatprep.subr.bf16.mxu0 %v3961
        %5977 = vmatpush1.bf16.msra.mxu0 %v3960
        %5978 = vmatprep.subr.bf16.mxu0 %v3977
        %5979 = vmatpush1.bf16.msra.mxu0 %v3976
        %5980 = vmatprep.mubr.bf16.mxu0 %v1153
        %5981 = vmatmul.mubr.bf16.gmra.mrb[0].mxu0 %v1152
        %v5982 = vpop.f32.mrb[0].mxu0
        %v5983 = vadd.f32 %v5940, %v5982
        %v5984 = vpop.f32.mrb[0].mxu0
        %v5985 = vadd.f32 %v5942, %v5984
        %v5986 = vpop.f32.mrb[0].mxu0
        %v5987 = vadd.f32 %v5944, %v5986
        %v5988 = vpop.f32.mrb[0].mxu0
        %v5989 = vadd.f32 %v5946, %v5988
        %5990 = vdwg.mxu0
        %5991 = vmatprep.subr.bf16.mxu0 %v3993
        %5992 = vmatpush1.bf16.msra.mxu0 %v3992
        %5993 = vmatprep.subr.bf16.mxu0 %v4009
        %5994 = vmatpush1.bf16.msra.mxu0 %v4008
        %5995 = vmatprep.subr.bf16.mxu0 %v4025
        %5996 = vmatpush1.bf16.msra.mxu0 %v4024
        %5997 = vmatprep.subr.bf16.mxu0 %v4041
        %5998 = vmatpush1.bf16.msra.mxu0 %v4040
        %5999 = vmatprep.subr.bf16.mxu0 %v4057
        %6000 = vmatpush1.bf16.msra.mxu0 %v4056
        %6001 = vmatprep.subr.bf16.mxu0 %v4073
        %6002 = vmatpush1.bf16.msra.mxu0 %v4072
        %6003 = vmatprep.subr.bf16.mxu0 %v4089
        %6004 = vmatpush1.bf16.msra.mxu0 %v4088
        %6005 = vmatprep.subr.bf16.mxu0 %v4105
        %6006 = vmatpush1.bf16.msra.mxu0 %v4104
        %6007 = vmatprep.subr.bf16.mxu0 %v4121
        %6008 = vmatpush1.bf16.msra.mxu0 %v4120
        %6009 = vmatprep.subr.bf16.mxu0 %v4137
        %6010 = vmatpush1.bf16.msra.mxu0 %v4136
        %6011 = vmatprep.subr.bf16.mxu0 %v4153
        %6012 = vmatpush1.bf16.msra.mxu0 %v4152
        %6013 = vmatprep.subr.bf16.mxu0 %v4169
        %6014 = vmatpush1.bf16.msra.mxu0 %v4168
        %6015 = vmatprep.subr.bf16.mxu0 %v4185
        %6016 = vmatpush1.bf16.msra.mxu0 %v4184
        %6017 = vmatprep.subr.bf16.mxu0 %v4201
        %6018 = vmatpush1.bf16.msra.mxu0 %v4200
        %6019 = vmatprep.subr.bf16.mxu0 %v4217
        %6020 = vmatpush1.bf16.msra.mxu0 %v4216
        %6021 = vmatprep.subr.bf16.mxu0 %v4233
        %6022 = vmatpush1.bf16.msra.mxu0 %v4232
        %6023 = vmatprep.mubr.bf16.mxu0 %v1155
        %6024 = vmatmul.mubr.bf16.gmra.mrb[0].mxu0 %v1154
        %v6025 = vpop.f32.mrb[0].mxu0
        %v6026 = vadd.f32 %v5983, %v6025
        %v6027 = vpop.f32.mrb[0].mxu0
        %v6028 = vadd.f32 %v5985, %v6027
        %v6029 = vpop.f32.mrb[0].mxu0
        %v6030 = vadd.f32 %v5987, %v6029
        %v6031 = vpop.f32.mrb[0].mxu0
        %v6032 = vadd.f32 %v5989, %v6031
        %6033 = vdwg.mxu0
        %6034 = vst [vmem:[%s258] sm:$0xff] %v5123
        %6035 = vst [vmem:[%s258 + $0x8] sm:$0xff] %v5125
        %6036 = vst [vmem:[%s258 + $0x10] sm:$0xff] %v5252
        %6037 = vst [vmem:[%s258 + $0x18] sm:$0xff] %v5254
        %6038 = vst [vmem:[%s258 + $0x20] sm:$0xff] %v5381
        %6039 = vst [vmem:[%s258 + $0x28] sm:$0xff] %v5383
        %6040 = vst [vmem:[%s258 + $0x30] sm:$0xff] %v5510
        %6041 = vst [vmem:[%s258 + $0x38] sm:$0xff] %v5512
        %6042 = vst [vmem:[%s258 + $0x40] sm:$0xff] %v5639
        %6043 = vst [vmem:[%s258 + $0x48] sm:$0xff] %v5641
        %6044 = vst [vmem:[%s258 + $0x50] sm:$0xff] %v5768
        %6045 = vst [vmem:[%s258 + $0x58] sm:$0xff] %v5770
        %6046 = vst [vmem:[%s258 + $0x60] sm:$0xff] %v5897
        %6047 = vst [vmem:[%s258 + $0x68] sm:$0xff] %v5899
        %6048 = vst [vmem:[%s258 + $0x70] sm:$0xff] %v6026
        %6049 = vst [vmem:[%s258 + $0x78] sm:$0xff] %v6028
        %6050 = vst [vmem:[%s258 + $0x80] sm:$0xff] %v5127
        %6051 = vst [vmem:[%s258 + $0x88] sm:$0xff] %v5129
        %6052 = vst [vmem:[%s258 + $0x90] sm:$0xff] %v5256
        %6053 = vst [vmem:[%s258 + $0x98] sm:$0xff] %v5258
        %6054 = vst [vmem:[%s258 + $0xa0] sm:$0xff] %v5385
        %6055 = vst [vmem:[%s258 + $0xa8] sm:$0xff] %v5387
        %6056 = vst [vmem:[%s258 + $0xb0] sm:$0xff] %v5514
        %6057 = vst [vmem:[%s258 + $0xb8] sm:$0xff] %v5516
        %6058 = vst [vmem:[%s258 + $0xc0] sm:$0xff] %v5643
        %6059 = vst [vmem:[%s258 + $0xc8] sm:$0xff] %v5645
        %6060 = vst [vmem:[%s258 + $0xd0] sm:$0xff] %v5772
        %6061 = vst [vmem:[%s258 + $0xd8] sm:$0xff] %v5774
        %6062 = vst [vmem:[%s258 + $0xe0] sm:$0xff] %v5901
        %6063 = vst [vmem:[%s258 + $0xe8] sm:$0xff] %v5903
        %6064 = vst [vmem:[%s258 + $0xf0] sm:$0xff] %v6030
        %6065 = vst [vmem:[%s258 + $0xf8] sm:$0xff] %v6032
        %s6066 = sand.u32 %s123, 1
        %s6067 = scalar_lea.sflag [#allocation4], %s6066
        %s6068 = sand.u32 %s123, 1
        %s6069 = smul.addr %s6068, 256
        %s6070 = scalar_lea.vmem [#allocation7], %s6069
        // Predicated region
        $region41: #{mlm_head.3} parent=31 // pred_check
          %p6071 = pneg %p133
        $region42: #{mlm_head.3} parent=31 // pred_check_branch
          %6073 = sbr.rel (%p6071) target = $region44
        $region43: #{mlm_head.3} parent=31 // pred_region
          %s6074 = smul.u32 2, %s27
          %s6075 = smul.u32 16, %s28
          %s6076 = ssub.s32 387, %s6075
          %p6077 = scmp.lt.s32.totalorder %s6076, 16
          %s6078 = scalar_select %p6077, %s6076, 16
          %s6079 = smul.u32 256, %s6078
          %s6081 = ssub.s32 4096, %s6079
          %6082 = vsyncadd %s6067, %s6081
          %p6083 = scmp.ne.s32.totalorder 0, %s6079
          %s6084 = smul.addr %s6074, 387
          %s6085 = sadd.s32 %s6075, %s6084
          %s6086 = smul.addr %s6085, 128
          %s6087 = scalar_lea.hbm %s3, %s6086
          %s6088 = smul.u32 %s6078, 8
          %s6089 = smul.u32 %s6088, 2
          %s6090 = sshll.u32 %s6070, 4
          %s6091 = int_to_ptr.vmem [resolvable:$true] %s6090
          %s6092 = sshll.u32 %s6089, 4
          %6096 = dma.vmem_to_hbm [thread:$0]  (%p6083), %s6091, %s6092, %s6087, %s6067, 2048, 49536, %s6088
        $region44: #{mlm_head.3} parent=31 // pred_fallthru
          _
      $region32: #{mlm_head.3} parent=5 // pred_fallthru
        _
      %p6097 = scmp.le.s32.totalorder 2, %s18
      // Predicated region
      $region45: #{mlm_head.3} parent=5 // pred_check
        %p6098 = pneg %p6097
      $region46: #{mlm_head.3} parent=5 // pred_check_branch
        %6100 = sbr.rel (%p6098) target = $region48
      $region47: #{mlm_head.3} parent=5 // pred_region
        %s6101 = ssub.s32 %s18, 2
        // Predicated region
        $region49: #{mlm_head.3} parent=47 // pred_check
          %p6102 = pneg %p139
        $region50: #{mlm_head.3} parent=47 // pred_check_branch
          %6104 = sbr.rel (%p6102) target = $region52
        $region51: #{mlm_head.3} parent=47 // pred_region
          %s6105 = sand.u32 %s124, 1
          %s6106 = scalar_lea.sflag [#allocation4], %s6105
          %s6107 = sand.u32 %s124, 1
          %s6108 = smul.addr %s6107, 256
          %s6109 = scalar_lea.vmem [#allocation7], %s6108
          %6110 = dma.done %s6106, 4096
        $region52: #{mlm_head.3} parent=47 // pred_fallthru
          _
      $region48: #{mlm_head.3} parent=5 // pred_fallthru
        _
    $region6: #{mlm_head.3} parent=1 // loop_footer
      %s22 = sadd.s32 1, %s18
    $region7: #{mlm_head.3} parent=1 // loop_footer_branch
      %17 = sbr.rel target = $region3
    $region8: #{mlm_head.3} parent=1 // loop_exit
      _
    %6111 = vsyncpa [#allocation3], 1
    %s6112 = scalar_lea.sflag [#allocation3], 1
    %6113 = vsyncpa %s6112, 1
    %6114 = vsyncpa [#allocation6], 1
    %s6115 = scalar_lea.sflag [#allocation6], 1
    %6116 = vsyncpa %s6115, 1
    %6117 = vsyncpa [#allocation4], 1
    %s6118 = scalar_lea.sflag [#allocation4], 1
    %6119 = vsyncpa %s6118, 1

</llo_original>
